<compile_context>
chip_gen: v7x
topology: tpu7x:2x2x1
jax: 0.10.0
libtpu: 0.0.40
codegen_flags: <defaults>
</compile_context>

<pallas_src>
import functools

import jax
import jax.numpy as jnp
import numpy as np
from jax import lax
from jax.experimental import pallas as pl
from jax.experimental.pallas import tpu as pltpu

SELU_ALPHA = 1.6732632423543772848170429916717
SELU_SCALE = 1.0507009873554804934193349852946


def _selu_unscaled(x):
    # SELU without the output scale (the scale is folded into the next conv's
    # weights by the wrapper).
    return jnp.where(x > 0, x, SELU_ALPHA * (jnp.exp(x) - 1.0))


def _conv3x3(xs, w_ref, cin, cout, H, W, left_ok, right_ok):
    """3x3 conv (pad=1, stride=1) on lane-packed tiles.

    xs:       list of cin (H, NWp) f32 tiles; the lane dim packs images of
              width W back-to-back, zero-padded up to NWp lanes.
    w_ref:    flat SMEM ref with (cout, cin, 3, 3) row-major f32 weights.
    left_ok / right_ok: (H, NWp) bool masks — True where the within-image
              column may read its w-1 / w+1 neighbour.
    Returns a list of cout (H, NWp) f32 tiles.
    """
    nwp = xs[0].shape[-1]
    zrow = jnp.zeros((1, nwp), jnp.float32)
    # Zero-pad each channel ONCE along H (sublane dim).  The three H-taps are
    # static sublane slices of this slab; the lane footprint is unchanged.
    slabs = [jnp.concatenate([zrow, x, zrow], axis=0) for x in xs]  # (H+2, NWp)

    accs = [None] * cout
    for kh in (-1, 0, 1):
        for kw in (-1, 0, 1):
            for ci in range(cin):
                # t(h, w) = x_ci(h + kh, w + kw), zero outside the image.
                t = slabs[ci][1 + kh:1 + kh + H, :]
                if kw != 0:
                    # Lane roll on the XLU + per-image boundary mask.
                    t = pltpu.roll(t, (-kw) % nwp, axis=1)
                    t = jnp.where(right_ok if kw > 0 else left_ok, t, 0.0)
                # Group the scalar SMEM weight loads ahead of the FMAs.
                ws = [w_ref[((o * cin + ci) * 3 + (kh + 1)) * 3 + (kw + 1)]
                      for o in range(cout)]
                for o in range(cout):
                    contrib = ws[o] * t
                    accs[o] = contrib if accs[o] is None else accs[o] + contrib
    return accs


def _smh_kernel(x_ref, w1_ref, w2_ref, w3_ref, w4_ref, o_ref, *, cin, H, W):
    nwp = x_ref.shape[-1]
    x = x_ref[...].astype(jnp.float32)                  # (cin, H, NWp)
    xs = [x[ci] for ci in range(cin)]

    # Per-image column masks for the 3x3 W-taps (shared by all conv layers).
    colw = lax.broadcasted_iota(jnp.int32, (H, nwp), 1) % W
    left_ok = colw > 0             # may read column w-1
    right_ok = colw < (W - 1)      # may read column w+1

    # conv1x1: cin -> 8, unscaled SELU (scale folded into w2).
    h1 = []
    for o in range(8):
        ws = [w1_ref[o * cin + ci] for ci in range(cin)]
        acc = ws[0] * xs[0]
        for ci in range(1, cin):
            acc = acc + ws[ci] * xs[ci]
        h1.append(_selu_unscaled(acc))

    # conv3x3 chain: 8 -> 4 -> 4 -> 1 (SELU scales folded into w3 / w4).
    h2 = [_selu_unscaled(v) for v in
          _conv3x3(h1, w2_ref, 8, 4, H, W, left_ok, right_ok)]
    h3 = [_selu_unscaled(v) for v in
          _conv3x3(h2, w3_ref, 4, 4, H, W, left_ok, right_ok)]
    z = _conv3x3(h3, w4_ref, 4, 1, H, W, left_ok, right_ok)[0]

    # sigmoid(z) = 1 / (1 + exp(-z)); approximate reciprocal runs on the EUP.
    sig = pl.reciprocal(1.0 + jnp.exp(-z), approx=True)
    o_ref[...] = sig.astype(o_ref.dtype)


def smh_forward(x, w1, w2, w3, w4):
    N, C, H, W = x.shape
    nw = N * W
    nwp = ((nw + 127) // 128) * 128        # lane-dense padded packed width
    # Pack the batch into the lane dim: (N, C, H, W) -> (C, H, N*W), then pad.
    xp = jnp.transpose(x, (1, 2, 0, 3)).reshape(C, H, nw)
    if nwp != nw:
        xp = jnp.pad(xp, ((0, 0), (0, 0), (0, nwp - nw)))

    # Fold each SELU's output scale into the following (linear) conv's weights.
    w1f = w1.reshape(-1).astype(jnp.float32)
    w2f = (SELU_SCALE * w2).reshape(-1).astype(jnp.float32)
    w3f = (SELU_SCALE * w3).reshape(-1).astype(jnp.float32)
    w4f = (SELU_SCALE * w4).reshape(-1).astype(jnp.float32)

    smem = pl.BlockSpec(memory_space=pltpu.MemorySpace.SMEM)
    vmem = pl.BlockSpec(memory_space=pltpu.MemorySpace.VMEM)
    kernel = functools.partial(_smh_kernel, cin=C, H=H, W=W)
    # NOTE: for production-size feature maps, add an H-strip grid axis (with a
    # 1-row halo per conv) and cap vmem_limit_bytes so the live footprint stays
    # inside v7x's 64 MiB VMEM and feeds both v7x TensorCores; at this small
    # test size a single whole-batch invocation is both smallest and fastest.
    out_packed = pl.pallas_call(
        kernel,
        out_shape=jax.ShapeDtypeStruct((H, nwp), x.dtype),
        in_specs=[vmem, smem, smem, smem, smem],
        out_specs=vmem,
    )(xp, w1f, w2f, w3f, w4f)

    # Unpack lanes back to (N, 1, H, W).
    out = out_packed[:, :nw].reshape(H, N, W)
    return jnp.transpose(out, (1, 0, 2))[:, None, :, :]


def smh_reference(x, w1, w2, w3, w4):
    """Pure-JAX reference (mirrors the PyTorch forward)."""
    def conv(v, w, pad):
        return lax.conv_general_dilated(
            v, w, (1, 1), ((pad, pad), (pad, pad)),
            dimension_numbers=("NCHW", "OIHW", "NCHW"))

    def selu(v):
        return SELU_SCALE * jnp.where(v > 0, v, SELU_ALPHA * (jnp.exp(v) - 1.0))

    h = selu(conv(x, w1, 0))
    h = selu(conv(h, w2, 1))
    h = selu(conv(h, w3, 1))
    z = conv(h, w4, 1)
    return 1.0 / (1.0 + jnp.exp(-z))


if __name__ == "__main__":
    key = jax.random.PRNGKey(0)
    k0, k1, k2, k3, k4 = jax.random.split(key, 5)

    N, C_in, H, W = 2, 4, 16, 16
    x = jax.random.normal(k0, (N, C_in, H, W), dtype=jnp.float32)

    # Deterministic synthetic weights (module shapes; convs are bias-free).
    w1 = 0.2 * jax.random.normal(k1, (8, C_in, 1, 1), dtype=jnp.float32)
    w2 = 0.2 * jax.random.normal(k2, (4, 8, 3, 3), dtype=jnp.float32)
    w3 = 0.2 * jax.random.normal(k3, (4, 4, 3, 3), dtype=jnp.float32)
    w4 = 0.2 * jax.random.normal(k4, (1, 4, 3, 3), dtype=jnp.float32)

    out = jax.block_until_ready(smh_forward(x, w1, w2, w3, w4))
    ref = jax.block_until_ready(smh_reference(x, w1, w2, w3, w4))

    assert out.shape == (N, 1, H, W), out.shape
    # Tolerance covers the approximate EUP reciprocal in the fused sigmoid and
    # the SELU-scale weight folding; structural errors are far larger than this.
    np.testing.assert_allclose(np.asarray(out), np.asarray(ref),
                               rtol=5e-3, atol=5e-3)
    print("KERNEL_OK")
</pallas_src>

<mosaic_0001>
module attributes {stable_mosaic.version = 11 : i64} {
  func.func @_smh_kernel(%arg0: memref<4x16x128xf32, #tpu.memory_space<vmem>>, %arg1: memref<32xf32, #tpu.memory_space<smem>>, %arg2: memref<288xf32, #tpu.memory_space<smem>>, %arg3: memref<144xf32, #tpu.memory_space<smem>>, %arg4: memref<36xf32, #tpu.memory_space<smem>>, %arg5: memref<16x128xf32, #tpu.memory_space<vmem>>) attributes {dimension_semantics = [], scalar_prefetch = 0 : i64, scratch_operands = 0 : i64, tpu.core_type = #tpu.core_type<tc>} {
    %c0 = arith.constant 0 : index
    %c0_0 = arith.constant 0 : index
    %c0_1 = arith.constant 0 : index
    %0 = vector.load %arg0[%c0, %c0_0, %c0_1] : memref<4x16x128xf32, #tpu.memory_space<vmem>>, vector<4x16x128xf32>
    %1 = vector.extract_strided_slice %0 {offsets = [0, 0, 0], sizes = [1, 16, 128], strides = [1, 1, 1]} : vector<4x16x128xf32> to vector<1x16x128xf32>
    %2 = vector.shape_cast %1 : vector<1x16x128xf32> to vector<16x128xf32>
    %3 = vector.extract_strided_slice %0 {offsets = [1, 0, 0], sizes = [1, 16, 128], strides = [1, 1, 1]} : vector<4x16x128xf32> to vector<1x16x128xf32>
    %4 = vector.shape_cast %3 : vector<1x16x128xf32> to vector<16x128xf32>
    %5 = vector.extract_strided_slice %0 {offsets = [2, 0, 0], sizes = [1, 16, 128], strides = [1, 1, 1]} : vector<4x16x128xf32> to vector<1x16x128xf32>
    %6 = vector.shape_cast %5 : vector<1x16x128xf32> to vector<16x128xf32>
    %7 = vector.extract_strided_slice %0 {offsets = [3, 0, 0], sizes = [1, 16, 128], strides = [1, 1, 1]} : vector<4x16x128xf32> to vector<1x16x128xf32>
    %8 = vector.shape_cast %7 : vector<1x16x128xf32> to vector<16x128xf32>
    %9 = tpu.iota {dimensions = array<i32: 1>} : vector<16x128xi32>
    %c16_i32 = arith.constant 16 : i32
    %c0_i32 = arith.constant 0 : i32
    %10 = arith.cmpi eq, %c16_i32, %c0_i32 : i32
    %c1_i32 = arith.constant 1 : i32
    %11 = arith.select %10, %c1_i32, %c16_i32 : i32
    %12 = vector.broadcast %11 : i32 to vector<16x128xi32>
    %13 = arith.remsi %9, %12 : vector<16x128xi32>
    %c0_i32_2 = arith.constant 0 : i32
    %14 = vector.broadcast %c0_i32_2 : i32 to vector<16x128xi32>
    %15 = arith.cmpi ne, %13, %14 : vector<16x128xi32>
    %c0_i32_3 = arith.constant 0 : i32
    %16 = vector.broadcast %c0_i32_3 : i32 to vector<16x128xi32>
    %17 = arith.cmpi slt, %13, %16 : vector<16x128xi32>
    %c0_i32_4 = arith.constant 0 : i32
    %18 = arith.cmpi slt, %11, %c0_i32_4 : i32
    %19 = vector.broadcast %18 : i1 to vector<16x128xi1>
    %20 = vector.broadcast %19 : vector<16x128xi1> to vector<16x128xi1>
    %21 = arith.xori %17, %20 : vector<16x128xi1>
    %22 = arith.andi %21, %15 : vector<16x128xi1>
    %23 = vector.broadcast %11 : i32 to vector<16x128xi32>
    %24 = arith.addi %13, %23 : vector<16x128xi32>
    %25 = arith.select %22, %24, %13 : vector<16x128xi1>, vector<16x128xi32>
    %c0_i32_5 = arith.constant 0 : i32
    %26 = vector.broadcast %c0_i32_5 : i32 to vector<16x128xi32>
    %27 = arith.cmpi sgt, %25, %26 : vector<16x128xi32>
    %c15_i32 = arith.constant 15 : i32
    %28 = vector.broadcast %c15_i32 : i32 to vector<16x128xi32>
    %29 = arith.cmpi slt, %25, %28 : vector<16x128xi32>
    %c0_6 = arith.constant 0 : index
    %30 = memref.load %arg1[%c0_6] : memref<32xf32, #tpu.memory_space<smem>>
    %c1 = arith.constant 1 : index
    %31 = memref.load %arg1[%c1] : memref<32xf32, #tpu.memory_space<smem>>
    %c2 = arith.constant 2 : index
    %32 = memref.load %arg1[%c2] : memref<32xf32, #tpu.memory_space<smem>>
    %c3 = arith.constant 3 : index
    %33 = memref.load %arg1[%c3] : memref<32xf32, #tpu.memory_space<smem>>
    %34 = vector.broadcast %30 : f32 to vector<16x128xf32>
    %35 = arith.mulf %34, %2 : vector<16x128xf32>
    %36 = vector.broadcast %31 : f32 to vector<16x128xf32>
    %37 = arith.mulf %36, %4 : vector<16x128xf32>
    %38 = arith.addf %35, %37 : vector<16x128xf32>
    %39 = vector.broadcast %32 : f32 to vector<16x128xf32>
    %40 = arith.mulf %39, %6 : vector<16x128xf32>
    %41 = arith.addf %38, %40 : vector<16x128xf32>
    %42 = vector.broadcast %33 : f32 to vector<16x128xf32>
    %43 = arith.mulf %42, %8 : vector<16x128xf32>
    %44 = arith.addf %41, %43 : vector<16x128xf32>
    %cst = arith.constant 0.000000e+00 : f32
    %45 = vector.broadcast %cst : f32 to vector<16x128xf32>
    %46 = arith.cmpf ogt, %44, %45 : vector<16x128xf32>
    %47 = math.exp %44 : vector<16x128xf32>
    %cst_7 = arith.constant 1.000000e+00 : f32
    %48 = vector.broadcast %cst_7 : f32 to vector<16x128xf32>
    %49 = arith.subf %47, %48 : vector<16x128xf32>
    %cst_8 = arith.constant 1.67326319 : f32
    %50 = vector.broadcast %cst_8 : f32 to vector<16x128xf32>
    %51 = arith.mulf %50, %49 : vector<16x128xf32>
    %52 = arith.select %46, %44, %51 : vector<16x128xi1>, vector<16x128xf32>
    %c4 = arith.constant 4 : index
    %53 = memref.load %arg1[%c4] : memref<32xf32, #tpu.memory_space<smem>>
    %c5 = arith.constant 5 : index
    %54 = memref.load %arg1[%c5] : memref<32xf32, #tpu.memory_space<smem>>
    %c6 = arith.constant 6 : index
    %55 = memref.load %arg1[%c6] : memref<32xf32, #tpu.memory_space<smem>>
    %c7 = arith.constant 7 : index
    %56 = memref.load %arg1[%c7] : memref<32xf32, #tpu.memory_space<smem>>
    %57 = vector.broadcast %53 : f32 to vector<16x128xf32>
    %58 = arith.mulf %57, %2 : vector<16x128xf32>
    %59 = vector.broadcast %54 : f32 to vector<16x128xf32>
    %60 = arith.mulf %59, %4 : vector<16x128xf32>
    %61 = arith.addf %58, %60 : vector<16x128xf32>
    %62 = vector.broadcast %55 : f32 to vector<16x128xf32>
    %63 = arith.mulf %62, %6 : vector<16x128xf32>
    %64 = arith.addf %61, %63 : vector<16x128xf32>
    %65 = vector.broadcast %56 : f32 to vector<16x128xf32>
    %66 = arith.mulf %65, %8 : vector<16x128xf32>
    %67 = arith.addf %64, %66 : vector<16x128xf32>
    %cst_9 = arith.constant 0.000000e+00 : f32
    %68 = vector.broadcast %cst_9 : f32 to vector<16x128xf32>
    %69 = arith.cmpf ogt, %67, %68 : vector<16x128xf32>
    %70 = math.exp %67 : vector<16x128xf32>
    %cst_10 = arith.constant 1.000000e+00 : f32
    %71 = vector.broadcast %cst_10 : f32 to vector<16x128xf32>
    %72 = arith.subf %70, %71 : vector<16x128xf32>
    %cst_11 = arith.constant 1.67326319 : f32
    %73 = vector.broadcast %cst_11 : f32 to vector<16x128xf32>
    %74 = arith.mulf %73, %72 : vector<16x128xf32>
    %75 = arith.select %69, %67, %74 : vector<16x128xi1>, vector<16x128xf32>
    %c8 = arith.constant 8 : index
    %76 = memref.load %arg1[%c8] : memref<32xf32, #tpu.memory_space<smem>>
    %c9 = arith.constant 9 : index
    %77 = memref.load %arg1[%c9] : memref<32xf32, #tpu.memory_space<smem>>
    %c10 = arith.constant 10 : index
    %78 = memref.load %arg1[%c10] : memref<32xf32, #tpu.memory_space<smem>>
    %c11 = arith.constant 11 : index
    %79 = memref.load %arg1[%c11] : memref<32xf32, #tpu.memory_space<smem>>
    %80 = vector.broadcast %76 : f32 to vector<16x128xf32>
    %81 = arith.mulf %80, %2 : vector<16x128xf32>
    %82 = vector.broadcast %77 : f32 to vector<16x128xf32>
    %83 = arith.mulf %82, %4 : vector<16x128xf32>
    %84 = arith.addf %81, %83 : vector<16x128xf32>
    %85 = vector.broadcast %78 : f32 to vector<16x128xf32>
    %86 = arith.mulf %85, %6 : vector<16x128xf32>
    %87 = arith.addf %84, %86 : vector<16x128xf32>
    %88 = vector.broadcast %79 : f32 to vector<16x128xf32>
    %89 = arith.mulf %88, %8 : vector<16x128xf32>
    %90 = arith.addf %87, %89 : vector<16x128xf32>
    %cst_12 = arith.constant 0.000000e+00 : f32
    %91 = vector.broadcast %cst_12 : f32 to vector<16x128xf32>
    %92 = arith.cmpf ogt, %90, %91 : vector<16x128xf32>
    %93 = math.exp %90 : vector<16x128xf32>
    %cst_13 = arith.constant 1.000000e+00 : f32
    %94 = vector.broadcast %cst_13 : f32 to vector<16x128xf32>
    %95 = arith.subf %93, %94 : vector<16x128xf32>
    %cst_14 = arith.constant 1.67326319 : f32
    %96 = vector.broadcast %cst_14 : f32 to vector<16x128xf32>
    %97 = arith.mulf %96, %95 : vector<16x128xf32>
    %98 = arith.select %92, %90, %97 : vector<16x128xi1>, vector<16x128xf32>
    %c12 = arith.constant 12 : index
    %99 = memref.load %arg1[%c12] : memref<32xf32, #tpu.memory_space<smem>>
    %c13 = arith.constant 13 : index
    %100 = memref.load %arg1[%c13] : memref<32xf32, #tpu.memory_space<smem>>
    %c14 = arith.constant 14 : index
    %101 = memref.load %arg1[%c14] : memref<32xf32, #tpu.memory_space<smem>>
    %c15 = arith.constant 15 : index
    %102 = memref.load %arg1[%c15] : memref<32xf32, #tpu.memory_space<smem>>
    %103 = vector.broadcast %99 : f32 to vector<16x128xf32>
    %104 = arith.mulf %103, %2 : vector<16x128xf32>
    %105 = vector.broadcast %100 : f32 to vector<16x128xf32>
    %106 = arith.mulf %105, %4 : vector<16x128xf32>
    %107 = arith.addf %104, %106 : vector<16x128xf32>
    %108 = vector.broadcast %101 : f32 to vector<16x128xf32>
    %109 = arith.mulf %108, %6 : vector<16x128xf32>
    %110 = arith.addf %107, %109 : vector<16x128xf32>
    %111 = vector.broadcast %102 : f32 to vector<16x128xf32>
    %112 = arith.mulf %111, %8 : vector<16x128xf32>
    %113 = arith.addf %110, %112 : vector<16x128xf32>
    %cst_15 = arith.constant 0.000000e+00 : f32
    %114 = vector.broadcast %cst_15 : f32 to vector<16x128xf32>
    %115 = arith.cmpf ogt, %113, %114 : vector<16x128xf32>
    %116 = math.exp %113 : vector<16x128xf32>
    %cst_16 = arith.constant 1.000000e+00 : f32
    %117 = vector.broadcast %cst_16 : f32 to vector<16x128xf32>
    %118 = arith.subf %116, %117 : vector<16x128xf32>
    %cst_17 = arith.constant 1.67326319 : f32
    %119 = vector.broadcast %cst_17 : f32 to vector<16x128xf32>
    %120 = arith.mulf %119, %118 : vector<16x128xf32>
    %121 = arith.select %115, %113, %120 : vector<16x128xi1>, vector<16x128xf32>
    %c16 = arith.constant 16 : index
    %122 = memref.load %arg1[%c16] : memref<32xf32, #tpu.memory_space<smem>>
    %c17 = arith.constant 17 : index
    %123 = memref.load %arg1[%c17] : memref<32xf32, #tpu.memory_space<smem>>
    %c18 = arith.constant 18 : index
    %124 = memref.load %arg1[%c18] : memref<32xf32, #tpu.memory_space<smem>>
    %c19 = arith.constant 19 : index
    %125 = memref.load %arg1[%c19] : memref<32xf32, #tpu.memory_space<smem>>
    %126 = vector.broadcast %122 : f32 to vector<16x128xf32>
    %127 = arith.mulf %126, %2 : vector<16x128xf32>
    %128 = vector.broadcast %123 : f32 to vector<16x128xf32>
    %129 = arith.mulf %128, %4 : vector<16x128xf32>
    %130 = arith.addf %127, %129 : vector<16x128xf32>
    %131 = vector.broadcast %124 : f32 to vector<16x128xf32>
    %132 = arith.mulf %131, %6 : vector<16x128xf32>
    %133 = arith.addf %130, %132 : vector<16x128xf32>
    %134 = vector.broadcast %125 : f32 to vector<16x128xf32>
    %135 = arith.mulf %134, %8 : vector<16x128xf32>
    %136 = arith.addf %133, %135 : vector<16x128xf32>
    %cst_18 = arith.constant 0.000000e+00 : f32
    %137 = vector.broadcast %cst_18 : f32 to vector<16x128xf32>
    %138 = arith.cmpf ogt, %136, %137 : vector<16x128xf32>
    %139 = math.exp %136 : vector<16x128xf32>
    %cst_19 = arith.constant 1.000000e+00 : f32
    %140 = vector.broadcast %cst_19 : f32 to vector<16x128xf32>
    %141 = arith.subf %139, %140 : vector<16x128xf32>
    %cst_20 = arith.constant 1.67326319 : f32
    %142 = vector.broadcast %cst_20 : f32 to vector<16x128xf32>
    %143 = arith.mulf %142, %141 : vector<16x128xf32>
    %144 = arith.select %138, %136, %143 : vector<16x128xi1>, vector<16x128xf32>
    %c20 = arith.constant 20 : index
    %145 = memref.load %arg1[%c20] : memref<32xf32, #tpu.memory_space<smem>>
    %c21 = arith.constant 21 : index
    %146 = memref.load %arg1[%c21] : memref<32xf32, #tpu.memory_space<smem>>
    %c22 = arith.constant 22 : index
    %147 = memref.load %arg1[%c22] : memref<32xf32, #tpu.memory_space<smem>>
    %c23 = arith.constant 23 : index
    %148 = memref.load %arg1[%c23] : memref<32xf32, #tpu.memory_space<smem>>
    %149 = vector.broadcast %145 : f32 to vector<16x128xf32>
    %150 = arith.mulf %149, %2 : vector<16x128xf32>
    %151 = vector.broadcast %146 : f32 to vector<16x128xf32>
    %152 = arith.mulf %151, %4 : vector<16x128xf32>
    %153 = arith.addf %150, %152 : vector<16x128xf32>
    %154 = vector.broadcast %147 : f32 to vector<16x128xf32>
    %155 = arith.mulf %154, %6 : vector<16x128xf32>
    %156 = arith.addf %153, %155 : vector<16x128xf32>
    %157 = vector.broadcast %148 : f32 to vector<16x128xf32>
    %158 = arith.mulf %157, %8 : vector<16x128xf32>
    %159 = arith.addf %156, %158 : vector<16x128xf32>
    %cst_21 = arith.constant 0.000000e+00 : f32
    %160 = vector.broadcast %cst_21 : f32 to vector<16x128xf32>
    %161 = arith.cmpf ogt, %159, %160 : vector<16x128xf32>
    %162 = math.exp %159 : vector<16x128xf32>
    %cst_22 = arith.constant 1.000000e+00 : f32
    %163 = vector.broadcast %cst_22 : f32 to vector<16x128xf32>
    %164 = arith.subf %162, %163 : vector<16x128xf32>
    %cst_23 = arith.constant 1.67326319 : f32
    %165 = vector.broadcast %cst_23 : f32 to vector<16x128xf32>
    %166 = arith.mulf %165, %164 : vector<16x128xf32>
    %167 = arith.select %161, %159, %166 : vector<16x128xi1>, vector<16x128xf32>
    %c24 = arith.constant 24 : index
    %168 = memref.load %arg1[%c24] : memref<32xf32, #tpu.memory_space<smem>>
    %c25 = arith.constant 25 : index
    %169 = memref.load %arg1[%c25] : memref<32xf32, #tpu.memory_space<smem>>
    %c26 = arith.constant 26 : index
    %170 = memref.load %arg1[%c26] : memref<32xf32, #tpu.memory_space<smem>>
    %c27 = arith.constant 27 : index
    %171 = memref.load %arg1[%c27] : memref<32xf32, #tpu.memory_space<smem>>
    %172 = vector.broadcast %168 : f32 to vector<16x128xf32>
    %173 = arith.mulf %172, %2 : vector<16x128xf32>
    %174 = vector.broadcast %169 : f32 to vector<16x128xf32>
    %175 = arith.mulf %174, %4 : vector<16x128xf32>
    %176 = arith.addf %173, %175 : vector<16x128xf32>
    %177 = vector.broadcast %170 : f32 to vector<16x128xf32>
    %178 = arith.mulf %177, %6 : vector<16x128xf32>
    %179 = arith.addf %176, %178 : vector<16x128xf32>
    %180 = vector.broadcast %171 : f32 to vector<16x128xf32>
    %181 = arith.mulf %180, %8 : vector<16x128xf32>
    %182 = arith.addf %179, %181 : vector<16x128xf32>
    %cst_24 = arith.constant 0.000000e+00 : f32
    %183 = vector.broadcast %cst_24 : f32 to vector<16x128xf32>
    %184 = arith.cmpf ogt, %182, %183 : vector<16x128xf32>
    %185 = math.exp %182 : vector<16x128xf32>
    %cst_25 = arith.constant 1.000000e+00 : f32
    %186 = vector.broadcast %cst_25 : f32 to vector<16x128xf32>
    %187 = arith.subf %185, %186 : vector<16x128xf32>
    %cst_26 = arith.constant 1.67326319 : f32
    %188 = vector.broadcast %cst_26 : f32 to vector<16x128xf32>
    %189 = arith.mulf %188, %187 : vector<16x128xf32>
    %190 = arith.select %184, %182, %189 : vector<16x128xi1>, vector<16x128xf32>
    %c28 = arith.constant 28 : index
    %191 = memref.load %arg1[%c28] : memref<32xf32, #tpu.memory_space<smem>>
    %c29 = arith.constant 29 : index
    %192 = memref.load %arg1[%c29] : memref<32xf32, #tpu.memory_space<smem>>
    %c30 = arith.constant 30 : index
    %193 = memref.load %arg1[%c30] : memref<32xf32, #tpu.memory_space<smem>>
    %c31 = arith.constant 31 : index
    %194 = memref.load %arg1[%c31] : memref<32xf32, #tpu.memory_space<smem>>
    %195 = vector.broadcast %191 : f32 to vector<16x128xf32>
    %196 = arith.mulf %195, %2 : vector<16x128xf32>
    %197 = vector.broadcast %192 : f32 to vector<16x128xf32>
    %198 = arith.mulf %197, %4 : vector<16x128xf32>
    %199 = arith.addf %196, %198 : vector<16x128xf32>
    %200 = vector.broadcast %193 : f32 to vector<16x128xf32>
    %201 = arith.mulf %200, %6 : vector<16x128xf32>
    %202 = arith.addf %199, %201 : vector<16x128xf32>
    %203 = vector.broadcast %194 : f32 to vector<16x128xf32>
    %204 = arith.mulf %203, %8 : vector<16x128xf32>
    %205 = arith.addf %202, %204 : vector<16x128xf32>
    %cst_27 = arith.constant 0.000000e+00 : f32
    %206 = vector.broadcast %cst_27 : f32 to vector<16x128xf32>
    %207 = arith.cmpf ogt, %205, %206 : vector<16x128xf32>
    %208 = math.exp %205 : vector<16x128xf32>
    %cst_28 = arith.constant 1.000000e+00 : f32
    %209 = vector.broadcast %cst_28 : f32 to vector<16x128xf32>
    %210 = arith.subf %208, %209 : vector<16x128xf32>
    %cst_29 = arith.constant 1.67326319 : f32
    %211 = vector.broadcast %cst_29 : f32 to vector<16x128xf32>
    %212 = arith.mulf %211, %210 : vector<16x128xf32>
    %213 = arith.select %207, %205, %212 : vector<16x128xi1>, vector<16x128xf32>
    %cst_30 = arith.constant 0.000000e+00 : f32
    %214 = vector.broadcast %cst_30 : f32 to vector<1x128xf32>
    %215 = tpu.concatenate %214, %52, %214 in 0 : vector<1x128xf32>, vector<16x128xf32>, vector<1x128xf32> -> vector<18x128xf32>
    %216 = tpu.concatenate %214, %75, %214 in 0 : vector<1x128xf32>, vector<16x128xf32>, vector<1x128xf32> -> vector<18x128xf32>
    %217 = tpu.concatenate %214, %98, %214 in 0 : vector<1x128xf32>, vector<16x128xf32>, vector<1x128xf32> -> vector<18x128xf32>
    %218 = tpu.concatenate %214, %121, %214 in 0 : vector<1x128xf32>, vector<16x128xf32>, vector<1x128xf32> -> vector<18x128xf32>
    %219 = tpu.concatenate %214, %144, %214 in 0 : vector<1x128xf32>, vector<16x128xf32>, vector<1x128xf32> -> vector<18x128xf32>
    %220 = tpu.concatenate %214, %167, %214 in 0 : vector<1x128xf32>, vector<16x128xf32>, vector<1x128xf32> -> vector<18x128xf32>
    %221 = tpu.concatenate %214, %190, %214 in 0 : vector<1x128xf32>, vector<16x128xf32>, vector<1x128xf32> -> vector<18x128xf32>
    %222 = tpu.concatenate %214, %213, %214 in 0 : vector<1x128xf32>, vector<16x128xf32>, vector<1x128xf32> -> vector<18x128xf32>
    %223 = vector.extract_strided_slice %215 {offsets = [0, 0], sizes = [16, 128], strides = [1, 1]} : vector<18x128xf32> to vector<16x128xf32>
    %c1_i32_31 = arith.constant 1 : i32
    %224 = tpu.dynamic_rotate %223 by %c1_i32_31 dim 1 : vector<16x128xf32>, i32 -> vector<16x128xf32>
    %cst_32 = arith.constant 0.000000e+00 : f32
    %225 = vector.broadcast %cst_32 : f32 to vector<16x128xf32>
    %226 = arith.select %27, %224, %225 : vector<16x128xi1>, vector<16x128xf32>
    %c0_33 = arith.constant 0 : index
    %227 = memref.load %arg2[%c0_33] : memref<288xf32, #tpu.memory_space<smem>>
    %c72 = arith.constant 72 : index
    %228 = memref.load %arg2[%c72] : memref<288xf32, #tpu.memory_space<smem>>
    %c144 = arith.constant 144 : index
    %229 = memref.load %arg2[%c144] : memref<288xf32, #tpu.memory_space<smem>>
    %c216 = arith.constant 216 : index
    %230 = memref.load %arg2[%c216] : memref<288xf32, #tpu.memory_space<smem>>
    %231 = vector.broadcast %227 : f32 to vector<16x128xf32>
    %232 = arith.mulf %231, %226 : vector<16x128xf32>
    %233 = vector.broadcast %228 : f32 to vector<16x128xf32>
    %234 = arith.mulf %233, %226 : vector<16x128xf32>
    %235 = vector.broadcast %229 : f32 to vector<16x128xf32>
    %236 = arith.mulf %235, %226 : vector<16x128xf32>
    %237 = vector.broadcast %230 : f32 to vector<16x128xf32>
    %238 = arith.mulf %237, %226 : vector<16x128xf32>
    %239 = vector.extract_strided_slice %216 {offsets = [0, 0], sizes = [16, 128], strides = [1, 1]} : vector<18x128xf32> to vector<16x128xf32>
    %c1_i32_34 = arith.constant 1 : i32
    %240 = tpu.dynamic_rotate %239 by %c1_i32_34 dim 1 : vector<16x128xf32>, i32 -> vector<16x128xf32>
    %cst_35 = arith.constant 0.000000e+00 : f32
    %241 = vector.broadcast %cst_35 : f32 to vector<16x128xf32>
    %242 = arith.select %27, %240, %241 : vector<16x128xi1>, vector<16x128xf32>
    %c9_36 = arith.constant 9 : index
    %243 = memref.load %arg2[%c9_36] : memref<288xf32, #tpu.memory_space<smem>>
    %c81 = arith.constant 81 : index
    %244 = memref.load %arg2[%c81] : memref<288xf32, #tpu.memory_space<smem>>
    %c153 = arith.constant 153 : index
    %245 = memref.load %arg2[%c153] : memref<288xf32, #tpu.memory_space<smem>>
    %c225 = arith.constant 225 : index
    %246 = memref.load %arg2[%c225] : memref<288xf32, #tpu.memory_space<smem>>
    %247 = vector.broadcast %243 : f32 to vector<16x128xf32>
    %248 = arith.mulf %247, %242 : vector<16x128xf32>
    %249 = arith.addf %232, %248 : vector<16x128xf32>
    %250 = vector.broadcast %244 : f32 to vector<16x128xf32>
    %251 = arith.mulf %250, %242 : vector<16x128xf32>
    %252 = arith.addf %234, %251 : vector<16x128xf32>
    %253 = vector.broadcast %245 : f32 to vector<16x128xf32>
    %254 = arith.mulf %253, %242 : vector<16x128xf32>
    %255 = arith.addf %236, %254 : vector<16x128xf32>
    %256 = vector.broadcast %246 : f32 to vector<16x128xf32>
    %257 = arith.mulf %256, %242 : vector<16x128xf32>
    %258 = arith.addf %238, %257 : vector<16x128xf32>
    %259 = vector.extract_strided_slice %217 {offsets = [0, 0], sizes = [16, 128], strides = [1, 1]} : vector<18x128xf32> to vector<16x128xf32>
    %c1_i32_37 = arith.constant 1 : i32
    %260 = tpu.dynamic_rotate %259 by %c1_i32_37 dim 1 : vector<16x128xf32>, i32 -> vector<16x128xf32>
    %cst_38 = arith.constant 0.000000e+00 : f32
    %261 = vector.broadcast %cst_38 : f32 to vector<16x128xf32>
    %262 = arith.select %27, %260, %261 : vector<16x128xi1>, vector<16x128xf32>
    %c18_39 = arith.constant 18 : index
    %263 = memref.load %arg2[%c18_39] : memref<288xf32, #tpu.memory_space<smem>>
    %c90 = arith.constant 90 : index
    %264 = memref.load %arg2[%c90] : memref<288xf32, #tpu.memory_space<smem>>
    %c162 = arith.constant 162 : index
    %265 = memref.load %arg2[%c162] : memref<288xf32, #tpu.memory_space<smem>>
    %c234 = arith.constant 234 : index
    %266 = memref.load %arg2[%c234] : memref<288xf32, #tpu.memory_space<smem>>
    %267 = vector.broadcast %263 : f32 to vector<16x128xf32>
    %268 = arith.mulf %267, %262 : vector<16x128xf32>
    %269 = arith.addf %249, %268 : vector<16x128xf32>
    %270 = vector.broadcast %264 : f32 to vector<16x128xf32>
    %271 = arith.mulf %270, %262 : vector<16x128xf32>
    %272 = arith.addf %252, %271 : vector<16x128xf32>
    %273 = vector.broadcast %265 : f32 to vector<16x128xf32>
    %274 = arith.mulf %273, %262 : vector<16x128xf32>
    %275 = arith.addf %255, %274 : vector<16x128xf32>
    %276 = vector.broadcast %266 : f32 to vector<16x128xf32>
    %277 = arith.mulf %276, %262 : vector<16x128xf32>
    %278 = arith.addf %258, %277 : vector<16x128xf32>
    %279 = vector.extract_strided_slice %218 {offsets = [0, 0], sizes = [16, 128], strides = [1, 1]} : vector<18x128xf32> to vector<16x128xf32>
    %c1_i32_40 = arith.constant 1 : i32
    %280 = tpu.dynamic_rotate %279 by %c1_i32_40 dim 1 : vector<16x128xf32>, i32 -> vector<16x128xf32>
    %cst_41 = arith.constant 0.000000e+00 : f32
    %281 = vector.broadcast %cst_41 : f32 to vector<16x128xf32>
    %282 = arith.select %27, %280, %281 : vector<16x128xi1>, vector<16x128xf32>
    %c27_42 = arith.constant 27 : index
    %283 = memref.load %arg2[%c27_42] : memref<288xf32, #tpu.memory_space<smem>>
    %c99 = arith.constant 99 : index
    %284 = memref.load %arg2[%c99] : memref<288xf32, #tpu.memory_space<smem>>
    %c171 = arith.constant 171 : index
    %285 = memref.load %arg2[%c171] : memref<288xf32, #tpu.memory_space<smem>>
    %c243 = arith.constant 243 : index
    %286 = memref.load %arg2[%c243] : memref<288xf32, #tpu.memory_space<smem>>
    %287 = vector.broadcast %283 : f32 to vector<16x128xf32>
    %288 = arith.mulf %287, %282 : vector<16x128xf32>
    %289 = arith.addf %269, %288 : vector<16x128xf32>
    %290 = vector.broadcast %284 : f32 to vector<16x128xf32>
    %291 = arith.mulf %290, %282 : vector<16x128xf32>
    %292 = arith.addf %272, %291 : vector<16x128xf32>
    %293 = vector.broadcast %285 : f32 to vector<16x128xf32>
    %294 = arith.mulf %293, %282 : vector<16x128xf32>
    %295 = arith.addf %275, %294 : vector<16x128xf32>
    %296 = vector.broadcast %286 : f32 to vector<16x128xf32>
    %297 = arith.mulf %296, %282 : vector<16x128xf32>
    %298 = arith.addf %278, %297 : vector<16x128xf32>
    %299 = vector.extract_strided_slice %219 {offsets = [0, 0], sizes = [16, 128], strides = [1, 1]} : vector<18x128xf32> to vector<16x128xf32>
    %c1_i32_43 = arith.constant 1 : i32
    %300 = tpu.dynamic_rotate %299 by %c1_i32_43 dim 1 : vector<16x128xf32>, i32 -> vector<16x128xf32>
    %cst_44 = arith.constant 0.000000e+00 : f32
    %301 = vector.broadcast %cst_44 : f32 to vector<16x128xf32>
    %302 = arith.select %27, %300, %301 : vector<16x128xi1>, vector<16x128xf32>
    %c36 = arith.constant 36 : index
    %303 = memref.load %arg2[%c36] : memref<288xf32, #tpu.memory_space<smem>>
    %c108 = arith.constant 108 : index
    %304 = memref.load %arg2[%c108] : memref<288xf32, #tpu.memory_space<smem>>
    %c180 = arith.constant 180 : index
    %305 = memref.load %arg2[%c180] : memref<288xf32, #tpu.memory_space<smem>>
    %c252 = arith.constant 252 : index
    %306 = memref.load %arg2[%c252] : memref<288xf32, #tpu.memory_space<smem>>
    %307 = vector.broadcast %303 : f32 to vector<16x128xf32>
    %308 = arith.mulf %307, %302 : vector<16x128xf32>
    %309 = arith.addf %289, %308 : vector<16x128xf32>
    %310 = vector.broadcast %304 : f32 to vector<16x128xf32>
    %311 = arith.mulf %310, %302 : vector<16x128xf32>
    %312 = arith.addf %292, %311 : vector<16x128xf32>
    %313 = vector.broadcast %305 : f32 to vector<16x128xf32>
    %314 = arith.mulf %313, %302 : vector<16x128xf32>
    %315 = arith.addf %295, %314 : vector<16x128xf32>
    %316 = vector.broadcast %306 : f32 to vector<16x128xf32>
    %317 = arith.mulf %316, %302 : vector<16x128xf32>
    %318 = arith.addf %298, %317 : vector<16x128xf32>
    %319 = vector.extract_strided_slice %220 {offsets = [0, 0], sizes = [16, 128], strides = [1, 1]} : vector<18x128xf32> to vector<16x128xf32>
    %c1_i32_45 = arith.constant 1 : i32
    %320 = tpu.dynamic_rotate %319 by %c1_i32_45 dim 1 : vector<16x128xf32>, i32 -> vector<16x128xf32>
    %cst_46 = arith.constant 0.000000e+00 : f32
    %321 = vector.broadcast %cst_46 : f32 to vector<16x128xf32>
    %322 = arith.select %27, %320, %321 : vector<16x128xi1>, vector<16x128xf32>
    %c45 = arith.constant 45 : index
    %323 = memref.load %arg2[%c45] : memref<288xf32, #tpu.memory_space<smem>>
    %c117 = arith.constant 117 : index
    %324 = memref.load %arg2[%c117] : memref<288xf32, #tpu.memory_space<smem>>
    %c189 = arith.constant 189 : index
    %325 = memref.load %arg2[%c189] : memref<288xf32, #tpu.memory_space<smem>>
    %c261 = arith.constant 261 : index
    %326 = memref.load %arg2[%c261] : memref<288xf32, #tpu.memory_space<smem>>
    %327 = vector.broadcast %323 : f32 to vector<16x128xf32>
    %328 = arith.mulf %327, %322 : vector<16x128xf32>
    %329 = arith.addf %309, %328 : vector<16x128xf32>
    %330 = vector.broadcast %324 : f32 to vector<16x128xf32>
    %331 = arith.mulf %330, %322 : vector<16x128xf32>
    %332 = arith.addf %312, %331 : vector<16x128xf32>
    %333 = vector.broadcast %325 : f32 to vector<16x128xf32>
    %334 = arith.mulf %333, %322 : vector<16x128xf32>
    %335 = arith.addf %315, %334 : vector<16x128xf32>
    %336 = vector.broadcast %326 : f32 to vector<16x128xf32>
    %337 = arith.mulf %336, %322 : vector<16x128xf32>
    %338 = arith.addf %318, %337 : vector<16x128xf32>
    %339 = vector.extract_strided_slice %221 {offsets = [0, 0], sizes = [16, 128], strides = [1, 1]} : vector<18x128xf32> to vector<16x128xf32>
    %c1_i32_47 = arith.constant 1 : i32
    %340 = tpu.dynamic_rotate %339 by %c1_i32_47 dim 1 : vector<16x128xf32>, i32 -> vector<16x128xf32>
    %cst_48 = arith.constant 0.000000e+00 : f32
    %341 = vector.broadcast %cst_48 : f32 to vector<16x128xf32>
    %342 = arith.select %27, %340, %341 : vector<16x128xi1>, vector<16x128xf32>
    %c54 = arith.constant 54 : index
    %343 = memref.load %arg2[%c54] : memref<288xf32, #tpu.memory_space<smem>>
    %c126 = arith.constant 126 : index
    %344 = memref.load %arg2[%c126] : memref<288xf32, #tpu.memory_space<smem>>
    %c198 = arith.constant 198 : index
    %345 = memref.load %arg2[%c198] : memref<288xf32, #tpu.memory_space<smem>>
    %c270 = arith.constant 270 : index
    %346 = memref.load %arg2[%c270] : memref<288xf32, #tpu.memory_space<smem>>
    %347 = vector.broadcast %343 : f32 to vector<16x128xf32>
    %348 = arith.mulf %347, %342 : vector<16x128xf32>
    %349 = arith.addf %329, %348 : vector<16x128xf32>
    %350 = vector.broadcast %344 : f32 to vector<16x128xf32>
    %351 = arith.mulf %350, %342 : vector<16x128xf32>
    %352 = arith.addf %332, %351 : vector<16x128xf32>
    %353 = vector.broadcast %345 : f32 to vector<16x128xf32>
    %354 = arith.mulf %353, %342 : vector<16x128xf32>
    %355 = arith.addf %335, %354 : vector<16x128xf32>
    %356 = vector.broadcast %346 : f32 to vector<16x128xf32>
    %357 = arith.mulf %356, %342 : vector<16x128xf32>
    %358 = arith.addf %338, %357 : vector<16x128xf32>
    %359 = vector.extract_strided_slice %222 {offsets = [0, 0], sizes = [16, 128], strides = [1, 1]} : vector<18x128xf32> to vector<16x128xf32>
    %c1_i32_49 = arith.constant 1 : i32
    %360 = tpu.dynamic_rotate %359 by %c1_i32_49 dim 1 : vector<16x128xf32>, i32 -> vector<16x128xf32>
    %cst_50 = arith.constant 0.000000e+00 : f32
    %361 = vector.broadcast %cst_50 : f32 to vector<16x128xf32>
    %362 = arith.select %27, %360, %361 : vector<16x128xi1>, vector<16x128xf32>
    %c63 = arith.constant 63 : index
    %363 = memref.load %arg2[%c63] : memref<288xf32, #tpu.memory_space<smem>>
    %c135 = arith.constant 135 : index
    %364 = memref.load %arg2[%c135] : memref<288xf32, #tpu.memory_space<smem>>
    %c207 = arith.constant 207 : index
    %365 = memref.load %arg2[%c207] : memref<288xf32, #tpu.memory_space<smem>>
    %c279 = arith.constant 279 : index
    %366 = memref.load %arg2[%c279] : memref<288xf32, #tpu.memory_space<smem>>
    %367 = vector.broadcast %363 : f32 to vector<16x128xf32>
    %368 = arith.mulf %367, %362 : vector<16x128xf32>
    %369 = arith.addf %349, %368 : vector<16x128xf32>
    %370 = vector.broadcast %364 : f32 to vector<16x128xf32>
    %371 = arith.mulf %370, %362 : vector<16x128xf32>
    %372 = arith.addf %352, %371 : vector<16x128xf32>
    %373 = vector.broadcast %365 : f32 to vector<16x128xf32>
    %374 = arith.mulf %373, %362 : vector<16x128xf32>
    %375 = arith.addf %355, %374 : vector<16x128xf32>
    %376 = vector.broadcast %366 : f32 to vector<16x128xf32>
    %377 = arith.mulf %376, %362 : vector<16x128xf32>
    %378 = arith.addf %358, %377 : vector<16x128xf32>
    %379 = vector.extract_strided_slice %215 {offsets = [0, 0], sizes = [16, 128], strides = [1, 1]} : vector<18x128xf32> to vector<16x128xf32>
    %c1_51 = arith.constant 1 : index
    %380 = memref.load %arg2[%c1_51] : memref<288xf32, #tpu.memory_space<smem>>
    %c73 = arith.constant 73 : index
    %381 = memref.load %arg2[%c73] : memref<288xf32, #tpu.memory_space<smem>>
    %c145 = arith.constant 145 : index
    %382 = memref.load %arg2[%c145] : memref<288xf32, #tpu.memory_space<smem>>
    %c217 = arith.constant 217 : index
    %383 = memref.load %arg2[%c217] : memref<288xf32, #tpu.memory_space<smem>>
    %384 = vector.broadcast %380 : f32 to vector<16x128xf32>
    %385 = arith.mulf %384, %379 : vector<16x128xf32>
    %386 = arith.addf %369, %385 : vector<16x128xf32>
    %387 = vector.broadcast %381 : f32 to vector<16x128xf32>
    %388 = arith.mulf %387, %379 : vector<16x128xf32>
    %389 = arith.addf %372, %388 : vector<16x128xf32>
    %390 = vector.broadcast %382 : f32 to vector<16x128xf32>
    %391 = arith.mulf %390, %379 : vector<16x128xf32>
    %392 = arith.addf %375, %391 : vector<16x128xf32>
    %393 = vector.broadcast %383 : f32 to vector<16x128xf32>
    %394 = arith.mulf %393, %379 : vector<16x128xf32>
    %395 = arith.addf %378, %394 : vector<16x128xf32>
    %396 = vector.extract_strided_slice %216 {offsets = [0, 0], sizes = [16, 128], strides = [1, 1]} : vector<18x128xf32> to vector<16x128xf32>
    %c10_52 = arith.constant 10 : index
    %397 = memref.load %arg2[%c10_52] : memref<288xf32, #tpu.memory_space<smem>>
    %c82 = arith.constant 82 : index
    %398 = memref.load %arg2[%c82] : memref<288xf32, #tpu.memory_space<smem>>
    %c154 = arith.constant 154 : index
    %399 = memref.load %arg2[%c154] : memref<288xf32, #tpu.memory_space<smem>>
    %c226 = arith.constant 226 : index
    %400 = memref.load %arg2[%c226] : memref<288xf32, #tpu.memory_space<smem>>
    %401 = vector.broadcast %397 : f32 to vector<16x128xf32>
    %402 = arith.mulf %401, %396 : vector<16x128xf32>
    %403 = arith.addf %386, %402 : vector<16x128xf32>
    %404 = vector.broadcast %398 : f32 to vector<16x128xf32>
    %405 = arith.mulf %404, %396 : vector<16x128xf32>
    %406 = arith.addf %389, %405 : vector<16x128xf32>
    %407 = vector.broadcast %399 : f32 to vector<16x128xf32>
    %408 = arith.mulf %407, %396 : vector<16x128xf32>
    %409 = arith.addf %392, %408 : vector<16x128xf32>
    %410 = vector.broadcast %400 : f32 to vector<16x128xf32>
    %411 = arith.mulf %410, %396 : vector<16x128xf32>
    %412 = arith.addf %395, %411 : vector<16x128xf32>
    %413 = vector.extract_strided_slice %217 {offsets = [0, 0], sizes = [16, 128], strides = [1, 1]} : vector<18x128xf32> to vector<16x128xf32>
    %c19_53 = arith.constant 19 : index
    %414 = memref.load %arg2[%c19_53] : memref<288xf32, #tpu.memory_space<smem>>
    %c91 = arith.constant 91 : index
    %415 = memref.load %arg2[%c91] : memref<288xf32, #tpu.memory_space<smem>>
    %c163 = arith.constant 163 : index
    %416 = memref.load %arg2[%c163] : memref<288xf32, #tpu.memory_space<smem>>
    %c235 = arith.constant 235 : index
    %417 = memref.load %arg2[%c235] : memref<288xf32, #tpu.memory_space<smem>>
    %418 = vector.broadcast %414 : f32 to vector<16x128xf32>
    %419 = arith.mulf %418, %413 : vector<16x128xf32>
    %420 = arith.addf %403, %419 : vector<16x128xf32>
    %421 = vector.broadcast %415 : f32 to vector<16x128xf32>
    %422 = arith.mulf %421, %413 : vector<16x128xf32>
    %423 = arith.addf %406, %422 : vector<16x128xf32>
    %424 = vector.broadcast %416 : f32 to vector<16x128xf32>
    %425 = arith.mulf %424, %413 : vector<16x128xf32>
    %426 = arith.addf %409, %425 : vector<16x128xf32>
    %427 = vector.broadcast %417 : f32 to vector<16x128xf32>
    %428 = arith.mulf %427, %413 : vector<16x128xf32>
    %429 = arith.addf %412, %428 : vector<16x128xf32>
    %430 = vector.extract_strided_slice %218 {offsets = [0, 0], sizes = [16, 128], strides = [1, 1]} : vector<18x128xf32> to vector<16x128xf32>
    %c28_54 = arith.constant 28 : index
    %431 = memref.load %arg2[%c28_54] : memref<288xf32, #tpu.memory_space<smem>>
    %c100 = arith.constant 100 : index
    %432 = memref.load %arg2[%c100] : memref<288xf32, #tpu.memory_space<smem>>
    %c172 = arith.constant 172 : index
    %433 = memref.load %arg2[%c172] : memref<288xf32, #tpu.memory_space<smem>>
    %c244 = arith.constant 244 : index
    %434 = memref.load %arg2[%c244] : memref<288xf32, #tpu.memory_space<smem>>
    %435 = vector.broadcast %431 : f32 to vector<16x128xf32>
    %436 = arith.mulf %435, %430 : vector<16x128xf32>
    %437 = arith.addf %420, %436 : vector<16x128xf32>
    %438 = vector.broadcast %432 : f32 to vector<16x128xf32>
    %439 = arith.mulf %438, %430 : vector<16x128xf32>
    %440 = arith.addf %423, %439 : vector<16x128xf32>
    %441 = vector.broadcast %433 : f32 to vector<16x128xf32>
    %442 = arith.mulf %441, %430 : vector<16x128xf32>
    %443 = arith.addf %426, %442 : vector<16x128xf32>
    %444 = vector.broadcast %434 : f32 to vector<16x128xf32>
    %445 = arith.mulf %444, %430 : vector<16x128xf32>
    %446 = arith.addf %429, %445 : vector<16x128xf32>
    %447 = vector.extract_strided_slice %219 {offsets = [0, 0], sizes = [16, 128], strides = [1, 1]} : vector<18x128xf32> to vector<16x128xf32>
    %c37 = arith.constant 37 : index
    %448 = memref.load %arg2[%c37] : memref<288xf32, #tpu.memory_space<smem>>
    %c109 = arith.constant 109 : index
    %449 = memref.load %arg2[%c109] : memref<288xf32, #tpu.memory_space<smem>>
    %c181 = arith.constant 181 : index
    %450 = memref.load %arg2[%c181] : memref<288xf32, #tpu.memory_space<smem>>
    %c253 = arith.constant 253 : index
    %451 = memref.load %arg2[%c253] : memref<288xf32, #tpu.memory_space<smem>>
    %452 = vector.broadcast %448 : f32 to vector<16x128xf32>
    %453 = arith.mulf %452, %447 : vector<16x128xf32>
    %454 = arith.addf %437, %453 : vector<16x128xf32>
    %455 = vector.broadcast %449 : f32 to vector<16x128xf32>
    %456 = arith.mulf %455, %447 : vector<16x128xf32>
    %457 = arith.addf %440, %456 : vector<16x128xf32>
    %458 = vector.broadcast %450 : f32 to vector<16x128xf32>
    %459 = arith.mulf %458, %447 : vector<16x128xf32>
    %460 = arith.addf %443, %459 : vector<16x128xf32>
    %461 = vector.broadcast %451 : f32 to vector<16x128xf32>
    %462 = arith.mulf %461, %447 : vector<16x128xf32>
    %463 = arith.addf %446, %462 : vector<16x128xf32>
    %464 = vector.extract_strided_slice %220 {offsets = [0, 0], sizes = [16, 128], strides = [1, 1]} : vector<18x128xf32> to vector<16x128xf32>
    %c46 = arith.constant 46 : index
    %465 = memref.load %arg2[%c46] : memref<288xf32, #tpu.memory_space<smem>>
    %c118 = arith.constant 118 : index
    %466 = memref.load %arg2[%c118] : memref<288xf32, #tpu.memory_space<smem>>
    %c190 = arith.constant 190 : index
    %467 = memref.load %arg2[%c190] : memref<288xf32, #tpu.memory_space<smem>>
    %c262 = arith.constant 262 : index
    %468 = memref.load %arg2[%c262] : memref<288xf32, #tpu.memory_space<smem>>
    %469 = vector.broadcast %465 : f32 to vector<16x128xf32>
    %470 = arith.mulf %469, %464 : vector<16x128xf32>
    %471 = arith.addf %454, %470 : vector<16x128xf32>
    %472 = vector.broadcast %466 : f32 to vector<16x128xf32>
    %473 = arith.mulf %472, %464 : vector<16x128xf32>
    %474 = arith.addf %457, %473 : vector<16x128xf32>
    %475 = vector.broadcast %467 : f32 to vector<16x128xf32>
    %476 = arith.mulf %475, %464 : vector<16x128xf32>
    %477 = arith.addf %460, %476 : vector<16x128xf32>
    %478 = vector.broadcast %468 : f32 to vector<16x128xf32>
    %479 = arith.mulf %478, %464 : vector<16x128xf32>
    %480 = arith.addf %463, %479 : vector<16x128xf32>
    %481 = vector.extract_strided_slice %221 {offsets = [0, 0], sizes = [16, 128], strides = [1, 1]} : vector<18x128xf32> to vector<16x128xf32>
    %c55 = arith.constant 55 : index
    %482 = memref.load %arg2[%c55] : memref<288xf32, #tpu.memory_space<smem>>
    %c127 = arith.constant 127 : index
    %483 = memref.load %arg2[%c127] : memref<288xf32, #tpu.memory_space<smem>>
    %c199 = arith.constant 199 : index
    %484 = memref.load %arg2[%c199] : memref<288xf32, #tpu.memory_space<smem>>
    %c271 = arith.constant 271 : index
    %485 = memref.load %arg2[%c271] : memref<288xf32, #tpu.memory_space<smem>>
    %486 = vector.broadcast %482 : f32 to vector<16x128xf32>
    %487 = arith.mulf %486, %481 : vector<16x128xf32>
    %488 = arith.addf %471, %487 : vector<16x128xf32>
    %489 = vector.broadcast %483 : f32 to vector<16x128xf32>
    %490 = arith.mulf %489, %481 : vector<16x128xf32>
    %491 = arith.addf %474, %490 : vector<16x128xf32>
    %492 = vector.broadcast %484 : f32 to vector<16x128xf32>
    %493 = arith.mulf %492, %481 : vector<16x128xf32>
    %494 = arith.addf %477, %493 : vector<16x128xf32>
    %495 = vector.broadcast %485 : f32 to vector<16x128xf32>
    %496 = arith.mulf %495, %481 : vector<16x128xf32>
    %497 = arith.addf %480, %496 : vector<16x128xf32>
    %498 = vector.extract_strided_slice %222 {offsets = [0, 0], sizes = [16, 128], strides = [1, 1]} : vector<18x128xf32> to vector<16x128xf32>
    %c64 = arith.constant 64 : index
    %499 = memref.load %arg2[%c64] : memref<288xf32, #tpu.memory_space<smem>>
    %c136 = arith.constant 136 : index
    %500 = memref.load %arg2[%c136] : memref<288xf32, #tpu.memory_space<smem>>
    %c208 = arith.constant 208 : index
    %501 = memref.load %arg2[%c208] : memref<288xf32, #tpu.memory_space<smem>>
    %c280 = arith.constant 280 : index
    %502 = memref.load %arg2[%c280] : memref<288xf32, #tpu.memory_space<smem>>
    %503 = vector.broadcast %499 : f32 to vector<16x128xf32>
    %504 = arith.mulf %503, %498 : vector<16x128xf32>
    %505 = arith.addf %488, %504 : vector<16x128xf32>
    %506 = vector.broadcast %500 : f32 to vector<16x128xf32>
    %507 = arith.mulf %506, %498 : vector<16x128xf32>
    %508 = arith.addf %491, %507 : vector<16x128xf32>
    %509 = vector.broadcast %501 : f32 to vector<16x128xf32>
    %510 = arith.mulf %509, %498 : vector<16x128xf32>
    %511 = arith.addf %494, %510 : vector<16x128xf32>
    %512 = vector.broadcast %502 : f32 to vector<16x128xf32>
    %513 = arith.mulf %512, %498 : vector<16x128xf32>
    %514 = arith.addf %497, %513 : vector<16x128xf32>
    %515 = vector.extract_strided_slice %215 {offsets = [0, 0], sizes = [16, 128], strides = [1, 1]} : vector<18x128xf32> to vector<16x128xf32>
    %c127_i32 = arith.constant 127 : i32
    %516 = tpu.dynamic_rotate %515 by %c127_i32 dim 1 : vector<16x128xf32>, i32 -> vector<16x128xf32>
    %cst_55 = arith.constant 0.000000e+00 : f32
    %517 = vector.broadcast %cst_55 : f32 to vector<16x128xf32>
    %518 = arith.select %29, %516, %517 : vector<16x128xi1>, vector<16x128xf32>
    %c2_56 = arith.constant 2 : index
    %519 = memref.load %arg2[%c2_56] : memref<288xf32, #tpu.memory_space<smem>>
    %c74 = arith.constant 74 : index
    %520 = memref.load %arg2[%c74] : memref<288xf32, #tpu.memory_space<smem>>
    %c146 = arith.constant 146 : index
    %521 = memref.load %arg2[%c146] : memref<288xf32, #tpu.memory_space<smem>>
    %c218 = arith.constant 218 : index
    %522 = memref.load %arg2[%c218] : memref<288xf32, #tpu.memory_space<smem>>
    %523 = vector.broadcast %519 : f32 to vector<16x128xf32>
    %524 = arith.mulf %523, %518 : vector<16x128xf32>
    %525 = arith.addf %505, %524 : vector<16x128xf32>
    %526 = vector.broadcast %520 : f32 to vector<16x128xf32>
    %527 = arith.mulf %526, %518 : vector<16x128xf32>
    %528 = arith.addf %508, %527 : vector<16x128xf32>
    %529 = vector.broadcast %521 : f32 to vector<16x128xf32>
    %530 = arith.mulf %529, %518 : vector<16x128xf32>
    %531 = arith.addf %511, %530 : vector<16x128xf32>
    %532 = vector.broadcast %522 : f32 to vector<16x128xf32>
    %533 = arith.mulf %532, %518 : vector<16x128xf32>
    %534 = arith.addf %514, %533 : vector<16x128xf32>
    %535 = vector.extract_strided_slice %216 {offsets = [0, 0], sizes = [16, 128], strides = [1, 1]} : vector<18x128xf32> to vector<16x128xf32>
    %c127_i32_57 = arith.constant 127 : i32
    %536 = tpu.dynamic_rotate %535 by %c127_i32_57 dim 1 : vector<16x128xf32>, i32 -> vector<16x128xf32>
    %cst_58 = arith.constant 0.000000e+00 : f32
    %537 = vector.broadcast %cst_58 : f32 to vector<16x128xf32>
    %538 = arith.select %29, %536, %537 : vector<16x128xi1>, vector<16x128xf32>
    %c11_59 = arith.constant 11 : index
    %539 = memref.load %arg2[%c11_59] : memref<288xf32, #tpu.memory_space<smem>>
    %c83 = arith.constant 83 : index
    %540 = memref.load %arg2[%c83] : memref<288xf32, #tpu.memory_space<smem>>
    %c155 = arith.constant 155 : index
    %541 = memref.load %arg2[%c155] : memref<288xf32, #tpu.memory_space<smem>>
    %c227 = arith.constant 227 : index
    %542 = memref.load %arg2[%c227] : memref<288xf32, #tpu.memory_space<smem>>
    %543 = vector.broadcast %539 : f32 to vector<16x128xf32>
    %544 = arith.mulf %543, %538 : vector<16x128xf32>
    %545 = arith.addf %525, %544 : vector<16x128xf32>
    %546 = vector.broadcast %540 : f32 to vector<16x128xf32>
    %547 = arith.mulf %546, %538 : vector<16x128xf32>
    %548 = arith.addf %528, %547 : vector<16x128xf32>
    %549 = vector.broadcast %541 : f32 to vector<16x128xf32>
    %550 = arith.mulf %549, %538 : vector<16x128xf32>
    %551 = arith.addf %531, %550 : vector<16x128xf32>
    %552 = vector.broadcast %542 : f32 to vector<16x128xf32>
    %553 = arith.mulf %552, %538 : vector<16x128xf32>
    %554 = arith.addf %534, %553 : vector<16x128xf32>
    %555 = vector.extract_strided_slice %217 {offsets = [0, 0], sizes = [16, 128], strides = [1, 1]} : vector<18x128xf32> to vector<16x128xf32>
    %c127_i32_60 = arith.constant 127 : i32
    %556 = tpu.dynamic_rotate %555 by %c127_i32_60 dim 1 : vector<16x128xf32>, i32 -> vector<16x128xf32>
    %cst_61 = arith.constant 0.000000e+00 : f32
    %557 = vector.broadcast %cst_61 : f32 to vector<16x128xf32>
    %558 = arith.select %29, %556, %557 : vector<16x128xi1>, vector<16x128xf32>
    %c20_62 = arith.constant 20 : index
    %559 = memref.load %arg2[%c20_62] : memref<288xf32, #tpu.memory_space<smem>>
    %c92 = arith.constant 92 : index
    %560 = memref.load %arg2[%c92] : memref<288xf32, #tpu.memory_space<smem>>
    %c164 = arith.constant 164 : index
    %561 = memref.load %arg2[%c164] : memref<288xf32, #tpu.memory_space<smem>>
    %c236 = arith.constant 236 : index
    %562 = memref.load %arg2[%c236] : memref<288xf32, #tpu.memory_space<smem>>
    %563 = vector.broadcast %559 : f32 to vector<16x128xf32>
    %564 = arith.mulf %563, %558 : vector<16x128xf32>
    %565 = arith.addf %545, %564 : vector<16x128xf32>
    %566 = vector.broadcast %560 : f32 to vector<16x128xf32>
    %567 = arith.mulf %566, %558 : vector<16x128xf32>
    %568 = arith.addf %548, %567 : vector<16x128xf32>
    %569 = vector.broadcast %561 : f32 to vector<16x128xf32>
    %570 = arith.mulf %569, %558 : vector<16x128xf32>
    %571 = arith.addf %551, %570 : vector<16x128xf32>
    %572 = vector.broadcast %562 : f32 to vector<16x128xf32>
    %573 = arith.mulf %572, %558 : vector<16x128xf32>
    %574 = arith.addf %554, %573 : vector<16x128xf32>
    %575 = vector.extract_strided_slice %218 {offsets = [0, 0], sizes = [16, 128], strides = [1, 1]} : vector<18x128xf32> to vector<16x128xf32>
    %c127_i32_63 = arith.constant 127 : i32
    %576 = tpu.dynamic_rotate %575 by %c127_i32_63 dim 1 : vector<16x128xf32>, i32 -> vector<16x128xf32>
    %cst_64 = arith.constant 0.000000e+00 : f32
    %577 = vector.broadcast %cst_64 : f32 to vector<16x128xf32>
    %578 = arith.select %29, %576, %577 : vector<16x128xi1>, vector<16x128xf32>
    %c29_65 = arith.constant 29 : index
    %579 = memref.load %arg2[%c29_65] : memref<288xf32, #tpu.memory_space<smem>>
    %c101 = arith.constant 101 : index
    %580 = memref.load %arg2[%c101] : memref<288xf32, #tpu.memory_space<smem>>
    %c173 = arith.constant 173 : index
    %581 = memref.load %arg2[%c173] : memref<288xf32, #tpu.memory_space<smem>>
    %c245 = arith.constant 245 : index
    %582 = memref.load %arg2[%c245] : memref<288xf32, #tpu.memory_space<smem>>
    %583 = vector.broadcast %579 : f32 to vector<16x128xf32>
    %584 = arith.mulf %583, %578 : vector<16x128xf32>
    %585 = arith.addf %565, %584 : vector<16x128xf32>
    %586 = vector.broadcast %580 : f32 to vector<16x128xf32>
    %587 = arith.mulf %586, %578 : vector<16x128xf32>
    %588 = arith.addf %568, %587 : vector<16x128xf32>
    %589 = vector.broadcast %581 : f32 to vector<16x128xf32>
    %590 = arith.mulf %589, %578 : vector<16x128xf32>
    %591 = arith.addf %571, %590 : vector<16x128xf32>
    %592 = vector.broadcast %582 : f32 to vector<16x128xf32>
    %593 = arith.mulf %592, %578 : vector<16x128xf32>
    %594 = arith.addf %574, %593 : vector<16x128xf32>
    %595 = vector.extract_strided_slice %219 {offsets = [0, 0], sizes = [16, 128], strides = [1, 1]} : vector<18x128xf32> to vector<16x128xf32>
    %c127_i32_66 = arith.constant 127 : i32
    %596 = tpu.dynamic_rotate %595 by %c127_i32_66 dim 1 : vector<16x128xf32>, i32 -> vector<16x128xf32>
    %cst_67 = arith.constant 0.000000e+00 : f32
    %597 = vector.broadcast %cst_67 : f32 to vector<16x128xf32>
    %598 = arith.select %29, %596, %597 : vector<16x128xi1>, vector<16x128xf32>
    %c38 = arith.constant 38 : index
    %599 = memref.load %arg2[%c38] : memref<288xf32, #tpu.memory_space<smem>>
    %c110 = arith.constant 110 : index
    %600 = memref.load %arg2[%c110] : memref<288xf32, #tpu.memory_space<smem>>
    %c182 = arith.constant 182 : index
    %601 = memref.load %arg2[%c182] : memref<288xf32, #tpu.memory_space<smem>>
    %c254 = arith.constant 254 : index
    %602 = memref.load %arg2[%c254] : memref<288xf32, #tpu.memory_space<smem>>
    %603 = vector.broadcast %599 : f32 to vector<16x128xf32>
    %604 = arith.mulf %603, %598 : vector<16x128xf32>
    %605 = arith.addf %585, %604 : vector<16x128xf32>
    %606 = vector.broadcast %600 : f32 to vector<16x128xf32>
    %607 = arith.mulf %606, %598 : vector<16x128xf32>
    %608 = arith.addf %588, %607 : vector<16x128xf32>
    %609 = vector.broadcast %601 : f32 to vector<16x128xf32>
    %610 = arith.mulf %609, %598 : vector<16x128xf32>
    %611 = arith.addf %591, %610 : vector<16x128xf32>
    %612 = vector.broadcast %602 : f32 to vector<16x128xf32>
    %613 = arith.mulf %612, %598 : vector<16x128xf32>
    %614 = arith.addf %594, %613 : vector<16x128xf32>
    %615 = vector.extract_strided_slice %220 {offsets = [0, 0], sizes = [16, 128], strides = [1, 1]} : vector<18x128xf32> to vector<16x128xf32>
    %c127_i32_68 = arith.constant 127 : i32
    %616 = tpu.dynamic_rotate %615 by %c127_i32_68 dim 1 : vector<16x128xf32>, i32 -> vector<16x128xf32>
    %cst_69 = arith.constant 0.000000e+00 : f32
    %617 = vector.broadcast %cst_69 : f32 to vector<16x128xf32>
    %618 = arith.select %29, %616, %617 : vector<16x128xi1>, vector<16x128xf32>
    %c47 = arith.constant 47 : index
    %619 = memref.load %arg2[%c47] : memref<288xf32, #tpu.memory_space<smem>>
    %c119 = arith.constant 119 : index
    %620 = memref.load %arg2[%c119] : memref<288xf32, #tpu.memory_space<smem>>
    %c191 = arith.constant 191 : index
    %621 = memref.load %arg2[%c191] : memref<288xf32, #tpu.memory_space<smem>>
    %c263 = arith.constant 263 : index
    %622 = memref.load %arg2[%c263] : memref<288xf32, #tpu.memory_space<smem>>
    %623 = vector.broadcast %619 : f32 to vector<16x128xf32>
    %624 = arith.mulf %623, %618 : vector<16x128xf32>
    %625 = arith.addf %605, %624 : vector<16x128xf32>
    %626 = vector.broadcast %620 : f32 to vector<16x128xf32>
    %627 = arith.mulf %626, %618 : vector<16x128xf32>
    %628 = arith.addf %608, %627 : vector<16x128xf32>
    %629 = vector.broadcast %621 : f32 to vector<16x128xf32>
    %630 = arith.mulf %629, %618 : vector<16x128xf32>
    %631 = arith.addf %611, %630 : vector<16x128xf32>
    %632 = vector.broadcast %622 : f32 to vector<16x128xf32>
    %633 = arith.mulf %632, %618 : vector<16x128xf32>
    %634 = arith.addf %614, %633 : vector<16x128xf32>
    %635 = vector.extract_strided_slice %221 {offsets = [0, 0], sizes = [16, 128], strides = [1, 1]} : vector<18x128xf32> to vector<16x128xf32>
    %c127_i32_70 = arith.constant 127 : i32
    %636 = tpu.dynamic_rotate %635 by %c127_i32_70 dim 1 : vector<16x128xf32>, i32 -> vector<16x128xf32>
    %cst_71 = arith.constant 0.000000e+00 : f32
    %637 = vector.broadcast %cst_71 : f32 to vector<16x128xf32>
    %638 = arith.select %29, %636, %637 : vector<16x128xi1>, vector<16x128xf32>
    %c56 = arith.constant 56 : index
    %639 = memref.load %arg2[%c56] : memref<288xf32, #tpu.memory_space<smem>>
    %c128 = arith.constant 128 : index
    %640 = memref.load %arg2[%c128] : memref<288xf32, #tpu.memory_space<smem>>
    %c200 = arith.constant 200 : index
    %641 = memref.load %arg2[%c200] : memref<288xf32, #tpu.memory_space<smem>>
    %c272 = arith.constant 272 : index
    %642 = memref.load %arg2[%c272] : memref<288xf32, #tpu.memory_space<smem>>
    %643 = vector.broadcast %639 : f32 to vector<16x128xf32>
    %644 = arith.mulf %643, %638 : vector<16x128xf32>
    %645 = arith.addf %625, %644 : vector<16x128xf32>
    %646 = vector.broadcast %640 : f32 to vector<16x128xf32>
    %647 = arith.mulf %646, %638 : vector<16x128xf32>
    %648 = arith.addf %628, %647 : vector<16x128xf32>
    %649 = vector.broadcast %641 : f32 to vector<16x128xf32>
    %650 = arith.mulf %649, %638 : vector<16x128xf32>
    %651 = arith.addf %631, %650 : vector<16x128xf32>
    %652 = vector.broadcast %642 : f32 to vector<16x128xf32>
    %653 = arith.mulf %652, %638 : vector<16x128xf32>
    %654 = arith.addf %634, %653 : vector<16x128xf32>
    %655 = vector.extract_strided_slice %222 {offsets = [0, 0], sizes = [16, 128], strides = [1, 1]} : vector<18x128xf32> to vector<16x128xf32>
    %c127_i32_72 = arith.constant 127 : i32
    %656 = tpu.dynamic_rotate %655 by %c127_i32_72 dim 1 : vector<16x128xf32>, i32 -> vector<16x128xf32>
    %cst_73 = arith.constant 0.000000e+00 : f32
    %657 = vector.broadcast %cst_73 : f32 to vector<16x128xf32>
    %658 = arith.select %29, %656, %657 : vector<16x128xi1>, vector<16x128xf32>
    %c65 = arith.constant 65 : index
    %659 = memref.load %arg2[%c65] : memref<288xf32, #tpu.memory_space<smem>>
    %c137 = arith.constant 137 : index
    %660 = memref.load %arg2[%c137] : memref<288xf32, #tpu.memory_space<smem>>
    %c209 = arith.constant 209 : index
    %661 = memref.load %arg2[%c209] : memref<288xf32, #tpu.memory_space<smem>>
    %c281 = arith.constant 281 : index
    %662 = memref.load %arg2[%c281] : memref<288xf32, #tpu.memory_space<smem>>
    %663 = vector.broadcast %659 : f32 to vector<16x128xf32>
    %664 = arith.mulf %663, %658 : vector<16x128xf32>
    %665 = arith.addf %645, %664 : vector<16x128xf32>
    %666 = vector.broadcast %660 : f32 to vector<16x128xf32>
    %667 = arith.mulf %666, %658 : vector<16x128xf32>
    %668 = arith.addf %648, %667 : vector<16x128xf32>
    %669 = vector.broadcast %661 : f32 to vector<16x128xf32>
    %670 = arith.mulf %669, %658 : vector<16x128xf32>
    %671 = arith.addf %651, %670 : vector<16x128xf32>
    %672 = vector.broadcast %662 : f32 to vector<16x128xf32>
    %673 = arith.mulf %672, %658 : vector<16x128xf32>
    %674 = arith.addf %654, %673 : vector<16x128xf32>
    %675 = vector.extract_strided_slice %215 {offsets = [1, 0], sizes = [16, 128], strides = [1, 1]} : vector<18x128xf32> to vector<16x128xf32>
    %c1_i32_74 = arith.constant 1 : i32
    %676 = tpu.dynamic_rotate %675 by %c1_i32_74 dim 1 : vector<16x128xf32>, i32 -> vector<16x128xf32>
    %cst_75 = arith.constant 0.000000e+00 : f32
    %677 = vector.broadcast %cst_75 : f32 to vector<16x128xf32>
    %678 = arith.select %27, %676, %677 : vector<16x128xi1>, vector<16x128xf32>
    %c3_76 = arith.constant 3 : index
    %679 = memref.load %arg2[%c3_76] : memref<288xf32, #tpu.memory_space<smem>>
    %c75 = arith.constant 75 : index
    %680 = memref.load %arg2[%c75] : memref<288xf32, #tpu.memory_space<smem>>
    %c147 = arith.constant 147 : index
    %681 = memref.load %arg2[%c147] : memref<288xf32, #tpu.memory_space<smem>>
    %c219 = arith.constant 219 : index
    %682 = memref.load %arg2[%c219] : memref<288xf32, #tpu.memory_space<smem>>
    %683 = vector.broadcast %679 : f32 to vector<16x128xf32>
    %684 = arith.mulf %683, %678 : vector<16x128xf32>
    %685 = arith.addf %665, %684 : vector<16x128xf32>
    %686 = vector.broadcast %680 : f32 to vector<16x128xf32>
    %687 = arith.mulf %686, %678 : vector<16x128xf32>
    %688 = arith.addf %668, %687 : vector<16x128xf32>
    %689 = vector.broadcast %681 : f32 to vector<16x128xf32>
    %690 = arith.mulf %689, %678 : vector<16x128xf32>
    %691 = arith.addf %671, %690 : vector<16x128xf32>
    %692 = vector.broadcast %682 : f32 to vector<16x128xf32>
    %693 = arith.mulf %692, %678 : vector<16x128xf32>
    %694 = arith.addf %674, %693 : vector<16x128xf32>
    %695 = vector.extract_strided_slice %216 {offsets = [1, 0], sizes = [16, 128], strides = [1, 1]} : vector<18x128xf32> to vector<16x128xf32>
    %c1_i32_77 = arith.constant 1 : i32
    %696 = tpu.dynamic_rotate %695 by %c1_i32_77 dim 1 : vector<16x128xf32>, i32 -> vector<16x128xf32>
    %cst_78 = arith.constant 0.000000e+00 : f32
    %697 = vector.broadcast %cst_78 : f32 to vector<16x128xf32>
    %698 = arith.select %27, %696, %697 : vector<16x128xi1>, vector<16x128xf32>
    %c12_79 = arith.constant 12 : index
    %699 = memref.load %arg2[%c12_79] : memref<288xf32, #tpu.memory_space<smem>>
    %c84 = arith.constant 84 : index
    %700 = memref.load %arg2[%c84] : memref<288xf32, #tpu.memory_space<smem>>
    %c156 = arith.constant 156 : index
    %701 = memref.load %arg2[%c156] : memref<288xf32, #tpu.memory_space<smem>>
    %c228 = arith.constant 228 : index
    %702 = memref.load %arg2[%c228] : memref<288xf32, #tpu.memory_space<smem>>
    %703 = vector.broadcast %699 : f32 to vector<16x128xf32>
    %704 = arith.mulf %703, %698 : vector<16x128xf32>
    %705 = arith.addf %685, %704 : vector<16x128xf32>
    %706 = vector.broadcast %700 : f32 to vector<16x128xf32>
    %707 = arith.mulf %706, %698 : vector<16x128xf32>
    %708 = arith.addf %688, %707 : vector<16x128xf32>
    %709 = vector.broadcast %701 : f32 to vector<16x128xf32>
    %710 = arith.mulf %709, %698 : vector<16x128xf32>
    %711 = arith.addf %691, %710 : vector<16x128xf32>
    %712 = vector.broadcast %702 : f32 to vector<16x128xf32>
    %713 = arith.mulf %712, %698 : vector<16x128xf32>
    %714 = arith.addf %694, %713 : vector<16x128xf32>
    %715 = vector.extract_strided_slice %217 {offsets = [1, 0], sizes = [16, 128], strides = [1, 1]} : vector<18x128xf32> to vector<16x128xf32>
    %c1_i32_80 = arith.constant 1 : i32
    %716 = tpu.dynamic_rotate %715 by %c1_i32_80 dim 1 : vector<16x128xf32>, i32 -> vector<16x128xf32>
    %cst_81 = arith.constant 0.000000e+00 : f32
    %717 = vector.broadcast %cst_81 : f32 to vector<16x128xf32>
    %718 = arith.select %27, %716, %717 : vector<16x128xi1>, vector<16x128xf32>
    %c21_82 = arith.constant 21 : index
    %719 = memref.load %arg2[%c21_82] : memref<288xf32, #tpu.memory_space<smem>>
    %c93 = arith.constant 93 : index
    %720 = memref.load %arg2[%c93] : memref<288xf32, #tpu.memory_space<smem>>
    %c165 = arith.constant 165 : index
    %721 = memref.load %arg2[%c165] : memref<288xf32, #tpu.memory_space<smem>>
    %c237 = arith.constant 237 : index
    %722 = memref.load %arg2[%c237] : memref<288xf32, #tpu.memory_space<smem>>
    %723 = vector.broadcast %719 : f32 to vector<16x128xf32>
    %724 = arith.mulf %723, %718 : vector<16x128xf32>
    %725 = arith.addf %705, %724 : vector<16x128xf32>
    %726 = vector.broadcast %720 : f32 to vector<16x128xf32>
    %727 = arith.mulf %726, %718 : vector<16x128xf32>
    %728 = arith.addf %708, %727 : vector<16x128xf32>
    %729 = vector.broadcast %721 : f32 to vector<16x128xf32>
    %730 = arith.mulf %729, %718 : vector<16x128xf32>
    %731 = arith.addf %711, %730 : vector<16x128xf32>
    %732 = vector.broadcast %722 : f32 to vector<16x128xf32>
    %733 = arith.mulf %732, %718 : vector<16x128xf32>
    %734 = arith.addf %714, %733 : vector<16x128xf32>
    %735 = vector.extract_strided_slice %218 {offsets = [1, 0], sizes = [16, 128], strides = [1, 1]} : vector<18x128xf32> to vector<16x128xf32>
    %c1_i32_83 = arith.constant 1 : i32
    %736 = tpu.dynamic_rotate %735 by %c1_i32_83 dim 1 : vector<16x128xf32>, i32 -> vector<16x128xf32>
    %cst_84 = arith.constant 0.000000e+00 : f32
    %737 = vector.broadcast %cst_84 : f32 to vector<16x128xf32>
    %738 = arith.select %27, %736, %737 : vector<16x128xi1>, vector<16x128xf32>
    %c30_85 = arith.constant 30 : index
    %739 = memref.load %arg2[%c30_85] : memref<288xf32, #tpu.memory_space<smem>>
    %c102 = arith.constant 102 : index
    %740 = memref.load %arg2[%c102] : memref<288xf32, #tpu.memory_space<smem>>
    %c174 = arith.constant 174 : index
    %741 = memref.load %arg2[%c174] : memref<288xf32, #tpu.memory_space<smem>>
    %c246 = arith.constant 246 : index
    %742 = memref.load %arg2[%c246] : memref<288xf32, #tpu.memory_space<smem>>
    %743 = vector.broadcast %739 : f32 to vector<16x128xf32>
    %744 = arith.mulf %743, %738 : vector<16x128xf32>
    %745 = arith.addf %725, %744 : vector<16x128xf32>
    %746 = vector.broadcast %740 : f32 to vector<16x128xf32>
    %747 = arith.mulf %746, %738 : vector<16x128xf32>
    %748 = arith.addf %728, %747 : vector<16x128xf32>
    %749 = vector.broadcast %741 : f32 to vector<16x128xf32>
    %750 = arith.mulf %749, %738 : vector<16x128xf32>
    %751 = arith.addf %731, %750 : vector<16x128xf32>
    %752 = vector.broadcast %742 : f32 to vector<16x128xf32>
    %753 = arith.mulf %752, %738 : vector<16x128xf32>
    %754 = arith.addf %734, %753 : vector<16x128xf32>
    %755 = vector.extract_strided_slice %219 {offsets = [1, 0], sizes = [16, 128], strides = [1, 1]} : vector<18x128xf32> to vector<16x128xf32>
    %c1_i32_86 = arith.constant 1 : i32
    %756 = tpu.dynamic_rotate %755 by %c1_i32_86 dim 1 : vector<16x128xf32>, i32 -> vector<16x128xf32>
    %cst_87 = arith.constant 0.000000e+00 : f32
    %757 = vector.broadcast %cst_87 : f32 to vector<16x128xf32>
    %758 = arith.select %27, %756, %757 : vector<16x128xi1>, vector<16x128xf32>
    %c39 = arith.constant 39 : index
    %759 = memref.load %arg2[%c39] : memref<288xf32, #tpu.memory_space<smem>>
    %c111 = arith.constant 111 : index
    %760 = memref.load %arg2[%c111] : memref<288xf32, #tpu.memory_space<smem>>
    %c183 = arith.constant 183 : index
    %761 = memref.load %arg2[%c183] : memref<288xf32, #tpu.memory_space<smem>>
    %c255 = arith.constant 255 : index
    %762 = memref.load %arg2[%c255] : memref<288xf32, #tpu.memory_space<smem>>
    %763 = vector.broadcast %759 : f32 to vector<16x128xf32>
    %764 = arith.mulf %763, %758 : vector<16x128xf32>
    %765 = arith.addf %745, %764 : vector<16x128xf32>
    %766 = vector.broadcast %760 : f32 to vector<16x128xf32>
    %767 = arith.mulf %766, %758 : vector<16x128xf32>
    %768 = arith.addf %748, %767 : vector<16x128xf32>
    %769 = vector.broadcast %761 : f32 to vector<16x128xf32>
    %770 = arith.mulf %769, %758 : vector<16x128xf32>
    %771 = arith.addf %751, %770 : vector<16x128xf32>
    %772 = vector.broadcast %762 : f32 to vector<16x128xf32>
    %773 = arith.mulf %772, %758 : vector<16x128xf32>
    %774 = arith.addf %754, %773 : vector<16x128xf32>
    %775 = vector.extract_strided_slice %220 {offsets = [1, 0], sizes = [16, 128], strides = [1, 1]} : vector<18x128xf32> to vector<16x128xf32>
    %c1_i32_88 = arith.constant 1 : i32
    %776 = tpu.dynamic_rotate %775 by %c1_i32_88 dim 1 : vector<16x128xf32>, i32 -> vector<16x128xf32>
    %cst_89 = arith.constant 0.000000e+00 : f32
    %777 = vector.broadcast %cst_89 : f32 to vector<16x128xf32>
    %778 = arith.select %27, %776, %777 : vector<16x128xi1>, vector<16x128xf32>
    %c48 = arith.constant 48 : index
    %779 = memref.load %arg2[%c48] : memref<288xf32, #tpu.memory_space<smem>>
    %c120 = arith.constant 120 : index
    %780 = memref.load %arg2[%c120] : memref<288xf32, #tpu.memory_space<smem>>
    %c192 = arith.constant 192 : index
    %781 = memref.load %arg2[%c192] : memref<288xf32, #tpu.memory_space<smem>>
    %c264 = arith.constant 264 : index
    %782 = memref.load %arg2[%c264] : memref<288xf32, #tpu.memory_space<smem>>
    %783 = vector.broadcast %779 : f32 to vector<16x128xf32>
    %784 = arith.mulf %783, %778 : vector<16x128xf32>
    %785 = arith.addf %765, %784 : vector<16x128xf32>
    %786 = vector.broadcast %780 : f32 to vector<16x128xf32>
    %787 = arith.mulf %786, %778 : vector<16x128xf32>
    %788 = arith.addf %768, %787 : vector<16x128xf32>
    %789 = vector.broadcast %781 : f32 to vector<16x128xf32>
    %790 = arith.mulf %789, %778 : vector<16x128xf32>
    %791 = arith.addf %771, %790 : vector<16x128xf32>
    %792 = vector.broadcast %782 : f32 to vector<16x128xf32>
    %793 = arith.mulf %792, %778 : vector<16x128xf32>
    %794 = arith.addf %774, %793 : vector<16x128xf32>
    %795 = vector.extract_strided_slice %221 {offsets = [1, 0], sizes = [16, 128], strides = [1, 1]} : vector<18x128xf32> to vector<16x128xf32>
    %c1_i32_90 = arith.constant 1 : i32
    %796 = tpu.dynamic_rotate %795 by %c1_i32_90 dim 1 : vector<16x128xf32>, i32 -> vector<16x128xf32>
    %cst_91 = arith.constant 0.000000e+00 : f32
    %797 = vector.broadcast %cst_91 : f32 to vector<16x128xf32>
    %798 = arith.select %27, %796, %797 : vector<16x128xi1>, vector<16x128xf32>
    %c57 = arith.constant 57 : index
    %799 = memref.load %arg2[%c57] : memref<288xf32, #tpu.memory_space<smem>>
    %c129 = arith.constant 129 : index
    %800 = memref.load %arg2[%c129] : memref<288xf32, #tpu.memory_space<smem>>
    %c201 = arith.constant 201 : index
    %801 = memref.load %arg2[%c201] : memref<288xf32, #tpu.memory_space<smem>>
    %c273 = arith.constant 273 : index
    %802 = memref.load %arg2[%c273] : memref<288xf32, #tpu.memory_space<smem>>
    %803 = vector.broadcast %799 : f32 to vector<16x128xf32>
    %804 = arith.mulf %803, %798 : vector<16x128xf32>
    %805 = arith.addf %785, %804 : vector<16x128xf32>
    %806 = vector.broadcast %800 : f32 to vector<16x128xf32>
    %807 = arith.mulf %806, %798 : vector<16x128xf32>
    %808 = arith.addf %788, %807 : vector<16x128xf32>
    %809 = vector.broadcast %801 : f32 to vector<16x128xf32>
    %810 = arith.mulf %809, %798 : vector<16x128xf32>
    %811 = arith.addf %791, %810 : vector<16x128xf32>
    %812 = vector.broadcast %802 : f32 to vector<16x128xf32>
    %813 = arith.mulf %812, %798 : vector<16x128xf32>
    %814 = arith.addf %794, %813 : vector<16x128xf32>
    %815 = vector.extract_strided_slice %222 {offsets = [1, 0], sizes = [16, 128], strides = [1, 1]} : vector<18x128xf32> to vector<16x128xf32>
    %c1_i32_92 = arith.constant 1 : i32
    %816 = tpu.dynamic_rotate %815 by %c1_i32_92 dim 1 : vector<16x128xf32>, i32 -> vector<16x128xf32>
    %cst_93 = arith.constant 0.000000e+00 : f32
    %817 = vector.broadcast %cst_93 : f32 to vector<16x128xf32>
    %818 = arith.select %27, %816, %817 : vector<16x128xi1>, vector<16x128xf32>
    %c66 = arith.constant 66 : index
    %819 = memref.load %arg2[%c66] : memref<288xf32, #tpu.memory_space<smem>>
    %c138 = arith.constant 138 : index
    %820 = memref.load %arg2[%c138] : memref<288xf32, #tpu.memory_space<smem>>
    %c210 = arith.constant 210 : index
    %821 = memref.load %arg2[%c210] : memref<288xf32, #tpu.memory_space<smem>>
    %c282 = arith.constant 282 : index
    %822 = memref.load %arg2[%c282] : memref<288xf32, #tpu.memory_space<smem>>
    %823 = vector.broadcast %819 : f32 to vector<16x128xf32>
    %824 = arith.mulf %823, %818 : vector<16x128xf32>
    %825 = arith.addf %805, %824 : vector<16x128xf32>
    %826 = vector.broadcast %820 : f32 to vector<16x128xf32>
    %827 = arith.mulf %826, %818 : vector<16x128xf32>
    %828 = arith.addf %808, %827 : vector<16x128xf32>
    %829 = vector.broadcast %821 : f32 to vector<16x128xf32>
    %830 = arith.mulf %829, %818 : vector<16x128xf32>
    %831 = arith.addf %811, %830 : vector<16x128xf32>
    %832 = vector.broadcast %822 : f32 to vector<16x128xf32>
    %833 = arith.mulf %832, %818 : vector<16x128xf32>
    %834 = arith.addf %814, %833 : vector<16x128xf32>
    %835 = vector.extract_strided_slice %215 {offsets = [1, 0], sizes = [16, 128], strides = [1, 1]} : vector<18x128xf32> to vector<16x128xf32>
    %c4_94 = arith.constant 4 : index
    %836 = memref.load %arg2[%c4_94] : memref<288xf32, #tpu.memory_space<smem>>
    %c76 = arith.constant 76 : index
    %837 = memref.load %arg2[%c76] : memref<288xf32, #tpu.memory_space<smem>>
    %c148 = arith.constant 148 : index
    %838 = memref.load %arg2[%c148] : memref<288xf32, #tpu.memory_space<smem>>
    %c220 = arith.constant 220 : index
    %839 = memref.load %arg2[%c220] : memref<288xf32, #tpu.memory_space<smem>>
    %840 = vector.broadcast %836 : f32 to vector<16x128xf32>
    %841 = arith.mulf %840, %835 : vector<16x128xf32>
    %842 = arith.addf %825, %841 : vector<16x128xf32>
    %843 = vector.broadcast %837 : f32 to vector<16x128xf32>
    %844 = arith.mulf %843, %835 : vector<16x128xf32>
    %845 = arith.addf %828, %844 : vector<16x128xf32>
    %846 = vector.broadcast %838 : f32 to vector<16x128xf32>
    %847 = arith.mulf %846, %835 : vector<16x128xf32>
    %848 = arith.addf %831, %847 : vector<16x128xf32>
    %849 = vector.broadcast %839 : f32 to vector<16x128xf32>
    %850 = arith.mulf %849, %835 : vector<16x128xf32>
    %851 = arith.addf %834, %850 : vector<16x128xf32>
    %852 = vector.extract_strided_slice %216 {offsets = [1, 0], sizes = [16, 128], strides = [1, 1]} : vector<18x128xf32> to vector<16x128xf32>
    %c13_95 = arith.constant 13 : index
    %853 = memref.load %arg2[%c13_95] : memref<288xf32, #tpu.memory_space<smem>>
    %c85 = arith.constant 85 : index
    %854 = memref.load %arg2[%c85] : memref<288xf32, #tpu.memory_space<smem>>
    %c157 = arith.constant 157 : index
    %855 = memref.load %arg2[%c157] : memref<288xf32, #tpu.memory_space<smem>>
    %c229 = arith.constant 229 : index
    %856 = memref.load %arg2[%c229] : memref<288xf32, #tpu.memory_space<smem>>
    %857 = vector.broadcast %853 : f32 to vector<16x128xf32>
    %858 = arith.mulf %857, %852 : vector<16x128xf32>
    %859 = arith.addf %842, %858 : vector<16x128xf32>
    %860 = vector.broadcast %854 : f32 to vector<16x128xf32>
    %861 = arith.mulf %860, %852 : vector<16x128xf32>
    %862 = arith.addf %845, %861 : vector<16x128xf32>
    %863 = vector.broadcast %855 : f32 to vector<16x128xf32>
    %864 = arith.mulf %863, %852 : vector<16x128xf32>
    %865 = arith.addf %848, %864 : vector<16x128xf32>
    %866 = vector.broadcast %856 : f32 to vector<16x128xf32>
    %867 = arith.mulf %866, %852 : vector<16x128xf32>
    %868 = arith.addf %851, %867 : vector<16x128xf32>
    %869 = vector.extract_strided_slice %217 {offsets = [1, 0], sizes = [16, 128], strides = [1, 1]} : vector<18x128xf32> to vector<16x128xf32>
    %c22_96 = arith.constant 22 : index
    %870 = memref.load %arg2[%c22_96] : memref<288xf32, #tpu.memory_space<smem>>
    %c94 = arith.constant 94 : index
    %871 = memref.load %arg2[%c94] : memref<288xf32, #tpu.memory_space<smem>>
    %c166 = arith.constant 166 : index
    %872 = memref.load %arg2[%c166] : memref<288xf32, #tpu.memory_space<smem>>
    %c238 = arith.constant 238 : index
    %873 = memref.load %arg2[%c238] : memref<288xf32, #tpu.memory_space<smem>>
    %874 = vector.broadcast %870 : f32 to vector<16x128xf32>
    %875 = arith.mulf %874, %869 : vector<16x128xf32>
    %876 = arith.addf %859, %875 : vector<16x128xf32>
    %877 = vector.broadcast %871 : f32 to vector<16x128xf32>
    %878 = arith.mulf %877, %869 : vector<16x128xf32>
    %879 = arith.addf %862, %878 : vector<16x128xf32>
    %880 = vector.broadcast %872 : f32 to vector<16x128xf32>
    %881 = arith.mulf %880, %869 : vector<16x128xf32>
    %882 = arith.addf %865, %881 : vector<16x128xf32>
    %883 = vector.broadcast %873 : f32 to vector<16x128xf32>
    %884 = arith.mulf %883, %869 : vector<16x128xf32>
    %885 = arith.addf %868, %884 : vector<16x128xf32>
    %886 = vector.extract_strided_slice %218 {offsets = [1, 0], sizes = [16, 128], strides = [1, 1]} : vector<18x128xf32> to vector<16x128xf32>
    %c31_97 = arith.constant 31 : index
    %887 = memref.load %arg2[%c31_97] : memref<288xf32, #tpu.memory_space<smem>>
    %c103 = arith.constant 103 : index
    %888 = memref.load %arg2[%c103] : memref<288xf32, #tpu.memory_space<smem>>
    %c175 = arith.constant 175 : index
    %889 = memref.load %arg2[%c175] : memref<288xf32, #tpu.memory_space<smem>>
    %c247 = arith.constant 247 : index
    %890 = memref.load %arg2[%c247] : memref<288xf32, #tpu.memory_space<smem>>
    %891 = vector.broadcast %887 : f32 to vector<16x128xf32>
    %892 = arith.mulf %891, %886 : vector<16x128xf32>
    %893 = arith.addf %876, %892 : vector<16x128xf32>
    %894 = vector.broadcast %888 : f32 to vector<16x128xf32>
    %895 = arith.mulf %894, %886 : vector<16x128xf32>
    %896 = arith.addf %879, %895 : vector<16x128xf32>
    %897 = vector.broadcast %889 : f32 to vector<16x128xf32>
    %898 = arith.mulf %897, %886 : vector<16x128xf32>
    %899 = arith.addf %882, %898 : vector<16x128xf32>
    %900 = vector.broadcast %890 : f32 to vector<16x128xf32>
    %901 = arith.mulf %900, %886 : vector<16x128xf32>
    %902 = arith.addf %885, %901 : vector<16x128xf32>
    %903 = vector.extract_strided_slice %219 {offsets = [1, 0], sizes = [16, 128], strides = [1, 1]} : vector<18x128xf32> to vector<16x128xf32>
    %c40 = arith.constant 40 : index
    %904 = memref.load %arg2[%c40] : memref<288xf32, #tpu.memory_space<smem>>
    %c112 = arith.constant 112 : index
    %905 = memref.load %arg2[%c112] : memref<288xf32, #tpu.memory_space<smem>>
    %c184 = arith.constant 184 : index
    %906 = memref.load %arg2[%c184] : memref<288xf32, #tpu.memory_space<smem>>
    %c256 = arith.constant 256 : index
    %907 = memref.load %arg2[%c256] : memref<288xf32, #tpu.memory_space<smem>>
    %908 = vector.broadcast %904 : f32 to vector<16x128xf32>
    %909 = arith.mulf %908, %903 : vector<16x128xf32>
    %910 = arith.addf %893, %909 : vector<16x128xf32>
    %911 = vector.broadcast %905 : f32 to vector<16x128xf32>
    %912 = arith.mulf %911, %903 : vector<16x128xf32>
    %913 = arith.addf %896, %912 : vector<16x128xf32>
    %914 = vector.broadcast %906 : f32 to vector<16x128xf32>
    %915 = arith.mulf %914, %903 : vector<16x128xf32>
    %916 = arith.addf %899, %915 : vector<16x128xf32>
    %917 = vector.broadcast %907 : f32 to vector<16x128xf32>
    %918 = arith.mulf %917, %903 : vector<16x128xf32>
    %919 = arith.addf %902, %918 : vector<16x128xf32>
    %920 = vector.extract_strided_slice %220 {offsets = [1, 0], sizes = [16, 128], strides = [1, 1]} : vector<18x128xf32> to vector<16x128xf32>
    %c49 = arith.constant 49 : index
    %921 = memref.load %arg2[%c49] : memref<288xf32, #tpu.memory_space<smem>>
    %c121 = arith.constant 121 : index
    %922 = memref.load %arg2[%c121] : memref<288xf32, #tpu.memory_space<smem>>
    %c193 = arith.constant 193 : index
    %923 = memref.load %arg2[%c193] : memref<288xf32, #tpu.memory_space<smem>>
    %c265 = arith.constant 265 : index
    %924 = memref.load %arg2[%c265] : memref<288xf32, #tpu.memory_space<smem>>
    %925 = vector.broadcast %921 : f32 to vector<16x128xf32>
    %926 = arith.mulf %925, %920 : vector<16x128xf32>
    %927 = arith.addf %910, %926 : vector<16x128xf32>
    %928 = vector.broadcast %922 : f32 to vector<16x128xf32>
    %929 = arith.mulf %928, %920 : vector<16x128xf32>
    %930 = arith.addf %913, %929 : vector<16x128xf32>
    %931 = vector.broadcast %923 : f32 to vector<16x128xf32>
    %932 = arith.mulf %931, %920 : vector<16x128xf32>
    %933 = arith.addf %916, %932 : vector<16x128xf32>
    %934 = vector.broadcast %924 : f32 to vector<16x128xf32>
    %935 = arith.mulf %934, %920 : vector<16x128xf32>
    %936 = arith.addf %919, %935 : vector<16x128xf32>
    %937 = vector.extract_strided_slice %221 {offsets = [1, 0], sizes = [16, 128], strides = [1, 1]} : vector<18x128xf32> to vector<16x128xf32>
    %c58 = arith.constant 58 : index
    %938 = memref.load %arg2[%c58] : memref<288xf32, #tpu.memory_space<smem>>
    %c130 = arith.constant 130 : index
    %939 = memref.load %arg2[%c130] : memref<288xf32, #tpu.memory_space<smem>>
    %c202 = arith.constant 202 : index
    %940 = memref.load %arg2[%c202] : memref<288xf32, #tpu.memory_space<smem>>
    %c274 = arith.constant 274 : index
    %941 = memref.load %arg2[%c274] : memref<288xf32, #tpu.memory_space<smem>>
    %942 = vector.broadcast %938 : f32 to vector<16x128xf32>
    %943 = arith.mulf %942, %937 : vector<16x128xf32>
    %944 = arith.addf %927, %943 : vector<16x128xf32>
    %945 = vector.broadcast %939 : f32 to vector<16x128xf32>
    %946 = arith.mulf %945, %937 : vector<16x128xf32>
    %947 = arith.addf %930, %946 : vector<16x128xf32>
    %948 = vector.broadcast %940 : f32 to vector<16x128xf32>
    %949 = arith.mulf %948, %937 : vector<16x128xf32>
    %950 = arith.addf %933, %949 : vector<16x128xf32>
    %951 = vector.broadcast %941 : f32 to vector<16x128xf32>
    %952 = arith.mulf %951, %937 : vector<16x128xf32>
    %953 = arith.addf %936, %952 : vector<16x128xf32>
    %954 = vector.extract_strided_slice %222 {offsets = [1, 0], sizes = [16, 128], strides = [1, 1]} : vector<18x128xf32> to vector<16x128xf32>
    %c67 = arith.constant 67 : index
    %955 = memref.load %arg2[%c67] : memref<288xf32, #tpu.memory_space<smem>>
    %c139 = arith.constant 139 : index
    %956 = memref.load %arg2[%c139] : memref<288xf32, #tpu.memory_space<smem>>
    %c211 = arith.constant 211 : index
    %957 = memref.load %arg2[%c211] : memref<288xf32, #tpu.memory_space<smem>>
    %c283 = arith.constant 283 : index
    %958 = memref.load %arg2[%c283] : memref<288xf32, #tpu.memory_space<smem>>
    %959 = vector.broadcast %955 : f32 to vector<16x128xf32>
    %960 = arith.mulf %959, %954 : vector<16x128xf32>
    %961 = arith.addf %944, %960 : vector<16x128xf32>
    %962 = vector.broadcast %956 : f32 to vector<16x128xf32>
    %963 = arith.mulf %962, %954 : vector<16x128xf32>
    %964 = arith.addf %947, %963 : vector<16x128xf32>
    %965 = vector.broadcast %957 : f32 to vector<16x128xf32>
    %966 = arith.mulf %965, %954 : vector<16x128xf32>
    %967 = arith.addf %950, %966 : vector<16x128xf32>
    %968 = vector.broadcast %958 : f32 to vector<16x128xf32>
    %969 = arith.mulf %968, %954 : vector<16x128xf32>
    %970 = arith.addf %953, %969 : vector<16x128xf32>
    %971 = vector.extract_strided_slice %215 {offsets = [1, 0], sizes = [16, 128], strides = [1, 1]} : vector<18x128xf32> to vector<16x128xf32>
    %c127_i32_98 = arith.constant 127 : i32
    %972 = tpu.dynamic_rotate %971 by %c127_i32_98 dim 1 : vector<16x128xf32>, i32 -> vector<16x128xf32>
    %cst_99 = arith.constant 0.000000e+00 : f32
    %973 = vector.broadcast %cst_99 : f32 to vector<16x128xf32>
    %974 = arith.select %29, %972, %973 : vector<16x128xi1>, vector<16x128xf32>
    %c5_100 = arith.constant 5 : index
    %975 = memref.load %arg2[%c5_100] : memref<288xf32, #tpu.memory_space<smem>>
    %c77 = arith.constant 77 : index
    %976 = memref.load %arg2[%c77] : memref<288xf32, #tpu.memory_space<smem>>
    %c149 = arith.constant 149 : index
    %977 = memref.load %arg2[%c149] : memref<288xf32, #tpu.memory_space<smem>>
    %c221 = arith.constant 221 : index
    %978 = memref.load %arg2[%c221] : memref<288xf32, #tpu.memory_space<smem>>
    %979 = vector.broadcast %975 : f32 to vector<16x128xf32>
    %980 = arith.mulf %979, %974 : vector<16x128xf32>
    %981 = arith.addf %961, %980 : vector<16x128xf32>
    %982 = vector.broadcast %976 : f32 to vector<16x128xf32>
    %983 = arith.mulf %982, %974 : vector<16x128xf32>
    %984 = arith.addf %964, %983 : vector<16x128xf32>
    %985 = vector.broadcast %977 : f32 to vector<16x128xf32>
    %986 = arith.mulf %985, %974 : vector<16x128xf32>
    %987 = arith.addf %967, %986 : vector<16x128xf32>
    %988 = vector.broadcast %978 : f32 to vector<16x128xf32>
    %989 = arith.mulf %988, %974 : vector<16x128xf32>
    %990 = arith.addf %970, %989 : vector<16x128xf32>
    %991 = vector.extract_strided_slice %216 {offsets = [1, 0], sizes = [16, 128], strides = [1, 1]} : vector<18x128xf32> to vector<16x128xf32>
    %c127_i32_101 = arith.constant 127 : i32
    %992 = tpu.dynamic_rotate %991 by %c127_i32_101 dim 1 : vector<16x128xf32>, i32 -> vector<16x128xf32>
    %cst_102 = arith.constant 0.000000e+00 : f32
    %993 = vector.broadcast %cst_102 : f32 to vector<16x128xf32>
    %994 = arith.select %29, %992, %993 : vector<16x128xi1>, vector<16x128xf32>
    %c14_103 = arith.constant 14 : index
    %995 = memref.load %arg2[%c14_103] : memref<288xf32, #tpu.memory_space<smem>>
    %c86 = arith.constant 86 : index
    %996 = memref.load %arg2[%c86] : memref<288xf32, #tpu.memory_space<smem>>
    %c158 = arith.constant 158 : index
    %997 = memref.load %arg2[%c158] : memref<288xf32, #tpu.memory_space<smem>>
    %c230 = arith.constant 230 : index
    %998 = memref.load %arg2[%c230] : memref<288xf32, #tpu.memory_space<smem>>
    %999 = vector.broadcast %995 : f32 to vector<16x128xf32>
    %1000 = arith.mulf %999, %994 : vector<16x128xf32>
    %1001 = arith.addf %981, %1000 : vector<16x128xf32>
    %1002 = vector.broadcast %996 : f32 to vector<16x128xf32>
    %1003 = arith.mulf %1002, %994 : vector<16x128xf32>
    %1004 = arith.addf %984, %1003 : vector<16x128xf32>
    %1005 = vector.broadcast %997 : f32 to vector<16x128xf32>
    %1006 = arith.mulf %1005, %994 : vector<16x128xf32>
    %1007 = arith.addf %987, %1006 : vector<16x128xf32>
    %1008 = vector.broadcast %998 : f32 to vector<16x128xf32>
    %1009 = arith.mulf %1008, %994 : vector<16x128xf32>
    %1010 = arith.addf %990, %1009 : vector<16x128xf32>
    %1011 = vector.extract_strided_slice %217 {offsets = [1, 0], sizes = [16, 128], strides = [1, 1]} : vector<18x128xf32> to vector<16x128xf32>
    %c127_i32_104 = arith.constant 127 : i32
    %1012 = tpu.dynamic_rotate %1011 by %c127_i32_104 dim 1 : vector<16x128xf32>, i32 -> vector<16x128xf32>
    %cst_105 = arith.constant 0.000000e+00 : f32
    %1013 = vector.broadcast %cst_105 : f32 to vector<16x128xf32>
    %1014 = arith.select %29, %1012, %1013 : vector<16x128xi1>, vector<16x128xf32>
    %c23_106 = arith.constant 23 : index
    %1015 = memref.load %arg2[%c23_106] : memref<288xf32, #tpu.memory_space<smem>>
    %c95 = arith.constant 95 : index
    %1016 = memref.load %arg2[%c95] : memref<288xf32, #tpu.memory_space<smem>>
    %c167 = arith.constant 167 : index
    %1017 = memref.load %arg2[%c167] : memref<288xf32, #tpu.memory_space<smem>>
    %c239 = arith.constant 239 : index
    %1018 = memref.load %arg2[%c239] : memref<288xf32, #tpu.memory_space<smem>>
    %1019 = vector.broadcast %1015 : f32 to vector<16x128xf32>
    %1020 = arith.mulf %1019, %1014 : vector<16x128xf32>
    %1021 = arith.addf %1001, %1020 : vector<16x128xf32>
    %1022 = vector.broadcast %1016 : f32 to vector<16x128xf32>
    %1023 = arith.mulf %1022, %1014 : vector<16x128xf32>
    %1024 = arith.addf %1004, %1023 : vector<16x128xf32>
    %1025 = vector.broadcast %1017 : f32 to vector<16x128xf32>
    %1026 = arith.mulf %1025, %1014 : vector<16x128xf32>
    %1027 = arith.addf %1007, %1026 : vector<16x128xf32>
    %1028 = vector.broadcast %1018 : f32 to vector<16x128xf32>
    %1029 = arith.mulf %1028, %1014 : vector<16x128xf32>
    %1030 = arith.addf %1010, %1029 : vector<16x128xf32>
    %1031 = vector.extract_strided_slice %218 {offsets = [1, 0], sizes = [16, 128], strides = [1, 1]} : vector<18x128xf32> to vector<16x128xf32>
    %c127_i32_107 = arith.constant 127 : i32
    %1032 = tpu.dynamic_rotate %1031 by %c127_i32_107 dim 1 : vector<16x128xf32>, i32 -> vector<16x128xf32>
    %cst_108 = arith.constant 0.000000e+00 : f32
    %1033 = vector.broadcast %cst_108 : f32 to vector<16x128xf32>
    %1034 = arith.select %29, %1032, %1033 : vector<16x128xi1>, vector<16x128xf32>
    %c32 = arith.constant 32 : index
    %1035 = memref.load %arg2[%c32] : memref<288xf32, #tpu.memory_space<smem>>
    %c104 = arith.constant 104 : index
    %1036 = memref.load %arg2[%c104] : memref<288xf32, #tpu.memory_space<smem>>
    %c176 = arith.constant 176 : index
    %1037 = memref.load %arg2[%c176] : memref<288xf32, #tpu.memory_space<smem>>
    %c248 = arith.constant 248 : index
    %1038 = memref.load %arg2[%c248] : memref<288xf32, #tpu.memory_space<smem>>
    %1039 = vector.broadcast %1035 : f32 to vector<16x128xf32>
    %1040 = arith.mulf %1039, %1034 : vector<16x128xf32>
    %1041 = arith.addf %1021, %1040 : vector<16x128xf32>
    %1042 = vector.broadcast %1036 : f32 to vector<16x128xf32>
    %1043 = arith.mulf %1042, %1034 : vector<16x128xf32>
    %1044 = arith.addf %1024, %1043 : vector<16x128xf32>
    %1045 = vector.broadcast %1037 : f32 to vector<16x128xf32>
    %1046 = arith.mulf %1045, %1034 : vector<16x128xf32>
    %1047 = arith.addf %1027, %1046 : vector<16x128xf32>
    %1048 = vector.broadcast %1038 : f32 to vector<16x128xf32>
    %1049 = arith.mulf %1048, %1034 : vector<16x128xf32>
    %1050 = arith.addf %1030, %1049 : vector<16x128xf32>
    %1051 = vector.extract_strided_slice %219 {offsets = [1, 0], sizes = [16, 128], strides = [1, 1]} : vector<18x128xf32> to vector<16x128xf32>
    %c127_i32_109 = arith.constant 127 : i32
    %1052 = tpu.dynamic_rotate %1051 by %c127_i32_109 dim 1 : vector<16x128xf32>, i32 -> vector<16x128xf32>
    %cst_110 = arith.constant 0.000000e+00 : f32
    %1053 = vector.broadcast %cst_110 : f32 to vector<16x128xf32>
    %1054 = arith.select %29, %1052, %1053 : vector<16x128xi1>, vector<16x128xf32>
    %c41 = arith.constant 41 : index
    %1055 = memref.load %arg2[%c41] : memref<288xf32, #tpu.memory_space<smem>>
    %c113 = arith.constant 113 : index
    %1056 = memref.load %arg2[%c113] : memref<288xf32, #tpu.memory_space<smem>>
    %c185 = arith.constant 185 : index
    %1057 = memref.load %arg2[%c185] : memref<288xf32, #tpu.memory_space<smem>>
    %c257 = arith.constant 257 : index
    %1058 = memref.load %arg2[%c257] : memref<288xf32, #tpu.memory_space<smem>>
    %1059 = vector.broadcast %1055 : f32 to vector<16x128xf32>
    %1060 = arith.mulf %1059, %1054 : vector<16x128xf32>
    %1061 = arith.addf %1041, %1060 : vector<16x128xf32>
    %1062 = vector.broadcast %1056 : f32 to vector<16x128xf32>
    %1063 = arith.mulf %1062, %1054 : vector<16x128xf32>
    %1064 = arith.addf %1044, %1063 : vector<16x128xf32>
    %1065 = vector.broadcast %1057 : f32 to vector<16x128xf32>
    %1066 = arith.mulf %1065, %1054 : vector<16x128xf32>
    %1067 = arith.addf %1047, %1066 : vector<16x128xf32>
    %1068 = vector.broadcast %1058 : f32 to vector<16x128xf32>
    %1069 = arith.mulf %1068, %1054 : vector<16x128xf32>
    %1070 = arith.addf %1050, %1069 : vector<16x128xf32>
    %1071 = vector.extract_strided_slice %220 {offsets = [1, 0], sizes = [16, 128], strides = [1, 1]} : vector<18x128xf32> to vector<16x128xf32>
    %c127_i32_111 = arith.constant 127 : i32
    %1072 = tpu.dynamic_rotate %1071 by %c127_i32_111 dim 1 : vector<16x128xf32>, i32 -> vector<16x128xf32>
    %cst_112 = arith.constant 0.000000e+00 : f32
    %1073 = vector.broadcast %cst_112 : f32 to vector<16x128xf32>
    %1074 = arith.select %29, %1072, %1073 : vector<16x128xi1>, vector<16x128xf32>
    %c50 = arith.constant 50 : index
    %1075 = memref.load %arg2[%c50] : memref<288xf32, #tpu.memory_space<smem>>
    %c122 = arith.constant 122 : index
    %1076 = memref.load %arg2[%c122] : memref<288xf32, #tpu.memory_space<smem>>
    %c194 = arith.constant 194 : index
    %1077 = memref.load %arg2[%c194] : memref<288xf32, #tpu.memory_space<smem>>
    %c266 = arith.constant 266 : index
    %1078 = memref.load %arg2[%c266] : memref<288xf32, #tpu.memory_space<smem>>
    %1079 = vector.broadcast %1075 : f32 to vector<16x128xf32>
    %1080 = arith.mulf %1079, %1074 : vector<16x128xf32>
    %1081 = arith.addf %1061, %1080 : vector<16x128xf32>
    %1082 = vector.broadcast %1076 : f32 to vector<16x128xf32>
    %1083 = arith.mulf %1082, %1074 : vector<16x128xf32>
    %1084 = arith.addf %1064, %1083 : vector<16x128xf32>
    %1085 = vector.broadcast %1077 : f32 to vector<16x128xf32>
    %1086 = arith.mulf %1085, %1074 : vector<16x128xf32>
    %1087 = arith.addf %1067, %1086 : vector<16x128xf32>
    %1088 = vector.broadcast %1078 : f32 to vector<16x128xf32>
    %1089 = arith.mulf %1088, %1074 : vector<16x128xf32>
    %1090 = arith.addf %1070, %1089 : vector<16x128xf32>
    %1091 = vector.extract_strided_slice %221 {offsets = [1, 0], sizes = [16, 128], strides = [1, 1]} : vector<18x128xf32> to vector<16x128xf32>
    %c127_i32_113 = arith.constant 127 : i32
    %1092 = tpu.dynamic_rotate %1091 by %c127_i32_113 dim 1 : vector<16x128xf32>, i32 -> vector<16x128xf32>
    %cst_114 = arith.constant 0.000000e+00 : f32
    %1093 = vector.broadcast %cst_114 : f32 to vector<16x128xf32>
    %1094 = arith.select %29, %1092, %1093 : vector<16x128xi1>, vector<16x128xf32>
    %c59 = arith.constant 59 : index
    %1095 = memref.load %arg2[%c59] : memref<288xf32, #tpu.memory_space<smem>>
    %c131 = arith.constant 131 : index
    %1096 = memref.load %arg2[%c131] : memref<288xf32, #tpu.memory_space<smem>>
    %c203 = arith.constant 203 : index
    %1097 = memref.load %arg2[%c203] : memref<288xf32, #tpu.memory_space<smem>>
    %c275 = arith.constant 275 : index
    %1098 = memref.load %arg2[%c275] : memref<288xf32, #tpu.memory_space<smem>>
    %1099 = vector.broadcast %1095 : f32 to vector<16x128xf32>
    %1100 = arith.mulf %1099, %1094 : vector<16x128xf32>
    %1101 = arith.addf %1081, %1100 : vector<16x128xf32>
    %1102 = vector.broadcast %1096 : f32 to vector<16x128xf32>
    %1103 = arith.mulf %1102, %1094 : vector<16x128xf32>
    %1104 = arith.addf %1084, %1103 : vector<16x128xf32>
    %1105 = vector.broadcast %1097 : f32 to vector<16x128xf32>
    %1106 = arith.mulf %1105, %1094 : vector<16x128xf32>
    %1107 = arith.addf %1087, %1106 : vector<16x128xf32>
    %1108 = vector.broadcast %1098 : f32 to vector<16x128xf32>
    %1109 = arith.mulf %1108, %1094 : vector<16x128xf32>
    %1110 = arith.addf %1090, %1109 : vector<16x128xf32>
    %1111 = vector.extract_strided_slice %222 {offsets = [1, 0], sizes = [16, 128], strides = [1, 1]} : vector<18x128xf32> to vector<16x128xf32>
    %c127_i32_115 = arith.constant 127 : i32
    %1112 = tpu.dynamic_rotate %1111 by %c127_i32_115 dim 1 : vector<16x128xf32>, i32 -> vector<16x128xf32>
    %cst_116 = arith.constant 0.000000e+00 : f32
    %1113 = vector.broadcast %cst_116 : f32 to vector<16x128xf32>
    %1114 = arith.select %29, %1112, %1113 : vector<16x128xi1>, vector<16x128xf32>
    %c68 = arith.constant 68 : index
    %1115 = memref.load %arg2[%c68] : memref<288xf32, #tpu.memory_space<smem>>
    %c140 = arith.constant 140 : index
    %1116 = memref.load %arg2[%c140] : memref<288xf32, #tpu.memory_space<smem>>
    %c212 = arith.constant 212 : index
    %1117 = memref.load %arg2[%c212] : memref<288xf32, #tpu.memory_space<smem>>
    %c284 = arith.constant 284 : index
    %1118 = memref.load %arg2[%c284] : memref<288xf32, #tpu.memory_space<smem>>
    %1119 = vector.broadcast %1115 : f32 to vector<16x128xf32>
    %1120 = arith.mulf %1119, %1114 : vector<16x128xf32>
    %1121 = arith.addf %1101, %1120 : vector<16x128xf32>
    %1122 = vector.broadcast %1116 : f32 to vector<16x128xf32>
    %1123 = arith.mulf %1122, %1114 : vector<16x128xf32>
    %1124 = arith.addf %1104, %1123 : vector<16x128xf32>
    %1125 = vector.broadcast %1117 : f32 to vector<16x128xf32>
    %1126 = arith.mulf %1125, %1114 : vector<16x128xf32>
    %1127 = arith.addf %1107, %1126 : vector<16x128xf32>
    %1128 = vector.broadcast %1118 : f32 to vector<16x128xf32>
    %1129 = arith.mulf %1128, %1114 : vector<16x128xf32>
    %1130 = arith.addf %1110, %1129 : vector<16x128xf32>
    %1131 = vector.extract_strided_slice %215 {offsets = [2, 0], sizes = [16, 128], strides = [1, 1]} : vector<18x128xf32> to vector<16x128xf32>
    %c1_i32_117 = arith.constant 1 : i32
    %1132 = tpu.dynamic_rotate %1131 by %c1_i32_117 dim 1 : vector<16x128xf32>, i32 -> vector<16x128xf32>
    %cst_118 = arith.constant 0.000000e+00 : f32
    %1133 = vector.broadcast %cst_118 : f32 to vector<16x128xf32>
    %1134 = arith.select %27, %1132, %1133 : vector<16x128xi1>, vector<16x128xf32>
    %c6_119 = arith.constant 6 : index
    %1135 = memref.load %arg2[%c6_119] : memref<288xf32, #tpu.memory_space<smem>>
    %c78 = arith.constant 78 : index
    %1136 = memref.load %arg2[%c78] : memref<288xf32, #tpu.memory_space<smem>>
    %c150 = arith.constant 150 : index
    %1137 = memref.load %arg2[%c150] : memref<288xf32, #tpu.memory_space<smem>>
    %c222 = arith.constant 222 : index
    %1138 = memref.load %arg2[%c222] : memref<288xf32, #tpu.memory_space<smem>>
    %1139 = vector.broadcast %1135 : f32 to vector<16x128xf32>
    %1140 = arith.mulf %1139, %1134 : vector<16x128xf32>
    %1141 = arith.addf %1121, %1140 : vector<16x128xf32>
    %1142 = vector.broadcast %1136 : f32 to vector<16x128xf32>
    %1143 = arith.mulf %1142, %1134 : vector<16x128xf32>
    %1144 = arith.addf %1124, %1143 : vector<16x128xf32>
    %1145 = vector.broadcast %1137 : f32 to vector<16x128xf32>
    %1146 = arith.mulf %1145, %1134 : vector<16x128xf32>
    %1147 = arith.addf %1127, %1146 : vector<16x128xf32>
    %1148 = vector.broadcast %1138 : f32 to vector<16x128xf32>
    %1149 = arith.mulf %1148, %1134 : vector<16x128xf32>
    %1150 = arith.addf %1130, %1149 : vector<16x128xf32>
    %1151 = vector.extract_strided_slice %216 {offsets = [2, 0], sizes = [16, 128], strides = [1, 1]} : vector<18x128xf32> to vector<16x128xf32>
    %c1_i32_120 = arith.constant 1 : i32
    %1152 = tpu.dynamic_rotate %1151 by %c1_i32_120 dim 1 : vector<16x128xf32>, i32 -> vector<16x128xf32>
    %cst_121 = arith.constant 0.000000e+00 : f32
    %1153 = vector.broadcast %cst_121 : f32 to vector<16x128xf32>
    %1154 = arith.select %27, %1152, %1153 : vector<16x128xi1>, vector<16x128xf32>
    %c15_122 = arith.constant 15 : index
    %1155 = memref.load %arg2[%c15_122] : memref<288xf32, #tpu.memory_space<smem>>
    %c87 = arith.constant 87 : index
    %1156 = memref.load %arg2[%c87] : memref<288xf32, #tpu.memory_space<smem>>
    %c159 = arith.constant 159 : index
    %1157 = memref.load %arg2[%c159] : memref<288xf32, #tpu.memory_space<smem>>
    %c231 = arith.constant 231 : index
    %1158 = memref.load %arg2[%c231] : memref<288xf32, #tpu.memory_space<smem>>
    %1159 = vector.broadcast %1155 : f32 to vector<16x128xf32>
    %1160 = arith.mulf %1159, %1154 : vector<16x128xf32>
    %1161 = arith.addf %1141, %1160 : vector<16x128xf32>
    %1162 = vector.broadcast %1156 : f32 to vector<16x128xf32>
    %1163 = arith.mulf %1162, %1154 : vector<16x128xf32>
    %1164 = arith.addf %1144, %1163 : vector<16x128xf32>
    %1165 = vector.broadcast %1157 : f32 to vector<16x128xf32>
    %1166 = arith.mulf %1165, %1154 : vector<16x128xf32>
    %1167 = arith.addf %1147, %1166 : vector<16x128xf32>
    %1168 = vector.broadcast %1158 : f32 to vector<16x128xf32>
    %1169 = arith.mulf %1168, %1154 : vector<16x128xf32>
    %1170 = arith.addf %1150, %1169 : vector<16x128xf32>
    %1171 = vector.extract_strided_slice %217 {offsets = [2, 0], sizes = [16, 128], strides = [1, 1]} : vector<18x128xf32> to vector<16x128xf32>
    %c1_i32_123 = arith.constant 1 : i32
    %1172 = tpu.dynamic_rotate %1171 by %c1_i32_123 dim 1 : vector<16x128xf32>, i32 -> vector<16x128xf32>
    %cst_124 = arith.constant 0.000000e+00 : f32
    %1173 = vector.broadcast %cst_124 : f32 to vector<16x128xf32>
    %1174 = arith.select %27, %1172, %1173 : vector<16x128xi1>, vector<16x128xf32>
    %c24_125 = arith.constant 24 : index
    %1175 = memref.load %arg2[%c24_125] : memref<288xf32, #tpu.memory_space<smem>>
    %c96 = arith.constant 96 : index
    %1176 = memref.load %arg2[%c96] : memref<288xf32, #tpu.memory_space<smem>>
    %c168 = arith.constant 168 : index
    %1177 = memref.load %arg2[%c168] : memref<288xf32, #tpu.memory_space<smem>>
    %c240 = arith.constant 240 : index
    %1178 = memref.load %arg2[%c240] : memref<288xf32, #tpu.memory_space<smem>>
    %1179 = vector.broadcast %1175 : f32 to vector<16x128xf32>
    %1180 = arith.mulf %1179, %1174 : vector<16x128xf32>
    %1181 = arith.addf %1161, %1180 : vector<16x128xf32>
    %1182 = vector.broadcast %1176 : f32 to vector<16x128xf32>
    %1183 = arith.mulf %1182, %1174 : vector<16x128xf32>
    %1184 = arith.addf %1164, %1183 : vector<16x128xf32>
    %1185 = vector.broadcast %1177 : f32 to vector<16x128xf32>
    %1186 = arith.mulf %1185, %1174 : vector<16x128xf32>
    %1187 = arith.addf %1167, %1186 : vector<16x128xf32>
    %1188 = vector.broadcast %1178 : f32 to vector<16x128xf32>
    %1189 = arith.mulf %1188, %1174 : vector<16x128xf32>
    %1190 = arith.addf %1170, %1189 : vector<16x128xf32>
    %1191 = vector.extract_strided_slice %218 {offsets = [2, 0], sizes = [16, 128], strides = [1, 1]} : vector<18x128xf32> to vector<16x128xf32>
    %c1_i32_126 = arith.constant 1 : i32
    %1192 = tpu.dynamic_rotate %1191 by %c1_i32_126 dim 1 : vector<16x128xf32>, i32 -> vector<16x128xf32>
    %cst_127 = arith.constant 0.000000e+00 : f32
    %1193 = vector.broadcast %cst_127 : f32 to vector<16x128xf32>
    %1194 = arith.select %27, %1192, %1193 : vector<16x128xi1>, vector<16x128xf32>
    %c33 = arith.constant 33 : index
    %1195 = memref.load %arg2[%c33] : memref<288xf32, #tpu.memory_space<smem>>
    %c105 = arith.constant 105 : index
    %1196 = memref.load %arg2[%c105] : memref<288xf32, #tpu.memory_space<smem>>
    %c177 = arith.constant 177 : index
    %1197 = memref.load %arg2[%c177] : memref<288xf32, #tpu.memory_space<smem>>
    %c249 = arith.constant 249 : index
    %1198 = memref.load %arg2[%c249] : memref<288xf32, #tpu.memory_space<smem>>
    %1199 = vector.broadcast %1195 : f32 to vector<16x128xf32>
    %1200 = arith.mulf %1199, %1194 : vector<16x128xf32>
    %1201 = arith.addf %1181, %1200 : vector<16x128xf32>
    %1202 = vector.broadcast %1196 : f32 to vector<16x128xf32>
    %1203 = arith.mulf %1202, %1194 : vector<16x128xf32>
    %1204 = arith.addf %1184, %1203 : vector<16x128xf32>
    %1205 = vector.broadcast %1197 : f32 to vector<16x128xf32>
    %1206 = arith.mulf %1205, %1194 : vector<16x128xf32>
    %1207 = arith.addf %1187, %1206 : vector<16x128xf32>
    %1208 = vector.broadcast %1198 : f32 to vector<16x128xf32>
    %1209 = arith.mulf %1208, %1194 : vector<16x128xf32>
    %1210 = arith.addf %1190, %1209 : vector<16x128xf32>
    %1211 = vector.extract_strided_slice %219 {offsets = [2, 0], sizes = [16, 128], strides = [1, 1]} : vector<18x128xf32> to vector<16x128xf32>
    %c1_i32_128 = arith.constant 1 : i32
    %1212 = tpu.dynamic_rotate %1211 by %c1_i32_128 dim 1 : vector<16x128xf32>, i32 -> vector<16x128xf32>
    %cst_129 = arith.constant 0.000000e+00 : f32
    %1213 = vector.broadcast %cst_129 : f32 to vector<16x128xf32>
    %1214 = arith.select %27, %1212, %1213 : vector<16x128xi1>, vector<16x128xf32>
    %c42 = arith.constant 42 : index
    %1215 = memref.load %arg2[%c42] : memref<288xf32, #tpu.memory_space<smem>>
    %c114 = arith.constant 114 : index
    %1216 = memref.load %arg2[%c114] : memref<288xf32, #tpu.memory_space<smem>>
    %c186 = arith.constant 186 : index
    %1217 = memref.load %arg2[%c186] : memref<288xf32, #tpu.memory_space<smem>>
    %c258 = arith.constant 258 : index
    %1218 = memref.load %arg2[%c258] : memref<288xf32, #tpu.memory_space<smem>>
    %1219 = vector.broadcast %1215 : f32 to vector<16x128xf32>
    %1220 = arith.mulf %1219, %1214 : vector<16x128xf32>
    %1221 = arith.addf %1201, %1220 : vector<16x128xf32>
    %1222 = vector.broadcast %1216 : f32 to vector<16x128xf32>
    %1223 = arith.mulf %1222, %1214 : vector<16x128xf32>
    %1224 = arith.addf %1204, %1223 : vector<16x128xf32>
    %1225 = vector.broadcast %1217 : f32 to vector<16x128xf32>
    %1226 = arith.mulf %1225, %1214 : vector<16x128xf32>
    %1227 = arith.addf %1207, %1226 : vector<16x128xf32>
    %1228 = vector.broadcast %1218 : f32 to vector<16x128xf32>
    %1229 = arith.mulf %1228, %1214 : vector<16x128xf32>
    %1230 = arith.addf %1210, %1229 : vector<16x128xf32>
    %1231 = vector.extract_strided_slice %220 {offsets = [2, 0], sizes = [16, 128], strides = [1, 1]} : vector<18x128xf32> to vector<16x128xf32>
    %c1_i32_130 = arith.constant 1 : i32
    %1232 = tpu.dynamic_rotate %1231 by %c1_i32_130 dim 1 : vector<16x128xf32>, i32 -> vector<16x128xf32>
    %cst_131 = arith.constant 0.000000e+00 : f32
    %1233 = vector.broadcast %cst_131 : f32 to vector<16x128xf32>
    %1234 = arith.select %27, %1232, %1233 : vector<16x128xi1>, vector<16x128xf32>
    %c51 = arith.constant 51 : index
    %1235 = memref.load %arg2[%c51] : memref<288xf32, #tpu.memory_space<smem>>
    %c123 = arith.constant 123 : index
    %1236 = memref.load %arg2[%c123] : memref<288xf32, #tpu.memory_space<smem>>
    %c195 = arith.constant 195 : index
    %1237 = memref.load %arg2[%c195] : memref<288xf32, #tpu.memory_space<smem>>
    %c267 = arith.constant 267 : index
    %1238 = memref.load %arg2[%c267] : memref<288xf32, #tpu.memory_space<smem>>
    %1239 = vector.broadcast %1235 : f32 to vector<16x128xf32>
    %1240 = arith.mulf %1239, %1234 : vector<16x128xf32>
    %1241 = arith.addf %1221, %1240 : vector<16x128xf32>
    %1242 = vector.broadcast %1236 : f32 to vector<16x128xf32>
    %1243 = arith.mulf %1242, %1234 : vector<16x128xf32>
    %1244 = arith.addf %1224, %1243 : vector<16x128xf32>
    %1245 = vector.broadcast %1237 : f32 to vector<16x128xf32>
    %1246 = arith.mulf %1245, %1234 : vector<16x128xf32>
    %1247 = arith.addf %1227, %1246 : vector<16x128xf32>
    %1248 = vector.broadcast %1238 : f32 to vector<16x128xf32>
    %1249 = arith.mulf %1248, %1234 : vector<16x128xf32>
    %1250 = arith.addf %1230, %1249 : vector<16x128xf32>
    %1251 = vector.extract_strided_slice %221 {offsets = [2, 0], sizes = [16, 128], strides = [1, 1]} : vector<18x128xf32> to vector<16x128xf32>
    %c1_i32_132 = arith.constant 1 : i32
    %1252 = tpu.dynamic_rotate %1251 by %c1_i32_132 dim 1 : vector<16x128xf32>, i32 -> vector<16x128xf32>
    %cst_133 = arith.constant 0.000000e+00 : f32
    %1253 = vector.broadcast %cst_133 : f32 to vector<16x128xf32>
    %1254 = arith.select %27, %1252, %1253 : vector<16x128xi1>, vector<16x128xf32>
    %c60 = arith.constant 60 : index
    %1255 = memref.load %arg2[%c60] : memref<288xf32, #tpu.memory_space<smem>>
    %c132 = arith.constant 132 : index
    %1256 = memref.load %arg2[%c132] : memref<288xf32, #tpu.memory_space<smem>>
    %c204 = arith.constant 204 : index
    %1257 = memref.load %arg2[%c204] : memref<288xf32, #tpu.memory_space<smem>>
    %c276 = arith.constant 276 : index
    %1258 = memref.load %arg2[%c276] : memref<288xf32, #tpu.memory_space<smem>>
    %1259 = vector.broadcast %1255 : f32 to vector<16x128xf32>
    %1260 = arith.mulf %1259, %1254 : vector<16x128xf32>
    %1261 = arith.addf %1241, %1260 : vector<16x128xf32>
    %1262 = vector.broadcast %1256 : f32 to vector<16x128xf32>
    %1263 = arith.mulf %1262, %1254 : vector<16x128xf32>
    %1264 = arith.addf %1244, %1263 : vector<16x128xf32>
    %1265 = vector.broadcast %1257 : f32 to vector<16x128xf32>
    %1266 = arith.mulf %1265, %1254 : vector<16x128xf32>
    %1267 = arith.addf %1247, %1266 : vector<16x128xf32>
    %1268 = vector.broadcast %1258 : f32 to vector<16x128xf32>
    %1269 = arith.mulf %1268, %1254 : vector<16x128xf32>
    %1270 = arith.addf %1250, %1269 : vector<16x128xf32>
    %1271 = vector.extract_strided_slice %222 {offsets = [2, 0], sizes = [16, 128], strides = [1, 1]} : vector<18x128xf32> to vector<16x128xf32>
    %c1_i32_134 = arith.constant 1 : i32
    %1272 = tpu.dynamic_rotate %1271 by %c1_i32_134 dim 1 : vector<16x128xf32>, i32 -> vector<16x128xf32>
    %cst_135 = arith.constant 0.000000e+00 : f32
    %1273 = vector.broadcast %cst_135 : f32 to vector<16x128xf32>
    %1274 = arith.select %27, %1272, %1273 : vector<16x128xi1>, vector<16x128xf32>
    %c69 = arith.constant 69 : index
    %1275 = memref.load %arg2[%c69] : memref<288xf32, #tpu.memory_space<smem>>
    %c141 = arith.constant 141 : index
    %1276 = memref.load %arg2[%c141] : memref<288xf32, #tpu.memory_space<smem>>
    %c213 = arith.constant 213 : index
    %1277 = memref.load %arg2[%c213] : memref<288xf32, #tpu.memory_space<smem>>
    %c285 = arith.constant 285 : index
    %1278 = memref.load %arg2[%c285] : memref<288xf32, #tpu.memory_space<smem>>
    %1279 = vector.broadcast %1275 : f32 to vector<16x128xf32>
    %1280 = arith.mulf %1279, %1274 : vector<16x128xf32>
    %1281 = arith.addf %1261, %1280 : vector<16x128xf32>
    %1282 = vector.broadcast %1276 : f32 to vector<16x128xf32>
    %1283 = arith.mulf %1282, %1274 : vector<16x128xf32>
    %1284 = arith.addf %1264, %1283 : vector<16x128xf32>
    %1285 = vector.broadcast %1277 : f32 to vector<16x128xf32>
    %1286 = arith.mulf %1285, %1274 : vector<16x128xf32>
    %1287 = arith.addf %1267, %1286 : vector<16x128xf32>
    %1288 = vector.broadcast %1278 : f32 to vector<16x128xf32>
    %1289 = arith.mulf %1288, %1274 : vector<16x128xf32>
    %1290 = arith.addf %1270, %1289 : vector<16x128xf32>
    %1291 = vector.extract_strided_slice %215 {offsets = [2, 0], sizes = [16, 128], strides = [1, 1]} : vector<18x128xf32> to vector<16x128xf32>
    %c7_136 = arith.constant 7 : index
    %1292 = memref.load %arg2[%c7_136] : memref<288xf32, #tpu.memory_space<smem>>
    %c79 = arith.constant 79 : index
    %1293 = memref.load %arg2[%c79] : memref<288xf32, #tpu.memory_space<smem>>
    %c151 = arith.constant 151 : index
    %1294 = memref.load %arg2[%c151] : memref<288xf32, #tpu.memory_space<smem>>
    %c223 = arith.constant 223 : index
    %1295 = memref.load %arg2[%c223] : memref<288xf32, #tpu.memory_space<smem>>
    %1296 = vector.broadcast %1292 : f32 to vector<16x128xf32>
    %1297 = arith.mulf %1296, %1291 : vector<16x128xf32>
    %1298 = arith.addf %1281, %1297 : vector<16x128xf32>
    %1299 = vector.broadcast %1293 : f32 to vector<16x128xf32>
    %1300 = arith.mulf %1299, %1291 : vector<16x128xf32>
    %1301 = arith.addf %1284, %1300 : vector<16x128xf32>
    %1302 = vector.broadcast %1294 : f32 to vector<16x128xf32>
    %1303 = arith.mulf %1302, %1291 : vector<16x128xf32>
    %1304 = arith.addf %1287, %1303 : vector<16x128xf32>
    %1305 = vector.broadcast %1295 : f32 to vector<16x128xf32>
    %1306 = arith.mulf %1305, %1291 : vector<16x128xf32>
    %1307 = arith.addf %1290, %1306 : vector<16x128xf32>
    %1308 = vector.extract_strided_slice %216 {offsets = [2, 0], sizes = [16, 128], strides = [1, 1]} : vector<18x128xf32> to vector<16x128xf32>
    %c16_137 = arith.constant 16 : index
    %1309 = memref.load %arg2[%c16_137] : memref<288xf32, #tpu.memory_space<smem>>
    %c88 = arith.constant 88 : index
    %1310 = memref.load %arg2[%c88] : memref<288xf32, #tpu.memory_space<smem>>
    %c160 = arith.constant 160 : index
    %1311 = memref.load %arg2[%c160] : memref<288xf32, #tpu.memory_space<smem>>
    %c232 = arith.constant 232 : index
    %1312 = memref.load %arg2[%c232] : memref<288xf32, #tpu.memory_space<smem>>
    %1313 = vector.broadcast %1309 : f32 to vector<16x128xf32>
    %1314 = arith.mulf %1313, %1308 : vector<16x128xf32>
    %1315 = arith.addf %1298, %1314 : vector<16x128xf32>
    %1316 = vector.broadcast %1310 : f32 to vector<16x128xf32>
    %1317 = arith.mulf %1316, %1308 : vector<16x128xf32>
    %1318 = arith.addf %1301, %1317 : vector<16x128xf32>
    %1319 = vector.broadcast %1311 : f32 to vector<16x128xf32>
    %1320 = arith.mulf %1319, %1308 : vector<16x128xf32>
    %1321 = arith.addf %1304, %1320 : vector<16x128xf32>
    %1322 = vector.broadcast %1312 : f32 to vector<16x128xf32>
    %1323 = arith.mulf %1322, %1308 : vector<16x128xf32>
    %1324 = arith.addf %1307, %1323 : vector<16x128xf32>
    %1325 = vector.extract_strided_slice %217 {offsets = [2, 0], sizes = [16, 128], strides = [1, 1]} : vector<18x128xf32> to vector<16x128xf32>
    %c25_138 = arith.constant 25 : index
    %1326 = memref.load %arg2[%c25_138] : memref<288xf32, #tpu.memory_space<smem>>
    %c97 = arith.constant 97 : index
    %1327 = memref.load %arg2[%c97] : memref<288xf32, #tpu.memory_space<smem>>
    %c169 = arith.constant 169 : index
    %1328 = memref.load %arg2[%c169] : memref<288xf32, #tpu.memory_space<smem>>
    %c241 = arith.constant 241 : index
    %1329 = memref.load %arg2[%c241] : memref<288xf32, #tpu.memory_space<smem>>
    %1330 = vector.broadcast %1326 : f32 to vector<16x128xf32>
    %1331 = arith.mulf %1330, %1325 : vector<16x128xf32>
    %1332 = arith.addf %1315, %1331 : vector<16x128xf32>
    %1333 = vector.broadcast %1327 : f32 to vector<16x128xf32>
    %1334 = arith.mulf %1333, %1325 : vector<16x128xf32>
    %1335 = arith.addf %1318, %1334 : vector<16x128xf32>
    %1336 = vector.broadcast %1328 : f32 to vector<16x128xf32>
    %1337 = arith.mulf %1336, %1325 : vector<16x128xf32>
    %1338 = arith.addf %1321, %1337 : vector<16x128xf32>
    %1339 = vector.broadcast %1329 : f32 to vector<16x128xf32>
    %1340 = arith.mulf %1339, %1325 : vector<16x128xf32>
    %1341 = arith.addf %1324, %1340 : vector<16x128xf32>
    %1342 = vector.extract_strided_slice %218 {offsets = [2, 0], sizes = [16, 128], strides = [1, 1]} : vector<18x128xf32> to vector<16x128xf32>
    %c34 = arith.constant 34 : index
    %1343 = memref.load %arg2[%c34] : memref<288xf32, #tpu.memory_space<smem>>
    %c106 = arith.constant 106 : index
    %1344 = memref.load %arg2[%c106] : memref<288xf32, #tpu.memory_space<smem>>
    %c178 = arith.constant 178 : index
    %1345 = memref.load %arg2[%c178] : memref<288xf32, #tpu.memory_space<smem>>
    %c250 = arith.constant 250 : index
    %1346 = memref.load %arg2[%c250] : memref<288xf32, #tpu.memory_space<smem>>
    %1347 = vector.broadcast %1343 : f32 to vector<16x128xf32>
    %1348 = arith.mulf %1347, %1342 : vector<16x128xf32>
    %1349 = arith.addf %1332, %1348 : vector<16x128xf32>
    %1350 = vector.broadcast %1344 : f32 to vector<16x128xf32>
    %1351 = arith.mulf %1350, %1342 : vector<16x128xf32>
    %1352 = arith.addf %1335, %1351 : vector<16x128xf32>
    %1353 = vector.broadcast %1345 : f32 to vector<16x128xf32>
    %1354 = arith.mulf %1353, %1342 : vector<16x128xf32>
    %1355 = arith.addf %1338, %1354 : vector<16x128xf32>
    %1356 = vector.broadcast %1346 : f32 to vector<16x128xf32>
    %1357 = arith.mulf %1356, %1342 : vector<16x128xf32>
    %1358 = arith.addf %1341, %1357 : vector<16x128xf32>
    %1359 = vector.extract_strided_slice %219 {offsets = [2, 0], sizes = [16, 128], strides = [1, 1]} : vector<18x128xf32> to vector<16x128xf32>
    %c43 = arith.constant 43 : index
    %1360 = memref.load %arg2[%c43] : memref<288xf32, #tpu.memory_space<smem>>
    %c115 = arith.constant 115 : index
    %1361 = memref.load %arg2[%c115] : memref<288xf32, #tpu.memory_space<smem>>
    %c187 = arith.constant 187 : index
    %1362 = memref.load %arg2[%c187] : memref<288xf32, #tpu.memory_space<smem>>
    %c259 = arith.constant 259 : index
    %1363 = memref.load %arg2[%c259] : memref<288xf32, #tpu.memory_space<smem>>
    %1364 = vector.broadcast %1360 : f32 to vector<16x128xf32>
    %1365 = arith.mulf %1364, %1359 : vector<16x128xf32>
    %1366 = arith.addf %1349, %1365 : vector<16x128xf32>
    %1367 = vector.broadcast %1361 : f32 to vector<16x128xf32>
    %1368 = arith.mulf %1367, %1359 : vector<16x128xf32>
    %1369 = arith.addf %1352, %1368 : vector<16x128xf32>
    %1370 = vector.broadcast %1362 : f32 to vector<16x128xf32>
    %1371 = arith.mulf %1370, %1359 : vector<16x128xf32>
    %1372 = arith.addf %1355, %1371 : vector<16x128xf32>
    %1373 = vector.broadcast %1363 : f32 to vector<16x128xf32>
    %1374 = arith.mulf %1373, %1359 : vector<16x128xf32>
    %1375 = arith.addf %1358, %1374 : vector<16x128xf32>
    %1376 = vector.extract_strided_slice %220 {offsets = [2, 0], sizes = [16, 128], strides = [1, 1]} : vector<18x128xf32> to vector<16x128xf32>
    %c52 = arith.constant 52 : index
    %1377 = memref.load %arg2[%c52] : memref<288xf32, #tpu.memory_space<smem>>
    %c124 = arith.constant 124 : index
    %1378 = memref.load %arg2[%c124] : memref<288xf32, #tpu.memory_space<smem>>
    %c196 = arith.constant 196 : index
    %1379 = memref.load %arg2[%c196] : memref<288xf32, #tpu.memory_space<smem>>
    %c268 = arith.constant 268 : index
    %1380 = memref.load %arg2[%c268] : memref<288xf32, #tpu.memory_space<smem>>
    %1381 = vector.broadcast %1377 : f32 to vector<16x128xf32>
    %1382 = arith.mulf %1381, %1376 : vector<16x128xf32>
    %1383 = arith.addf %1366, %1382 : vector<16x128xf32>
    %1384 = vector.broadcast %1378 : f32 to vector<16x128xf32>
    %1385 = arith.mulf %1384, %1376 : vector<16x128xf32>
    %1386 = arith.addf %1369, %1385 : vector<16x128xf32>
    %1387 = vector.broadcast %1379 : f32 to vector<16x128xf32>
    %1388 = arith.mulf %1387, %1376 : vector<16x128xf32>
    %1389 = arith.addf %1372, %1388 : vector<16x128xf32>
    %1390 = vector.broadcast %1380 : f32 to vector<16x128xf32>
    %1391 = arith.mulf %1390, %1376 : vector<16x128xf32>
    %1392 = arith.addf %1375, %1391 : vector<16x128xf32>
    %1393 = vector.extract_strided_slice %221 {offsets = [2, 0], sizes = [16, 128], strides = [1, 1]} : vector<18x128xf32> to vector<16x128xf32>
    %c61 = arith.constant 61 : index
    %1394 = memref.load %arg2[%c61] : memref<288xf32, #tpu.memory_space<smem>>
    %c133 = arith.constant 133 : index
    %1395 = memref.load %arg2[%c133] : memref<288xf32, #tpu.memory_space<smem>>
    %c205 = arith.constant 205 : index
    %1396 = memref.load %arg2[%c205] : memref<288xf32, #tpu.memory_space<smem>>
    %c277 = arith.constant 277 : index
    %1397 = memref.load %arg2[%c277] : memref<288xf32, #tpu.memory_space<smem>>
    %1398 = vector.broadcast %1394 : f32 to vector<16x128xf32>
    %1399 = arith.mulf %1398, %1393 : vector<16x128xf32>
    %1400 = arith.addf %1383, %1399 : vector<16x128xf32>
    %1401 = vector.broadcast %1395 : f32 to vector<16x128xf32>
    %1402 = arith.mulf %1401, %1393 : vector<16x128xf32>
    %1403 = arith.addf %1386, %1402 : vector<16x128xf32>
    %1404 = vector.broadcast %1396 : f32 to vector<16x128xf32>
    %1405 = arith.mulf %1404, %1393 : vector<16x128xf32>
    %1406 = arith.addf %1389, %1405 : vector<16x128xf32>
    %1407 = vector.broadcast %1397 : f32 to vector<16x128xf32>
    %1408 = arith.mulf %1407, %1393 : vector<16x128xf32>
    %1409 = arith.addf %1392, %1408 : vector<16x128xf32>
    %1410 = vector.extract_strided_slice %222 {offsets = [2, 0], sizes = [16, 128], strides = [1, 1]} : vector<18x128xf32> to vector<16x128xf32>
    %c70 = arith.constant 70 : index
    %1411 = memref.load %arg2[%c70] : memref<288xf32, #tpu.memory_space<smem>>
    %c142 = arith.constant 142 : index
    %1412 = memref.load %arg2[%c142] : memref<288xf32, #tpu.memory_space<smem>>
    %c214 = arith.constant 214 : index
    %1413 = memref.load %arg2[%c214] : memref<288xf32, #tpu.memory_space<smem>>
    %c286 = arith.constant 286 : index
    %1414 = memref.load %arg2[%c286] : memref<288xf32, #tpu.memory_space<smem>>
    %1415 = vector.broadcast %1411 : f32 to vector<16x128xf32>
    %1416 = arith.mulf %1415, %1410 : vector<16x128xf32>
    %1417 = arith.addf %1400, %1416 : vector<16x128xf32>
    %1418 = vector.broadcast %1412 : f32 to vector<16x128xf32>
    %1419 = arith.mulf %1418, %1410 : vector<16x128xf32>
    %1420 = arith.addf %1403, %1419 : vector<16x128xf32>
    %1421 = vector.broadcast %1413 : f32 to vector<16x128xf32>
    %1422 = arith.mulf %1421, %1410 : vector<16x128xf32>
    %1423 = arith.addf %1406, %1422 : vector<16x128xf32>
    %1424 = vector.broadcast %1414 : f32 to vector<16x128xf32>
    %1425 = arith.mulf %1424, %1410 : vector<16x128xf32>
    %1426 = arith.addf %1409, %1425 : vector<16x128xf32>
    %1427 = vector.extract_strided_slice %215 {offsets = [2, 0], sizes = [16, 128], strides = [1, 1]} : vector<18x128xf32> to vector<16x128xf32>
    %c127_i32_139 = arith.constant 127 : i32
    %1428 = tpu.dynamic_rotate %1427 by %c127_i32_139 dim 1 : vector<16x128xf32>, i32 -> vector<16x128xf32>
    %cst_140 = arith.constant 0.000000e+00 : f32
    %1429 = vector.broadcast %cst_140 : f32 to vector<16x128xf32>
    %1430 = arith.select %29, %1428, %1429 : vector<16x128xi1>, vector<16x128xf32>
    %c8_141 = arith.constant 8 : index
    %1431 = memref.load %arg2[%c8_141] : memref<288xf32, #tpu.memory_space<smem>>
    %c80 = arith.constant 80 : index
    %1432 = memref.load %arg2[%c80] : memref<288xf32, #tpu.memory_space<smem>>
    %c152 = arith.constant 152 : index
    %1433 = memref.load %arg2[%c152] : memref<288xf32, #tpu.memory_space<smem>>
    %c224 = arith.constant 224 : index
    %1434 = memref.load %arg2[%c224] : memref<288xf32, #tpu.memory_space<smem>>
    %1435 = vector.broadcast %1431 : f32 to vector<16x128xf32>
    %1436 = arith.mulf %1435, %1430 : vector<16x128xf32>
    %1437 = arith.addf %1417, %1436 : vector<16x128xf32>
    %1438 = vector.broadcast %1432 : f32 to vector<16x128xf32>
    %1439 = arith.mulf %1438, %1430 : vector<16x128xf32>
    %1440 = arith.addf %1420, %1439 : vector<16x128xf32>
    %1441 = vector.broadcast %1433 : f32 to vector<16x128xf32>
    %1442 = arith.mulf %1441, %1430 : vector<16x128xf32>
    %1443 = arith.addf %1423, %1442 : vector<16x128xf32>
    %1444 = vector.broadcast %1434 : f32 to vector<16x128xf32>
    %1445 = arith.mulf %1444, %1430 : vector<16x128xf32>
    %1446 = arith.addf %1426, %1445 : vector<16x128xf32>
    %1447 = vector.extract_strided_slice %216 {offsets = [2, 0], sizes = [16, 128], strides = [1, 1]} : vector<18x128xf32> to vector<16x128xf32>
    %c127_i32_142 = arith.constant 127 : i32
    %1448 = tpu.dynamic_rotate %1447 by %c127_i32_142 dim 1 : vector<16x128xf32>, i32 -> vector<16x128xf32>
    %cst_143 = arith.constant 0.000000e+00 : f32
    %1449 = vector.broadcast %cst_143 : f32 to vector<16x128xf32>
    %1450 = arith.select %29, %1448, %1449 : vector<16x128xi1>, vector<16x128xf32>
    %c17_144 = arith.constant 17 : index
    %1451 = memref.load %arg2[%c17_144] : memref<288xf32, #tpu.memory_space<smem>>
    %c89 = arith.constant 89 : index
    %1452 = memref.load %arg2[%c89] : memref<288xf32, #tpu.memory_space<smem>>
    %c161 = arith.constant 161 : index
    %1453 = memref.load %arg2[%c161] : memref<288xf32, #tpu.memory_space<smem>>
    %c233 = arith.constant 233 : index
    %1454 = memref.load %arg2[%c233] : memref<288xf32, #tpu.memory_space<smem>>
    %1455 = vector.broadcast %1451 : f32 to vector<16x128xf32>
    %1456 = arith.mulf %1455, %1450 : vector<16x128xf32>
    %1457 = arith.addf %1437, %1456 : vector<16x128xf32>
    %1458 = vector.broadcast %1452 : f32 to vector<16x128xf32>
    %1459 = arith.mulf %1458, %1450 : vector<16x128xf32>
    %1460 = arith.addf %1440, %1459 : vector<16x128xf32>
    %1461 = vector.broadcast %1453 : f32 to vector<16x128xf32>
    %1462 = arith.mulf %1461, %1450 : vector<16x128xf32>
    %1463 = arith.addf %1443, %1462 : vector<16x128xf32>
    %1464 = vector.broadcast %1454 : f32 to vector<16x128xf32>
    %1465 = arith.mulf %1464, %1450 : vector<16x128xf32>
    %1466 = arith.addf %1446, %1465 : vector<16x128xf32>
    %1467 = vector.extract_strided_slice %217 {offsets = [2, 0], sizes = [16, 128], strides = [1, 1]} : vector<18x128xf32> to vector<16x128xf32>
    %c127_i32_145 = arith.constant 127 : i32
    %1468 = tpu.dynamic_rotate %1467 by %c127_i32_145 dim 1 : vector<16x128xf32>, i32 -> vector<16x128xf32>
    %cst_146 = arith.constant 0.000000e+00 : f32
    %1469 = vector.broadcast %cst_146 : f32 to vector<16x128xf32>
    %1470 = arith.select %29, %1468, %1469 : vector<16x128xi1>, vector<16x128xf32>
    %c26_147 = arith.constant 26 : index
    %1471 = memref.load %arg2[%c26_147] : memref<288xf32, #tpu.memory_space<smem>>
    %c98 = arith.constant 98 : index
    %1472 = memref.load %arg2[%c98] : memref<288xf32, #tpu.memory_space<smem>>
    %c170 = arith.constant 170 : index
    %1473 = memref.load %arg2[%c170] : memref<288xf32, #tpu.memory_space<smem>>
    %c242 = arith.constant 242 : index
    %1474 = memref.load %arg2[%c242] : memref<288xf32, #tpu.memory_space<smem>>
    %1475 = vector.broadcast %1471 : f32 to vector<16x128xf32>
    %1476 = arith.mulf %1475, %1470 : vector<16x128xf32>
    %1477 = arith.addf %1457, %1476 : vector<16x128xf32>
    %1478 = vector.broadcast %1472 : f32 to vector<16x128xf32>
    %1479 = arith.mulf %1478, %1470 : vector<16x128xf32>
    %1480 = arith.addf %1460, %1479 : vector<16x128xf32>
    %1481 = vector.broadcast %1473 : f32 to vector<16x128xf32>
    %1482 = arith.mulf %1481, %1470 : vector<16x128xf32>
    %1483 = arith.addf %1463, %1482 : vector<16x128xf32>
    %1484 = vector.broadcast %1474 : f32 to vector<16x128xf32>
    %1485 = arith.mulf %1484, %1470 : vector<16x128xf32>
    %1486 = arith.addf %1466, %1485 : vector<16x128xf32>
    %1487 = vector.extract_strided_slice %218 {offsets = [2, 0], sizes = [16, 128], strides = [1, 1]} : vector<18x128xf32> to vector<16x128xf32>
    %c127_i32_148 = arith.constant 127 : i32
    %1488 = tpu.dynamic_rotate %1487 by %c127_i32_148 dim 1 : vector<16x128xf32>, i32 -> vector<16x128xf32>
    %cst_149 = arith.constant 0.000000e+00 : f32
    %1489 = vector.broadcast %cst_149 : f32 to vector<16x128xf32>
    %1490 = arith.select %29, %1488, %1489 : vector<16x128xi1>, vector<16x128xf32>
    %c35 = arith.constant 35 : index
    %1491 = memref.load %arg2[%c35] : memref<288xf32, #tpu.memory_space<smem>>
    %c107 = arith.constant 107 : index
    %1492 = memref.load %arg2[%c107] : memref<288xf32, #tpu.memory_space<smem>>
    %c179 = arith.constant 179 : index
    %1493 = memref.load %arg2[%c179] : memref<288xf32, #tpu.memory_space<smem>>
    %c251 = arith.constant 251 : index
    %1494 = memref.load %arg2[%c251] : memref<288xf32, #tpu.memory_space<smem>>
    %1495 = vector.broadcast %1491 : f32 to vector<16x128xf32>
    %1496 = arith.mulf %1495, %1490 : vector<16x128xf32>
    %1497 = arith.addf %1477, %1496 : vector<16x128xf32>
    %1498 = vector.broadcast %1492 : f32 to vector<16x128xf32>
    %1499 = arith.mulf %1498, %1490 : vector<16x128xf32>
    %1500 = arith.addf %1480, %1499 : vector<16x128xf32>
    %1501 = vector.broadcast %1493 : f32 to vector<16x128xf32>
    %1502 = arith.mulf %1501, %1490 : vector<16x128xf32>
    %1503 = arith.addf %1483, %1502 : vector<16x128xf32>
    %1504 = vector.broadcast %1494 : f32 to vector<16x128xf32>
    %1505 = arith.mulf %1504, %1490 : vector<16x128xf32>
    %1506 = arith.addf %1486, %1505 : vector<16x128xf32>
    %1507 = vector.extract_strided_slice %219 {offsets = [2, 0], sizes = [16, 128], strides = [1, 1]} : vector<18x128xf32> to vector<16x128xf32>
    %c127_i32_150 = arith.constant 127 : i32
    %1508 = tpu.dynamic_rotate %1507 by %c127_i32_150 dim 1 : vector<16x128xf32>, i32 -> vector<16x128xf32>
    %cst_151 = arith.constant 0.000000e+00 : f32
    %1509 = vector.broadcast %cst_151 : f32 to vector<16x128xf32>
    %1510 = arith.select %29, %1508, %1509 : vector<16x128xi1>, vector<16x128xf32>
    %c44 = arith.constant 44 : index
    %1511 = memref.load %arg2[%c44] : memref<288xf32, #tpu.memory_space<smem>>
    %c116 = arith.constant 116 : index
    %1512 = memref.load %arg2[%c116] : memref<288xf32, #tpu.memory_space<smem>>
    %c188 = arith.constant 188 : index
    %1513 = memref.load %arg2[%c188] : memref<288xf32, #tpu.memory_space<smem>>
    %c260 = arith.constant 260 : index
    %1514 = memref.load %arg2[%c260] : memref<288xf32, #tpu.memory_space<smem>>
    %1515 = vector.broadcast %1511 : f32 to vector<16x128xf32>
    %1516 = arith.mulf %1515, %1510 : vector<16x128xf32>
    %1517 = arith.addf %1497, %1516 : vector<16x128xf32>
    %1518 = vector.broadcast %1512 : f32 to vector<16x128xf32>
    %1519 = arith.mulf %1518, %1510 : vector<16x128xf32>
    %1520 = arith.addf %1500, %1519 : vector<16x128xf32>
    %1521 = vector.broadcast %1513 : f32 to vector<16x128xf32>
    %1522 = arith.mulf %1521, %1510 : vector<16x128xf32>
    %1523 = arith.addf %1503, %1522 : vector<16x128xf32>
    %1524 = vector.broadcast %1514 : f32 to vector<16x128xf32>
    %1525 = arith.mulf %1524, %1510 : vector<16x128xf32>
    %1526 = arith.addf %1506, %1525 : vector<16x128xf32>
    %1527 = vector.extract_strided_slice %220 {offsets = [2, 0], sizes = [16, 128], strides = [1, 1]} : vector<18x128xf32> to vector<16x128xf32>
    %c127_i32_152 = arith.constant 127 : i32
    %1528 = tpu.dynamic_rotate %1527 by %c127_i32_152 dim 1 : vector<16x128xf32>, i32 -> vector<16x128xf32>
    %cst_153 = arith.constant 0.000000e+00 : f32
    %1529 = vector.broadcast %cst_153 : f32 to vector<16x128xf32>
    %1530 = arith.select %29, %1528, %1529 : vector<16x128xi1>, vector<16x128xf32>
    %c53 = arith.constant 53 : index
    %1531 = memref.load %arg2[%c53] : memref<288xf32, #tpu.memory_space<smem>>
    %c125 = arith.constant 125 : index
    %1532 = memref.load %arg2[%c125] : memref<288xf32, #tpu.memory_space<smem>>
    %c197 = arith.constant 197 : index
    %1533 = memref.load %arg2[%c197] : memref<288xf32, #tpu.memory_space<smem>>
    %c269 = arith.constant 269 : index
    %1534 = memref.load %arg2[%c269] : memref<288xf32, #tpu.memory_space<smem>>
    %1535 = vector.broadcast %1531 : f32 to vector<16x128xf32>
    %1536 = arith.mulf %1535, %1530 : vector<16x128xf32>
    %1537 = arith.addf %1517, %1536 : vector<16x128xf32>
    %1538 = vector.broadcast %1532 : f32 to vector<16x128xf32>
    %1539 = arith.mulf %1538, %1530 : vector<16x128xf32>
    %1540 = arith.addf %1520, %1539 : vector<16x128xf32>
    %1541 = vector.broadcast %1533 : f32 to vector<16x128xf32>
    %1542 = arith.mulf %1541, %1530 : vector<16x128xf32>
    %1543 = arith.addf %1523, %1542 : vector<16x128xf32>
    %1544 = vector.broadcast %1534 : f32 to vector<16x128xf32>
    %1545 = arith.mulf %1544, %1530 : vector<16x128xf32>
    %1546 = arith.addf %1526, %1545 : vector<16x128xf32>
    %1547 = vector.extract_strided_slice %221 {offsets = [2, 0], sizes = [16, 128], strides = [1, 1]} : vector<18x128xf32> to vector<16x128xf32>
    %c127_i32_154 = arith.constant 127 : i32
    %1548 = tpu.dynamic_rotate %1547 by %c127_i32_154 dim 1 : vector<16x128xf32>, i32 -> vector<16x128xf32>
    %cst_155 = arith.constant 0.000000e+00 : f32
    %1549 = vector.broadcast %cst_155 : f32 to vector<16x128xf32>
    %1550 = arith.select %29, %1548, %1549 : vector<16x128xi1>, vector<16x128xf32>
    %c62 = arith.constant 62 : index
    %1551 = memref.load %arg2[%c62] : memref<288xf32, #tpu.memory_space<smem>>
    %c134 = arith.constant 134 : index
    %1552 = memref.load %arg2[%c134] : memref<288xf32, #tpu.memory_space<smem>>
    %c206 = arith.constant 206 : index
    %1553 = memref.load %arg2[%c206] : memref<288xf32, #tpu.memory_space<smem>>
    %c278 = arith.constant 278 : index
    %1554 = memref.load %arg2[%c278] : memref<288xf32, #tpu.memory_space<smem>>
    %1555 = vector.broadcast %1551 : f32 to vector<16x128xf32>
    %1556 = arith.mulf %1555, %1550 : vector<16x128xf32>
    %1557 = arith.addf %1537, %1556 : vector<16x128xf32>
    %1558 = vector.broadcast %1552 : f32 to vector<16x128xf32>
    %1559 = arith.mulf %1558, %1550 : vector<16x128xf32>
    %1560 = arith.addf %1540, %1559 : vector<16x128xf32>
    %1561 = vector.broadcast %1553 : f32 to vector<16x128xf32>
    %1562 = arith.mulf %1561, %1550 : vector<16x128xf32>
    %1563 = arith.addf %1543, %1562 : vector<16x128xf32>
    %1564 = vector.broadcast %1554 : f32 to vector<16x128xf32>
    %1565 = arith.mulf %1564, %1550 : vector<16x128xf32>
    %1566 = arith.addf %1546, %1565 : vector<16x128xf32>
    %1567 = vector.extract_strided_slice %222 {offsets = [2, 0], sizes = [16, 128], strides = [1, 1]} : vector<18x128xf32> to vector<16x128xf32>
    %c127_i32_156 = arith.constant 127 : i32
    %1568 = tpu.dynamic_rotate %1567 by %c127_i32_156 dim 1 : vector<16x128xf32>, i32 -> vector<16x128xf32>
    %cst_157 = arith.constant 0.000000e+00 : f32
    %1569 = vector.broadcast %cst_157 : f32 to vector<16x128xf32>
    %1570 = arith.select %29, %1568, %1569 : vector<16x128xi1>, vector<16x128xf32>
    %c71 = arith.constant 71 : index
    %1571 = memref.load %arg2[%c71] : memref<288xf32, #tpu.memory_space<smem>>
    %c143 = arith.constant 143 : index
    %1572 = memref.load %arg2[%c143] : memref<288xf32, #tpu.memory_space<smem>>
    %c215 = arith.constant 215 : index
    %1573 = memref.load %arg2[%c215] : memref<288xf32, #tpu.memory_space<smem>>
    %c287 = arith.constant 287 : index
    %1574 = memref.load %arg2[%c287] : memref<288xf32, #tpu.memory_space<smem>>
    %1575 = vector.broadcast %1571 : f32 to vector<16x128xf32>
    %1576 = arith.mulf %1575, %1570 : vector<16x128xf32>
    %1577 = arith.addf %1557, %1576 : vector<16x128xf32>
    %1578 = vector.broadcast %1572 : f32 to vector<16x128xf32>
    %1579 = arith.mulf %1578, %1570 : vector<16x128xf32>
    %1580 = arith.addf %1560, %1579 : vector<16x128xf32>
    %1581 = vector.broadcast %1573 : f32 to vector<16x128xf32>
    %1582 = arith.mulf %1581, %1570 : vector<16x128xf32>
    %1583 = arith.addf %1563, %1582 : vector<16x128xf32>
    %1584 = vector.broadcast %1574 : f32 to vector<16x128xf32>
    %1585 = arith.mulf %1584, %1570 : vector<16x128xf32>
    %1586 = arith.addf %1566, %1585 : vector<16x128xf32>
    %cst_158 = arith.constant 0.000000e+00 : f32
    %1587 = vector.broadcast %cst_158 : f32 to vector<16x128xf32>
    %1588 = arith.cmpf ogt, %1577, %1587 : vector<16x128xf32>
    %1589 = math.exp %1577 : vector<16x128xf32>
    %cst_159 = arith.constant 1.000000e+00 : f32
    %1590 = vector.broadcast %cst_159 : f32 to vector<16x128xf32>
    %1591 = arith.subf %1589, %1590 : vector<16x128xf32>
    %cst_160 = arith.constant 1.67326319 : f32
    %1592 = vector.broadcast %cst_160 : f32 to vector<16x128xf32>
    %1593 = arith.mulf %1592, %1591 : vector<16x128xf32>
    %1594 = arith.select %1588, %1577, %1593 : vector<16x128xi1>, vector<16x128xf32>
    %cst_161 = arith.constant 0.000000e+00 : f32
    %1595 = vector.broadcast %cst_161 : f32 to vector<16x128xf32>
    %1596 = arith.cmpf ogt, %1580, %1595 : vector<16x128xf32>
    %1597 = math.exp %1580 : vector<16x128xf32>
    %cst_162 = arith.constant 1.000000e+00 : f32
    %1598 = vector.broadcast %cst_162 : f32 to vector<16x128xf32>
    %1599 = arith.subf %1597, %1598 : vector<16x128xf32>
    %cst_163 = arith.constant 1.67326319 : f32
    %1600 = vector.broadcast %cst_163 : f32 to vector<16x128xf32>
    %1601 = arith.mulf %1600, %1599 : vector<16x128xf32>
    %1602 = arith.select %1596, %1580, %1601 : vector<16x128xi1>, vector<16x128xf32>
    %cst_164 = arith.constant 0.000000e+00 : f32
    %1603 = vector.broadcast %cst_164 : f32 to vector<16x128xf32>
    %1604 = arith.cmpf ogt, %1583, %1603 : vector<16x128xf32>
    %1605 = math.exp %1583 : vector<16x128xf32>
    %cst_165 = arith.constant 1.000000e+00 : f32
    %1606 = vector.broadcast %cst_165 : f32 to vector<16x128xf32>
    %1607 = arith.subf %1605, %1606 : vector<16x128xf32>
    %cst_166 = arith.constant 1.67326319 : f32
    %1608 = vector.broadcast %cst_166 : f32 to vector<16x128xf32>
    %1609 = arith.mulf %1608, %1607 : vector<16x128xf32>
    %1610 = arith.select %1604, %1583, %1609 : vector<16x128xi1>, vector<16x128xf32>
    %cst_167 = arith.constant 0.000000e+00 : f32
    %1611 = vector.broadcast %cst_167 : f32 to vector<16x128xf32>
    %1612 = arith.cmpf ogt, %1586, %1611 : vector<16x128xf32>
    %1613 = math.exp %1586 : vector<16x128xf32>
    %cst_168 = arith.constant 1.000000e+00 : f32
    %1614 = vector.broadcast %cst_168 : f32 to vector<16x128xf32>
    %1615 = arith.subf %1613, %1614 : vector<16x128xf32>
    %cst_169 = arith.constant 1.67326319 : f32
    %1616 = vector.broadcast %cst_169 : f32 to vector<16x128xf32>
    %1617 = arith.mulf %1616, %1615 : vector<16x128xf32>
    %1618 = arith.select %1612, %1586, %1617 : vector<16x128xi1>, vector<16x128xf32>
    %cst_170 = arith.constant 0.000000e+00 : f32
    %1619 = vector.broadcast %cst_170 : f32 to vector<1x128xf32>
    %1620 = tpu.concatenate %1619, %1594, %1619 in 0 : vector<1x128xf32>, vector<16x128xf32>, vector<1x128xf32> -> vector<18x128xf32>
    %1621 = tpu.concatenate %1619, %1602, %1619 in 0 : vector<1x128xf32>, vector<16x128xf32>, vector<1x128xf32> -> vector<18x128xf32>
    %1622 = tpu.concatenate %1619, %1610, %1619 in 0 : vector<1x128xf32>, vector<16x128xf32>, vector<1x128xf32> -> vector<18x128xf32>
    %1623 = tpu.concatenate %1619, %1618, %1619 in 0 : vector<1x128xf32>, vector<16x128xf32>, vector<1x128xf32> -> vector<18x128xf32>
    %1624 = vector.extract_strided_slice %1620 {offsets = [0, 0], sizes = [16, 128], strides = [1, 1]} : vector<18x128xf32> to vector<16x128xf32>
    %c1_i32_171 = arith.constant 1 : i32
    %1625 = tpu.dynamic_rotate %1624 by %c1_i32_171 dim 1 : vector<16x128xf32>, i32 -> vector<16x128xf32>
    %cst_172 = arith.constant 0.000000e+00 : f32
    %1626 = vector.broadcast %cst_172 : f32 to vector<16x128xf32>
    %1627 = arith.select %27, %1625, %1626 : vector<16x128xi1>, vector<16x128xf32>
    %c0_173 = arith.constant 0 : index
    %1628 = memref.load %arg3[%c0_173] : memref<144xf32, #tpu.memory_space<smem>>
    %c36_174 = arith.constant 36 : index
    %1629 = memref.load %arg3[%c36_174] : memref<144xf32, #tpu.memory_space<smem>>
    %c72_175 = arith.constant 72 : index
    %1630 = memref.load %arg3[%c72_175] : memref<144xf32, #tpu.memory_space<smem>>
    %c108_176 = arith.constant 108 : index
    %1631 = memref.load %arg3[%c108_176] : memref<144xf32, #tpu.memory_space<smem>>
    %1632 = vector.broadcast %1628 : f32 to vector<16x128xf32>
    %1633 = arith.mulf %1632, %1627 : vector<16x128xf32>
    %1634 = vector.broadcast %1629 : f32 to vector<16x128xf32>
    %1635 = arith.mulf %1634, %1627 : vector<16x128xf32>
    %1636 = vector.broadcast %1630 : f32 to vector<16x128xf32>
    %1637 = arith.mulf %1636, %1627 : vector<16x128xf32>
    %1638 = vector.broadcast %1631 : f32 to vector<16x128xf32>
    %1639 = arith.mulf %1638, %1627 : vector<16x128xf32>
    %1640 = vector.extract_strided_slice %1621 {offsets = [0, 0], sizes = [16, 128], strides = [1, 1]} : vector<18x128xf32> to vector<16x128xf32>
    %c1_i32_177 = arith.constant 1 : i32
    %1641 = tpu.dynamic_rotate %1640 by %c1_i32_177 dim 1 : vector<16x128xf32>, i32 -> vector<16x128xf32>
    %cst_178 = arith.constant 0.000000e+00 : f32
    %1642 = vector.broadcast %cst_178 : f32 to vector<16x128xf32>
    %1643 = arith.select %27, %1641, %1642 : vector<16x128xi1>, vector<16x128xf32>
    %c9_179 = arith.constant 9 : index
    %1644 = memref.load %arg3[%c9_179] : memref<144xf32, #tpu.memory_space<smem>>
    %c45_180 = arith.constant 45 : index
    %1645 = memref.load %arg3[%c45_180] : memref<144xf32, #tpu.memory_space<smem>>
    %c81_181 = arith.constant 81 : index
    %1646 = memref.load %arg3[%c81_181] : memref<144xf32, #tpu.memory_space<smem>>
    %c117_182 = arith.constant 117 : index
    %1647 = memref.load %arg3[%c117_182] : memref<144xf32, #tpu.memory_space<smem>>
    %1648 = vector.broadcast %1644 : f32 to vector<16x128xf32>
    %1649 = arith.mulf %1648, %1643 : vector<16x128xf32>
    %1650 = arith.addf %1633, %1649 : vector<16x128xf32>
    %1651 = vector.broadcast %1645 : f32 to vector<16x128xf32>
    %1652 = arith.mulf %1651, %1643 : vector<16x128xf32>
    %1653 = arith.addf %1635, %1652 : vector<16x128xf32>
    %1654 = vector.broadcast %1646 : f32 to vector<16x128xf32>
    %1655 = arith.mulf %1654, %1643 : vector<16x128xf32>
    %1656 = arith.addf %1637, %1655 : vector<16x128xf32>
    %1657 = vector.broadcast %1647 : f32 to vector<16x128xf32>
    %1658 = arith.mulf %1657, %1643 : vector<16x128xf32>
    %1659 = arith.addf %1639, %1658 : vector<16x128xf32>
    %1660 = vector.extract_strided_slice %1622 {offsets = [0, 0], sizes = [16, 128], strides = [1, 1]} : vector<18x128xf32> to vector<16x128xf32>
    %c1_i32_183 = arith.constant 1 : i32
    %1661 = tpu.dynamic_rotate %1660 by %c1_i32_183 dim 1 : vector<16x128xf32>, i32 -> vector<16x128xf32>
    %cst_184 = arith.constant 0.000000e+00 : f32
    %1662 = vector.broadcast %cst_184 : f32 to vector<16x128xf32>
    %1663 = arith.select %27, %1661, %1662 : vector<16x128xi1>, vector<16x128xf32>
    %c18_185 = arith.constant 18 : index
    %1664 = memref.load %arg3[%c18_185] : memref<144xf32, #tpu.memory_space<smem>>
    %c54_186 = arith.constant 54 : index
    %1665 = memref.load %arg3[%c54_186] : memref<144xf32, #tpu.memory_space<smem>>
    %c90_187 = arith.constant 90 : index
    %1666 = memref.load %arg3[%c90_187] : memref<144xf32, #tpu.memory_space<smem>>
    %c126_188 = arith.constant 126 : index
    %1667 = memref.load %arg3[%c126_188] : memref<144xf32, #tpu.memory_space<smem>>
    %1668 = vector.broadcast %1664 : f32 to vector<16x128xf32>
    %1669 = arith.mulf %1668, %1663 : vector<16x128xf32>
    %1670 = arith.addf %1650, %1669 : vector<16x128xf32>
    %1671 = vector.broadcast %1665 : f32 to vector<16x128xf32>
    %1672 = arith.mulf %1671, %1663 : vector<16x128xf32>
    %1673 = arith.addf %1653, %1672 : vector<16x128xf32>
    %1674 = vector.broadcast %1666 : f32 to vector<16x128xf32>
    %1675 = arith.mulf %1674, %1663 : vector<16x128xf32>
    %1676 = arith.addf %1656, %1675 : vector<16x128xf32>
    %1677 = vector.broadcast %1667 : f32 to vector<16x128xf32>
    %1678 = arith.mulf %1677, %1663 : vector<16x128xf32>
    %1679 = arith.addf %1659, %1678 : vector<16x128xf32>
    %1680 = vector.extract_strided_slice %1623 {offsets = [0, 0], sizes = [16, 128], strides = [1, 1]} : vector<18x128xf32> to vector<16x128xf32>
    %c1_i32_189 = arith.constant 1 : i32
    %1681 = tpu.dynamic_rotate %1680 by %c1_i32_189 dim 1 : vector<16x128xf32>, i32 -> vector<16x128xf32>
    %cst_190 = arith.constant 0.000000e+00 : f32
    %1682 = vector.broadcast %cst_190 : f32 to vector<16x128xf32>
    %1683 = arith.select %27, %1681, %1682 : vector<16x128xi1>, vector<16x128xf32>
    %c27_191 = arith.constant 27 : index
    %1684 = memref.load %arg3[%c27_191] : memref<144xf32, #tpu.memory_space<smem>>
    %c63_192 = arith.constant 63 : index
    %1685 = memref.load %arg3[%c63_192] : memref<144xf32, #tpu.memory_space<smem>>
    %c99_193 = arith.constant 99 : index
    %1686 = memref.load %arg3[%c99_193] : memref<144xf32, #tpu.memory_space<smem>>
    %c135_194 = arith.constant 135 : index
    %1687 = memref.load %arg3[%c135_194] : memref<144xf32, #tpu.memory_space<smem>>
    %1688 = vector.broadcast %1684 : f32 to vector<16x128xf32>
    %1689 = arith.mulf %1688, %1683 : vector<16x128xf32>
    %1690 = arith.addf %1670, %1689 : vector<16x128xf32>
    %1691 = vector.broadcast %1685 : f32 to vector<16x128xf32>
    %1692 = arith.mulf %1691, %1683 : vector<16x128xf32>
    %1693 = arith.addf %1673, %1692 : vector<16x128xf32>
    %1694 = vector.broadcast %1686 : f32 to vector<16x128xf32>
    %1695 = arith.mulf %1694, %1683 : vector<16x128xf32>
    %1696 = arith.addf %1676, %1695 : vector<16x128xf32>
    %1697 = vector.broadcast %1687 : f32 to vector<16x128xf32>
    %1698 = arith.mulf %1697, %1683 : vector<16x128xf32>
    %1699 = arith.addf %1679, %1698 : vector<16x128xf32>
    %1700 = vector.extract_strided_slice %1620 {offsets = [0, 0], sizes = [16, 128], strides = [1, 1]} : vector<18x128xf32> to vector<16x128xf32>
    %c1_195 = arith.constant 1 : index
    %1701 = memref.load %arg3[%c1_195] : memref<144xf32, #tpu.memory_space<smem>>
    %c37_196 = arith.constant 37 : index
    %1702 = memref.load %arg3[%c37_196] : memref<144xf32, #tpu.memory_space<smem>>
    %c73_197 = arith.constant 73 : index
    %1703 = memref.load %arg3[%c73_197] : memref<144xf32, #tpu.memory_space<smem>>
    %c109_198 = arith.constant 109 : index
    %1704 = memref.load %arg3[%c109_198] : memref<144xf32, #tpu.memory_space<smem>>
    %1705 = vector.broadcast %1701 : f32 to vector<16x128xf32>
    %1706 = arith.mulf %1705, %1700 : vector<16x128xf32>
    %1707 = arith.addf %1690, %1706 : vector<16x128xf32>
    %1708 = vector.broadcast %1702 : f32 to vector<16x128xf32>
    %1709 = arith.mulf %1708, %1700 : vector<16x128xf32>
    %1710 = arith.addf %1693, %1709 : vector<16x128xf32>
    %1711 = vector.broadcast %1703 : f32 to vector<16x128xf32>
    %1712 = arith.mulf %1711, %1700 : vector<16x128xf32>
    %1713 = arith.addf %1696, %1712 : vector<16x128xf32>
    %1714 = vector.broadcast %1704 : f32 to vector<16x128xf32>
    %1715 = arith.mulf %1714, %1700 : vector<16x128xf32>
    %1716 = arith.addf %1699, %1715 : vector<16x128xf32>
    %1717 = vector.extract_strided_slice %1621 {offsets = [0, 0], sizes = [16, 128], strides = [1, 1]} : vector<18x128xf32> to vector<16x128xf32>
    %c10_199 = arith.constant 10 : index
    %1718 = memref.load %arg3[%c10_199] : memref<144xf32, #tpu.memory_space<smem>>
    %c46_200 = arith.constant 46 : index
    %1719 = memref.load %arg3[%c46_200] : memref<144xf32, #tpu.memory_space<smem>>
    %c82_201 = arith.constant 82 : index
    %1720 = memref.load %arg3[%c82_201] : memref<144xf32, #tpu.memory_space<smem>>
    %c118_202 = arith.constant 118 : index
    %1721 = memref.load %arg3[%c118_202] : memref<144xf32, #tpu.memory_space<smem>>
    %1722 = vector.broadcast %1718 : f32 to vector<16x128xf32>
    %1723 = arith.mulf %1722, %1717 : vector<16x128xf32>
    %1724 = arith.addf %1707, %1723 : vector<16x128xf32>
    %1725 = vector.broadcast %1719 : f32 to vector<16x128xf32>
    %1726 = arith.mulf %1725, %1717 : vector<16x128xf32>
    %1727 = arith.addf %1710, %1726 : vector<16x128xf32>
    %1728 = vector.broadcast %1720 : f32 to vector<16x128xf32>
    %1729 = arith.mulf %1728, %1717 : vector<16x128xf32>
    %1730 = arith.addf %1713, %1729 : vector<16x128xf32>
    %1731 = vector.broadcast %1721 : f32 to vector<16x128xf32>
    %1732 = arith.mulf %1731, %1717 : vector<16x128xf32>
    %1733 = arith.addf %1716, %1732 : vector<16x128xf32>
    %1734 = vector.extract_strided_slice %1622 {offsets = [0, 0], sizes = [16, 128], strides = [1, 1]} : vector<18x128xf32> to vector<16x128xf32>
    %c19_203 = arith.constant 19 : index
    %1735 = memref.load %arg3[%c19_203] : memref<144xf32, #tpu.memory_space<smem>>
    %c55_204 = arith.constant 55 : index
    %1736 = memref.load %arg3[%c55_204] : memref<144xf32, #tpu.memory_space<smem>>
    %c91_205 = arith.constant 91 : index
    %1737 = memref.load %arg3[%c91_205] : memref<144xf32, #tpu.memory_space<smem>>
    %c127_206 = arith.constant 127 : index
    %1738 = memref.load %arg3[%c127_206] : memref<144xf32, #tpu.memory_space<smem>>
    %1739 = vector.broadcast %1735 : f32 to vector<16x128xf32>
    %1740 = arith.mulf %1739, %1734 : vector<16x128xf32>
    %1741 = arith.addf %1724, %1740 : vector<16x128xf32>
    %1742 = vector.broadcast %1736 : f32 to vector<16x128xf32>
    %1743 = arith.mulf %1742, %1734 : vector<16x128xf32>
    %1744 = arith.addf %1727, %1743 : vector<16x128xf32>
    %1745 = vector.broadcast %1737 : f32 to vector<16x128xf32>
    %1746 = arith.mulf %1745, %1734 : vector<16x128xf32>
    %1747 = arith.addf %1730, %1746 : vector<16x128xf32>
    %1748 = vector.broadcast %1738 : f32 to vector<16x128xf32>
    %1749 = arith.mulf %1748, %1734 : vector<16x128xf32>
    %1750 = arith.addf %1733, %1749 : vector<16x128xf32>
    %1751 = vector.extract_strided_slice %1623 {offsets = [0, 0], sizes = [16, 128], strides = [1, 1]} : vector<18x128xf32> to vector<16x128xf32>
    %c28_207 = arith.constant 28 : index
    %1752 = memref.load %arg3[%c28_207] : memref<144xf32, #tpu.memory_space<smem>>
    %c64_208 = arith.constant 64 : index
    %1753 = memref.load %arg3[%c64_208] : memref<144xf32, #tpu.memory_space<smem>>
    %c100_209 = arith.constant 100 : index
    %1754 = memref.load %arg3[%c100_209] : memref<144xf32, #tpu.memory_space<smem>>
    %c136_210 = arith.constant 136 : index
    %1755 = memref.load %arg3[%c136_210] : memref<144xf32, #tpu.memory_space<smem>>
    %1756 = vector.broadcast %1752 : f32 to vector<16x128xf32>
    %1757 = arith.mulf %1756, %1751 : vector<16x128xf32>
    %1758 = arith.addf %1741, %1757 : vector<16x128xf32>
    %1759 = vector.broadcast %1753 : f32 to vector<16x128xf32>
    %1760 = arith.mulf %1759, %1751 : vector<16x128xf32>
    %1761 = arith.addf %1744, %1760 : vector<16x128xf32>
    %1762 = vector.broadcast %1754 : f32 to vector<16x128xf32>
    %1763 = arith.mulf %1762, %1751 : vector<16x128xf32>
    %1764 = arith.addf %1747, %1763 : vector<16x128xf32>
    %1765 = vector.broadcast %1755 : f32 to vector<16x128xf32>
    %1766 = arith.mulf %1765, %1751 : vector<16x128xf32>
    %1767 = arith.addf %1750, %1766 : vector<16x128xf32>
    %1768 = vector.extract_strided_slice %1620 {offsets = [0, 0], sizes = [16, 128], strides = [1, 1]} : vector<18x128xf32> to vector<16x128xf32>
    %c127_i32_211 = arith.constant 127 : i32
    %1769 = tpu.dynamic_rotate %1768 by %c127_i32_211 dim 1 : vector<16x128xf32>, i32 -> vector<16x128xf32>
    %cst_212 = arith.constant 0.000000e+00 : f32
    %1770 = vector.broadcast %cst_212 : f32 to vector<16x128xf32>
    %1771 = arith.select %29, %1769, %1770 : vector<16x128xi1>, vector<16x128xf32>
    %c2_213 = arith.constant 2 : index
    %1772 = memref.load %arg3[%c2_213] : memref<144xf32, #tpu.memory_space<smem>>
    %c38_214 = arith.constant 38 : index
    %1773 = memref.load %arg3[%c38_214] : memref<144xf32, #tpu.memory_space<smem>>
    %c74_215 = arith.constant 74 : index
    %1774 = memref.load %arg3[%c74_215] : memref<144xf32, #tpu.memory_space<smem>>
    %c110_216 = arith.constant 110 : index
    %1775 = memref.load %arg3[%c110_216] : memref<144xf32, #tpu.memory_space<smem>>
    %1776 = vector.broadcast %1772 : f32 to vector<16x128xf32>
    %1777 = arith.mulf %1776, %1771 : vector<16x128xf32>
    %1778 = arith.addf %1758, %1777 : vector<16x128xf32>
    %1779 = vector.broadcast %1773 : f32 to vector<16x128xf32>
    %1780 = arith.mulf %1779, %1771 : vector<16x128xf32>
    %1781 = arith.addf %1761, %1780 : vector<16x128xf32>
    %1782 = vector.broadcast %1774 : f32 to vector<16x128xf32>
    %1783 = arith.mulf %1782, %1771 : vector<16x128xf32>
    %1784 = arith.addf %1764, %1783 : vector<16x128xf32>
    %1785 = vector.broadcast %1775 : f32 to vector<16x128xf32>
    %1786 = arith.mulf %1785, %1771 : vector<16x128xf32>
    %1787 = arith.addf %1767, %1786 : vector<16x128xf32>
    %1788 = vector.extract_strided_slice %1621 {offsets = [0, 0], sizes = [16, 128], strides = [1, 1]} : vector<18x128xf32> to vector<16x128xf32>
    %c127_i32_217 = arith.constant 127 : i32
    %1789 = tpu.dynamic_rotate %1788 by %c127_i32_217 dim 1 : vector<16x128xf32>, i32 -> vector<16x128xf32>
    %cst_218 = arith.constant 0.000000e+00 : f32
    %1790 = vector.broadcast %cst_218 : f32 to vector<16x128xf32>
    %1791 = arith.select %29, %1789, %1790 : vector<16x128xi1>, vector<16x128xf32>
    %c11_219 = arith.constant 11 : index
    %1792 = memref.load %arg3[%c11_219] : memref<144xf32, #tpu.memory_space<smem>>
    %c47_220 = arith.constant 47 : index
    %1793 = memref.load %arg3[%c47_220] : memref<144xf32, #tpu.memory_space<smem>>
    %c83_221 = arith.constant 83 : index
    %1794 = memref.load %arg3[%c83_221] : memref<144xf32, #tpu.memory_space<smem>>
    %c119_222 = arith.constant 119 : index
    %1795 = memref.load %arg3[%c119_222] : memref<144xf32, #tpu.memory_space<smem>>
    %1796 = vector.broadcast %1792 : f32 to vector<16x128xf32>
    %1797 = arith.mulf %1796, %1791 : vector<16x128xf32>
    %1798 = arith.addf %1778, %1797 : vector<16x128xf32>
    %1799 = vector.broadcast %1793 : f32 to vector<16x128xf32>
    %1800 = arith.mulf %1799, %1791 : vector<16x128xf32>
    %1801 = arith.addf %1781, %1800 : vector<16x128xf32>
    %1802 = vector.broadcast %1794 : f32 to vector<16x128xf32>
    %1803 = arith.mulf %1802, %1791 : vector<16x128xf32>
    %1804 = arith.addf %1784, %1803 : vector<16x128xf32>
    %1805 = vector.broadcast %1795 : f32 to vector<16x128xf32>
    %1806 = arith.mulf %1805, %1791 : vector<16x128xf32>
    %1807 = arith.addf %1787, %1806 : vector<16x128xf32>
    %1808 = vector.extract_strided_slice %1622 {offsets = [0, 0], sizes = [16, 128], strides = [1, 1]} : vector<18x128xf32> to vector<16x128xf32>
    %c127_i32_223 = arith.constant 127 : i32
    %1809 = tpu.dynamic_rotate %1808 by %c127_i32_223 dim 1 : vector<16x128xf32>, i32 -> vector<16x128xf32>
    %cst_224 = arith.constant 0.000000e+00 : f32
    %1810 = vector.broadcast %cst_224 : f32 to vector<16x128xf32>
    %1811 = arith.select %29, %1809, %1810 : vector<16x128xi1>, vector<16x128xf32>
    %c20_225 = arith.constant 20 : index
    %1812 = memref.load %arg3[%c20_225] : memref<144xf32, #tpu.memory_space<smem>>
    %c56_226 = arith.constant 56 : index
    %1813 = memref.load %arg3[%c56_226] : memref<144xf32, #tpu.memory_space<smem>>
    %c92_227 = arith.constant 92 : index
    %1814 = memref.load %arg3[%c92_227] : memref<144xf32, #tpu.memory_space<smem>>
    %c128_228 = arith.constant 128 : index
    %1815 = memref.load %arg3[%c128_228] : memref<144xf32, #tpu.memory_space<smem>>
    %1816 = vector.broadcast %1812 : f32 to vector<16x128xf32>
    %1817 = arith.mulf %1816, %1811 : vector<16x128xf32>
    %1818 = arith.addf %1798, %1817 : vector<16x128xf32>
    %1819 = vector.broadcast %1813 : f32 to vector<16x128xf32>
    %1820 = arith.mulf %1819, %1811 : vector<16x128xf32>
    %1821 = arith.addf %1801, %1820 : vector<16x128xf32>
    %1822 = vector.broadcast %1814 : f32 to vector<16x128xf32>
    %1823 = arith.mulf %1822, %1811 : vector<16x128xf32>
    %1824 = arith.addf %1804, %1823 : vector<16x128xf32>
    %1825 = vector.broadcast %1815 : f32 to vector<16x128xf32>
    %1826 = arith.mulf %1825, %1811 : vector<16x128xf32>
    %1827 = arith.addf %1807, %1826 : vector<16x128xf32>
    %1828 = vector.extract_strided_slice %1623 {offsets = [0, 0], sizes = [16, 128], strides = [1, 1]} : vector<18x128xf32> to vector<16x128xf32>
    %c127_i32_229 = arith.constant 127 : i32
    %1829 = tpu.dynamic_rotate %1828 by %c127_i32_229 dim 1 : vector<16x128xf32>, i32 -> vector<16x128xf32>
    %cst_230 = arith.constant 0.000000e+00 : f32
    %1830 = vector.broadcast %cst_230 : f32 to vector<16x128xf32>
    %1831 = arith.select %29, %1829, %1830 : vector<16x128xi1>, vector<16x128xf32>
    %c29_231 = arith.constant 29 : index
    %1832 = memref.load %arg3[%c29_231] : memref<144xf32, #tpu.memory_space<smem>>
    %c65_232 = arith.constant 65 : index
    %1833 = memref.load %arg3[%c65_232] : memref<144xf32, #tpu.memory_space<smem>>
    %c101_233 = arith.constant 101 : index
    %1834 = memref.load %arg3[%c101_233] : memref<144xf32, #tpu.memory_space<smem>>
    %c137_234 = arith.constant 137 : index
    %1835 = memref.load %arg3[%c137_234] : memref<144xf32, #tpu.memory_space<smem>>
    %1836 = vector.broadcast %1832 : f32 to vector<16x128xf32>
    %1837 = arith.mulf %1836, %1831 : vector<16x128xf32>
    %1838 = arith.addf %1818, %1837 : vector<16x128xf32>
    %1839 = vector.broadcast %1833 : f32 to vector<16x128xf32>
    %1840 = arith.mulf %1839, %1831 : vector<16x128xf32>
    %1841 = arith.addf %1821, %1840 : vector<16x128xf32>
    %1842 = vector.broadcast %1834 : f32 to vector<16x128xf32>
    %1843 = arith.mulf %1842, %1831 : vector<16x128xf32>
    %1844 = arith.addf %1824, %1843 : vector<16x128xf32>
    %1845 = vector.broadcast %1835 : f32 to vector<16x128xf32>
    %1846 = arith.mulf %1845, %1831 : vector<16x128xf32>
    %1847 = arith.addf %1827, %1846 : vector<16x128xf32>
    %1848 = vector.extract_strided_slice %1620 {offsets = [1, 0], sizes = [16, 128], strides = [1, 1]} : vector<18x128xf32> to vector<16x128xf32>
    %c1_i32_235 = arith.constant 1 : i32
    %1849 = tpu.dynamic_rotate %1848 by %c1_i32_235 dim 1 : vector<16x128xf32>, i32 -> vector<16x128xf32>
    %cst_236 = arith.constant 0.000000e+00 : f32
    %1850 = vector.broadcast %cst_236 : f32 to vector<16x128xf32>
    %1851 = arith.select %27, %1849, %1850 : vector<16x128xi1>, vector<16x128xf32>
    %c3_237 = arith.constant 3 : index
    %1852 = memref.load %arg3[%c3_237] : memref<144xf32, #tpu.memory_space<smem>>
    %c39_238 = arith.constant 39 : index
    %1853 = memref.load %arg3[%c39_238] : memref<144xf32, #tpu.memory_space<smem>>
    %c75_239 = arith.constant 75 : index
    %1854 = memref.load %arg3[%c75_239] : memref<144xf32, #tpu.memory_space<smem>>
    %c111_240 = arith.constant 111 : index
    %1855 = memref.load %arg3[%c111_240] : memref<144xf32, #tpu.memory_space<smem>>
    %1856 = vector.broadcast %1852 : f32 to vector<16x128xf32>
    %1857 = arith.mulf %1856, %1851 : vector<16x128xf32>
    %1858 = arith.addf %1838, %1857 : vector<16x128xf32>
    %1859 = vector.broadcast %1853 : f32 to vector<16x128xf32>
    %1860 = arith.mulf %1859, %1851 : vector<16x128xf32>
    %1861 = arith.addf %1841, %1860 : vector<16x128xf32>
    %1862 = vector.broadcast %1854 : f32 to vector<16x128xf32>
    %1863 = arith.mulf %1862, %1851 : vector<16x128xf32>
    %1864 = arith.addf %1844, %1863 : vector<16x128xf32>
    %1865 = vector.broadcast %1855 : f32 to vector<16x128xf32>
    %1866 = arith.mulf %1865, %1851 : vector<16x128xf32>
    %1867 = arith.addf %1847, %1866 : vector<16x128xf32>
    %1868 = vector.extract_strided_slice %1621 {offsets = [1, 0], sizes = [16, 128], strides = [1, 1]} : vector<18x128xf32> to vector<16x128xf32>
    %c1_i32_241 = arith.constant 1 : i32
    %1869 = tpu.dynamic_rotate %1868 by %c1_i32_241 dim 1 : vector<16x128xf32>, i32 -> vector<16x128xf32>
    %cst_242 = arith.constant 0.000000e+00 : f32
    %1870 = vector.broadcast %cst_242 : f32 to vector<16x128xf32>
    %1871 = arith.select %27, %1869, %1870 : vector<16x128xi1>, vector<16x128xf32>
    %c12_243 = arith.constant 12 : index
    %1872 = memref.load %arg3[%c12_243] : memref<144xf32, #tpu.memory_space<smem>>
    %c48_244 = arith.constant 48 : index
    %1873 = memref.load %arg3[%c48_244] : memref<144xf32, #tpu.memory_space<smem>>
    %c84_245 = arith.constant 84 : index
    %1874 = memref.load %arg3[%c84_245] : memref<144xf32, #tpu.memory_space<smem>>
    %c120_246 = arith.constant 120 : index
    %1875 = memref.load %arg3[%c120_246] : memref<144xf32, #tpu.memory_space<smem>>
    %1876 = vector.broadcast %1872 : f32 to vector<16x128xf32>
    %1877 = arith.mulf %1876, %1871 : vector<16x128xf32>
    %1878 = arith.addf %1858, %1877 : vector<16x128xf32>
    %1879 = vector.broadcast %1873 : f32 to vector<16x128xf32>
    %1880 = arith.mulf %1879, %1871 : vector<16x128xf32>
    %1881 = arith.addf %1861, %1880 : vector<16x128xf32>
    %1882 = vector.broadcast %1874 : f32 to vector<16x128xf32>
    %1883 = arith.mulf %1882, %1871 : vector<16x128xf32>
    %1884 = arith.addf %1864, %1883 : vector<16x128xf32>
    %1885 = vector.broadcast %1875 : f32 to vector<16x128xf32>
    %1886 = arith.mulf %1885, %1871 : vector<16x128xf32>
    %1887 = arith.addf %1867, %1886 : vector<16x128xf32>
    %1888 = vector.extract_strided_slice %1622 {offsets = [1, 0], sizes = [16, 128], strides = [1, 1]} : vector<18x128xf32> to vector<16x128xf32>
    %c1_i32_247 = arith.constant 1 : i32
    %1889 = tpu.dynamic_rotate %1888 by %c1_i32_247 dim 1 : vector<16x128xf32>, i32 -> vector<16x128xf32>
    %cst_248 = arith.constant 0.000000e+00 : f32
    %1890 = vector.broadcast %cst_248 : f32 to vector<16x128xf32>
    %1891 = arith.select %27, %1889, %1890 : vector<16x128xi1>, vector<16x128xf32>
    %c21_249 = arith.constant 21 : index
    %1892 = memref.load %arg3[%c21_249] : memref<144xf32, #tpu.memory_space<smem>>
    %c57_250 = arith.constant 57 : index
    %1893 = memref.load %arg3[%c57_250] : memref<144xf32, #tpu.memory_space<smem>>
    %c93_251 = arith.constant 93 : index
    %1894 = memref.load %arg3[%c93_251] : memref<144xf32, #tpu.memory_space<smem>>
    %c129_252 = arith.constant 129 : index
    %1895 = memref.load %arg3[%c129_252] : memref<144xf32, #tpu.memory_space<smem>>
    %1896 = vector.broadcast %1892 : f32 to vector<16x128xf32>
    %1897 = arith.mulf %1896, %1891 : vector<16x128xf32>
    %1898 = arith.addf %1878, %1897 : vector<16x128xf32>
    %1899 = vector.broadcast %1893 : f32 to vector<16x128xf32>
    %1900 = arith.mulf %1899, %1891 : vector<16x128xf32>
    %1901 = arith.addf %1881, %1900 : vector<16x128xf32>
    %1902 = vector.broadcast %1894 : f32 to vector<16x128xf32>
    %1903 = arith.mulf %1902, %1891 : vector<16x128xf32>
    %1904 = arith.addf %1884, %1903 : vector<16x128xf32>
    %1905 = vector.broadcast %1895 : f32 to vector<16x128xf32>
    %1906 = arith.mulf %1905, %1891 : vector<16x128xf32>
    %1907 = arith.addf %1887, %1906 : vector<16x128xf32>
    %1908 = vector.extract_strided_slice %1623 {offsets = [1, 0], sizes = [16, 128], strides = [1, 1]} : vector<18x128xf32> to vector<16x128xf32>
    %c1_i32_253 = arith.constant 1 : i32
    %1909 = tpu.dynamic_rotate %1908 by %c1_i32_253 dim 1 : vector<16x128xf32>, i32 -> vector<16x128xf32>
    %cst_254 = arith.constant 0.000000e+00 : f32
    %1910 = vector.broadcast %cst_254 : f32 to vector<16x128xf32>
    %1911 = arith.select %27, %1909, %1910 : vector<16x128xi1>, vector<16x128xf32>
    %c30_255 = arith.constant 30 : index
    %1912 = memref.load %arg3[%c30_255] : memref<144xf32, #tpu.memory_space<smem>>
    %c66_256 = arith.constant 66 : index
    %1913 = memref.load %arg3[%c66_256] : memref<144xf32, #tpu.memory_space<smem>>
    %c102_257 = arith.constant 102 : index
    %1914 = memref.load %arg3[%c102_257] : memref<144xf32, #tpu.memory_space<smem>>
    %c138_258 = arith.constant 138 : index
    %1915 = memref.load %arg3[%c138_258] : memref<144xf32, #tpu.memory_space<smem>>
    %1916 = vector.broadcast %1912 : f32 to vector<16x128xf32>
    %1917 = arith.mulf %1916, %1911 : vector<16x128xf32>
    %1918 = arith.addf %1898, %1917 : vector<16x128xf32>
    %1919 = vector.broadcast %1913 : f32 to vector<16x128xf32>
    %1920 = arith.mulf %1919, %1911 : vector<16x128xf32>
    %1921 = arith.addf %1901, %1920 : vector<16x128xf32>
    %1922 = vector.broadcast %1914 : f32 to vector<16x128xf32>
    %1923 = arith.mulf %1922, %1911 : vector<16x128xf32>
    %1924 = arith.addf %1904, %1923 : vector<16x128xf32>
    %1925 = vector.broadcast %1915 : f32 to vector<16x128xf32>
    %1926 = arith.mulf %1925, %1911 : vector<16x128xf32>
    %1927 = arith.addf %1907, %1926 : vector<16x128xf32>
    %1928 = vector.extract_strided_slice %1620 {offsets = [1, 0], sizes = [16, 128], strides = [1, 1]} : vector<18x128xf32> to vector<16x128xf32>
    %c4_259 = arith.constant 4 : index
    %1929 = memref.load %arg3[%c4_259] : memref<144xf32, #tpu.memory_space<smem>>
    %c40_260 = arith.constant 40 : index
    %1930 = memref.load %arg3[%c40_260] : memref<144xf32, #tpu.memory_space<smem>>
    %c76_261 = arith.constant 76 : index
    %1931 = memref.load %arg3[%c76_261] : memref<144xf32, #tpu.memory_space<smem>>
    %c112_262 = arith.constant 112 : index
    %1932 = memref.load %arg3[%c112_262] : memref<144xf32, #tpu.memory_space<smem>>
    %1933 = vector.broadcast %1929 : f32 to vector<16x128xf32>
    %1934 = arith.mulf %1933, %1928 : vector<16x128xf32>
    %1935 = arith.addf %1918, %1934 : vector<16x128xf32>
    %1936 = vector.broadcast %1930 : f32 to vector<16x128xf32>
    %1937 = arith.mulf %1936, %1928 : vector<16x128xf32>
    %1938 = arith.addf %1921, %1937 : vector<16x128xf32>
    %1939 = vector.broadcast %1931 : f32 to vector<16x128xf32>
    %1940 = arith.mulf %1939, %1928 : vector<16x128xf32>
    %1941 = arith.addf %1924, %1940 : vector<16x128xf32>
    %1942 = vector.broadcast %1932 : f32 to vector<16x128xf32>
    %1943 = arith.mulf %1942, %1928 : vector<16x128xf32>
    %1944 = arith.addf %1927, %1943 : vector<16x128xf32>
    %1945 = vector.extract_strided_slice %1621 {offsets = [1, 0], sizes = [16, 128], strides = [1, 1]} : vector<18x128xf32> to vector<16x128xf32>
    %c13_263 = arith.constant 13 : index
    %1946 = memref.load %arg3[%c13_263] : memref<144xf32, #tpu.memory_space<smem>>
    %c49_264 = arith.constant 49 : index
    %1947 = memref.load %arg3[%c49_264] : memref<144xf32, #tpu.memory_space<smem>>
    %c85_265 = arith.constant 85 : index
    %1948 = memref.load %arg3[%c85_265] : memref<144xf32, #tpu.memory_space<smem>>
    %c121_266 = arith.constant 121 : index
    %1949 = memref.load %arg3[%c121_266] : memref<144xf32, #tpu.memory_space<smem>>
    %1950 = vector.broadcast %1946 : f32 to vector<16x128xf32>
    %1951 = arith.mulf %1950, %1945 : vector<16x128xf32>
    %1952 = arith.addf %1935, %1951 : vector<16x128xf32>
    %1953 = vector.broadcast %1947 : f32 to vector<16x128xf32>
    %1954 = arith.mulf %1953, %1945 : vector<16x128xf32>
    %1955 = arith.addf %1938, %1954 : vector<16x128xf32>
    %1956 = vector.broadcast %1948 : f32 to vector<16x128xf32>
    %1957 = arith.mulf %1956, %1945 : vector<16x128xf32>
    %1958 = arith.addf %1941, %1957 : vector<16x128xf32>
    %1959 = vector.broadcast %1949 : f32 to vector<16x128xf32>
    %1960 = arith.mulf %1959, %1945 : vector<16x128xf32>
    %1961 = arith.addf %1944, %1960 : vector<16x128xf32>
    %1962 = vector.extract_strided_slice %1622 {offsets = [1, 0], sizes = [16, 128], strides = [1, 1]} : vector<18x128xf32> to vector<16x128xf32>
    %c22_267 = arith.constant 22 : index
    %1963 = memref.load %arg3[%c22_267] : memref<144xf32, #tpu.memory_space<smem>>
    %c58_268 = arith.constant 58 : index
    %1964 = memref.load %arg3[%c58_268] : memref<144xf32, #tpu.memory_space<smem>>
    %c94_269 = arith.constant 94 : index
    %1965 = memref.load %arg3[%c94_269] : memref<144xf32, #tpu.memory_space<smem>>
    %c130_270 = arith.constant 130 : index
    %1966 = memref.load %arg3[%c130_270] : memref<144xf32, #tpu.memory_space<smem>>
    %1967 = vector.broadcast %1963 : f32 to vector<16x128xf32>
    %1968 = arith.mulf %1967, %1962 : vector<16x128xf32>
    %1969 = arith.addf %1952, %1968 : vector<16x128xf32>
    %1970 = vector.broadcast %1964 : f32 to vector<16x128xf32>
    %1971 = arith.mulf %1970, %1962 : vector<16x128xf32>
    %1972 = arith.addf %1955, %1971 : vector<16x128xf32>
    %1973 = vector.broadcast %1965 : f32 to vector<16x128xf32>
    %1974 = arith.mulf %1973, %1962 : vector<16x128xf32>
    %1975 = arith.addf %1958, %1974 : vector<16x128xf32>
    %1976 = vector.broadcast %1966 : f32 to vector<16x128xf32>
    %1977 = arith.mulf %1976, %1962 : vector<16x128xf32>
    %1978 = arith.addf %1961, %1977 : vector<16x128xf32>
    %1979 = vector.extract_strided_slice %1623 {offsets = [1, 0], sizes = [16, 128], strides = [1, 1]} : vector<18x128xf32> to vector<16x128xf32>
    %c31_271 = arith.constant 31 : index
    %1980 = memref.load %arg3[%c31_271] : memref<144xf32, #tpu.memory_space<smem>>
    %c67_272 = arith.constant 67 : index
    %1981 = memref.load %arg3[%c67_272] : memref<144xf32, #tpu.memory_space<smem>>
    %c103_273 = arith.constant 103 : index
    %1982 = memref.load %arg3[%c103_273] : memref<144xf32, #tpu.memory_space<smem>>
    %c139_274 = arith.constant 139 : index
    %1983 = memref.load %arg3[%c139_274] : memref<144xf32, #tpu.memory_space<smem>>
    %1984 = vector.broadcast %1980 : f32 to vector<16x128xf32>
    %1985 = arith.mulf %1984, %1979 : vector<16x128xf32>
    %1986 = arith.addf %1969, %1985 : vector<16x128xf32>
    %1987 = vector.broadcast %1981 : f32 to vector<16x128xf32>
    %1988 = arith.mulf %1987, %1979 : vector<16x128xf32>
    %1989 = arith.addf %1972, %1988 : vector<16x128xf32>
    %1990 = vector.broadcast %1982 : f32 to vector<16x128xf32>
    %1991 = arith.mulf %1990, %1979 : vector<16x128xf32>
    %1992 = arith.addf %1975, %1991 : vector<16x128xf32>
    %1993 = vector.broadcast %1983 : f32 to vector<16x128xf32>
    %1994 = arith.mulf %1993, %1979 : vector<16x128xf32>
    %1995 = arith.addf %1978, %1994 : vector<16x128xf32>
    %1996 = vector.extract_strided_slice %1620 {offsets = [1, 0], sizes = [16, 128], strides = [1, 1]} : vector<18x128xf32> to vector<16x128xf32>
    %c127_i32_275 = arith.constant 127 : i32
    %1997 = tpu.dynamic_rotate %1996 by %c127_i32_275 dim 1 : vector<16x128xf32>, i32 -> vector<16x128xf32>
    %cst_276 = arith.constant 0.000000e+00 : f32
    %1998 = vector.broadcast %cst_276 : f32 to vector<16x128xf32>
    %1999 = arith.select %29, %1997, %1998 : vector<16x128xi1>, vector<16x128xf32>
    %c5_277 = arith.constant 5 : index
    %2000 = memref.load %arg3[%c5_277] : memref<144xf32, #tpu.memory_space<smem>>
    %c41_278 = arith.constant 41 : index
    %2001 = memref.load %arg3[%c41_278] : memref<144xf32, #tpu.memory_space<smem>>
    %c77_279 = arith.constant 77 : index
    %2002 = memref.load %arg3[%c77_279] : memref<144xf32, #tpu.memory_space<smem>>
    %c113_280 = arith.constant 113 : index
    %2003 = memref.load %arg3[%c113_280] : memref<144xf32, #tpu.memory_space<smem>>
    %2004 = vector.broadcast %2000 : f32 to vector<16x128xf32>
    %2005 = arith.mulf %2004, %1999 : vector<16x128xf32>
    %2006 = arith.addf %1986, %2005 : vector<16x128xf32>
    %2007 = vector.broadcast %2001 : f32 to vector<16x128xf32>
    %2008 = arith.mulf %2007, %1999 : vector<16x128xf32>
    %2009 = arith.addf %1989, %2008 : vector<16x128xf32>
    %2010 = vector.broadcast %2002 : f32 to vector<16x128xf32>
    %2011 = arith.mulf %2010, %1999 : vector<16x128xf32>
    %2012 = arith.addf %1992, %2011 : vector<16x128xf32>
    %2013 = vector.broadcast %2003 : f32 to vector<16x128xf32>
    %2014 = arith.mulf %2013, %1999 : vector<16x128xf32>
    %2015 = arith.addf %1995, %2014 : vector<16x128xf32>
    %2016 = vector.extract_strided_slice %1621 {offsets = [1, 0], sizes = [16, 128], strides = [1, 1]} : vector<18x128xf32> to vector<16x128xf32>
    %c127_i32_281 = arith.constant 127 : i32
    %2017 = tpu.dynamic_rotate %2016 by %c127_i32_281 dim 1 : vector<16x128xf32>, i32 -> vector<16x128xf32>
    %cst_282 = arith.constant 0.000000e+00 : f32
    %2018 = vector.broadcast %cst_282 : f32 to vector<16x128xf32>
    %2019 = arith.select %29, %2017, %2018 : vector<16x128xi1>, vector<16x128xf32>
    %c14_283 = arith.constant 14 : index
    %2020 = memref.load %arg3[%c14_283] : memref<144xf32, #tpu.memory_space<smem>>
    %c50_284 = arith.constant 50 : index
    %2021 = memref.load %arg3[%c50_284] : memref<144xf32, #tpu.memory_space<smem>>
    %c86_285 = arith.constant 86 : index
    %2022 = memref.load %arg3[%c86_285] : memref<144xf32, #tpu.memory_space<smem>>
    %c122_286 = arith.constant 122 : index
    %2023 = memref.load %arg3[%c122_286] : memref<144xf32, #tpu.memory_space<smem>>
    %2024 = vector.broadcast %2020 : f32 to vector<16x128xf32>
    %2025 = arith.mulf %2024, %2019 : vector<16x128xf32>
    %2026 = arith.addf %2006, %2025 : vector<16x128xf32>
    %2027 = vector.broadcast %2021 : f32 to vector<16x128xf32>
    %2028 = arith.mulf %2027, %2019 : vector<16x128xf32>
    %2029 = arith.addf %2009, %2028 : vector<16x128xf32>
    %2030 = vector.broadcast %2022 : f32 to vector<16x128xf32>
    %2031 = arith.mulf %2030, %2019 : vector<16x128xf32>
    %2032 = arith.addf %2012, %2031 : vector<16x128xf32>
    %2033 = vector.broadcast %2023 : f32 to vector<16x128xf32>
    %2034 = arith.mulf %2033, %2019 : vector<16x128xf32>
    %2035 = arith.addf %2015, %2034 : vector<16x128xf32>
    %2036 = vector.extract_strided_slice %1622 {offsets = [1, 0], sizes = [16, 128], strides = [1, 1]} : vector<18x128xf32> to vector<16x128xf32>
    %c127_i32_287 = arith.constant 127 : i32
    %2037 = tpu.dynamic_rotate %2036 by %c127_i32_287 dim 1 : vector<16x128xf32>, i32 -> vector<16x128xf32>
    %cst_288 = arith.constant 0.000000e+00 : f32
    %2038 = vector.broadcast %cst_288 : f32 to vector<16x128xf32>
    %2039 = arith.select %29, %2037, %2038 : vector<16x128xi1>, vector<16x128xf32>
    %c23_289 = arith.constant 23 : index
    %2040 = memref.load %arg3[%c23_289] : memref<144xf32, #tpu.memory_space<smem>>
    %c59_290 = arith.constant 59 : index
    %2041 = memref.load %arg3[%c59_290] : memref<144xf32, #tpu.memory_space<smem>>
    %c95_291 = arith.constant 95 : index
    %2042 = memref.load %arg3[%c95_291] : memref<144xf32, #tpu.memory_space<smem>>
    %c131_292 = arith.constant 131 : index
    %2043 = memref.load %arg3[%c131_292] : memref<144xf32, #tpu.memory_space<smem>>
    %2044 = vector.broadcast %2040 : f32 to vector<16x128xf32>
    %2045 = arith.mulf %2044, %2039 : vector<16x128xf32>
    %2046 = arith.addf %2026, %2045 : vector<16x128xf32>
    %2047 = vector.broadcast %2041 : f32 to vector<16x128xf32>
    %2048 = arith.mulf %2047, %2039 : vector<16x128xf32>
    %2049 = arith.addf %2029, %2048 : vector<16x128xf32>
    %2050 = vector.broadcast %2042 : f32 to vector<16x128xf32>
    %2051 = arith.mulf %2050, %2039 : vector<16x128xf32>
    %2052 = arith.addf %2032, %2051 : vector<16x128xf32>
    %2053 = vector.broadcast %2043 : f32 to vector<16x128xf32>
    %2054 = arith.mulf %2053, %2039 : vector<16x128xf32>
    %2055 = arith.addf %2035, %2054 : vector<16x128xf32>
    %2056 = vector.extract_strided_slice %1623 {offsets = [1, 0], sizes = [16, 128], strides = [1, 1]} : vector<18x128xf32> to vector<16x128xf32>
    %c127_i32_293 = arith.constant 127 : i32
    %2057 = tpu.dynamic_rotate %2056 by %c127_i32_293 dim 1 : vector<16x128xf32>, i32 -> vector<16x128xf32>
    %cst_294 = arith.constant 0.000000e+00 : f32
    %2058 = vector.broadcast %cst_294 : f32 to vector<16x128xf32>
    %2059 = arith.select %29, %2057, %2058 : vector<16x128xi1>, vector<16x128xf32>
    %c32_295 = arith.constant 32 : index
    %2060 = memref.load %arg3[%c32_295] : memref<144xf32, #tpu.memory_space<smem>>
    %c68_296 = arith.constant 68 : index
    %2061 = memref.load %arg3[%c68_296] : memref<144xf32, #tpu.memory_space<smem>>
    %c104_297 = arith.constant 104 : index
    %2062 = memref.load %arg3[%c104_297] : memref<144xf32, #tpu.memory_space<smem>>
    %c140_298 = arith.constant 140 : index
    %2063 = memref.load %arg3[%c140_298] : memref<144xf32, #tpu.memory_space<smem>>
    %2064 = vector.broadcast %2060 : f32 to vector<16x128xf32>
    %2065 = arith.mulf %2064, %2059 : vector<16x128xf32>
    %2066 = arith.addf %2046, %2065 : vector<16x128xf32>
    %2067 = vector.broadcast %2061 : f32 to vector<16x128xf32>
    %2068 = arith.mulf %2067, %2059 : vector<16x128xf32>
    %2069 = arith.addf %2049, %2068 : vector<16x128xf32>
    %2070 = vector.broadcast %2062 : f32 to vector<16x128xf32>
    %2071 = arith.mulf %2070, %2059 : vector<16x128xf32>
    %2072 = arith.addf %2052, %2071 : vector<16x128xf32>
    %2073 = vector.broadcast %2063 : f32 to vector<16x128xf32>
    %2074 = arith.mulf %2073, %2059 : vector<16x128xf32>
    %2075 = arith.addf %2055, %2074 : vector<16x128xf32>
    %2076 = vector.extract_strided_slice %1620 {offsets = [2, 0], sizes = [16, 128], strides = [1, 1]} : vector<18x128xf32> to vector<16x128xf32>
    %c1_i32_299 = arith.constant 1 : i32
    %2077 = tpu.dynamic_rotate %2076 by %c1_i32_299 dim 1 : vector<16x128xf32>, i32 -> vector<16x128xf32>
    %cst_300 = arith.constant 0.000000e+00 : f32
    %2078 = vector.broadcast %cst_300 : f32 to vector<16x128xf32>
    %2079 = arith.select %27, %2077, %2078 : vector<16x128xi1>, vector<16x128xf32>
    %c6_301 = arith.constant 6 : index
    %2080 = memref.load %arg3[%c6_301] : memref<144xf32, #tpu.memory_space<smem>>
    %c42_302 = arith.constant 42 : index
    %2081 = memref.load %arg3[%c42_302] : memref<144xf32, #tpu.memory_space<smem>>
    %c78_303 = arith.constant 78 : index
    %2082 = memref.load %arg3[%c78_303] : memref<144xf32, #tpu.memory_space<smem>>
    %c114_304 = arith.constant 114 : index
    %2083 = memref.load %arg3[%c114_304] : memref<144xf32, #tpu.memory_space<smem>>
    %2084 = vector.broadcast %2080 : f32 to vector<16x128xf32>
    %2085 = arith.mulf %2084, %2079 : vector<16x128xf32>
    %2086 = arith.addf %2066, %2085 : vector<16x128xf32>
    %2087 = vector.broadcast %2081 : f32 to vector<16x128xf32>
    %2088 = arith.mulf %2087, %2079 : vector<16x128xf32>
    %2089 = arith.addf %2069, %2088 : vector<16x128xf32>
    %2090 = vector.broadcast %2082 : f32 to vector<16x128xf32>
    %2091 = arith.mulf %2090, %2079 : vector<16x128xf32>
    %2092 = arith.addf %2072, %2091 : vector<16x128xf32>
    %2093 = vector.broadcast %2083 : f32 to vector<16x128xf32>
    %2094 = arith.mulf %2093, %2079 : vector<16x128xf32>
    %2095 = arith.addf %2075, %2094 : vector<16x128xf32>
    %2096 = vector.extract_strided_slice %1621 {offsets = [2, 0], sizes = [16, 128], strides = [1, 1]} : vector<18x128xf32> to vector<16x128xf32>
    %c1_i32_305 = arith.constant 1 : i32
    %2097 = tpu.dynamic_rotate %2096 by %c1_i32_305 dim 1 : vector<16x128xf32>, i32 -> vector<16x128xf32>
    %cst_306 = arith.constant 0.000000e+00 : f32
    %2098 = vector.broadcast %cst_306 : f32 to vector<16x128xf32>
    %2099 = arith.select %27, %2097, %2098 : vector<16x128xi1>, vector<16x128xf32>
    %c15_307 = arith.constant 15 : index
    %2100 = memref.load %arg3[%c15_307] : memref<144xf32, #tpu.memory_space<smem>>
    %c51_308 = arith.constant 51 : index
    %2101 = memref.load %arg3[%c51_308] : memref<144xf32, #tpu.memory_space<smem>>
    %c87_309 = arith.constant 87 : index
    %2102 = memref.load %arg3[%c87_309] : memref<144xf32, #tpu.memory_space<smem>>
    %c123_310 = arith.constant 123 : index
    %2103 = memref.load %arg3[%c123_310] : memref<144xf32, #tpu.memory_space<smem>>
    %2104 = vector.broadcast %2100 : f32 to vector<16x128xf32>
    %2105 = arith.mulf %2104, %2099 : vector<16x128xf32>
    %2106 = arith.addf %2086, %2105 : vector<16x128xf32>
    %2107 = vector.broadcast %2101 : f32 to vector<16x128xf32>
    %2108 = arith.mulf %2107, %2099 : vector<16x128xf32>
    %2109 = arith.addf %2089, %2108 : vector<16x128xf32>
    %2110 = vector.broadcast %2102 : f32 to vector<16x128xf32>
    %2111 = arith.mulf %2110, %2099 : vector<16x128xf32>
    %2112 = arith.addf %2092, %2111 : vector<16x128xf32>
    %2113 = vector.broadcast %2103 : f32 to vector<16x128xf32>
    %2114 = arith.mulf %2113, %2099 : vector<16x128xf32>
    %2115 = arith.addf %2095, %2114 : vector<16x128xf32>
    %2116 = vector.extract_strided_slice %1622 {offsets = [2, 0], sizes = [16, 128], strides = [1, 1]} : vector<18x128xf32> to vector<16x128xf32>
    %c1_i32_311 = arith.constant 1 : i32
    %2117 = tpu.dynamic_rotate %2116 by %c1_i32_311 dim 1 : vector<16x128xf32>, i32 -> vector<16x128xf32>
    %cst_312 = arith.constant 0.000000e+00 : f32
    %2118 = vector.broadcast %cst_312 : f32 to vector<16x128xf32>
    %2119 = arith.select %27, %2117, %2118 : vector<16x128xi1>, vector<16x128xf32>
    %c24_313 = arith.constant 24 : index
    %2120 = memref.load %arg3[%c24_313] : memref<144xf32, #tpu.memory_space<smem>>
    %c60_314 = arith.constant 60 : index
    %2121 = memref.load %arg3[%c60_314] : memref<144xf32, #tpu.memory_space<smem>>
    %c96_315 = arith.constant 96 : index
    %2122 = memref.load %arg3[%c96_315] : memref<144xf32, #tpu.memory_space<smem>>
    %c132_316 = arith.constant 132 : index
    %2123 = memref.load %arg3[%c132_316] : memref<144xf32, #tpu.memory_space<smem>>
    %2124 = vector.broadcast %2120 : f32 to vector<16x128xf32>
    %2125 = arith.mulf %2124, %2119 : vector<16x128xf32>
    %2126 = arith.addf %2106, %2125 : vector<16x128xf32>
    %2127 = vector.broadcast %2121 : f32 to vector<16x128xf32>
    %2128 = arith.mulf %2127, %2119 : vector<16x128xf32>
    %2129 = arith.addf %2109, %2128 : vector<16x128xf32>
    %2130 = vector.broadcast %2122 : f32 to vector<16x128xf32>
    %2131 = arith.mulf %2130, %2119 : vector<16x128xf32>
    %2132 = arith.addf %2112, %2131 : vector<16x128xf32>
    %2133 = vector.broadcast %2123 : f32 to vector<16x128xf32>
    %2134 = arith.mulf %2133, %2119 : vector<16x128xf32>
    %2135 = arith.addf %2115, %2134 : vector<16x128xf32>
    %2136 = vector.extract_strided_slice %1623 {offsets = [2, 0], sizes = [16, 128], strides = [1, 1]} : vector<18x128xf32> to vector<16x128xf32>
    %c1_i32_317 = arith.constant 1 : i32
    %2137 = tpu.dynamic_rotate %2136 by %c1_i32_317 dim 1 : vector<16x128xf32>, i32 -> vector<16x128xf32>
    %cst_318 = arith.constant 0.000000e+00 : f32
    %2138 = vector.broadcast %cst_318 : f32 to vector<16x128xf32>
    %2139 = arith.select %27, %2137, %2138 : vector<16x128xi1>, vector<16x128xf32>
    %c33_319 = arith.constant 33 : index
    %2140 = memref.load %arg3[%c33_319] : memref<144xf32, #tpu.memory_space<smem>>
    %c69_320 = arith.constant 69 : index
    %2141 = memref.load %arg3[%c69_320] : memref<144xf32, #tpu.memory_space<smem>>
    %c105_321 = arith.constant 105 : index
    %2142 = memref.load %arg3[%c105_321] : memref<144xf32, #tpu.memory_space<smem>>
    %c141_322 = arith.constant 141 : index
    %2143 = memref.load %arg3[%c141_322] : memref<144xf32, #tpu.memory_space<smem>>
    %2144 = vector.broadcast %2140 : f32 to vector<16x128xf32>
    %2145 = arith.mulf %2144, %2139 : vector<16x128xf32>
    %2146 = arith.addf %2126, %2145 : vector<16x128xf32>
    %2147 = vector.broadcast %2141 : f32 to vector<16x128xf32>
    %2148 = arith.mulf %2147, %2139 : vector<16x128xf32>
    %2149 = arith.addf %2129, %2148 : vector<16x128xf32>
    %2150 = vector.broadcast %2142 : f32 to vector<16x128xf32>
    %2151 = arith.mulf %2150, %2139 : vector<16x128xf32>
    %2152 = arith.addf %2132, %2151 : vector<16x128xf32>
    %2153 = vector.broadcast %2143 : f32 to vector<16x128xf32>
    %2154 = arith.mulf %2153, %2139 : vector<16x128xf32>
    %2155 = arith.addf %2135, %2154 : vector<16x128xf32>
    %2156 = vector.extract_strided_slice %1620 {offsets = [2, 0], sizes = [16, 128], strides = [1, 1]} : vector<18x128xf32> to vector<16x128xf32>
    %c7_323 = arith.constant 7 : index
    %2157 = memref.load %arg3[%c7_323] : memref<144xf32, #tpu.memory_space<smem>>
    %c43_324 = arith.constant 43 : index
    %2158 = memref.load %arg3[%c43_324] : memref<144xf32, #tpu.memory_space<smem>>
    %c79_325 = arith.constant 79 : index
    %2159 = memref.load %arg3[%c79_325] : memref<144xf32, #tpu.memory_space<smem>>
    %c115_326 = arith.constant 115 : index
    %2160 = memref.load %arg3[%c115_326] : memref<144xf32, #tpu.memory_space<smem>>
    %2161 = vector.broadcast %2157 : f32 to vector<16x128xf32>
    %2162 = arith.mulf %2161, %2156 : vector<16x128xf32>
    %2163 = arith.addf %2146, %2162 : vector<16x128xf32>
    %2164 = vector.broadcast %2158 : f32 to vector<16x128xf32>
    %2165 = arith.mulf %2164, %2156 : vector<16x128xf32>
    %2166 = arith.addf %2149, %2165 : vector<16x128xf32>
    %2167 = vector.broadcast %2159 : f32 to vector<16x128xf32>
    %2168 = arith.mulf %2167, %2156 : vector<16x128xf32>
    %2169 = arith.addf %2152, %2168 : vector<16x128xf32>
    %2170 = vector.broadcast %2160 : f32 to vector<16x128xf32>
    %2171 = arith.mulf %2170, %2156 : vector<16x128xf32>
    %2172 = arith.addf %2155, %2171 : vector<16x128xf32>
    %2173 = vector.extract_strided_slice %1621 {offsets = [2, 0], sizes = [16, 128], strides = [1, 1]} : vector<18x128xf32> to vector<16x128xf32>
    %c16_327 = arith.constant 16 : index
    %2174 = memref.load %arg3[%c16_327] : memref<144xf32, #tpu.memory_space<smem>>
    %c52_328 = arith.constant 52 : index
    %2175 = memref.load %arg3[%c52_328] : memref<144xf32, #tpu.memory_space<smem>>
    %c88_329 = arith.constant 88 : index
    %2176 = memref.load %arg3[%c88_329] : memref<144xf32, #tpu.memory_space<smem>>
    %c124_330 = arith.constant 124 : index
    %2177 = memref.load %arg3[%c124_330] : memref<144xf32, #tpu.memory_space<smem>>
    %2178 = vector.broadcast %2174 : f32 to vector<16x128xf32>
    %2179 = arith.mulf %2178, %2173 : vector<16x128xf32>
    %2180 = arith.addf %2163, %2179 : vector<16x128xf32>
    %2181 = vector.broadcast %2175 : f32 to vector<16x128xf32>
    %2182 = arith.mulf %2181, %2173 : vector<16x128xf32>
    %2183 = arith.addf %2166, %2182 : vector<16x128xf32>
    %2184 = vector.broadcast %2176 : f32 to vector<16x128xf32>
    %2185 = arith.mulf %2184, %2173 : vector<16x128xf32>
    %2186 = arith.addf %2169, %2185 : vector<16x128xf32>
    %2187 = vector.broadcast %2177 : f32 to vector<16x128xf32>
    %2188 = arith.mulf %2187, %2173 : vector<16x128xf32>
    %2189 = arith.addf %2172, %2188 : vector<16x128xf32>
    %2190 = vector.extract_strided_slice %1622 {offsets = [2, 0], sizes = [16, 128], strides = [1, 1]} : vector<18x128xf32> to vector<16x128xf32>
    %c25_331 = arith.constant 25 : index
    %2191 = memref.load %arg3[%c25_331] : memref<144xf32, #tpu.memory_space<smem>>
    %c61_332 = arith.constant 61 : index
    %2192 = memref.load %arg3[%c61_332] : memref<144xf32, #tpu.memory_space<smem>>
    %c97_333 = arith.constant 97 : index
    %2193 = memref.load %arg3[%c97_333] : memref<144xf32, #tpu.memory_space<smem>>
    %c133_334 = arith.constant 133 : index
    %2194 = memref.load %arg3[%c133_334] : memref<144xf32, #tpu.memory_space<smem>>
    %2195 = vector.broadcast %2191 : f32 to vector<16x128xf32>
    %2196 = arith.mulf %2195, %2190 : vector<16x128xf32>
    %2197 = arith.addf %2180, %2196 : vector<16x128xf32>
    %2198 = vector.broadcast %2192 : f32 to vector<16x128xf32>
    %2199 = arith.mulf %2198, %2190 : vector<16x128xf32>
    %2200 = arith.addf %2183, %2199 : vector<16x128xf32>
    %2201 = vector.broadcast %2193 : f32 to vector<16x128xf32>
    %2202 = arith.mulf %2201, %2190 : vector<16x128xf32>
    %2203 = arith.addf %2186, %2202 : vector<16x128xf32>
    %2204 = vector.broadcast %2194 : f32 to vector<16x128xf32>
    %2205 = arith.mulf %2204, %2190 : vector<16x128xf32>
    %2206 = arith.addf %2189, %2205 : vector<16x128xf32>
    %2207 = vector.extract_strided_slice %1623 {offsets = [2, 0], sizes = [16, 128], strides = [1, 1]} : vector<18x128xf32> to vector<16x128xf32>
    %c34_335 = arith.constant 34 : index
    %2208 = memref.load %arg3[%c34_335] : memref<144xf32, #tpu.memory_space<smem>>
    %c70_336 = arith.constant 70 : index
    %2209 = memref.load %arg3[%c70_336] : memref<144xf32, #tpu.memory_space<smem>>
    %c106_337 = arith.constant 106 : index
    %2210 = memref.load %arg3[%c106_337] : memref<144xf32, #tpu.memory_space<smem>>
    %c142_338 = arith.constant 142 : index
    %2211 = memref.load %arg3[%c142_338] : memref<144xf32, #tpu.memory_space<smem>>
    %2212 = vector.broadcast %2208 : f32 to vector<16x128xf32>
    %2213 = arith.mulf %2212, %2207 : vector<16x128xf32>
    %2214 = arith.addf %2197, %2213 : vector<16x128xf32>
    %2215 = vector.broadcast %2209 : f32 to vector<16x128xf32>
    %2216 = arith.mulf %2215, %2207 : vector<16x128xf32>
    %2217 = arith.addf %2200, %2216 : vector<16x128xf32>
    %2218 = vector.broadcast %2210 : f32 to vector<16x128xf32>
    %2219 = arith.mulf %2218, %2207 : vector<16x128xf32>
    %2220 = arith.addf %2203, %2219 : vector<16x128xf32>
    %2221 = vector.broadcast %2211 : f32 to vector<16x128xf32>
    %2222 = arith.mulf %2221, %2207 : vector<16x128xf32>
    %2223 = arith.addf %2206, %2222 : vector<16x128xf32>
    %2224 = vector.extract_strided_slice %1620 {offsets = [2, 0], sizes = [16, 128], strides = [1, 1]} : vector<18x128xf32> to vector<16x128xf32>
    %c127_i32_339 = arith.constant 127 : i32
    %2225 = tpu.dynamic_rotate %2224 by %c127_i32_339 dim 1 : vector<16x128xf32>, i32 -> vector<16x128xf32>
    %cst_340 = arith.constant 0.000000e+00 : f32
    %2226 = vector.broadcast %cst_340 : f32 to vector<16x128xf32>
    %2227 = arith.select %29, %2225, %2226 : vector<16x128xi1>, vector<16x128xf32>
    %c8_341 = arith.constant 8 : index
    %2228 = memref.load %arg3[%c8_341] : memref<144xf32, #tpu.memory_space<smem>>
    %c44_342 = arith.constant 44 : index
    %2229 = memref.load %arg3[%c44_342] : memref<144xf32, #tpu.memory_space<smem>>
    %c80_343 = arith.constant 80 : index
    %2230 = memref.load %arg3[%c80_343] : memref<144xf32, #tpu.memory_space<smem>>
    %c116_344 = arith.constant 116 : index
    %2231 = memref.load %arg3[%c116_344] : memref<144xf32, #tpu.memory_space<smem>>
    %2232 = vector.broadcast %2228 : f32 to vector<16x128xf32>
    %2233 = arith.mulf %2232, %2227 : vector<16x128xf32>
    %2234 = arith.addf %2214, %2233 : vector<16x128xf32>
    %2235 = vector.broadcast %2229 : f32 to vector<16x128xf32>
    %2236 = arith.mulf %2235, %2227 : vector<16x128xf32>
    %2237 = arith.addf %2217, %2236 : vector<16x128xf32>
    %2238 = vector.broadcast %2230 : f32 to vector<16x128xf32>
    %2239 = arith.mulf %2238, %2227 : vector<16x128xf32>
    %2240 = arith.addf %2220, %2239 : vector<16x128xf32>
    %2241 = vector.broadcast %2231 : f32 to vector<16x128xf32>
    %2242 = arith.mulf %2241, %2227 : vector<16x128xf32>
    %2243 = arith.addf %2223, %2242 : vector<16x128xf32>
    %2244 = vector.extract_strided_slice %1621 {offsets = [2, 0], sizes = [16, 128], strides = [1, 1]} : vector<18x128xf32> to vector<16x128xf32>
    %c127_i32_345 = arith.constant 127 : i32
    %2245 = tpu.dynamic_rotate %2244 by %c127_i32_345 dim 1 : vector<16x128xf32>, i32 -> vector<16x128xf32>
    %cst_346 = arith.constant 0.000000e+00 : f32
    %2246 = vector.broadcast %cst_346 : f32 to vector<16x128xf32>
    %2247 = arith.select %29, %2245, %2246 : vector<16x128xi1>, vector<16x128xf32>
    %c17_347 = arith.constant 17 : index
    %2248 = memref.load %arg3[%c17_347] : memref<144xf32, #tpu.memory_space<smem>>
    %c53_348 = arith.constant 53 : index
    %2249 = memref.load %arg3[%c53_348] : memref<144xf32, #tpu.memory_space<smem>>
    %c89_349 = arith.constant 89 : index
    %2250 = memref.load %arg3[%c89_349] : memref<144xf32, #tpu.memory_space<smem>>
    %c125_350 = arith.constant 125 : index
    %2251 = memref.load %arg3[%c125_350] : memref<144xf32, #tpu.memory_space<smem>>
    %2252 = vector.broadcast %2248 : f32 to vector<16x128xf32>
    %2253 = arith.mulf %2252, %2247 : vector<16x128xf32>
    %2254 = arith.addf %2234, %2253 : vector<16x128xf32>
    %2255 = vector.broadcast %2249 : f32 to vector<16x128xf32>
    %2256 = arith.mulf %2255, %2247 : vector<16x128xf32>
    %2257 = arith.addf %2237, %2256 : vector<16x128xf32>
    %2258 = vector.broadcast %2250 : f32 to vector<16x128xf32>
    %2259 = arith.mulf %2258, %2247 : vector<16x128xf32>
    %2260 = arith.addf %2240, %2259 : vector<16x128xf32>
    %2261 = vector.broadcast %2251 : f32 to vector<16x128xf32>
    %2262 = arith.mulf %2261, %2247 : vector<16x128xf32>
    %2263 = arith.addf %2243, %2262 : vector<16x128xf32>
    %2264 = vector.extract_strided_slice %1622 {offsets = [2, 0], sizes = [16, 128], strides = [1, 1]} : vector<18x128xf32> to vector<16x128xf32>
    %c127_i32_351 = arith.constant 127 : i32
    %2265 = tpu.dynamic_rotate %2264 by %c127_i32_351 dim 1 : vector<16x128xf32>, i32 -> vector<16x128xf32>
    %cst_352 = arith.constant 0.000000e+00 : f32
    %2266 = vector.broadcast %cst_352 : f32 to vector<16x128xf32>
    %2267 = arith.select %29, %2265, %2266 : vector<16x128xi1>, vector<16x128xf32>
    %c26_353 = arith.constant 26 : index
    %2268 = memref.load %arg3[%c26_353] : memref<144xf32, #tpu.memory_space<smem>>
    %c62_354 = arith.constant 62 : index
    %2269 = memref.load %arg3[%c62_354] : memref<144xf32, #tpu.memory_space<smem>>
    %c98_355 = arith.constant 98 : index
    %2270 = memref.load %arg3[%c98_355] : memref<144xf32, #tpu.memory_space<smem>>
    %c134_356 = arith.constant 134 : index
    %2271 = memref.load %arg3[%c134_356] : memref<144xf32, #tpu.memory_space<smem>>
    %2272 = vector.broadcast %2268 : f32 to vector<16x128xf32>
    %2273 = arith.mulf %2272, %2267 : vector<16x128xf32>
    %2274 = arith.addf %2254, %2273 : vector<16x128xf32>
    %2275 = vector.broadcast %2269 : f32 to vector<16x128xf32>
    %2276 = arith.mulf %2275, %2267 : vector<16x128xf32>
    %2277 = arith.addf %2257, %2276 : vector<16x128xf32>
    %2278 = vector.broadcast %2270 : f32 to vector<16x128xf32>
    %2279 = arith.mulf %2278, %2267 : vector<16x128xf32>
    %2280 = arith.addf %2260, %2279 : vector<16x128xf32>
    %2281 = vector.broadcast %2271 : f32 to vector<16x128xf32>
    %2282 = arith.mulf %2281, %2267 : vector<16x128xf32>
    %2283 = arith.addf %2263, %2282 : vector<16x128xf32>
    %2284 = vector.extract_strided_slice %1623 {offsets = [2, 0], sizes = [16, 128], strides = [1, 1]} : vector<18x128xf32> to vector<16x128xf32>
    %c127_i32_357 = arith.constant 127 : i32
    %2285 = tpu.dynamic_rotate %2284 by %c127_i32_357 dim 1 : vector<16x128xf32>, i32 -> vector<16x128xf32>
    %cst_358 = arith.constant 0.000000e+00 : f32
    %2286 = vector.broadcast %cst_358 : f32 to vector<16x128xf32>
    %2287 = arith.select %29, %2285, %2286 : vector<16x128xi1>, vector<16x128xf32>
    %c35_359 = arith.constant 35 : index
    %2288 = memref.load %arg3[%c35_359] : memref<144xf32, #tpu.memory_space<smem>>
    %c71_360 = arith.constant 71 : index
    %2289 = memref.load %arg3[%c71_360] : memref<144xf32, #tpu.memory_space<smem>>
    %c107_361 = arith.constant 107 : index
    %2290 = memref.load %arg3[%c107_361] : memref<144xf32, #tpu.memory_space<smem>>
    %c143_362 = arith.constant 143 : index
    %2291 = memref.load %arg3[%c143_362] : memref<144xf32, #tpu.memory_space<smem>>
    %2292 = vector.broadcast %2288 : f32 to vector<16x128xf32>
    %2293 = arith.mulf %2292, %2287 : vector<16x128xf32>
    %2294 = arith.addf %2274, %2293 : vector<16x128xf32>
    %2295 = vector.broadcast %2289 : f32 to vector<16x128xf32>
    %2296 = arith.mulf %2295, %2287 : vector<16x128xf32>
    %2297 = arith.addf %2277, %2296 : vector<16x128xf32>
    %2298 = vector.broadcast %2290 : f32 to vector<16x128xf32>
    %2299 = arith.mulf %2298, %2287 : vector<16x128xf32>
    %2300 = arith.addf %2280, %2299 : vector<16x128xf32>
    %2301 = vector.broadcast %2291 : f32 to vector<16x128xf32>
    %2302 = arith.mulf %2301, %2287 : vector<16x128xf32>
    %2303 = arith.addf %2283, %2302 : vector<16x128xf32>
    %cst_363 = arith.constant 0.000000e+00 : f32
    %2304 = vector.broadcast %cst_363 : f32 to vector<16x128xf32>
    %2305 = arith.cmpf ogt, %2294, %2304 : vector<16x128xf32>
    %2306 = math.exp %2294 : vector<16x128xf32>
    %cst_364 = arith.constant 1.000000e+00 : f32
    %2307 = vector.broadcast %cst_364 : f32 to vector<16x128xf32>
    %2308 = arith.subf %2306, %2307 : vector<16x128xf32>
    %cst_365 = arith.constant 1.67326319 : f32
    %2309 = vector.broadcast %cst_365 : f32 to vector<16x128xf32>
    %2310 = arith.mulf %2309, %2308 : vector<16x128xf32>
    %2311 = arith.select %2305, %2294, %2310 : vector<16x128xi1>, vector<16x128xf32>
    %cst_366 = arith.constant 0.000000e+00 : f32
    %2312 = vector.broadcast %cst_366 : f32 to vector<16x128xf32>
    %2313 = arith.cmpf ogt, %2297, %2312 : vector<16x128xf32>
    %2314 = math.exp %2297 : vector<16x128xf32>
    %cst_367 = arith.constant 1.000000e+00 : f32
    %2315 = vector.broadcast %cst_367 : f32 to vector<16x128xf32>
    %2316 = arith.subf %2314, %2315 : vector<16x128xf32>
    %cst_368 = arith.constant 1.67326319 : f32
    %2317 = vector.broadcast %cst_368 : f32 to vector<16x128xf32>
    %2318 = arith.mulf %2317, %2316 : vector<16x128xf32>
    %2319 = arith.select %2313, %2297, %2318 : vector<16x128xi1>, vector<16x128xf32>
    %cst_369 = arith.constant 0.000000e+00 : f32
    %2320 = vector.broadcast %cst_369 : f32 to vector<16x128xf32>
    %2321 = arith.cmpf ogt, %2300, %2320 : vector<16x128xf32>
    %2322 = math.exp %2300 : vector<16x128xf32>
    %cst_370 = arith.constant 1.000000e+00 : f32
    %2323 = vector.broadcast %cst_370 : f32 to vector<16x128xf32>
    %2324 = arith.subf %2322, %2323 : vector<16x128xf32>
    %cst_371 = arith.constant 1.67326319 : f32
    %2325 = vector.broadcast %cst_371 : f32 to vector<16x128xf32>
    %2326 = arith.mulf %2325, %2324 : vector<16x128xf32>
    %2327 = arith.select %2321, %2300, %2326 : vector<16x128xi1>, vector<16x128xf32>
    %cst_372 = arith.constant 0.000000e+00 : f32
    %2328 = vector.broadcast %cst_372 : f32 to vector<16x128xf32>
    %2329 = arith.cmpf ogt, %2303, %2328 : vector<16x128xf32>
    %2330 = math.exp %2303 : vector<16x128xf32>
    %cst_373 = arith.constant 1.000000e+00 : f32
    %2331 = vector.broadcast %cst_373 : f32 to vector<16x128xf32>
    %2332 = arith.subf %2330, %2331 : vector<16x128xf32>
    %cst_374 = arith.constant 1.67326319 : f32
    %2333 = vector.broadcast %cst_374 : f32 to vector<16x128xf32>
    %2334 = arith.mulf %2333, %2332 : vector<16x128xf32>
    %2335 = arith.select %2329, %2303, %2334 : vector<16x128xi1>, vector<16x128xf32>
    %cst_375 = arith.constant 0.000000e+00 : f32
    %2336 = vector.broadcast %cst_375 : f32 to vector<1x128xf32>
    %2337 = tpu.concatenate %2336, %2311, %2336 in 0 : vector<1x128xf32>, vector<16x128xf32>, vector<1x128xf32> -> vector<18x128xf32>
    %2338 = tpu.concatenate %2336, %2319, %2336 in 0 : vector<1x128xf32>, vector<16x128xf32>, vector<1x128xf32> -> vector<18x128xf32>
    %2339 = tpu.concatenate %2336, %2327, %2336 in 0 : vector<1x128xf32>, vector<16x128xf32>, vector<1x128xf32> -> vector<18x128xf32>
    %2340 = tpu.concatenate %2336, %2335, %2336 in 0 : vector<1x128xf32>, vector<16x128xf32>, vector<1x128xf32> -> vector<18x128xf32>
    %2341 = vector.extract_strided_slice %2337 {offsets = [0, 0], sizes = [16, 128], strides = [1, 1]} : vector<18x128xf32> to vector<16x128xf32>
    %c1_i32_376 = arith.constant 1 : i32
    %2342 = tpu.dynamic_rotate %2341 by %c1_i32_376 dim 1 : vector<16x128xf32>, i32 -> vector<16x128xf32>
    %cst_377 = arith.constant 0.000000e+00 : f32
    %2343 = vector.broadcast %cst_377 : f32 to vector<16x128xf32>
    %2344 = arith.select %27, %2342, %2343 : vector<16x128xi1>, vector<16x128xf32>
    %c0_378 = arith.constant 0 : index
    %2345 = memref.load %arg4[%c0_378] : memref<36xf32, #tpu.memory_space<smem>>
    %2346 = vector.broadcast %2345 : f32 to vector<16x128xf32>
    %2347 = arith.mulf %2346, %2344 : vector<16x128xf32>
    %2348 = vector.extract_strided_slice %2338 {offsets = [0, 0], sizes = [16, 128], strides = [1, 1]} : vector<18x128xf32> to vector<16x128xf32>
    %c1_i32_379 = arith.constant 1 : i32
    %2349 = tpu.dynamic_rotate %2348 by %c1_i32_379 dim 1 : vector<16x128xf32>, i32 -> vector<16x128xf32>
    %cst_380 = arith.constant 0.000000e+00 : f32
    %2350 = vector.broadcast %cst_380 : f32 to vector<16x128xf32>
    %2351 = arith.select %27, %2349, %2350 : vector<16x128xi1>, vector<16x128xf32>
    %c9_381 = arith.constant 9 : index
    %2352 = memref.load %arg4[%c9_381] : memref<36xf32, #tpu.memory_space<smem>>
    %2353 = vector.broadcast %2352 : f32 to vector<16x128xf32>
    %2354 = arith.mulf %2353, %2351 : vector<16x128xf32>
    %2355 = arith.addf %2347, %2354 : vector<16x128xf32>
    %2356 = vector.extract_strided_slice %2339 {offsets = [0, 0], sizes = [16, 128], strides = [1, 1]} : vector<18x128xf32> to vector<16x128xf32>
    %c1_i32_382 = arith.constant 1 : i32
    %2357 = tpu.dynamic_rotate %2356 by %c1_i32_382 dim 1 : vector<16x128xf32>, i32 -> vector<16x128xf32>
    %cst_383 = arith.constant 0.000000e+00 : f32
    %2358 = vector.broadcast %cst_383 : f32 to vector<16x128xf32>
    %2359 = arith.select %27, %2357, %2358 : vector<16x128xi1>, vector<16x128xf32>
    %c18_384 = arith.constant 18 : index
    %2360 = memref.load %arg4[%c18_384] : memref<36xf32, #tpu.memory_space<smem>>
    %2361 = vector.broadcast %2360 : f32 to vector<16x128xf32>
    %2362 = arith.mulf %2361, %2359 : vector<16x128xf32>
    %2363 = arith.addf %2355, %2362 : vector<16x128xf32>
    %2364 = vector.extract_strided_slice %2340 {offsets = [0, 0], sizes = [16, 128], strides = [1, 1]} : vector<18x128xf32> to vector<16x128xf32>
    %c1_i32_385 = arith.constant 1 : i32
    %2365 = tpu.dynamic_rotate %2364 by %c1_i32_385 dim 1 : vector<16x128xf32>, i32 -> vector<16x128xf32>
    %cst_386 = arith.constant 0.000000e+00 : f32
    %2366 = vector.broadcast %cst_386 : f32 to vector<16x128xf32>
    %2367 = arith.select %27, %2365, %2366 : vector<16x128xi1>, vector<16x128xf32>
    %c27_387 = arith.constant 27 : index
    %2368 = memref.load %arg4[%c27_387] : memref<36xf32, #tpu.memory_space<smem>>
    %2369 = vector.broadcast %2368 : f32 to vector<16x128xf32>
    %2370 = arith.mulf %2369, %2367 : vector<16x128xf32>
    %2371 = arith.addf %2363, %2370 : vector<16x128xf32>
    %2372 = vector.extract_strided_slice %2337 {offsets = [0, 0], sizes = [16, 128], strides = [1, 1]} : vector<18x128xf32> to vector<16x128xf32>
    %c1_388 = arith.constant 1 : index
    %2373 = memref.load %arg4[%c1_388] : memref<36xf32, #tpu.memory_space<smem>>
    %2374 = vector.broadcast %2373 : f32 to vector<16x128xf32>
    %2375 = arith.mulf %2374, %2372 : vector<16x128xf32>
    %2376 = arith.addf %2371, %2375 : vector<16x128xf32>
    %2377 = vector.extract_strided_slice %2338 {offsets = [0, 0], sizes = [16, 128], strides = [1, 1]} : vector<18x128xf32> to vector<16x128xf32>
    %c10_389 = arith.constant 10 : index
    %2378 = memref.load %arg4[%c10_389] : memref<36xf32, #tpu.memory_space<smem>>
    %2379 = vector.broadcast %2378 : f32 to vector<16x128xf32>
    %2380 = arith.mulf %2379, %2377 : vector<16x128xf32>
    %2381 = arith.addf %2376, %2380 : vector<16x128xf32>
    %2382 = vector.extract_strided_slice %2339 {offsets = [0, 0], sizes = [16, 128], strides = [1, 1]} : vector<18x128xf32> to vector<16x128xf32>
    %c19_390 = arith.constant 19 : index
    %2383 = memref.load %arg4[%c19_390] : memref<36xf32, #tpu.memory_space<smem>>
    %2384 = vector.broadcast %2383 : f32 to vector<16x128xf32>
    %2385 = arith.mulf %2384, %2382 : vector<16x128xf32>
    %2386 = arith.addf %2381, %2385 : vector<16x128xf32>
    %2387 = vector.extract_strided_slice %2340 {offsets = [0, 0], sizes = [16, 128], strides = [1, 1]} : vector<18x128xf32> to vector<16x128xf32>
    %c28_391 = arith.constant 28 : index
    %2388 = memref.load %arg4[%c28_391] : memref<36xf32, #tpu.memory_space<smem>>
    %2389 = vector.broadcast %2388 : f32 to vector<16x128xf32>
    %2390 = arith.mulf %2389, %2387 : vector<16x128xf32>
    %2391 = arith.addf %2386, %2390 : vector<16x128xf32>
    %2392 = vector.extract_strided_slice %2337 {offsets = [0, 0], sizes = [16, 128], strides = [1, 1]} : vector<18x128xf32> to vector<16x128xf32>
    %c127_i32_392 = arith.constant 127 : i32
    %2393 = tpu.dynamic_rotate %2392 by %c127_i32_392 dim 1 : vector<16x128xf32>, i32 -> vector<16x128xf32>
    %cst_393 = arith.constant 0.000000e+00 : f32
    %2394 = vector.broadcast %cst_393 : f32 to vector<16x128xf32>
    %2395 = arith.select %29, %2393, %2394 : vector<16x128xi1>, vector<16x128xf32>
    %c2_394 = arith.constant 2 : index
    %2396 = memref.load %arg4[%c2_394] : memref<36xf32, #tpu.memory_space<smem>>
    %2397 = vector.broadcast %2396 : f32 to vector<16x128xf32>
    %2398 = arith.mulf %2397, %2395 : vector<16x128xf32>
    %2399 = arith.addf %2391, %2398 : vector<16x128xf32>
    %2400 = vector.extract_strided_slice %2338 {offsets = [0, 0], sizes = [16, 128], strides = [1, 1]} : vector<18x128xf32> to vector<16x128xf32>
    %c127_i32_395 = arith.constant 127 : i32
    %2401 = tpu.dynamic_rotate %2400 by %c127_i32_395 dim 1 : vector<16x128xf32>, i32 -> vector<16x128xf32>
    %cst_396 = arith.constant 0.000000e+00 : f32
    %2402 = vector.broadcast %cst_396 : f32 to vector<16x128xf32>
    %2403 = arith.select %29, %2401, %2402 : vector<16x128xi1>, vector<16x128xf32>
    %c11_397 = arith.constant 11 : index
    %2404 = memref.load %arg4[%c11_397] : memref<36xf32, #tpu.memory_space<smem>>
    %2405 = vector.broadcast %2404 : f32 to vector<16x128xf32>
    %2406 = arith.mulf %2405, %2403 : vector<16x128xf32>
    %2407 = arith.addf %2399, %2406 : vector<16x128xf32>
    %2408 = vector.extract_strided_slice %2339 {offsets = [0, 0], sizes = [16, 128], strides = [1, 1]} : vector<18x128xf32> to vector<16x128xf32>
    %c127_i32_398 = arith.constant 127 : i32
    %2409 = tpu.dynamic_rotate %2408 by %c127_i32_398 dim 1 : vector<16x128xf32>, i32 -> vector<16x128xf32>
    %cst_399 = arith.constant 0.000000e+00 : f32
    %2410 = vector.broadcast %cst_399 : f32 to vector<16x128xf32>
    %2411 = arith.select %29, %2409, %2410 : vector<16x128xi1>, vector<16x128xf32>
    %c20_400 = arith.constant 20 : index
    %2412 = memref.load %arg4[%c20_400] : memref<36xf32, #tpu.memory_space<smem>>
    %2413 = vector.broadcast %2412 : f32 to vector<16x128xf32>
    %2414 = arith.mulf %2413, %2411 : vector<16x128xf32>
    %2415 = arith.addf %2407, %2414 : vector<16x128xf32>
    %2416 = vector.extract_strided_slice %2340 {offsets = [0, 0], sizes = [16, 128], strides = [1, 1]} : vector<18x128xf32> to vector<16x128xf32>
    %c127_i32_401 = arith.constant 127 : i32
    %2417 = tpu.dynamic_rotate %2416 by %c127_i32_401 dim 1 : vector<16x128xf32>, i32 -> vector<16x128xf32>
    %cst_402 = arith.constant 0.000000e+00 : f32
    %2418 = vector.broadcast %cst_402 : f32 to vector<16x128xf32>
    %2419 = arith.select %29, %2417, %2418 : vector<16x128xi1>, vector<16x128xf32>
    %c29_403 = arith.constant 29 : index
    %2420 = memref.load %arg4[%c29_403] : memref<36xf32, #tpu.memory_space<smem>>
    %2421 = vector.broadcast %2420 : f32 to vector<16x128xf32>
    %2422 = arith.mulf %2421, %2419 : vector<16x128xf32>
    %2423 = arith.addf %2415, %2422 : vector<16x128xf32>
    %2424 = vector.extract_strided_slice %2337 {offsets = [1, 0], sizes = [16, 128], strides = [1, 1]} : vector<18x128xf32> to vector<16x128xf32>
    %c1_i32_404 = arith.constant 1 : i32
    %2425 = tpu.dynamic_rotate %2424 by %c1_i32_404 dim 1 : vector<16x128xf32>, i32 -> vector<16x128xf32>
    %cst_405 = arith.constant 0.000000e+00 : f32
    %2426 = vector.broadcast %cst_405 : f32 to vector<16x128xf32>
    %2427 = arith.select %27, %2425, %2426 : vector<16x128xi1>, vector<16x128xf32>
    %c3_406 = arith.constant 3 : index
    %2428 = memref.load %arg4[%c3_406] : memref<36xf32, #tpu.memory_space<smem>>
    %2429 = vector.broadcast %2428 : f32 to vector<16x128xf32>
    %2430 = arith.mulf %2429, %2427 : vector<16x128xf32>
    %2431 = arith.addf %2423, %2430 : vector<16x128xf32>
    %2432 = vector.extract_strided_slice %2338 {offsets = [1, 0], sizes = [16, 128], strides = [1, 1]} : vector<18x128xf32> to vector<16x128xf32>
    %c1_i32_407 = arith.constant 1 : i32
    %2433 = tpu.dynamic_rotate %2432 by %c1_i32_407 dim 1 : vector<16x128xf32>, i32 -> vector<16x128xf32>
    %cst_408 = arith.constant 0.000000e+00 : f32
    %2434 = vector.broadcast %cst_408 : f32 to vector<16x128xf32>
    %2435 = arith.select %27, %2433, %2434 : vector<16x128xi1>, vector<16x128xf32>
    %c12_409 = arith.constant 12 : index
    %2436 = memref.load %arg4[%c12_409] : memref<36xf32, #tpu.memory_space<smem>>
    %2437 = vector.broadcast %2436 : f32 to vector<16x128xf32>
    %2438 = arith.mulf %2437, %2435 : vector<16x128xf32>
    %2439 = arith.addf %2431, %2438 : vector<16x128xf32>
    %2440 = vector.extract_strided_slice %2339 {offsets = [1, 0], sizes = [16, 128], strides = [1, 1]} : vector<18x128xf32> to vector<16x128xf32>
    %c1_i32_410 = arith.constant 1 : i32
    %2441 = tpu.dynamic_rotate %2440 by %c1_i32_410 dim 1 : vector<16x128xf32>, i32 -> vector<16x128xf32>
    %cst_411 = arith.constant 0.000000e+00 : f32
    %2442 = vector.broadcast %cst_411 : f32 to vector<16x128xf32>
    %2443 = arith.select %27, %2441, %2442 : vector<16x128xi1>, vector<16x128xf32>
    %c21_412 = arith.constant 21 : index
    %2444 = memref.load %arg4[%c21_412] : memref<36xf32, #tpu.memory_space<smem>>
    %2445 = vector.broadcast %2444 : f32 to vector<16x128xf32>
    %2446 = arith.mulf %2445, %2443 : vector<16x128xf32>
    %2447 = arith.addf %2439, %2446 : vector<16x128xf32>
    %2448 = vector.extract_strided_slice %2340 {offsets = [1, 0], sizes = [16, 128], strides = [1, 1]} : vector<18x128xf32> to vector<16x128xf32>
    %c1_i32_413 = arith.constant 1 : i32
    %2449 = tpu.dynamic_rotate %2448 by %c1_i32_413 dim 1 : vector<16x128xf32>, i32 -> vector<16x128xf32>
    %cst_414 = arith.constant 0.000000e+00 : f32
    %2450 = vector.broadcast %cst_414 : f32 to vector<16x128xf32>
    %2451 = arith.select %27, %2449, %2450 : vector<16x128xi1>, vector<16x128xf32>
    %c30_415 = arith.constant 30 : index
    %2452 = memref.load %arg4[%c30_415] : memref<36xf32, #tpu.memory_space<smem>>
    %2453 = vector.broadcast %2452 : f32 to vector<16x128xf32>
    %2454 = arith.mulf %2453, %2451 : vector<16x128xf32>
    %2455 = arith.addf %2447, %2454 : vector<16x128xf32>
    %2456 = vector.extract_strided_slice %2337 {offsets = [1, 0], sizes = [16, 128], strides = [1, 1]} : vector<18x128xf32> to vector<16x128xf32>
    %c4_416 = arith.constant 4 : index
    %2457 = memref.load %arg4[%c4_416] : memref<36xf32, #tpu.memory_space<smem>>
    %2458 = vector.broadcast %2457 : f32 to vector<16x128xf32>
    %2459 = arith.mulf %2458, %2456 : vector<16x128xf32>
    %2460 = arith.addf %2455, %2459 : vector<16x128xf32>
    %2461 = vector.extract_strided_slice %2338 {offsets = [1, 0], sizes = [16, 128], strides = [1, 1]} : vector<18x128xf32> to vector<16x128xf32>
    %c13_417 = arith.constant 13 : index
    %2462 = memref.load %arg4[%c13_417] : memref<36xf32, #tpu.memory_space<smem>>
    %2463 = vector.broadcast %2462 : f32 to vector<16x128xf32>
    %2464 = arith.mulf %2463, %2461 : vector<16x128xf32>
    %2465 = arith.addf %2460, %2464 : vector<16x128xf32>
    %2466 = vector.extract_strided_slice %2339 {offsets = [1, 0], sizes = [16, 128], strides = [1, 1]} : vector<18x128xf32> to vector<16x128xf32>
    %c22_418 = arith.constant 22 : index
    %2467 = memref.load %arg4[%c22_418] : memref<36xf32, #tpu.memory_space<smem>>
    %2468 = vector.broadcast %2467 : f32 to vector<16x128xf32>
    %2469 = arith.mulf %2468, %2466 : vector<16x128xf32>
    %2470 = arith.addf %2465, %2469 : vector<16x128xf32>
    %2471 = vector.extract_strided_slice %2340 {offsets = [1, 0], sizes = [16, 128], strides = [1, 1]} : vector<18x128xf32> to vector<16x128xf32>
    %c31_419 = arith.constant 31 : index
    %2472 = memref.load %arg4[%c31_419] : memref<36xf32, #tpu.memory_space<smem>>
    %2473 = vector.broadcast %2472 : f32 to vector<16x128xf32>
    %2474 = arith.mulf %2473, %2471 : vector<16x128xf32>
    %2475 = arith.addf %2470, %2474 : vector<16x128xf32>
    %2476 = vector.extract_strided_slice %2337 {offsets = [1, 0], sizes = [16, 128], strides = [1, 1]} : vector<18x128xf32> to vector<16x128xf32>
    %c127_i32_420 = arith.constant 127 : i32
    %2477 = tpu.dynamic_rotate %2476 by %c127_i32_420 dim 1 : vector<16x128xf32>, i32 -> vector<16x128xf32>
    %cst_421 = arith.constant 0.000000e+00 : f32
    %2478 = vector.broadcast %cst_421 : f32 to vector<16x128xf32>
    %2479 = arith.select %29, %2477, %2478 : vector<16x128xi1>, vector<16x128xf32>
    %c5_422 = arith.constant 5 : index
    %2480 = memref.load %arg4[%c5_422] : memref<36xf32, #tpu.memory_space<smem>>
    %2481 = vector.broadcast %2480 : f32 to vector<16x128xf32>
    %2482 = arith.mulf %2481, %2479 : vector<16x128xf32>
    %2483 = arith.addf %2475, %2482 : vector<16x128xf32>
    %2484 = vector.extract_strided_slice %2338 {offsets = [1, 0], sizes = [16, 128], strides = [1, 1]} : vector<18x128xf32> to vector<16x128xf32>
    %c127_i32_423 = arith.constant 127 : i32
    %2485 = tpu.dynamic_rotate %2484 by %c127_i32_423 dim 1 : vector<16x128xf32>, i32 -> vector<16x128xf32>
    %cst_424 = arith.constant 0.000000e+00 : f32
    %2486 = vector.broadcast %cst_424 : f32 to vector<16x128xf32>
    %2487 = arith.select %29, %2485, %2486 : vector<16x128xi1>, vector<16x128xf32>
    %c14_425 = arith.constant 14 : index
    %2488 = memref.load %arg4[%c14_425] : memref<36xf32, #tpu.memory_space<smem>>
    %2489 = vector.broadcast %2488 : f32 to vector<16x128xf32>
    %2490 = arith.mulf %2489, %2487 : vector<16x128xf32>
    %2491 = arith.addf %2483, %2490 : vector<16x128xf32>
    %2492 = vector.extract_strided_slice %2339 {offsets = [1, 0], sizes = [16, 128], strides = [1, 1]} : vector<18x128xf32> to vector<16x128xf32>
    %c127_i32_426 = arith.constant 127 : i32
    %2493 = tpu.dynamic_rotate %2492 by %c127_i32_426 dim 1 : vector<16x128xf32>, i32 -> vector<16x128xf32>
    %cst_427 = arith.constant 0.000000e+00 : f32
    %2494 = vector.broadcast %cst_427 : f32 to vector<16x128xf32>
    %2495 = arith.select %29, %2493, %2494 : vector<16x128xi1>, vector<16x128xf32>
    %c23_428 = arith.constant 23 : index
    %2496 = memref.load %arg4[%c23_428] : memref<36xf32, #tpu.memory_space<smem>>
    %2497 = vector.broadcast %2496 : f32 to vector<16x128xf32>
    %2498 = arith.mulf %2497, %2495 : vector<16x128xf32>
    %2499 = arith.addf %2491, %2498 : vector<16x128xf32>
    %2500 = vector.extract_strided_slice %2340 {offsets = [1, 0], sizes = [16, 128], strides = [1, 1]} : vector<18x128xf32> to vector<16x128xf32>
    %c127_i32_429 = arith.constant 127 : i32
    %2501 = tpu.dynamic_rotate %2500 by %c127_i32_429 dim 1 : vector<16x128xf32>, i32 -> vector<16x128xf32>
    %cst_430 = arith.constant 0.000000e+00 : f32
    %2502 = vector.broadcast %cst_430 : f32 to vector<16x128xf32>
    %2503 = arith.select %29, %2501, %2502 : vector<16x128xi1>, vector<16x128xf32>
    %c32_431 = arith.constant 32 : index
    %2504 = memref.load %arg4[%c32_431] : memref<36xf32, #tpu.memory_space<smem>>
    %2505 = vector.broadcast %2504 : f32 to vector<16x128xf32>
    %2506 = arith.mulf %2505, %2503 : vector<16x128xf32>
    %2507 = arith.addf %2499, %2506 : vector<16x128xf32>
    %2508 = vector.extract_strided_slice %2337 {offsets = [2, 0], sizes = [16, 128], strides = [1, 1]} : vector<18x128xf32> to vector<16x128xf32>
    %c1_i32_432 = arith.constant 1 : i32
    %2509 = tpu.dynamic_rotate %2508 by %c1_i32_432 dim 1 : vector<16x128xf32>, i32 -> vector<16x128xf32>
    %cst_433 = arith.constant 0.000000e+00 : f32
    %2510 = vector.broadcast %cst_433 : f32 to vector<16x128xf32>
    %2511 = arith.select %27, %2509, %2510 : vector<16x128xi1>, vector<16x128xf32>
    %c6_434 = arith.constant 6 : index
    %2512 = memref.load %arg4[%c6_434] : memref<36xf32, #tpu.memory_space<smem>>
    %2513 = vector.broadcast %2512 : f32 to vector<16x128xf32>
    %2514 = arith.mulf %2513, %2511 : vector<16x128xf32>
    %2515 = arith.addf %2507, %2514 : vector<16x128xf32>
    %2516 = vector.extract_strided_slice %2338 {offsets = [2, 0], sizes = [16, 128], strides = [1, 1]} : vector<18x128xf32> to vector<16x128xf32>
    %c1_i32_435 = arith.constant 1 : i32
    %2517 = tpu.dynamic_rotate %2516 by %c1_i32_435 dim 1 : vector<16x128xf32>, i32 -> vector<16x128xf32>
    %cst_436 = arith.constant 0.000000e+00 : f32
    %2518 = vector.broadcast %cst_436 : f32 to vector<16x128xf32>
    %2519 = arith.select %27, %2517, %2518 : vector<16x128xi1>, vector<16x128xf32>
    %c15_437 = arith.constant 15 : index
    %2520 = memref.load %arg4[%c15_437] : memref<36xf32, #tpu.memory_space<smem>>
    %2521 = vector.broadcast %2520 : f32 to vector<16x128xf32>
    %2522 = arith.mulf %2521, %2519 : vector<16x128xf32>
    %2523 = arith.addf %2515, %2522 : vector<16x128xf32>
    %2524 = vector.extract_strided_slice %2339 {offsets = [2, 0], sizes = [16, 128], strides = [1, 1]} : vector<18x128xf32> to vector<16x128xf32>
    %c1_i32_438 = arith.constant 1 : i32
    %2525 = tpu.dynamic_rotate %2524 by %c1_i32_438 dim 1 : vector<16x128xf32>, i32 -> vector<16x128xf32>
    %cst_439 = arith.constant 0.000000e+00 : f32
    %2526 = vector.broadcast %cst_439 : f32 to vector<16x128xf32>
    %2527 = arith.select %27, %2525, %2526 : vector<16x128xi1>, vector<16x128xf32>
    %c24_440 = arith.constant 24 : index
    %2528 = memref.load %arg4[%c24_440] : memref<36xf32, #tpu.memory_space<smem>>
    %2529 = vector.broadcast %2528 : f32 to vector<16x128xf32>
    %2530 = arith.mulf %2529, %2527 : vector<16x128xf32>
    %2531 = arith.addf %2523, %2530 : vector<16x128xf32>
    %2532 = vector.extract_strided_slice %2340 {offsets = [2, 0], sizes = [16, 128], strides = [1, 1]} : vector<18x128xf32> to vector<16x128xf32>
    %c1_i32_441 = arith.constant 1 : i32
    %2533 = tpu.dynamic_rotate %2532 by %c1_i32_441 dim 1 : vector<16x128xf32>, i32 -> vector<16x128xf32>
    %cst_442 = arith.constant 0.000000e+00 : f32
    %2534 = vector.broadcast %cst_442 : f32 to vector<16x128xf32>
    %2535 = arith.select %27, %2533, %2534 : vector<16x128xi1>, vector<16x128xf32>
    %c33_443 = arith.constant 33 : index
    %2536 = memref.load %arg4[%c33_443] : memref<36xf32, #tpu.memory_space<smem>>
    %2537 = vector.broadcast %2536 : f32 to vector<16x128xf32>
    %2538 = arith.mulf %2537, %2535 : vector<16x128xf32>
    %2539 = arith.addf %2531, %2538 : vector<16x128xf32>
    %2540 = vector.extract_strided_slice %2337 {offsets = [2, 0], sizes = [16, 128], strides = [1, 1]} : vector<18x128xf32> to vector<16x128xf32>
    %c7_444 = arith.constant 7 : index
    %2541 = memref.load %arg4[%c7_444] : memref<36xf32, #tpu.memory_space<smem>>
    %2542 = vector.broadcast %2541 : f32 to vector<16x128xf32>
    %2543 = arith.mulf %2542, %2540 : vector<16x128xf32>
    %2544 = arith.addf %2539, %2543 : vector<16x128xf32>
    %2545 = vector.extract_strided_slice %2338 {offsets = [2, 0], sizes = [16, 128], strides = [1, 1]} : vector<18x128xf32> to vector<16x128xf32>
    %c16_445 = arith.constant 16 : index
    %2546 = memref.load %arg4[%c16_445] : memref<36xf32, #tpu.memory_space<smem>>
    %2547 = vector.broadcast %2546 : f32 to vector<16x128xf32>
    %2548 = arith.mulf %2547, %2545 : vector<16x128xf32>
    %2549 = arith.addf %2544, %2548 : vector<16x128xf32>
    %2550 = vector.extract_strided_slice %2339 {offsets = [2, 0], sizes = [16, 128], strides = [1, 1]} : vector<18x128xf32> to vector<16x128xf32>
    %c25_446 = arith.constant 25 : index
    %2551 = memref.load %arg4[%c25_446] : memref<36xf32, #tpu.memory_space<smem>>
    %2552 = vector.broadcast %2551 : f32 to vector<16x128xf32>
    %2553 = arith.mulf %2552, %2550 : vector<16x128xf32>
    %2554 = arith.addf %2549, %2553 : vector<16x128xf32>
    %2555 = vector.extract_strided_slice %2340 {offsets = [2, 0], sizes = [16, 128], strides = [1, 1]} : vector<18x128xf32> to vector<16x128xf32>
    %c34_447 = arith.constant 34 : index
    %2556 = memref.load %arg4[%c34_447] : memref<36xf32, #tpu.memory_space<smem>>
    %2557 = vector.broadcast %2556 : f32 to vector<16x128xf32>
    %2558 = arith.mulf %2557, %2555 : vector<16x128xf32>
    %2559 = arith.addf %2554, %2558 : vector<16x128xf32>
    %2560 = vector.extract_strided_slice %2337 {offsets = [2, 0], sizes = [16, 128], strides = [1, 1]} : vector<18x128xf32> to vector<16x128xf32>
    %c127_i32_448 = arith.constant 127 : i32
    %2561 = tpu.dynamic_rotate %2560 by %c127_i32_448 dim 1 : vector<16x128xf32>, i32 -> vector<16x128xf32>
    %cst_449 = arith.constant 0.000000e+00 : f32
    %2562 = vector.broadcast %cst_449 : f32 to vector<16x128xf32>
    %2563 = arith.select %29, %2561, %2562 : vector<16x128xi1>, vector<16x128xf32>
    %c8_450 = arith.constant 8 : index
    %2564 = memref.load %arg4[%c8_450] : memref<36xf32, #tpu.memory_space<smem>>
    %2565 = vector.broadcast %2564 : f32 to vector<16x128xf32>
    %2566 = arith.mulf %2565, %2563 : vector<16x128xf32>
    %2567 = arith.addf %2559, %2566 : vector<16x128xf32>
    %2568 = vector.extract_strided_slice %2338 {offsets = [2, 0], sizes = [16, 128], strides = [1, 1]} : vector<18x128xf32> to vector<16x128xf32>
    %c127_i32_451 = arith.constant 127 : i32
    %2569 = tpu.dynamic_rotate %2568 by %c127_i32_451 dim 1 : vector<16x128xf32>, i32 -> vector<16x128xf32>
    %cst_452 = arith.constant 0.000000e+00 : f32
    %2570 = vector.broadcast %cst_452 : f32 to vector<16x128xf32>
    %2571 = arith.select %29, %2569, %2570 : vector<16x128xi1>, vector<16x128xf32>
    %c17_453 = arith.constant 17 : index
    %2572 = memref.load %arg4[%c17_453] : memref<36xf32, #tpu.memory_space<smem>>
    %2573 = vector.broadcast %2572 : f32 to vector<16x128xf32>
    %2574 = arith.mulf %2573, %2571 : vector<16x128xf32>
    %2575 = arith.addf %2567, %2574 : vector<16x128xf32>
    %2576 = vector.extract_strided_slice %2339 {offsets = [2, 0], sizes = [16, 128], strides = [1, 1]} : vector<18x128xf32> to vector<16x128xf32>
    %c127_i32_454 = arith.constant 127 : i32
    %2577 = tpu.dynamic_rotate %2576 by %c127_i32_454 dim 1 : vector<16x128xf32>, i32 -> vector<16x128xf32>
    %cst_455 = arith.constant 0.000000e+00 : f32
    %2578 = vector.broadcast %cst_455 : f32 to vector<16x128xf32>
    %2579 = arith.select %29, %2577, %2578 : vector<16x128xi1>, vector<16x128xf32>
    %c26_456 = arith.constant 26 : index
    %2580 = memref.load %arg4[%c26_456] : memref<36xf32, #tpu.memory_space<smem>>
    %2581 = vector.broadcast %2580 : f32 to vector<16x128xf32>
    %2582 = arith.mulf %2581, %2579 : vector<16x128xf32>
    %2583 = arith.addf %2575, %2582 : vector<16x128xf32>
    %2584 = vector.extract_strided_slice %2340 {offsets = [2, 0], sizes = [16, 128], strides = [1, 1]} : vector<18x128xf32> to vector<16x128xf32>
    %c127_i32_457 = arith.constant 127 : i32
    %2585 = tpu.dynamic_rotate %2584 by %c127_i32_457 dim 1 : vector<16x128xf32>, i32 -> vector<16x128xf32>
    %cst_458 = arith.constant 0.000000e+00 : f32
    %2586 = vector.broadcast %cst_458 : f32 to vector<16x128xf32>
    %2587 = arith.select %29, %2585, %2586 : vector<16x128xi1>, vector<16x128xf32>
    %c35_459 = arith.constant 35 : index
    %2588 = memref.load %arg4[%c35_459] : memref<36xf32, #tpu.memory_space<smem>>
    %2589 = vector.broadcast %2588 : f32 to vector<16x128xf32>
    %2590 = arith.mulf %2589, %2587 : vector<16x128xf32>
    %2591 = arith.addf %2583, %2590 : vector<16x128xf32>
    %cst_460 = arith.constant 0.000000e+00 : f32
    %2592 = vector.broadcast %cst_460 : f32 to vector<16x128xf32>
    %2593 = arith.subf %2592, %2591 : vector<16x128xf32>
    %2594 = math.exp %2593 : vector<16x128xf32>
    %cst_461 = arith.constant 1.000000e+00 : f32
    %2595 = vector.broadcast %cst_461 : f32 to vector<16x128xf32>
    %2596 = arith.addf %2595, %2594 : vector<16x128xf32>
    %2597 = tpu.reciprocal %2596 {approx = true} : vector<16x128xf32> -> vector<16x128xf32>
    %c0_462 = arith.constant 0 : index
    %c0_463 = arith.constant 0 : index
    %2598 = vector.load %arg5[%c0_462, %c0_463] : memref<16x128xf32, #tpu.memory_space<vmem>>, vector<16x128xf32>
    tpu.vector_store %arg5[%c0_462, %c0_463], %2597 {strides = array<i32>} : memref<16x128xf32, #tpu.memory_space<vmem>>, vector<16x128xf32>,
    return
  }
}

</mosaic_0001>

<llo_original>
// kernel: tpu_custom_call.1
$region0: #{tpu_custom_call.1}
  #allocation0 [shape = 'u32[]', space=smem, size = 0x4, offset = 0x4, fixed_abs, tag = 'smem constant byte address 0x4 - core index']
  #allocation1 [shape = 'u32[144,128]{1,0:T(1,128)}', space=vmem, size = 0x12000, scoped, tag = 'internal scratch']
  %s0 = inlined_call_operand.hbm [shape: f32[4,16,128], index: 0, kind: input, shape index: {}]
  %s1 = inlined_call_operand.vmem [shape: f32[32], index: 1, kind: input, shape index: {}]
  %s2 = inlined_call_operand.vmem [shape: f32[288], index: 2, kind: input, shape index: {}]
  %s3 = inlined_call_operand.vmem [shape: f32[144], index: 3, kind: input, shape index: {}]
  %s4 = inlined_call_operand.vmem [shape: f32[36], index: 4, kind: input, shape index: {}]
  %s5 = inlined_call_operand.hbm [shape: f32[16,128], index: 5, kind: output, shape index: {}]
  %s6 = sld [smem:[#allocation0]]
  $region50: #{tpu_custom_call.1} parent=0
    _
  %s8 = ssub.s32 1, %s6
  %s9 = scalar_select 0, %s8, %s6
  $region1: #{tpu_custom_call.1} parent=0
    #allocation2 [shape = 'u8[32768]{0}', space=vmem, size = 0x8000, scoped, tag = 'input window, operand 0, single buffered']
    #allocation3 [shape = 's32[1]{0}', space=sflag, size = 0x4, scoped, tag = 'scoped memory for tpu_custom_call.1']
    #allocation4 [shape = 's32[1]{0}', space=sflag, size = 0x4, scoped, tag = 'scoped memory for tpu_custom_call.1']
    #allocation5 [shape = 's32[1]{0}', space=sflag, size = 0x4, scoped, tag = 'scoped memory for tpu_custom_call.1']
    #allocation6 [shape = 'u8[512]{0}', space=smem, size = 0x200, scoped, tag = 'input window, operand 1, single buffered']
    #allocation7 [shape = 'u8[1536]{0}', space=smem, size = 0x600, scoped, tag = 'input window, operand 2, single buffered']
    #allocation8 [shape = 's32[1]{0}', space=sflag, size = 0x4, scoped, tag = 'scoped memory for tpu_custom_call.1']
    #allocation9 [shape = 'u8[1024]{0}', space=smem, size = 0x400, scoped, tag = 'input window, operand 3, single buffered']
    #allocation10 [shape = 'u8[512]{0}', space=smem, size = 0x200, scoped, tag = 'input window, operand 4, single buffered']
    #allocation11 [shape = 's32[1]{0}', space=sflag, size = 0x4, scoped, tag = 'scoped memory for tpu_custom_call.1']
    #allocation12 [shape = 'u8[8192]{0}', space=vmem, size = 0x2000, scoped, tag = 'output window, operand 0, single buffered']
    %10 = vsyncpa [#allocation3], 0
    %11 = vsyncpa [#allocation5], 0
    %12 = vsyncpa [#allocation8], 0
    %13 = vsyncpa [#allocation11], 0
    %14 = vsyncpa [#allocation4], 0
    // Predicated region
    $region2: #{tpu_custom_call.1} parent=1 // pred_check
      _
    $region3: #{tpu_custom_call.1} parent=1 // pred_check_branch
      %16 = sbr.rel (0) target = $region5
    $region4: #{tpu_custom_call.1} parent=1 // pred_region
      %s18 = ssub.s32 1024, 1024
      %19 = vsyncadd [#allocation3], %s18
      %s20 = sshll.u32 [#allocation2], 4
      %s21 = int_to_ptr.vmem [resolvable:$true] %s20
      %26 = dma.hbm_to_vmem [thread:$0]  %s0, 1024, %s21, [#allocation3], 128, 128, 8
    $region5: #{tpu_custom_call.1} parent=1 // pred_fallthru
      _
    // Predicated region
    $region6: #{tpu_custom_call.1} parent=1 // pred_check
      _
    $region7: #{tpu_custom_call.1} parent=1 // pred_check_branch
      %28 = sbr.rel (0) target = $region9
    $region8: #{tpu_custom_call.1} parent=1 // pred_region
      %s30 = ssub.s32 16, 16
      %31 = vsyncadd [#allocation5], %s30
      %s33 = sshll.u32 %s1, 4
      %s34 = int_to_ptr.vmem [resolvable:$true] %s33
      %36 = dma.vmem_to_smem %s34, 16, [#allocation6], [#allocation5]
    $region9: #{tpu_custom_call.1} parent=1 // pred_fallthru
      _
    // Predicated region
    $region10: #{tpu_custom_call.1} parent=1 // pred_check
      _
    $region11: #{tpu_custom_call.1} parent=1 // pred_check_branch
      %38 = sbr.rel (0) target = $region13
    $region12: #{tpu_custom_call.1} parent=1 // pred_region
      %s40 = ssub.s32 48, 48
      %41 = vsyncadd [#allocation8], %s40
      %s43 = sshll.u32 %s2, 4
      %s44 = int_to_ptr.vmem [resolvable:$true] %s43
      %46 = dma.vmem_to_smem %s44, 48, [#allocation7], [#allocation8]
    $region13: #{tpu_custom_call.1} parent=1 // pred_fallthru
      _
    // Predicated region
    $region14: #{tpu_custom_call.1} parent=1 // pred_check
      _
    $region15: #{tpu_custom_call.1} parent=1 // pred_check_branch
      %48 = sbr.rel (0) target = $region17
    $region16: #{tpu_custom_call.1} parent=1 // pred_region
      %s50 = ssub.s32 32, 32
      %51 = vsyncadd [#allocation8], %s50
      %s53 = sshll.u32 %s3, 4
      %s54 = int_to_ptr.vmem [resolvable:$true] %s53
      %56 = dma.vmem_to_smem %s54, 32, [#allocation9], [#allocation8]
    $region17: #{tpu_custom_call.1} parent=1 // pred_fallthru
      _
    // Predicated region
    $region18: #{tpu_custom_call.1} parent=1 // pred_check
      _
    $region19: #{tpu_custom_call.1} parent=1 // pred_check_branch
      %58 = sbr.rel (0) target = $region21
    $region20: #{tpu_custom_call.1} parent=1 // pred_region
      %s60 = ssub.s32 16, 16
      %61 = vsyncadd [#allocation11], %s60
      %s63 = sshll.u32 %s4, 4
      %s64 = int_to_ptr.vmem [resolvable:$true] %s63
      %66 = dma.vmem_to_smem %s64, 16, [#allocation10], [#allocation11]
    $region21: #{tpu_custom_call.1} parent=1 // pred_fallthru
      _
    // Predicated region
    $region22: #{tpu_custom_call.1} parent=1 // pred_check
      _
    $region23: #{tpu_custom_call.1} parent=1 // pred_check_branch
      %68 = sbr.rel (0) target = $region25
    $region24: #{tpu_custom_call.1} parent=1 // pred_region
      %69 = dma.done [#allocation3], 1024
    $region25: #{tpu_custom_call.1} parent=1 // pred_fallthru
      _
    // Predicated region
    $region26: #{tpu_custom_call.1} parent=1 // pred_check
      _
    $region27: #{tpu_custom_call.1} parent=1 // pred_check_branch
      %71 = sbr.rel (0) target = $region29
    $region28: #{tpu_custom_call.1} parent=1 // pred_region
      %72 = dma.done [#allocation5], 16
    $region29: #{tpu_custom_call.1} parent=1 // pred_fallthru
      _
    // Predicated region
    $region30: #{tpu_custom_call.1} parent=1 // pred_check
      _
    $region31: #{tpu_custom_call.1} parent=1 // pred_check_branch
      %74 = sbr.rel (0) target = $region33
    $region32: #{tpu_custom_call.1} parent=1 // pred_region
      %75 = dma.done [#allocation8], 48
    $region33: #{tpu_custom_call.1} parent=1 // pred_fallthru
      _
    // Predicated region
    $region34: #{tpu_custom_call.1} parent=1 // pred_check
      _
    $region35: #{tpu_custom_call.1} parent=1 // pred_check_branch
      %77 = sbr.rel (0) target = $region37
    $region36: #{tpu_custom_call.1} parent=1 // pred_region
      %78 = dma.done [#allocation8], 32
    $region37: #{tpu_custom_call.1} parent=1 // pred_fallthru
      _
    // Predicated region
    $region38: #{tpu_custom_call.1} parent=1 // pred_check
      _
    $region39: #{tpu_custom_call.1} parent=1 // pred_check_branch
      %80 = sbr.rel (0) target = $region41
    $region40: #{tpu_custom_call.1} parent=1 // pred_region
      %81 = dma.done [#allocation11], 16
    $region41: #{tpu_custom_call.1} parent=1 // pred_fallthru
      _
    %82 = sfence
    %v83 = vld [vmem:[#allocation2] sm:$0xff]
    %v84 = vld [vmem:[#allocation2 + $0x8] sm:$0xff]
    %v85 = vld [vmem:[#allocation2 + $0x10] sm:$0xff]
    %v86 = vld [vmem:[#allocation2 + $0x18] sm:$0xff]
    %v87 = vld [vmem:[#allocation2 + $0x20] sm:$0xff]
    %v88 = vld [vmem:[#allocation2 + $0x28] sm:$0xff]
    %v89 = vld [vmem:[#allocation2 + $0x30] sm:$0xff]
    %v90 = vld [vmem:[#allocation2 + $0x38] sm:$0xff]
    %v91 = vlaneseq
    %v92 = vand.u32 %v91, 127
    %vm93 = vcmp.lt.s32.totalorder %v92, 0
    %v94 = vsub.s32 0, %v92
    %v95 = vsel %vm93, %v94, %v92
    %v96 = vshrl.u32 %v95, 4
    %v97 = vand.u32 %v95, 15
    %v98 = vsub.s32 0, %v97
    %v99 = vsel %vm93, %v98, %v97
    %vm100 = vcmp.ne.s32.totalorder %v99, 0
    %vm101 = vcmp.lt.s32.totalorder %v99, 0
    %vm102 = vmand %vm101, %vm100
    %v103 = vadd.s32 %v99, 16
    %v104 = vsel %vm102, %v103, %v99
    %vm105 = vcmp.gt.s32.totalorder %v104, 0
    %vm106 = vcmp.lt.s32.totalorder %v104, 15
    %s107 = sld [smem:[#allocation6]]
    %s108 = sld [smem:[#allocation6 + $0x1]]
    %s109 = sld [smem:[#allocation6 + $0x2]]
    %s110 = sld [smem:[#allocation6 + $0x3]]
    %v111 = vstv %s107
    %v112 = vmul.f32 %v111, %v83
    %v113 = vmul.f32 %v111, %v84
    %v114 = vstv %s108
    %v115 = vmul.f32 %v114, %v85
    %v116 = vmul.f32 %v114, %v86
    %v117 = vadd.f32 %v112, %v115
    %v118 = vadd.f32 %v113, %v116
    %v119 = vstv %s109
    %v120 = vmul.f32 %v119, %v87
    %v121 = vmul.f32 %v119, %v88
    %v122 = vadd.f32 %v117, %v120
    %v123 = vadd.f32 %v118, %v121
    %v124 = vstv %s110
    %v125 = vmul.f32 %v124, %v89
    %v126 = vmul.f32 %v124, %v90
    %v127 = vadd.f32 %v122, %v125
    %v128 = vadd.f32 %v123, %v126
    %vm129 = vcmp.gt.f32.partialorder %v127, 0.0
    %vm130 = vcmp.gt.f32.partialorder %v128, 0.0
    %v131 = vmul.f32 %v127, 1.442695
    %v132 = vpow.pop %v131
    %v133 = vmul.f32 %v128, 1.442695
    %v134 = vpow.pop %v133
    %v135 = vsub.f32 %v132, 1.0
    %v136 = vsub.f32 %v134, 1.0
    %v137 = vmul.f32 %v135, 1.6732632
    %v138 = vmul.f32 %v136, 1.6732632
    %v139 = vsel %vm129, %v127, %v137
    %v140 = vsel %vm130, %v128, %v138
    %s141 = sld [smem:[#allocation6 + $0x4]]
    %s142 = sld [smem:[#allocation6 + $0x5]]
    %s143 = sld [smem:[#allocation6 + $0x6]]
    %s144 = sld [smem:[#allocation6 + $0x7]]
    %v145 = vstv %s141
    %v146 = vmul.f32 %v145, %v83
    %v147 = vmul.f32 %v145, %v84
    %v148 = vstv %s142
    %v149 = vmul.f32 %v148, %v85
    %v150 = vmul.f32 %v148, %v86
    %v151 = vadd.f32 %v146, %v149
    %v152 = vadd.f32 %v147, %v150
    %v153 = vstv %s143
    %v154 = vmul.f32 %v153, %v87
    %v155 = vmul.f32 %v153, %v88
    %v156 = vadd.f32 %v151, %v154
    %v157 = vadd.f32 %v152, %v155
    %v158 = vstv %s144
    %v159 = vmul.f32 %v158, %v89
    %v160 = vmul.f32 %v158, %v90
    %v161 = vadd.f32 %v156, %v159
    %v162 = vadd.f32 %v157, %v160
    %vm163 = vcmp.gt.f32.partialorder %v161, 0.0
    %vm164 = vcmp.gt.f32.partialorder %v162, 0.0
    %v165 = vmul.f32 %v161, 1.442695
    %v166 = vpow.pop %v165
    %v167 = vmul.f32 %v162, 1.442695
    %v168 = vpow.pop %v167
    %v169 = vsub.f32 %v166, 1.0
    %v170 = vsub.f32 %v168, 1.0
    %v171 = vmul.f32 %v169, 1.6732632
    %v172 = vmul.f32 %v170, 1.6732632
    %v173 = vsel %vm163, %v161, %v171
    %v174 = vsel %vm164, %v162, %v172
    %s175 = sld [smem:[#allocation6 + $0x8]]
    %s176 = sld [smem:[#allocation6 + $0x9]]
    %s177 = sld [smem:[#allocation6 + $0xa]]
    %s178 = sld [smem:[#allocation6 + $0xb]]
    %v179 = vstv %s175
    %v180 = vmul.f32 %v179, %v83
    %v181 = vmul.f32 %v179, %v84
    %v182 = vstv %s176
    %v183 = vmul.f32 %v182, %v85
    %v184 = vmul.f32 %v182, %v86
    %v185 = vadd.f32 %v180, %v183
    %v186 = vadd.f32 %v181, %v184
    %v187 = vstv %s177
    %v188 = vmul.f32 %v187, %v87
    %v189 = vmul.f32 %v187, %v88
    %v190 = vadd.f32 %v185, %v188
    %v191 = vadd.f32 %v186, %v189
    %v192 = vstv %s178
    %v193 = vmul.f32 %v192, %v89
    %v194 = vmul.f32 %v192, %v90
    %v195 = vadd.f32 %v190, %v193
    %v196 = vadd.f32 %v191, %v194
    %vm197 = vcmp.gt.f32.partialorder %v195, 0.0
    %vm198 = vcmp.gt.f32.partialorder %v196, 0.0
    %v199 = vmul.f32 %v195, 1.442695
    %v200 = vpow.pop %v199
    %v201 = vmul.f32 %v196, 1.442695
    %v202 = vpow.pop %v201
    %v203 = vsub.f32 %v200, 1.0
    %v204 = vsub.f32 %v202, 1.0
    %v205 = vmul.f32 %v203, 1.6732632
    %v206 = vmul.f32 %v204, 1.6732632
    %v207 = vsel %vm197, %v195, %v205
    %v208 = vsel %vm198, %v196, %v206
    %s209 = sld [smem:[#allocation6 + $0xc]]
    %s210 = sld [smem:[#allocation6 + $0xd]]
    %s211 = sld [smem:[#allocation6 + $0xe]]
    %s212 = sld [smem:[#allocation6 + $0xf]]
    %v213 = vstv %s209
    %v214 = vmul.f32 %v213, %v83
    %v215 = vmul.f32 %v213, %v84
    %v216 = vstv %s210
    %v217 = vmul.f32 %v216, %v85
    %v218 = vmul.f32 %v216, %v86
    %v219 = vadd.f32 %v214, %v217
    %v220 = vadd.f32 %v215, %v218
    %v221 = vstv %s211
    %v222 = vmul.f32 %v221, %v87
    %v223 = vmul.f32 %v221, %v88
    %v224 = vadd.f32 %v219, %v222
    %v225 = vadd.f32 %v220, %v223
    %v226 = vstv %s212
    %v227 = vmul.f32 %v226, %v89
    %v228 = vmul.f32 %v226, %v90
    %v229 = vadd.f32 %v224, %v227
    %v230 = vadd.f32 %v225, %v228
    %vm231 = vcmp.gt.f32.partialorder %v229, 0.0
    %vm232 = vcmp.gt.f32.partialorder %v230, 0.0
    %v233 = vmul.f32 %v229, 1.442695
    %v234 = vpow.pop %v233
    %v235 = vmul.f32 %v230, 1.442695
    %v236 = vpow.pop %v235
    %v237 = vsub.f32 %v234, 1.0
    %v238 = vsub.f32 %v236, 1.0
    %v239 = vmul.f32 %v237, 1.6732632
    %v240 = vmul.f32 %v238, 1.6732632
    %v241 = vsel %vm231, %v229, %v239
    %v242 = vsel %vm232, %v230, %v240
    %s243 = sld [smem:[#allocation6 + $0x10]]
    %s244 = sld [smem:[#allocation6 + $0x11]]
    %s245 = sld [smem:[#allocation6 + $0x12]]
    %s246 = sld [smem:[#allocation6 + $0x13]]
    %v247 = vstv %s243
    %v248 = vmul.f32 %v247, %v83
    %v249 = vmul.f32 %v247, %v84
    %v250 = vstv %s244
    %v251 = vmul.f32 %v250, %v85
    %v252 = vmul.f32 %v250, %v86
    %v253 = vadd.f32 %v248, %v251
    %v254 = vadd.f32 %v249, %v252
    %v255 = vstv %s245
    %v256 = vmul.f32 %v255, %v87
    %v257 = vmul.f32 %v255, %v88
    %v258 = vadd.f32 %v253, %v256
    %v259 = vadd.f32 %v254, %v257
    %v260 = vstv %s246
    %v261 = vmul.f32 %v260, %v89
    %v262 = vmul.f32 %v260, %v90
    %v263 = vadd.f32 %v258, %v261
    %v264 = vadd.f32 %v259, %v262
    %vm265 = vcmp.gt.f32.partialorder %v263, 0.0
    %vm266 = vcmp.gt.f32.partialorder %v264, 0.0
    %v267 = vmul.f32 %v263, 1.442695
    %v268 = vpow.pop %v267
    %v269 = vmul.f32 %v264, 1.442695
    %v270 = vpow.pop %v269
    %v271 = vsub.f32 %v268, 1.0
    %v272 = vsub.f32 %v270, 1.0
    %v273 = vmul.f32 %v271, 1.6732632
    %v274 = vmul.f32 %v272, 1.6732632
    %v275 = vsel %vm265, %v263, %v273
    %v276 = vsel %vm266, %v264, %v274
    %s277 = sld [smem:[#allocation6 + $0x14]]
    %s278 = sld [smem:[#allocation6 + $0x15]]
    %s279 = sld [smem:[#allocation6 + $0x16]]
    %s280 = sld [smem:[#allocation6 + $0x17]]
    %v281 = vstv %s277
    %v282 = vmul.f32 %v281, %v83
    %v283 = vmul.f32 %v281, %v84
    %v284 = vstv %s278
    %v285 = vmul.f32 %v284, %v85
    %v286 = vmul.f32 %v284, %v86
    %v287 = vadd.f32 %v282, %v285
    %v288 = vadd.f32 %v283, %v286
    %v289 = vstv %s279
    %v290 = vmul.f32 %v289, %v87
    %v291 = vmul.f32 %v289, %v88
    %v292 = vadd.f32 %v287, %v290
    %v293 = vadd.f32 %v288, %v291
    %v294 = vstv %s280
    %v295 = vmul.f32 %v294, %v89
    %v296 = vmul.f32 %v294, %v90
    %v297 = vadd.f32 %v292, %v295
    %v298 = vadd.f32 %v293, %v296
    %vm299 = vcmp.gt.f32.partialorder %v297, 0.0
    %vm300 = vcmp.gt.f32.partialorder %v298, 0.0
    %v301 = vmul.f32 %v297, 1.442695
    %v302 = vpow.pop %v301
    %v303 = vmul.f32 %v298, 1.442695
    %v304 = vpow.pop %v303
    %v305 = vsub.f32 %v302, 1.0
    %v306 = vsub.f32 %v304, 1.0
    %v307 = vmul.f32 %v305, 1.6732632
    %v308 = vmul.f32 %v306, 1.6732632
    %v309 = vsel %vm299, %v297, %v307
    %v310 = vsel %vm300, %v298, %v308
    %s311 = sld [smem:[#allocation6 + $0x18]]
    %s312 = sld [smem:[#allocation6 + $0x19]]
    %s313 = sld [smem:[#allocation6 + $0x1a]]
    %s314 = sld [smem:[#allocation6 + $0x1b]]
    %v315 = vstv %s311
    %v316 = vmul.f32 %v315, %v83
    %v317 = vmul.f32 %v315, %v84
    %v318 = vstv %s312
    %v319 = vmul.f32 %v318, %v85
    %v320 = vmul.f32 %v318, %v86
    %v321 = vadd.f32 %v316, %v319
    %v322 = vadd.f32 %v317, %v320
    %v323 = vstv %s313
    %v324 = vmul.f32 %v323, %v87
    %v325 = vmul.f32 %v323, %v88
    %v326 = vadd.f32 %v321, %v324
    %v327 = vadd.f32 %v322, %v325
    %v328 = vstv %s314
    %v329 = vmul.f32 %v328, %v89
    %v330 = vmul.f32 %v328, %v90
    %v331 = vadd.f32 %v326, %v329
    %v332 = vadd.f32 %v327, %v330
    %vm333 = vcmp.gt.f32.partialorder %v331, 0.0
    %vm334 = vcmp.gt.f32.partialorder %v332, 0.0
    %v335 = vmul.f32 %v331, 1.442695
    %v336 = vpow.pop %v335
    %v337 = vmul.f32 %v332, 1.442695
    %v338 = vpow.pop %v337
    %v339 = vsub.f32 %v336, 1.0
    %v340 = vsub.f32 %v338, 1.0
    %v341 = vmul.f32 %v339, 1.6732632
    %v342 = vmul.f32 %v340, 1.6732632
    %v343 = vsel %vm333, %v331, %v341
    %v344 = vsel %vm334, %v332, %v342
    %s345 = sld [smem:[#allocation6 + $0x1c]]
    %s346 = sld [smem:[#allocation6 + $0x1d]]
    %s347 = sld [smem:[#allocation6 + $0x1e]]
    %s348 = sld [smem:[#allocation6 + $0x1f]]
    %v349 = vstv %s345
    %v350 = vmul.f32 %v349, %v83
    %v351 = vmul.f32 %v349, %v84
    %v352 = vstv %s346
    %v353 = vmul.f32 %v352, %v85
    %v354 = vmul.f32 %v352, %v86
    %v355 = vadd.f32 %v350, %v353
    %v356 = vadd.f32 %v351, %v354
    %v357 = vstv %s347
    %v358 = vmul.f32 %v357, %v87
    %v359 = vmul.f32 %v357, %v88
    %v360 = vadd.f32 %v355, %v358
    %v361 = vadd.f32 %v356, %v359
    %v362 = vstv %s348
    %v363 = vmul.f32 %v362, %v89
    %v364 = vmul.f32 %v362, %v90
    %v365 = vadd.f32 %v360, %v363
    %v366 = vadd.f32 %v361, %v364
    %vm367 = vcmp.gt.f32.partialorder %v365, 0.0
    %vm368 = vcmp.gt.f32.partialorder %v366, 0.0
    %v369 = vmul.f32 %v365, 1.442695
    %v370 = vpow.pop %v369
    %v371 = vmul.f32 %v366, 1.442695
    %v372 = vpow.pop %v371
    %v373 = vsub.f32 %v370, 1.0
    %v374 = vsub.f32 %v372, 1.0
    %v375 = vmul.f32 %v373, 1.6732632
    %v376 = vmul.f32 %v374, 1.6732632
    %v377 = vsel %vm367, %v365, %v375
    %v378 = vsel %vm368, %v366, %v376
    %vm381 = vcmask 1040384
    %v382 = vrot.slane %v139, 7
    %v383 = vrot.slane %v140, 7
    %v384 = vsel %vm381, %v382, %v383
    %v388 = vsel %vm381, 0.0, %v382
    %v389 = vsel %vm381, %v383, 0.0
    %v392 = vrot.slane %v173, 7
    %v393 = vrot.slane %v174, 7
    %v394 = vsel %vm381, %v392, %v393
    %v398 = vsel %vm381, 0.0, %v392
    %v399 = vsel %vm381, %v393, 0.0
    %v402 = vrot.slane %v207, 7
    %v403 = vrot.slane %v208, 7
    %v404 = vsel %vm381, %v402, %v403
    %v408 = vsel %vm381, 0.0, %v402
    %v409 = vsel %vm381, %v403, 0.0
    %v412 = vrot.slane %v241, 7
    %v413 = vrot.slane %v242, 7
    %v414 = vsel %vm381, %v412, %v413
    %v418 = vsel %vm381, 0.0, %v412
    %v419 = vsel %vm381, %v413, 0.0
    %v422 = vrot.slane %v275, 7
    %v423 = vrot.slane %v276, 7
    %v424 = vsel %vm381, %v422, %v423
    %v428 = vsel %vm381, 0.0, %v422
    %v429 = vsel %vm381, %v423, 0.0
    %v432 = vrot.slane %v309, 7
    %v433 = vrot.slane %v310, 7
    %v434 = vsel %vm381, %v432, %v433
    %v438 = vsel %vm381, 0.0, %v432
    %v439 = vsel %vm381, %v433, 0.0
    %v442 = vrot.slane %v343, 7
    %v443 = vrot.slane %v344, 7
    %v444 = vsel %vm381, %v442, %v443
    %v448 = vsel %vm381, 0.0, %v442
    %v449 = vsel %vm381, %v443, 0.0
    %v452 = vrot.slane %v377, 7
    %v453 = vrot.slane %v378, 7
    %v454 = vsel %vm381, %v452, %v453
    %v458 = vsel %vm381, 0.0, %v452
    %v459 = vsel %vm381, %v453, 0.0
    %460 = vrot.lane.b32.xlu0 %v388, 1
    %v461 = vpop.permute.xlu0 %460
    %462 = vrot.lane.b32.xlu0 %v384, 1
    %v463 = vpop.permute.xlu0 %462
    %v464 = vsel %vm105, %v461, 0.0
    %v465 = vsel %vm105, %v463, 0.0
    %s466 = sld [smem:[#allocation7]]
    %s467 = sld [smem:[#allocation7 + $0x48]]
    %s468 = sld [smem:[#allocation7 + $0x90]]
    %s469 = sld [smem:[#allocation7 + $0xd8]]
    %v470 = vstv %s466
    %v471 = vmul.f32 %v470, %v464
    %v472 = vmul.f32 %v470, %v465
    %v473 = vstv %s467
    %v474 = vmul.f32 %v473, %v464
    %v475 = vmul.f32 %v473, %v465
    %v476 = vstv %s468
    %v477 = vmul.f32 %v476, %v464
    %v478 = vmul.f32 %v476, %v465
    %v479 = vstv %s469
    %v480 = vmul.f32 %v479, %v464
    %v481 = vmul.f32 %v479, %v465
    %482 = vrot.lane.b32.xlu0 %v398, 1
    %v483 = vpop.permute.xlu0 %482
    %484 = vrot.lane.b32.xlu0 %v394, 1
    %v485 = vpop.permute.xlu0 %484
    %v486 = vsel %vm105, %v483, 0.0
    %v487 = vsel %vm105, %v485, 0.0
    %s488 = sld [smem:[#allocation7 + $0x9]]
    %s489 = sld [smem:[#allocation7 + $0x51]]
    %s490 = sld [smem:[#allocation7 + $0x99]]
    %s491 = sld [smem:[#allocation7 + $0xe1]]
    %v492 = vstv %s488
    %v493 = vmul.f32 %v492, %v486
    %v494 = vmul.f32 %v492, %v487
    %v495 = vadd.f32 %v471, %v493
    %v496 = vadd.f32 %v472, %v494
    %v497 = vstv %s489
    %v498 = vmul.f32 %v497, %v486
    %v499 = vmul.f32 %v497, %v487
    %v500 = vadd.f32 %v474, %v498
    %v501 = vadd.f32 %v475, %v499
    %v502 = vstv %s490
    %v503 = vmul.f32 %v502, %v486
    %v504 = vmul.f32 %v502, %v487
    %v505 = vadd.f32 %v477, %v503
    %v506 = vadd.f32 %v478, %v504
    %v507 = vstv %s491
    %v508 = vmul.f32 %v507, %v486
    %v509 = vmul.f32 %v507, %v487
    %v510 = vadd.f32 %v480, %v508
    %v511 = vadd.f32 %v481, %v509
    %512 = vrot.lane.b32.xlu0 %v408, 1
    %v513 = vpop.permute.xlu0 %512
    %514 = vrot.lane.b32.xlu0 %v404, 1
    %v515 = vpop.permute.xlu0 %514
    %v516 = vsel %vm105, %v513, 0.0
    %v517 = vsel %vm105, %v515, 0.0
    %s518 = sld [smem:[#allocation7 + $0x12]]
    %s519 = sld [smem:[#allocation7 + $0x5a]]
    %s520 = sld [smem:[#allocation7 + $0xa2]]
    %s521 = sld [smem:[#allocation7 + $0xea]]
    %v522 = vstv %s518
    %v523 = vmul.f32 %v522, %v516
    %v524 = vmul.f32 %v522, %v517
    %v525 = vadd.f32 %v495, %v523
    %v526 = vadd.f32 %v496, %v524
    %v527 = vstv %s519
    %v528 = vmul.f32 %v527, %v516
    %v529 = vmul.f32 %v527, %v517
    %v530 = vadd.f32 %v500, %v528
    %v531 = vadd.f32 %v501, %v529
    %v532 = vstv %s520
    %v533 = vmul.f32 %v532, %v516
    %v534 = vmul.f32 %v532, %v517
    %v535 = vadd.f32 %v505, %v533
    %v536 = vadd.f32 %v506, %v534
    %v537 = vstv %s521
    %v538 = vmul.f32 %v537, %v516
    %v539 = vmul.f32 %v537, %v517
    %v540 = vadd.f32 %v510, %v538
    %v541 = vadd.f32 %v511, %v539
    %542 = vrot.lane.b32.xlu0 %v418, 1
    %v543 = vpop.permute.xlu0 %542
    %544 = vrot.lane.b32.xlu0 %v414, 1
    %v545 = vpop.permute.xlu0 %544
    %v546 = vsel %vm105, %v543, 0.0
    %v547 = vsel %vm105, %v545, 0.0
    %s548 = sld [smem:[#allocation7 + $0x1b]]
    %s549 = sld [smem:[#allocation7 + $0x63]]
    %s550 = sld [smem:[#allocation7 + $0xab]]
    %s551 = sld [smem:[#allocation7 + $0xf3]]
    %v552 = vstv %s548
    %v553 = vmul.f32 %v552, %v546
    %v554 = vmul.f32 %v552, %v547
    %v555 = vadd.f32 %v525, %v553
    %v556 = vadd.f32 %v526, %v554
    %v557 = vstv %s549
    %v558 = vmul.f32 %v557, %v546
    %v559 = vmul.f32 %v557, %v547
    %v560 = vadd.f32 %v530, %v558
    %v561 = vadd.f32 %v531, %v559
    %v562 = vstv %s550
    %v563 = vmul.f32 %v562, %v546
    %v564 = vmul.f32 %v562, %v547
    %v565 = vadd.f32 %v535, %v563
    %v566 = vadd.f32 %v536, %v564
    %v567 = vstv %s551
    %v568 = vmul.f32 %v567, %v546
    %v569 = vmul.f32 %v567, %v547
    %v570 = vadd.f32 %v540, %v568
    %v571 = vadd.f32 %v541, %v569
    %572 = vrot.lane.b32.xlu0 %v428, 1
    %v573 = vpop.permute.xlu0 %572
    %574 = vrot.lane.b32.xlu0 %v424, 1
    %v575 = vpop.permute.xlu0 %574
    %v576 = vsel %vm105, %v573, 0.0
    %v577 = vsel %vm105, %v575, 0.0
    %s578 = sld [smem:[#allocation7 + $0x24]]
    %s579 = sld [smem:[#allocation7 + $0x6c]]
    %s580 = sld [smem:[#allocation7 + $0xb4]]
    %s581 = sld [smem:[#allocation7 + $0xfc]]
    %v582 = vstv %s578
    %v583 = vmul.f32 %v582, %v576
    %v584 = vmul.f32 %v582, %v577
    %v585 = vadd.f32 %v555, %v583
    %v586 = vadd.f32 %v556, %v584
    %v587 = vstv %s579
    %v588 = vmul.f32 %v587, %v576
    %v589 = vmul.f32 %v587, %v577
    %v590 = vadd.f32 %v560, %v588
    %v591 = vadd.f32 %v561, %v589
    %v592 = vstv %s580
    %v593 = vmul.f32 %v592, %v576
    %v594 = vmul.f32 %v592, %v577
    %v595 = vadd.f32 %v565, %v593
    %v596 = vadd.f32 %v566, %v594
    %v597 = vstv %s581
    %v598 = vmul.f32 %v597, %v576
    %v599 = vmul.f32 %v597, %v577
    %v600 = vadd.f32 %v570, %v598
    %v601 = vadd.f32 %v571, %v599
    %602 = vrot.lane.b32.xlu0 %v438, 1
    %v603 = vpop.permute.xlu0 %602
    %604 = vrot.lane.b32.xlu0 %v434, 1
    %v605 = vpop.permute.xlu0 %604
    %v606 = vsel %vm105, %v603, 0.0
    %v607 = vsel %vm105, %v605, 0.0
    %s608 = sld [smem:[#allocation7 + $0x2d]]
    %s609 = sld [smem:[#allocation7 + $0x75]]
    %s610 = sld [smem:[#allocation7 + $0xbd]]
    %s611 = sld [smem:[#allocation7 + $0x105]]
    %v612 = vstv %s608
    %v613 = vmul.f32 %v612, %v606
    %v614 = vmul.f32 %v612, %v607
    %v615 = vadd.f32 %v585, %v613
    %v616 = vadd.f32 %v586, %v614
    %v617 = vstv %s609
    %v618 = vmul.f32 %v617, %v606
    %v619 = vmul.f32 %v617, %v607
    %v620 = vadd.f32 %v590, %v618
    %v621 = vadd.f32 %v591, %v619
    %v622 = vstv %s610
    %v623 = vmul.f32 %v622, %v606
    %v624 = vmul.f32 %v622, %v607
    %v625 = vadd.f32 %v595, %v623
    %v626 = vadd.f32 %v596, %v624
    %v627 = vstv %s611
    %v628 = vmul.f32 %v627, %v606
    %v629 = vmul.f32 %v627, %v607
    %v630 = vadd.f32 %v600, %v628
    %v631 = vadd.f32 %v601, %v629
    %632 = vrot.lane.b32.xlu0 %v448, 1
    %v633 = vpop.permute.xlu0 %632
    %634 = vrot.lane.b32.xlu0 %v444, 1
    %v635 = vpop.permute.xlu0 %634
    %v636 = vsel %vm105, %v633, 0.0
    %v637 = vsel %vm105, %v635, 0.0
    %s638 = sld [smem:[#allocation7 + $0x36]]
    %s639 = sld [smem:[#allocation7 + $0x7e]]
    %s640 = sld [smem:[#allocation7 + $0xc6]]
    %s641 = sld [smem:[#allocation7 + $0x10e]]
    %v642 = vstv %s638
    %v643 = vmul.f32 %v642, %v636
    %v644 = vmul.f32 %v642, %v637
    %v645 = vadd.f32 %v615, %v643
    %v646 = vadd.f32 %v616, %v644
    %v647 = vstv %s639
    %v648 = vmul.f32 %v647, %v636
    %v649 = vmul.f32 %v647, %v637
    %v650 = vadd.f32 %v620, %v648
    %v651 = vadd.f32 %v621, %v649
    %v652 = vstv %s640
    %v653 = vmul.f32 %v652, %v636
    %v654 = vmul.f32 %v652, %v637
    %v655 = vadd.f32 %v625, %v653
    %v656 = vadd.f32 %v626, %v654
    %v657 = vstv %s641
    %v658 = vmul.f32 %v657, %v636
    %v659 = vmul.f32 %v657, %v637
    %v660 = vadd.f32 %v630, %v658
    %v661 = vadd.f32 %v631, %v659
    %662 = vrot.lane.b32.xlu0 %v458, 1
    %v663 = vpop.permute.xlu0 %662
    %664 = vrot.lane.b32.xlu0 %v454, 1
    %v665 = vpop.permute.xlu0 %664
    %v666 = vsel %vm105, %v663, 0.0
    %v667 = vsel %vm105, %v665, 0.0
    %s668 = sld [smem:[#allocation7 + $0x3f]]
    %s669 = sld [smem:[#allocation7 + $0x87]]
    %s670 = sld [smem:[#allocation7 + $0xcf]]
    %s671 = sld [smem:[#allocation7 + $0x117]]
    %v672 = vstv %s668
    %v673 = vmul.f32 %v672, %v666
    %v674 = vmul.f32 %v672, %v667
    %v675 = vadd.f32 %v645, %v673
    %v676 = vadd.f32 %v646, %v674
    %v677 = vstv %s669
    %v678 = vmul.f32 %v677, %v666
    %v679 = vmul.f32 %v677, %v667
    %v680 = vadd.f32 %v650, %v678
    %v681 = vadd.f32 %v651, %v679
    %v682 = vstv %s670
    %v683 = vmul.f32 %v682, %v666
    %v684 = vmul.f32 %v682, %v667
    %v685 = vadd.f32 %v655, %v683
    %v686 = vadd.f32 %v656, %v684
    %v687 = vstv %s671
    %v688 = vmul.f32 %v687, %v666
    %v689 = vmul.f32 %v687, %v667
    %v690 = vadd.f32 %v660, %v688
    %v691 = vadd.f32 %v661, %v689
    %s692 = sld [smem:[#allocation7 + $0x1]]
    %s693 = sld [smem:[#allocation7 + $0x49]]
    %s694 = sld [smem:[#allocation7 + $0x91]]
    %s695 = sld [smem:[#allocation7 + $0xd9]]
    %v696 = vstv %s692
    %v697 = vmul.f32 %v696, %v388
    %v698 = vmul.f32 %v696, %v384
    %v699 = vadd.f32 %v675, %v697
    %v700 = vadd.f32 %v676, %v698
    %v701 = vstv %s693
    %v702 = vmul.f32 %v701, %v388
    %v703 = vmul.f32 %v701, %v384
    %v704 = vadd.f32 %v680, %v702
    %v705 = vadd.f32 %v681, %v703
    %v706 = vstv %s694
    %v707 = vmul.f32 %v706, %v388
    %v708 = vmul.f32 %v706, %v384
    %v709 = vadd.f32 %v685, %v707
    %v710 = vadd.f32 %v686, %v708
    %v711 = vstv %s695
    %v712 = vmul.f32 %v711, %v388
    %v713 = vmul.f32 %v711, %v384
    %v714 = vadd.f32 %v690, %v712
    %v715 = vadd.f32 %v691, %v713
    %s716 = sld [smem:[#allocation7 + $0xa]]
    %s717 = sld [smem:[#allocation7 + $0x52]]
    %s718 = sld [smem:[#allocation7 + $0x9a]]
    %s719 = sld [smem:[#allocation7 + $0xe2]]
    %v720 = vstv %s716
    %v721 = vmul.f32 %v720, %v398
    %v722 = vmul.f32 %v720, %v394
    %v723 = vadd.f32 %v699, %v721
    %v724 = vadd.f32 %v700, %v722
    %v725 = vstv %s717
    %v726 = vmul.f32 %v725, %v398
    %v727 = vmul.f32 %v725, %v394
    %v728 = vadd.f32 %v704, %v726
    %v729 = vadd.f32 %v705, %v727
    %v730 = vstv %s718
    %v731 = vmul.f32 %v730, %v398
    %v732 = vmul.f32 %v730, %v394
    %v733 = vadd.f32 %v709, %v731
    %v734 = vadd.f32 %v710, %v732
    %v735 = vstv %s719
    %v736 = vmul.f32 %v735, %v398
    %v737 = vmul.f32 %v735, %v394
    %v738 = vadd.f32 %v714, %v736
    %v739 = vadd.f32 %v715, %v737
    %s740 = sld [smem:[#allocation7 + $0x13]]
    %s741 = sld [smem:[#allocation7 + $0x5b]]
    %s742 = sld [smem:[#allocation7 + $0xa3]]
    %s743 = sld [smem:[#allocation7 + $0xeb]]
    %v744 = vstv %s740
    %v745 = vmul.f32 %v744, %v408
    %v746 = vmul.f32 %v744, %v404
    %v747 = vadd.f32 %v723, %v745
    %v748 = vadd.f32 %v724, %v746
    %v749 = vstv %s741
    %v750 = vmul.f32 %v749, %v408
    %v751 = vmul.f32 %v749, %v404
    %v752 = vadd.f32 %v728, %v750
    %v753 = vadd.f32 %v729, %v751
    %v754 = vstv %s742
    %v755 = vmul.f32 %v754, %v408
    %v756 = vmul.f32 %v754, %v404
    %v757 = vadd.f32 %v733, %v755
    %v758 = vadd.f32 %v734, %v756
    %v759 = vstv %s743
    %v760 = vmul.f32 %v759, %v408
    %v761 = vmul.f32 %v759, %v404
    %v762 = vadd.f32 %v738, %v760
    %v763 = vadd.f32 %v739, %v761
    %s764 = sld [smem:[#allocation7 + $0x1c]]
    %s765 = sld [smem:[#allocation7 + $0x64]]
    %s766 = sld [smem:[#allocation7 + $0xac]]
    %s767 = sld [smem:[#allocation7 + $0xf4]]
    %v768 = vstv %s764
    %v769 = vmul.f32 %v768, %v418
    %v770 = vmul.f32 %v768, %v414
    %v771 = vadd.f32 %v747, %v769
    %v772 = vadd.f32 %v748, %v770
    %v773 = vstv %s765
    %v774 = vmul.f32 %v773, %v418
    %v775 = vmul.f32 %v773, %v414
    %v776 = vadd.f32 %v752, %v774
    %v777 = vadd.f32 %v753, %v775
    %v778 = vstv %s766
    %v779 = vmul.f32 %v778, %v418
    %v780 = vmul.f32 %v778, %v414
    %v781 = vadd.f32 %v757, %v779
    %v782 = vadd.f32 %v758, %v780
    %v783 = vstv %s767
    %v784 = vmul.f32 %v783, %v418
    %v785 = vmul.f32 %v783, %v414
    %v786 = vadd.f32 %v762, %v784
    %v787 = vadd.f32 %v763, %v785
    %s788 = sld [smem:[#allocation7 + $0x25]]
    %s789 = sld [smem:[#allocation7 + $0x6d]]
    %s790 = sld [smem:[#allocation7 + $0xb5]]
    %s791 = sld [smem:[#allocation7 + $0xfd]]
    %v792 = vstv %s788
    %v793 = vmul.f32 %v792, %v428
    %v794 = vmul.f32 %v792, %v424
    %v795 = vadd.f32 %v771, %v793
    %v796 = vadd.f32 %v772, %v794
    %v797 = vstv %s789
    %v798 = vmul.f32 %v797, %v428
    %v799 = vmul.f32 %v797, %v424
    %v800 = vadd.f32 %v776, %v798
    %v801 = vadd.f32 %v777, %v799
    %v802 = vstv %s790
    %v803 = vmul.f32 %v802, %v428
    %v804 = vmul.f32 %v802, %v424
    %v805 = vadd.f32 %v781, %v803
    %v806 = vadd.f32 %v782, %v804
    %v807 = vstv %s791
    %v808 = vmul.f32 %v807, %v428
    %v809 = vmul.f32 %v807, %v424
    %v810 = vadd.f32 %v786, %v808
    %v811 = vadd.f32 %v787, %v809
    %s812 = sld [smem:[#allocation7 + $0x2e]]
    %s813 = sld [smem:[#allocation7 + $0x76]]
    %s814 = sld [smem:[#allocation7 + $0xbe]]
    %s815 = sld [smem:[#allocation7 + $0x106]]
    %v816 = vstv %s812
    %v817 = vmul.f32 %v816, %v438
    %v818 = vmul.f32 %v816, %v434
    %v819 = vadd.f32 %v795, %v817
    %v820 = vadd.f32 %v796, %v818
    %v821 = vstv %s813
    %v822 = vmul.f32 %v821, %v438
    %v823 = vmul.f32 %v821, %v434
    %v824 = vadd.f32 %v800, %v822
    %v825 = vadd.f32 %v801, %v823
    %v826 = vstv %s814
    %v827 = vmul.f32 %v826, %v438
    %v828 = vmul.f32 %v826, %v434
    %v829 = vadd.f32 %v805, %v827
    %v830 = vadd.f32 %v806, %v828
    %v831 = vstv %s815
    %v832 = vmul.f32 %v831, %v438
    %v833 = vmul.f32 %v831, %v434
    %v834 = vadd.f32 %v810, %v832
    %v835 = vadd.f32 %v811, %v833
    %s836 = sld [smem:[#allocation7 + $0x37]]
    %s837 = sld [smem:[#allocation7 + $0x7f]]
    %s838 = sld [smem:[#allocation7 + $0xc7]]
    %s839 = sld [smem:[#allocation7 + $0x10f]]
    %v840 = vstv %s836
    %v841 = vmul.f32 %v840, %v448
    %v842 = vmul.f32 %v840, %v444
    %v843 = vadd.f32 %v819, %v841
    %v844 = vadd.f32 %v820, %v842
    %v845 = vstv %s837
    %v846 = vmul.f32 %v845, %v448
    %v847 = vmul.f32 %v845, %v444
    %v848 = vadd.f32 %v824, %v846
    %v849 = vadd.f32 %v825, %v847
    %v850 = vstv %s838
    %v851 = vmul.f32 %v850, %v448
    %v852 = vmul.f32 %v850, %v444
    %v853 = vadd.f32 %v829, %v851
    %v854 = vadd.f32 %v830, %v852
    %v855 = vstv %s839
    %v856 = vmul.f32 %v855, %v448
    %v857 = vmul.f32 %v855, %v444
    %v858 = vadd.f32 %v834, %v856
    %v859 = vadd.f32 %v835, %v857
    %s860 = sld [smem:[#allocation7 + $0x40]]
    %s861 = sld [smem:[#allocation7 + $0x88]]
    %s862 = sld [smem:[#allocation7 + $0xd0]]
    %s863 = sld [smem:[#allocation7 + $0x118]]
    %v864 = vstv %s860
    %v865 = vmul.f32 %v864, %v458
    %v866 = vmul.f32 %v864, %v454
    %v867 = vadd.f32 %v843, %v865
    %v868 = vadd.f32 %v844, %v866
    %v869 = vstv %s861
    %v870 = vmul.f32 %v869, %v458
    %v871 = vmul.f32 %v869, %v454
    %v872 = vadd.f32 %v848, %v870
    %v873 = vadd.f32 %v849, %v871
    %v874 = vstv %s862
    %v875 = vmul.f32 %v874, %v458
    %v876 = vmul.f32 %v874, %v454
    %v877 = vadd.f32 %v853, %v875
    %v878 = vadd.f32 %v854, %v876
    %v879 = vstv %s863
    %v880 = vmul.f32 %v879, %v458
    %v881 = vmul.f32 %v879, %v454
    %v882 = vadd.f32 %v858, %v880
    %v883 = vadd.f32 %v859, %v881
    %884 = vrot.lane.b32.xlu0 %v388, 127
    %v885 = vpop.permute.xlu0 %884
    %886 = vrot.lane.b32.xlu0 %v384, 127
    %v887 = vpop.permute.xlu0 %886
    %v888 = vsel %vm106, %v885, 0.0
    %v889 = vsel %vm106, %v887, 0.0
    %s890 = sld [smem:[#allocation7 + $0x2]]
    %s891 = sld [smem:[#allocation7 + $0x4a]]
    %s892 = sld [smem:[#allocation7 + $0x92]]
    %s893 = sld [smem:[#allocation7 + $0xda]]
    %v894 = vstv %s890
    %v895 = vmul.f32 %v894, %v888
    %v896 = vmul.f32 %v894, %v889
    %v897 = vadd.f32 %v867, %v895
    %v898 = vadd.f32 %v868, %v896
    %v899 = vstv %s891
    %v900 = vmul.f32 %v899, %v888
    %v901 = vmul.f32 %v899, %v889
    %v902 = vadd.f32 %v872, %v900
    %v903 = vadd.f32 %v873, %v901
    %v904 = vstv %s892
    %v905 = vmul.f32 %v904, %v888
    %v906 = vmul.f32 %v904, %v889
    %v907 = vadd.f32 %v877, %v905
    %v908 = vadd.f32 %v878, %v906
    %v909 = vstv %s893
    %v910 = vmul.f32 %v909, %v888
    %v911 = vmul.f32 %v909, %v889
    %v912 = vadd.f32 %v882, %v910
    %v913 = vadd.f32 %v883, %v911
    %914 = vrot.lane.b32.xlu0 %v398, 127
    %v915 = vpop.permute.xlu0 %914
    %916 = vrot.lane.b32.xlu0 %v394, 127
    %v917 = vpop.permute.xlu0 %916
    %v918 = vsel %vm106, %v915, 0.0
    %v919 = vsel %vm106, %v917, 0.0
    %s920 = sld [smem:[#allocation7 + $0xb]]
    %s921 = sld [smem:[#allocation7 + $0x53]]
    %s922 = sld [smem:[#allocation7 + $0x9b]]
    %s923 = sld [smem:[#allocation7 + $0xe3]]
    %v924 = vstv %s920
    %v925 = vmul.f32 %v924, %v918
    %v926 = vmul.f32 %v924, %v919
    %v927 = vadd.f32 %v897, %v925
    %v928 = vadd.f32 %v898, %v926
    %v929 = vstv %s921
    %v930 = vmul.f32 %v929, %v918
    %v931 = vmul.f32 %v929, %v919
    %v932 = vadd.f32 %v902, %v930
    %v933 = vadd.f32 %v903, %v931
    %v934 = vstv %s922
    %v935 = vmul.f32 %v934, %v918
    %v936 = vmul.f32 %v934, %v919
    %v937 = vadd.f32 %v907, %v935
    %v938 = vadd.f32 %v908, %v936
    %v939 = vstv %s923
    %v940 = vmul.f32 %v939, %v918
    %v941 = vmul.f32 %v939, %v919
    %v942 = vadd.f32 %v912, %v940
    %v943 = vadd.f32 %v913, %v941
    %944 = vrot.lane.b32.xlu0 %v408, 127
    %v945 = vpop.permute.xlu0 %944
    %946 = vrot.lane.b32.xlu0 %v404, 127
    %v947 = vpop.permute.xlu0 %946
    %v948 = vsel %vm106, %v945, 0.0
    %v949 = vsel %vm106, %v947, 0.0
    %s950 = sld [smem:[#allocation7 + $0x14]]
    %s951 = sld [smem:[#allocation7 + $0x5c]]
    %s952 = sld [smem:[#allocation7 + $0xa4]]
    %s953 = sld [smem:[#allocation7 + $0xec]]
    %v954 = vstv %s950
    %v955 = vmul.f32 %v954, %v948
    %v956 = vmul.f32 %v954, %v949
    %v957 = vadd.f32 %v927, %v955
    %v958 = vadd.f32 %v928, %v956
    %v959 = vstv %s951
    %v960 = vmul.f32 %v959, %v948
    %v961 = vmul.f32 %v959, %v949
    %v962 = vadd.f32 %v932, %v960
    %v963 = vadd.f32 %v933, %v961
    %v964 = vstv %s952
    %v965 = vmul.f32 %v964, %v948
    %v966 = vmul.f32 %v964, %v949
    %v967 = vadd.f32 %v937, %v965
    %v968 = vadd.f32 %v938, %v966
    %v969 = vstv %s953
    %v970 = vmul.f32 %v969, %v948
    %v971 = vmul.f32 %v969, %v949
    %v972 = vadd.f32 %v942, %v970
    %v973 = vadd.f32 %v943, %v971
    %974 = vrot.lane.b32.xlu0 %v418, 127
    %v975 = vpop.permute.xlu0 %974
    %976 = vrot.lane.b32.xlu0 %v414, 127
    %v977 = vpop.permute.xlu0 %976
    %v978 = vsel %vm106, %v975, 0.0
    %v979 = vsel %vm106, %v977, 0.0
    %s980 = sld [smem:[#allocation7 + $0x1d]]
    %s981 = sld [smem:[#allocation7 + $0x65]]
    %s982 = sld [smem:[#allocation7 + $0xad]]
    %s983 = sld [smem:[#allocation7 + $0xf5]]
    %v984 = vstv %s980
    %v985 = vmul.f32 %v984, %v978
    %v986 = vmul.f32 %v984, %v979
    %v987 = vadd.f32 %v957, %v985
    %v988 = vadd.f32 %v958, %v986
    %v989 = vstv %s981
    %v990 = vmul.f32 %v989, %v978
    %v991 = vmul.f32 %v989, %v979
    %v992 = vadd.f32 %v962, %v990
    %v993 = vadd.f32 %v963, %v991
    %v994 = vstv %s982
    %v995 = vmul.f32 %v994, %v978
    %v996 = vmul.f32 %v994, %v979
    %v997 = vadd.f32 %v967, %v995
    %v998 = vadd.f32 %v968, %v996
    %v999 = vstv %s983
    %v1000 = vmul.f32 %v999, %v978
    %v1001 = vmul.f32 %v999, %v979
    %v1002 = vadd.f32 %v972, %v1000
    %v1003 = vadd.f32 %v973, %v1001
    %1004 = vrot.lane.b32.xlu0 %v428, 127
    %v1005 = vpop.permute.xlu0 %1004
    %1006 = vrot.lane.b32.xlu0 %v424, 127
    %v1007 = vpop.permute.xlu0 %1006
    %v1008 = vsel %vm106, %v1005, 0.0
    %v1009 = vsel %vm106, %v1007, 0.0
    %s1010 = sld [smem:[#allocation7 + $0x26]]
    %s1011 = sld [smem:[#allocation7 + $0x6e]]
    %s1012 = sld [smem:[#allocation7 + $0xb6]]
    %s1013 = sld [smem:[#allocation7 + $0xfe]]
    %v1014 = vstv %s1010
    %v1015 = vmul.f32 %v1014, %v1008
    %v1016 = vmul.f32 %v1014, %v1009
    %v1017 = vadd.f32 %v987, %v1015
    %v1018 = vadd.f32 %v988, %v1016
    %v1019 = vstv %s1011
    %v1020 = vmul.f32 %v1019, %v1008
    %v1021 = vmul.f32 %v1019, %v1009
    %v1022 = vadd.f32 %v992, %v1020
    %v1023 = vadd.f32 %v993, %v1021
    %v1024 = vstv %s1012
    %v1025 = vmul.f32 %v1024, %v1008
    %v1026 = vmul.f32 %v1024, %v1009
    %v1027 = vadd.f32 %v997, %v1025
    %v1028 = vadd.f32 %v998, %v1026
    %v1029 = vstv %s1013
    %v1030 = vmul.f32 %v1029, %v1008
    %v1031 = vmul.f32 %v1029, %v1009
    %v1032 = vadd.f32 %v1002, %v1030
    %v1033 = vadd.f32 %v1003, %v1031
    %1034 = vrot.lane.b32.xlu0 %v438, 127
    %v1035 = vpop.permute.xlu0 %1034
    %1036 = vrot.lane.b32.xlu0 %v434, 127
    %v1037 = vpop.permute.xlu0 %1036
    %v1038 = vsel %vm106, %v1035, 0.0
    %v1039 = vsel %vm106, %v1037, 0.0
    %s1040 = sld [smem:[#allocation7 + $0x2f]]
    %s1041 = sld [smem:[#allocation7 + $0x77]]
    %s1042 = sld [smem:[#allocation7 + $0xbf]]
    %s1043 = sld [smem:[#allocation7 + $0x107]]
    %v1044 = vstv %s1040
    %v1045 = vmul.f32 %v1044, %v1038
    %v1046 = vmul.f32 %v1044, %v1039
    %v1047 = vadd.f32 %v1017, %v1045
    %v1048 = vadd.f32 %v1018, %v1046
    %v1049 = vstv %s1041
    %v1050 = vmul.f32 %v1049, %v1038
    %v1051 = vmul.f32 %v1049, %v1039
    %v1052 = vadd.f32 %v1022, %v1050
    %v1053 = vadd.f32 %v1023, %v1051
    %v1054 = vstv %s1042
    %v1055 = vmul.f32 %v1054, %v1038
    %v1056 = vmul.f32 %v1054, %v1039
    %v1057 = vadd.f32 %v1027, %v1055
    %v1058 = vadd.f32 %v1028, %v1056
    %v1059 = vstv %s1043
    %v1060 = vmul.f32 %v1059, %v1038
    %v1061 = vmul.f32 %v1059, %v1039
    %v1062 = vadd.f32 %v1032, %v1060
    %v1063 = vadd.f32 %v1033, %v1061
    %1064 = vrot.lane.b32.xlu0 %v448, 127
    %v1065 = vpop.permute.xlu0 %1064
    %1066 = vrot.lane.b32.xlu0 %v444, 127
    %v1067 = vpop.permute.xlu0 %1066
    %v1068 = vsel %vm106, %v1065, 0.0
    %v1069 = vsel %vm106, %v1067, 0.0
    %s1070 = sld [smem:[#allocation7 + $0x38]]
    %s1071 = sld [smem:[#allocation7 + $0x80]]
    %s1072 = sld [smem:[#allocation7 + $0xc8]]
    %s1073 = sld [smem:[#allocation7 + $0x110]]
    %v1074 = vstv %s1070
    %v1075 = vmul.f32 %v1074, %v1068
    %v1076 = vmul.f32 %v1074, %v1069
    %v1077 = vadd.f32 %v1047, %v1075
    %v1078 = vadd.f32 %v1048, %v1076
    %v1079 = vstv %s1071
    %v1080 = vmul.f32 %v1079, %v1068
    %v1081 = vmul.f32 %v1079, %v1069
    %v1082 = vadd.f32 %v1052, %v1080
    %v1083 = vadd.f32 %v1053, %v1081
    %v1084 = vstv %s1072
    %v1085 = vmul.f32 %v1084, %v1068
    %v1086 = vmul.f32 %v1084, %v1069
    %v1087 = vadd.f32 %v1057, %v1085
    %v1088 = vadd.f32 %v1058, %v1086
    %v1089 = vstv %s1073
    %v1090 = vmul.f32 %v1089, %v1068
    %v1091 = vmul.f32 %v1089, %v1069
    %v1092 = vadd.f32 %v1062, %v1090
    %v1093 = vadd.f32 %v1063, %v1091
    %1094 = vrot.lane.b32.xlu0 %v458, 127
    %v1095 = vpop.permute.xlu0 %1094
    %1096 = vrot.lane.b32.xlu0 %v454, 127
    %v1097 = vpop.permute.xlu0 %1096
    %v1098 = vsel %vm106, %v1095, 0.0
    %v1099 = vsel %vm106, %v1097, 0.0
    %s1100 = sld [smem:[#allocation7 + $0x41]]
    %s1101 = sld [smem:[#allocation7 + $0x89]]
    %s1102 = sld [smem:[#allocation7 + $0xd1]]
    %s1103 = sld [smem:[#allocation7 + $0x119]]
    %v1104 = vstv %s1100
    %v1105 = vmul.f32 %v1104, %v1098
    %v1106 = vmul.f32 %v1104, %v1099
    %v1107 = vadd.f32 %v1077, %v1105
    %v1108 = vadd.f32 %v1078, %v1106
    %v1109 = vstv %s1101
    %v1110 = vmul.f32 %v1109, %v1098
    %v1111 = vmul.f32 %v1109, %v1099
    %v1112 = vadd.f32 %v1082, %v1110
    %v1113 = vadd.f32 %v1083, %v1111
    %v1114 = vstv %s1102
    %v1115 = vmul.f32 %v1114, %v1098
    %v1116 = vmul.f32 %v1114, %v1099
    %v1117 = vadd.f32 %v1087, %v1115
    %v1118 = vadd.f32 %v1088, %v1116
    %v1119 = vstv %s1103
    %v1120 = vmul.f32 %v1119, %v1098
    %v1121 = vmul.f32 %v1119, %v1099
    %v1122 = vadd.f32 %v1092, %v1120
    %v1123 = vadd.f32 %v1093, %v1121
    %vm1126 = vcmask 1046528
    %v1127 = vrot.slane %v388, 1
    %v1128 = vrot.slane %v384, 1
    %v1129 = vsel %vm1126, %v1127, %v1128
    %v1130 = vrot.slane %v389, 1
    %v1131 = vsel %vm1126, %v1128, %v1130
    %1134 = vrot.lane.b32.xlu0 %v1129, 1
    %v1135 = vpop.permute.xlu0 %1134
    %1136 = vrot.lane.b32.xlu0 %v1131, 1
    %v1137 = vpop.permute.xlu0 %1136
    %v1138 = vsel %vm105, %v1135, 0.0
    %v1139 = vsel %vm105, %v1137, 0.0
    %s1140 = sld [smem:[#allocation7 + $0x3]]
    %s1141 = sld [smem:[#allocation7 + $0x4b]]
    %s1142 = sld [smem:[#allocation7 + $0x93]]
    %s1143 = sld [smem:[#allocation7 + $0xdb]]
    %v1144 = vstv %s1140
    %v1145 = vmul.f32 %v1144, %v1138
    %v1146 = vmul.f32 %v1144, %v1139
    %v1147 = vadd.f32 %v1107, %v1145
    %v1148 = vadd.f32 %v1108, %v1146
    %v1149 = vstv %s1141
    %v1150 = vmul.f32 %v1149, %v1138
    %v1151 = vmul.f32 %v1149, %v1139
    %v1152 = vadd.f32 %v1112, %v1150
    %v1153 = vadd.f32 %v1113, %v1151
    %v1154 = vstv %s1142
    %v1155 = vmul.f32 %v1154, %v1138
    %v1156 = vmul.f32 %v1154, %v1139
    %v1157 = vadd.f32 %v1117, %v1155
    %v1158 = vadd.f32 %v1118, %v1156
    %v1159 = vstv %s1143
    %v1160 = vmul.f32 %v1159, %v1138
    %v1161 = vmul.f32 %v1159, %v1139
    %v1162 = vadd.f32 %v1122, %v1160
    %v1163 = vadd.f32 %v1123, %v1161
    %v1166 = vrot.slane %v398, 1
    %v1167 = vrot.slane %v394, 1
    %v1168 = vsel %vm1126, %v1166, %v1167
    %v1169 = vrot.slane %v399, 1
    %v1170 = vsel %vm1126, %v1167, %v1169
    %1173 = vrot.lane.b32.xlu0 %v1168, 1
    %v1174 = vpop.permute.xlu0 %1173
    %1175 = vrot.lane.b32.xlu0 %v1170, 1
    %v1176 = vpop.permute.xlu0 %1175
    %v1177 = vsel %vm105, %v1174, 0.0
    %v1178 = vsel %vm105, %v1176, 0.0
    %s1179 = sld [smem:[#allocation7 + $0xc]]
    %s1180 = sld [smem:[#allocation7 + $0x54]]
    %s1181 = sld [smem:[#allocation7 + $0x9c]]
    %s1182 = sld [smem:[#allocation7 + $0xe4]]
    %v1183 = vstv %s1179
    %v1184 = vmul.f32 %v1183, %v1177
    %v1185 = vmul.f32 %v1183, %v1178
    %v1186 = vadd.f32 %v1147, %v1184
    %v1187 = vadd.f32 %v1148, %v1185
    %v1188 = vstv %s1180
    %v1189 = vmul.f32 %v1188, %v1177
    %v1190 = vmul.f32 %v1188, %v1178
    %v1191 = vadd.f32 %v1152, %v1189
    %v1192 = vadd.f32 %v1153, %v1190
    %v1193 = vstv %s1181
    %v1194 = vmul.f32 %v1193, %v1177
    %v1195 = vmul.f32 %v1193, %v1178
    %v1196 = vadd.f32 %v1157, %v1194
    %v1197 = vadd.f32 %v1158, %v1195
    %v1198 = vstv %s1182
    %v1199 = vmul.f32 %v1198, %v1177
    %v1200 = vmul.f32 %v1198, %v1178
    %v1201 = vadd.f32 %v1162, %v1199
    %v1202 = vadd.f32 %v1163, %v1200
    %v1205 = vrot.slane %v408, 1
    %v1206 = vrot.slane %v404, 1
    %v1207 = vsel %vm1126, %v1205, %v1206
    %v1208 = vrot.slane %v409, 1
    %v1209 = vsel %vm1126, %v1206, %v1208
    %1212 = vrot.lane.b32.xlu0 %v1207, 1
    %v1213 = vpop.permute.xlu0 %1212
    %1214 = vrot.lane.b32.xlu0 %v1209, 1
    %v1215 = vpop.permute.xlu0 %1214
    %v1216 = vsel %vm105, %v1213, 0.0
    %v1217 = vsel %vm105, %v1215, 0.0
    %s1218 = sld [smem:[#allocation7 + $0x15]]
    %s1219 = sld [smem:[#allocation7 + $0x5d]]
    %s1220 = sld [smem:[#allocation7 + $0xa5]]
    %s1221 = sld [smem:[#allocation7 + $0xed]]
    %v1222 = vstv %s1218
    %v1223 = vmul.f32 %v1222, %v1216
    %v1224 = vmul.f32 %v1222, %v1217
    %v1225 = vadd.f32 %v1186, %v1223
    %v1226 = vadd.f32 %v1187, %v1224
    %v1227 = vstv %s1219
    %v1228 = vmul.f32 %v1227, %v1216
    %v1229 = vmul.f32 %v1227, %v1217
    %v1230 = vadd.f32 %v1191, %v1228
    %v1231 = vadd.f32 %v1192, %v1229
    %v1232 = vstv %s1220
    %v1233 = vmul.f32 %v1232, %v1216
    %v1234 = vmul.f32 %v1232, %v1217
    %v1235 = vadd.f32 %v1196, %v1233
    %v1236 = vadd.f32 %v1197, %v1234
    %v1237 = vstv %s1221
    %v1238 = vmul.f32 %v1237, %v1216
    %v1239 = vmul.f32 %v1237, %v1217
    %v1240 = vadd.f32 %v1201, %v1238
    %v1241 = vadd.f32 %v1202, %v1239
    %v1244 = vrot.slane %v418, 1
    %v1245 = vrot.slane %v414, 1
    %v1246 = vsel %vm1126, %v1244, %v1245
    %v1247 = vrot.slane %v419, 1
    %v1248 = vsel %vm1126, %v1245, %v1247
    %1251 = vrot.lane.b32.xlu0 %v1246, 1
    %v1252 = vpop.permute.xlu0 %1251
    %1253 = vrot.lane.b32.xlu0 %v1248, 1
    %v1254 = vpop.permute.xlu0 %1253
    %v1255 = vsel %vm105, %v1252, 0.0
    %v1256 = vsel %vm105, %v1254, 0.0
    %s1257 = sld [smem:[#allocation7 + $0x1e]]
    %s1258 = sld [smem:[#allocation7 + $0x66]]
    %s1259 = sld [smem:[#allocation7 + $0xae]]
    %s1260 = sld [smem:[#allocation7 + $0xf6]]
    %v1261 = vstv %s1257
    %v1262 = vmul.f32 %v1261, %v1255
    %v1263 = vmul.f32 %v1261, %v1256
    %v1264 = vadd.f32 %v1225, %v1262
    %v1265 = vadd.f32 %v1226, %v1263
    %v1266 = vstv %s1258
    %v1267 = vmul.f32 %v1266, %v1255
    %v1268 = vmul.f32 %v1266, %v1256
    %v1269 = vadd.f32 %v1230, %v1267
    %v1270 = vadd.f32 %v1231, %v1268
    %v1271 = vstv %s1259
    %v1272 = vmul.f32 %v1271, %v1255
    %v1273 = vmul.f32 %v1271, %v1256
    %v1274 = vadd.f32 %v1235, %v1272
    %v1275 = vadd.f32 %v1236, %v1273
    %v1276 = vstv %s1260
    %v1277 = vmul.f32 %v1276, %v1255
    %v1278 = vmul.f32 %v1276, %v1256
    %v1279 = vadd.f32 %v1240, %v1277
    %v1280 = vadd.f32 %v1241, %v1278
    %v1283 = vrot.slane %v428, 1
    %v1284 = vrot.slane %v424, 1
    %v1285 = vsel %vm1126, %v1283, %v1284
    %v1286 = vrot.slane %v429, 1
    %v1287 = vsel %vm1126, %v1284, %v1286
    %1290 = vrot.lane.b32.xlu0 %v1285, 1
    %v1291 = vpop.permute.xlu0 %1290
    %1292 = vrot.lane.b32.xlu0 %v1287, 1
    %v1293 = vpop.permute.xlu0 %1292
    %v1294 = vsel %vm105, %v1291, 0.0
    %v1295 = vsel %vm105, %v1293, 0.0
    %s1296 = sld [smem:[#allocation7 + $0x27]]
    %s1297 = sld [smem:[#allocation7 + $0x6f]]
    %s1298 = sld [smem:[#allocation7 + $0xb7]]
    %s1299 = sld [smem:[#allocation7 + $0xff]]
    %v1300 = vstv %s1296
    %v1301 = vmul.f32 %v1300, %v1294
    %v1302 = vmul.f32 %v1300, %v1295
    %v1303 = vadd.f32 %v1264, %v1301
    %v1304 = vadd.f32 %v1265, %v1302
    %v1305 = vstv %s1297
    %v1306 = vmul.f32 %v1305, %v1294
    %v1307 = vmul.f32 %v1305, %v1295
    %v1308 = vadd.f32 %v1269, %v1306
    %v1309 = vadd.f32 %v1270, %v1307
    %v1310 = vstv %s1298
    %v1311 = vmul.f32 %v1310, %v1294
    %v1312 = vmul.f32 %v1310, %v1295
    %v1313 = vadd.f32 %v1274, %v1311
    %v1314 = vadd.f32 %v1275, %v1312
    %v1315 = vstv %s1299
    %v1316 = vmul.f32 %v1315, %v1294
    %v1317 = vmul.f32 %v1315, %v1295
    %v1318 = vadd.f32 %v1279, %v1316
    %v1319 = vadd.f32 %v1280, %v1317
    %v1322 = vrot.slane %v438, 1
    %v1323 = vrot.slane %v434, 1
    %v1324 = vsel %vm1126, %v1322, %v1323
    %v1325 = vrot.slane %v439, 1
    %v1326 = vsel %vm1126, %v1323, %v1325
    %1329 = vrot.lane.b32.xlu0 %v1324, 1
    %v1330 = vpop.permute.xlu0 %1329
    %1331 = vrot.lane.b32.xlu0 %v1326, 1
    %v1332 = vpop.permute.xlu0 %1331
    %v1333 = vsel %vm105, %v1330, 0.0
    %v1334 = vsel %vm105, %v1332, 0.0
    %s1335 = sld [smem:[#allocation7 + $0x30]]
    %s1336 = sld [smem:[#allocation7 + $0x78]]
    %s1337 = sld [smem:[#allocation7 + $0xc0]]
    %s1338 = sld [smem:[#allocation7 + $0x108]]
    %v1339 = vstv %s1335
    %v1340 = vmul.f32 %v1339, %v1333
    %v1341 = vmul.f32 %v1339, %v1334
    %v1342 = vadd.f32 %v1303, %v1340
    %v1343 = vadd.f32 %v1304, %v1341
    %v1344 = vstv %s1336
    %v1345 = vmul.f32 %v1344, %v1333
    %v1346 = vmul.f32 %v1344, %v1334
    %v1347 = vadd.f32 %v1308, %v1345
    %v1348 = vadd.f32 %v1309, %v1346
    %v1349 = vstv %s1337
    %v1350 = vmul.f32 %v1349, %v1333
    %v1351 = vmul.f32 %v1349, %v1334
    %v1352 = vadd.f32 %v1313, %v1350
    %v1353 = vadd.f32 %v1314, %v1351
    %v1354 = vstv %s1338
    %v1355 = vmul.f32 %v1354, %v1333
    %v1356 = vmul.f32 %v1354, %v1334
    %v1357 = vadd.f32 %v1318, %v1355
    %v1358 = vadd.f32 %v1319, %v1356
    %v1361 = vrot.slane %v448, 1
    %v1362 = vrot.slane %v444, 1
    %v1363 = vsel %vm1126, %v1361, %v1362
    %v1364 = vrot.slane %v449, 1
    %v1365 = vsel %vm1126, %v1362, %v1364
    %1368 = vrot.lane.b32.xlu0 %v1363, 1
    %v1369 = vpop.permute.xlu0 %1368
    %1370 = vrot.lane.b32.xlu0 %v1365, 1
    %v1371 = vpop.permute.xlu0 %1370
    %v1372 = vsel %vm105, %v1369, 0.0
    %v1373 = vsel %vm105, %v1371, 0.0
    %s1374 = sld [smem:[#allocation7 + $0x39]]
    %s1375 = sld [smem:[#allocation7 + $0x81]]
    %s1376 = sld [smem:[#allocation7 + $0xc9]]
    %s1377 = sld [smem:[#allocation7 + $0x111]]
    %v1378 = vstv %s1374
    %v1379 = vmul.f32 %v1378, %v1372
    %v1380 = vmul.f32 %v1378, %v1373
    %v1381 = vadd.f32 %v1342, %v1379
    %v1382 = vadd.f32 %v1343, %v1380
    %v1383 = vstv %s1375
    %v1384 = vmul.f32 %v1383, %v1372
    %v1385 = vmul.f32 %v1383, %v1373
    %v1386 = vadd.f32 %v1347, %v1384
    %v1387 = vadd.f32 %v1348, %v1385
    %v1388 = vstv %s1376
    %v1389 = vmul.f32 %v1388, %v1372
    %v1390 = vmul.f32 %v1388, %v1373
    %v1391 = vadd.f32 %v1352, %v1389
    %v1392 = vadd.f32 %v1353, %v1390
    %v1393 = vstv %s1377
    %v1394 = vmul.f32 %v1393, %v1372
    %v1395 = vmul.f32 %v1393, %v1373
    %v1396 = vadd.f32 %v1357, %v1394
    %v1397 = vadd.f32 %v1358, %v1395
    %v1400 = vrot.slane %v458, 1
    %v1401 = vrot.slane %v454, 1
    %v1402 = vsel %vm1126, %v1400, %v1401
    %v1403 = vrot.slane %v459, 1
    %v1404 = vsel %vm1126, %v1401, %v1403
    %1407 = vrot.lane.b32.xlu0 %v1402, 1
    %v1408 = vpop.permute.xlu0 %1407
    %1409 = vrot.lane.b32.xlu0 %v1404, 1
    %v1410 = vpop.permute.xlu0 %1409
    %v1411 = vsel %vm105, %v1408, 0.0
    %v1412 = vsel %vm105, %v1410, 0.0
    %s1413 = sld [smem:[#allocation7 + $0x42]]
    %s1414 = sld [smem:[#allocation7 + $0x8a]]
    %s1415 = sld [smem:[#allocation7 + $0xd2]]
    %s1416 = sld [smem:[#allocation7 + $0x11a]]
    %v1417 = vstv %s1413
    %v1418 = vmul.f32 %v1417, %v1411
    %v1419 = vmul.f32 %v1417, %v1412
    %v1420 = vadd.f32 %v1381, %v1418
    %v1421 = vadd.f32 %v1382, %v1419
    %v1422 = vstv %s1414
    %v1423 = vmul.f32 %v1422, %v1411
    %v1424 = vmul.f32 %v1422, %v1412
    %v1425 = vadd.f32 %v1386, %v1423
    %v1426 = vadd.f32 %v1387, %v1424
    %v1427 = vstv %s1415
    %v1428 = vmul.f32 %v1427, %v1411
    %v1429 = vmul.f32 %v1427, %v1412
    %v1430 = vadd.f32 %v1391, %v1428
    %v1431 = vadd.f32 %v1392, %v1429
    %v1432 = vstv %s1416
    %v1433 = vmul.f32 %v1432, %v1411
    %v1434 = vmul.f32 %v1432, %v1412
    %v1435 = vadd.f32 %v1396, %v1433
    %v1436 = vadd.f32 %v1397, %v1434
    %s1437 = sld [smem:[#allocation7 + $0x4]]
    %s1438 = sld [smem:[#allocation7 + $0x4c]]
    %s1439 = sld [smem:[#allocation7 + $0x94]]
    %s1440 = sld [smem:[#allocation7 + $0xdc]]
    %v1441 = vstv %s1437
    %v1442 = vmul.f32 %v1441, %v388
    %v1443 = vmul.f32 %v1441, %v384
    %v1444 = vmul.f32 %v1441, %v389
    %v1448 = vrot.slane %v1442, 1
    %v1449 = vrot.slane %v1443, 1
    %v1450 = vsel %vm1126, %v1448, %v1449
    %v1451 = vrot.slane %v1444, 1
    %v1452 = vsel %vm1126, %v1449, %v1451
    %v1455 = vadd.f32 %v1420, %v1450
    %v1456 = vadd.f32 %v1421, %v1452
    %v1457 = vstv %s1438
    %v1458 = vmul.f32 %v1457, %v388
    %v1459 = vmul.f32 %v1457, %v384
    %v1460 = vmul.f32 %v1457, %v389
    %v1464 = vrot.slane %v1458, 1
    %v1465 = vrot.slane %v1459, 1
    %v1466 = vsel %vm1126, %v1464, %v1465
    %v1467 = vrot.slane %v1460, 1
    %v1468 = vsel %vm1126, %v1465, %v1467
    %v1471 = vadd.f32 %v1425, %v1466
    %v1472 = vadd.f32 %v1426, %v1468
    %v1473 = vstv %s1439
    %v1474 = vmul.f32 %v1473, %v388
    %v1475 = vmul.f32 %v1473, %v384
    %v1476 = vmul.f32 %v1473, %v389
    %v1480 = vrot.slane %v1474, 1
    %v1481 = vrot.slane %v1475, 1
    %v1482 = vsel %vm1126, %v1480, %v1481
    %v1483 = vrot.slane %v1476, 1
    %v1484 = vsel %vm1126, %v1481, %v1483
    %v1487 = vadd.f32 %v1430, %v1482
    %v1488 = vadd.f32 %v1431, %v1484
    %v1489 = vstv %s1440
    %v1490 = vmul.f32 %v1489, %v388
    %v1491 = vmul.f32 %v1489, %v384
    %v1492 = vmul.f32 %v1489, %v389
    %v1496 = vrot.slane %v1490, 1
    %v1497 = vrot.slane %v1491, 1
    %v1498 = vsel %vm1126, %v1496, %v1497
    %v1499 = vrot.slane %v1492, 1
    %v1500 = vsel %vm1126, %v1497, %v1499
    %v1503 = vadd.f32 %v1435, %v1498
    %v1504 = vadd.f32 %v1436, %v1500
    %s1505 = sld [smem:[#allocation7 + $0xd]]
    %s1506 = sld [smem:[#allocation7 + $0x55]]
    %s1507 = sld [smem:[#allocation7 + $0x9d]]
    %s1508 = sld [smem:[#allocation7 + $0xe5]]
    %v1509 = vstv %s1505
    %v1510 = vmul.f32 %v1509, %v398
    %v1511 = vmul.f32 %v1509, %v394
    %v1512 = vmul.f32 %v1509, %v399
    %v1516 = vrot.slane %v1510, 1
    %v1517 = vrot.slane %v1511, 1
    %v1518 = vsel %vm1126, %v1516, %v1517
    %v1519 = vrot.slane %v1512, 1
    %v1520 = vsel %vm1126, %v1517, %v1519
    %v1523 = vadd.f32 %v1455, %v1518
    %v1524 = vadd.f32 %v1456, %v1520
    %v1525 = vstv %s1506
    %v1526 = vmul.f32 %v1525, %v398
    %v1527 = vmul.f32 %v1525, %v394
    %v1528 = vmul.f32 %v1525, %v399
    %v1532 = vrot.slane %v1526, 1
    %v1533 = vrot.slane %v1527, 1
    %v1534 = vsel %vm1126, %v1532, %v1533
    %v1535 = vrot.slane %v1528, 1
    %v1536 = vsel %vm1126, %v1533, %v1535
    %v1539 = vadd.f32 %v1471, %v1534
    %v1540 = vadd.f32 %v1472, %v1536
    %v1541 = vstv %s1507
    %v1542 = vmul.f32 %v1541, %v398
    %v1543 = vmul.f32 %v1541, %v394
    %v1544 = vmul.f32 %v1541, %v399
    %v1548 = vrot.slane %v1542, 1
    %v1549 = vrot.slane %v1543, 1
    %v1550 = vsel %vm1126, %v1548, %v1549
    %v1551 = vrot.slane %v1544, 1
    %v1552 = vsel %vm1126, %v1549, %v1551
    %v1555 = vadd.f32 %v1487, %v1550
    %v1556 = vadd.f32 %v1488, %v1552
    %v1557 = vstv %s1508
    %v1558 = vmul.f32 %v1557, %v398
    %v1559 = vmul.f32 %v1557, %v394
    %v1560 = vmul.f32 %v1557, %v399
    %v1564 = vrot.slane %v1558, 1
    %v1565 = vrot.slane %v1559, 1
    %v1566 = vsel %vm1126, %v1564, %v1565
    %v1567 = vrot.slane %v1560, 1
    %v1568 = vsel %vm1126, %v1565, %v1567
    %v1571 = vadd.f32 %v1503, %v1566
    %v1572 = vadd.f32 %v1504, %v1568
    %s1573 = sld [smem:[#allocation7 + $0x16]]
    %s1574 = sld [smem:[#allocation7 + $0x5e]]
    %s1575 = sld [smem:[#allocation7 + $0xa6]]
    %s1576 = sld [smem:[#allocation7 + $0xee]]
    %v1577 = vstv %s1573
    %v1578 = vmul.f32 %v1577, %v408
    %v1579 = vmul.f32 %v1577, %v404
    %v1580 = vmul.f32 %v1577, %v409
    %v1584 = vrot.slane %v1578, 1
    %v1585 = vrot.slane %v1579, 1
    %v1586 = vsel %vm1126, %v1584, %v1585
    %v1587 = vrot.slane %v1580, 1
    %v1588 = vsel %vm1126, %v1585, %v1587
    %v1591 = vadd.f32 %v1523, %v1586
    %v1592 = vadd.f32 %v1524, %v1588
    %v1593 = vstv %s1574
    %v1594 = vmul.f32 %v1593, %v408
    %v1595 = vmul.f32 %v1593, %v404
    %v1596 = vmul.f32 %v1593, %v409
    %v1600 = vrot.slane %v1594, 1
    %v1601 = vrot.slane %v1595, 1
    %v1602 = vsel %vm1126, %v1600, %v1601
    %v1603 = vrot.slane %v1596, 1
    %v1604 = vsel %vm1126, %v1601, %v1603
    %v1607 = vadd.f32 %v1539, %v1602
    %v1608 = vadd.f32 %v1540, %v1604
    %v1609 = vstv %s1575
    %v1610 = vmul.f32 %v1609, %v408
    %v1611 = vmul.f32 %v1609, %v404
    %v1612 = vmul.f32 %v1609, %v409
    %v1616 = vrot.slane %v1610, 1
    %v1617 = vrot.slane %v1611, 1
    %v1618 = vsel %vm1126, %v1616, %v1617
    %v1619 = vrot.slane %v1612, 1
    %v1620 = vsel %vm1126, %v1617, %v1619
    %v1623 = vadd.f32 %v1555, %v1618
    %v1624 = vadd.f32 %v1556, %v1620
    %v1625 = vstv %s1576
    %v1626 = vmul.f32 %v1625, %v408
    %v1627 = vmul.f32 %v1625, %v404
    %v1628 = vmul.f32 %v1625, %v409
    %v1632 = vrot.slane %v1626, 1
    %v1633 = vrot.slane %v1627, 1
    %v1634 = vsel %vm1126, %v1632, %v1633
    %v1635 = vrot.slane %v1628, 1
    %v1636 = vsel %vm1126, %v1633, %v1635
    %v1639 = vadd.f32 %v1571, %v1634
    %v1640 = vadd.f32 %v1572, %v1636
    %s1641 = sld [smem:[#allocation7 + $0x1f]]
    %s1642 = sld [smem:[#allocation7 + $0x67]]
    %s1643 = sld [smem:[#allocation7 + $0xaf]]
    %s1644 = sld [smem:[#allocation7 + $0xf7]]
    %v1645 = vstv %s1641
    %v1646 = vmul.f32 %v1645, %v418
    %v1647 = vmul.f32 %v1645, %v414
    %v1648 = vmul.f32 %v1645, %v419
    %v1652 = vrot.slane %v1646, 1
    %v1653 = vrot.slane %v1647, 1
    %v1654 = vsel %vm1126, %v1652, %v1653
    %v1655 = vrot.slane %v1648, 1
    %v1656 = vsel %vm1126, %v1653, %v1655
    %v1659 = vadd.f32 %v1591, %v1654
    %v1660 = vadd.f32 %v1592, %v1656
    %v1661 = vstv %s1642
    %v1662 = vmul.f32 %v1661, %v418
    %v1663 = vmul.f32 %v1661, %v414
    %v1664 = vmul.f32 %v1661, %v419
    %v1668 = vrot.slane %v1662, 1
    %v1669 = vrot.slane %v1663, 1
    %v1670 = vsel %vm1126, %v1668, %v1669
    %v1671 = vrot.slane %v1664, 1
    %v1672 = vsel %vm1126, %v1669, %v1671
    %v1675 = vadd.f32 %v1607, %v1670
    %v1676 = vadd.f32 %v1608, %v1672
    %v1677 = vstv %s1643
    %v1678 = vmul.f32 %v1677, %v418
    %v1679 = vmul.f32 %v1677, %v414
    %v1680 = vmul.f32 %v1677, %v419
    %v1684 = vrot.slane %v1678, 1
    %v1685 = vrot.slane %v1679, 1
    %v1686 = vsel %vm1126, %v1684, %v1685
    %v1687 = vrot.slane %v1680, 1
    %v1688 = vsel %vm1126, %v1685, %v1687
    %v1691 = vadd.f32 %v1623, %v1686
    %v1692 = vadd.f32 %v1624, %v1688
    %v1693 = vstv %s1644
    %v1694 = vmul.f32 %v1693, %v418
    %v1695 = vmul.f32 %v1693, %v414
    %v1696 = vmul.f32 %v1693, %v419
    %v1700 = vrot.slane %v1694, 1
    %v1701 = vrot.slane %v1695, 1
    %v1702 = vsel %vm1126, %v1700, %v1701
    %v1703 = vrot.slane %v1696, 1
    %v1704 = vsel %vm1126, %v1701, %v1703
    %v1707 = vadd.f32 %v1639, %v1702
    %v1708 = vadd.f32 %v1640, %v1704
    %s1709 = sld [smem:[#allocation7 + $0x28]]
    %s1710 = sld [smem:[#allocation7 + $0x70]]
    %s1711 = sld [smem:[#allocation7 + $0xb8]]
    %s1712 = sld [smem:[#allocation7 + $0x100]]
    %v1713 = vstv %s1709
    %v1714 = vmul.f32 %v1713, %v428
    %v1715 = vmul.f32 %v1713, %v424
    %v1716 = vmul.f32 %v1713, %v429
    %v1720 = vrot.slane %v1714, 1
    %v1721 = vrot.slane %v1715, 1
    %v1722 = vsel %vm1126, %v1720, %v1721
    %v1723 = vrot.slane %v1716, 1
    %v1724 = vsel %vm1126, %v1721, %v1723
    %v1727 = vadd.f32 %v1659, %v1722
    %v1728 = vadd.f32 %v1660, %v1724
    %v1729 = vstv %s1710
    %v1730 = vmul.f32 %v1729, %v428
    %v1731 = vmul.f32 %v1729, %v424
    %v1732 = vmul.f32 %v1729, %v429
    %v1736 = vrot.slane %v1730, 1
    %v1737 = vrot.slane %v1731, 1
    %v1738 = vsel %vm1126, %v1736, %v1737
    %v1739 = vrot.slane %v1732, 1
    %v1740 = vsel %vm1126, %v1737, %v1739
    %v1743 = vadd.f32 %v1675, %v1738
    %v1744 = vadd.f32 %v1676, %v1740
    %v1745 = vstv %s1711
    %v1746 = vmul.f32 %v1745, %v428
    %v1747 = vmul.f32 %v1745, %v424
    %v1748 = vmul.f32 %v1745, %v429
    %v1752 = vrot.slane %v1746, 1
    %v1753 = vrot.slane %v1747, 1
    %v1754 = vsel %vm1126, %v1752, %v1753
    %v1755 = vrot.slane %v1748, 1
    %v1756 = vsel %vm1126, %v1753, %v1755
    %v1759 = vadd.f32 %v1691, %v1754
    %v1760 = vadd.f32 %v1692, %v1756
    %v1761 = vstv %s1712
    %v1762 = vmul.f32 %v1761, %v428
    %v1763 = vmul.f32 %v1761, %v424
    %v1764 = vmul.f32 %v1761, %v429
    %v1768 = vrot.slane %v1762, 1
    %v1769 = vrot.slane %v1763, 1
    %v1770 = vsel %vm1126, %v1768, %v1769
    %v1771 = vrot.slane %v1764, 1
    %v1772 = vsel %vm1126, %v1769, %v1771
    %v1775 = vadd.f32 %v1707, %v1770
    %v1776 = vadd.f32 %v1708, %v1772
    %s1777 = sld [smem:[#allocation7 + $0x31]]
    %s1778 = sld [smem:[#allocation7 + $0x79]]
    %s1779 = sld [smem:[#allocation7 + $0xc1]]
    %s1780 = sld [smem:[#allocation7 + $0x109]]
    %v1781 = vstv %s1777
    %v1782 = vmul.f32 %v1781, %v438
    %v1783 = vmul.f32 %v1781, %v434
    %v1784 = vmul.f32 %v1781, %v439
    %v1788 = vrot.slane %v1782, 1
    %v1789 = vrot.slane %v1783, 1
    %v1790 = vsel %vm1126, %v1788, %v1789
    %v1791 = vrot.slane %v1784, 1
    %v1792 = vsel %vm1126, %v1789, %v1791
    %v1795 = vadd.f32 %v1727, %v1790
    %v1796 = vadd.f32 %v1728, %v1792
    %v1797 = vstv %s1778
    %v1798 = vmul.f32 %v1797, %v438
    %v1799 = vmul.f32 %v1797, %v434
    %v1800 = vmul.f32 %v1797, %v439
    %v1804 = vrot.slane %v1798, 1
    %v1805 = vrot.slane %v1799, 1
    %v1806 = vsel %vm1126, %v1804, %v1805
    %v1807 = vrot.slane %v1800, 1
    %v1808 = vsel %vm1126, %v1805, %v1807
    %v1811 = vadd.f32 %v1743, %v1806
    %v1812 = vadd.f32 %v1744, %v1808
    %v1813 = vstv %s1779
    %v1814 = vmul.f32 %v1813, %v438
    %v1815 = vmul.f32 %v1813, %v434
    %v1816 = vmul.f32 %v1813, %v439
    %v1820 = vrot.slane %v1814, 1
    %v1821 = vrot.slane %v1815, 1
    %v1822 = vsel %vm1126, %v1820, %v1821
    %v1823 = vrot.slane %v1816, 1
    %v1824 = vsel %vm1126, %v1821, %v1823
    %v1827 = vadd.f32 %v1759, %v1822
    %v1828 = vadd.f32 %v1760, %v1824
    %v1829 = vstv %s1780
    %v1830 = vmul.f32 %v1829, %v438
    %v1831 = vmul.f32 %v1829, %v434
    %v1832 = vmul.f32 %v1829, %v439
    %v1836 = vrot.slane %v1830, 1
    %v1837 = vrot.slane %v1831, 1
    %v1838 = vsel %vm1126, %v1836, %v1837
    %v1839 = vrot.slane %v1832, 1
    %v1840 = vsel %vm1126, %v1837, %v1839
    %v1843 = vadd.f32 %v1775, %v1838
    %v1844 = vadd.f32 %v1776, %v1840
    %s1845 = sld [smem:[#allocation7 + $0x3a]]
    %s1846 = sld [smem:[#allocation7 + $0x82]]
    %s1847 = sld [smem:[#allocation7 + $0xca]]
    %s1848 = sld [smem:[#allocation7 + $0x112]]
    %v1849 = vstv %s1845
    %v1850 = vmul.f32 %v1849, %v448
    %v1851 = vmul.f32 %v1849, %v444
    %v1852 = vmul.f32 %v1849, %v449
    %v1856 = vrot.slane %v1850, 1
    %v1857 = vrot.slane %v1851, 1
    %v1858 = vsel %vm1126, %v1856, %v1857
    %v1859 = vrot.slane %v1852, 1
    %v1860 = vsel %vm1126, %v1857, %v1859
    %v1863 = vadd.f32 %v1795, %v1858
    %v1864 = vadd.f32 %v1796, %v1860
    %v1865 = vstv %s1846
    %v1866 = vmul.f32 %v1865, %v448
    %v1867 = vmul.f32 %v1865, %v444
    %v1868 = vmul.f32 %v1865, %v449
    %v1872 = vrot.slane %v1866, 1
    %v1873 = vrot.slane %v1867, 1
    %v1874 = vsel %vm1126, %v1872, %v1873
    %v1875 = vrot.slane %v1868, 1
    %v1876 = vsel %vm1126, %v1873, %v1875
    %v1879 = vadd.f32 %v1811, %v1874
    %v1880 = vadd.f32 %v1812, %v1876
    %v1881 = vstv %s1847
    %v1882 = vmul.f32 %v1881, %v448
    %v1883 = vmul.f32 %v1881, %v444
    %v1884 = vmul.f32 %v1881, %v449
    %v1888 = vrot.slane %v1882, 1
    %v1889 = vrot.slane %v1883, 1
    %v1890 = vsel %vm1126, %v1888, %v1889
    %v1891 = vrot.slane %v1884, 1
    %v1892 = vsel %vm1126, %v1889, %v1891
    %v1895 = vadd.f32 %v1827, %v1890
    %v1896 = vadd.f32 %v1828, %v1892
    %v1897 = vstv %s1848
    %v1898 = vmul.f32 %v1897, %v448
    %v1899 = vmul.f32 %v1897, %v444
    %v1900 = vmul.f32 %v1897, %v449
    %v1904 = vrot.slane %v1898, 1
    %v1905 = vrot.slane %v1899, 1
    %v1906 = vsel %vm1126, %v1904, %v1905
    %v1907 = vrot.slane %v1900, 1
    %v1908 = vsel %vm1126, %v1905, %v1907
    %v1911 = vadd.f32 %v1843, %v1906
    %v1912 = vadd.f32 %v1844, %v1908
    %s1913 = sld [smem:[#allocation7 + $0x43]]
    %s1914 = sld [smem:[#allocation7 + $0x8b]]
    %s1915 = sld [smem:[#allocation7 + $0xd3]]
    %s1916 = sld [smem:[#allocation7 + $0x11b]]
    %v1917 = vstv %s1913
    %v1918 = vmul.f32 %v1917, %v458
    %v1919 = vmul.f32 %v1917, %v454
    %v1920 = vmul.f32 %v1917, %v459
    %v1924 = vrot.slane %v1918, 1
    %v1925 = vrot.slane %v1919, 1
    %v1926 = vsel %vm1126, %v1924, %v1925
    %v1927 = vrot.slane %v1920, 1
    %v1928 = vsel %vm1126, %v1925, %v1927
    %v1931 = vadd.f32 %v1863, %v1926
    %v1932 = vadd.f32 %v1864, %v1928
    %v1933 = vstv %s1914
    %v1934 = vmul.f32 %v1933, %v458
    %v1935 = vmul.f32 %v1933, %v454
    %v1936 = vmul.f32 %v1933, %v459
    %v1940 = vrot.slane %v1934, 1
    %v1941 = vrot.slane %v1935, 1
    %v1942 = vsel %vm1126, %v1940, %v1941
    %v1943 = vrot.slane %v1936, 1
    %v1944 = vsel %vm1126, %v1941, %v1943
    %v1947 = vadd.f32 %v1879, %v1942
    %v1948 = vadd.f32 %v1880, %v1944
    %v1949 = vstv %s1915
    %v1950 = vmul.f32 %v1949, %v458
    %v1951 = vmul.f32 %v1949, %v454
    %v1952 = vmul.f32 %v1949, %v459
    %v1956 = vrot.slane %v1950, 1
    %v1957 = vrot.slane %v1951, 1
    %v1958 = vsel %vm1126, %v1956, %v1957
    %v1959 = vrot.slane %v1952, 1
    %v1960 = vsel %vm1126, %v1957, %v1959
    %v1963 = vadd.f32 %v1895, %v1958
    %v1964 = vadd.f32 %v1896, %v1960
    %v1965 = vstv %s1916
    %v1966 = vmul.f32 %v1965, %v458
    %v1967 = vmul.f32 %v1965, %v454
    %v1968 = vmul.f32 %v1965, %v459
    %v1972 = vrot.slane %v1966, 1
    %v1973 = vrot.slane %v1967, 1
    %v1974 = vsel %vm1126, %v1972, %v1973
    %v1975 = vrot.slane %v1968, 1
    %v1976 = vsel %vm1126, %v1973, %v1975
    %v1979 = vadd.f32 %v1911, %v1974
    %v1980 = vadd.f32 %v1912, %v1976
    %1981 = vrot.lane.b32.xlu0 %v1129, 127
    %v1982 = vpop.permute.xlu0 %1981
    %1983 = vrot.lane.b32.xlu0 %v1131, 127
    %v1984 = vpop.permute.xlu0 %1983
    %v1985 = vsel %vm106, %v1982, 0.0
    %v1986 = vsel %vm106, %v1984, 0.0
    %s1987 = sld [smem:[#allocation7 + $0x5]]
    %s1988 = sld [smem:[#allocation7 + $0x4d]]
    %s1989 = sld [smem:[#allocation7 + $0x95]]
    %s1990 = sld [smem:[#allocation7 + $0xdd]]
    %v1991 = vstv %s1987
    %v1992 = vmul.f32 %v1991, %v1985
    %v1993 = vmul.f32 %v1991, %v1986
    %v1994 = vadd.f32 %v1931, %v1992
    %v1995 = vadd.f32 %v1932, %v1993
    %v1996 = vstv %s1988
    %v1997 = vmul.f32 %v1996, %v1985
    %v1998 = vmul.f32 %v1996, %v1986
    %v1999 = vadd.f32 %v1947, %v1997
    %v2000 = vadd.f32 %v1948, %v1998
    %v2001 = vstv %s1989
    %v2002 = vmul.f32 %v2001, %v1985
    %v2003 = vmul.f32 %v2001, %v1986
    %v2004 = vadd.f32 %v1963, %v2002
    %v2005 = vadd.f32 %v1964, %v2003
    %v2006 = vstv %s1990
    %v2007 = vmul.f32 %v2006, %v1985
    %v2008 = vmul.f32 %v2006, %v1986
    %v2009 = vadd.f32 %v1979, %v2007
    %v2010 = vadd.f32 %v1980, %v2008
    %2011 = vrot.lane.b32.xlu0 %v1168, 127
    %v2012 = vpop.permute.xlu0 %2011
    %2013 = vrot.lane.b32.xlu0 %v1170, 127
    %v2014 = vpop.permute.xlu0 %2013
    %v2015 = vsel %vm106, %v2012, 0.0
    %v2016 = vsel %vm106, %v2014, 0.0
    %s2017 = sld [smem:[#allocation7 + $0xe]]
    %s2018 = sld [smem:[#allocation7 + $0x56]]
    %s2019 = sld [smem:[#allocation7 + $0x9e]]
    %s2020 = sld [smem:[#allocation7 + $0xe6]]
    %v2021 = vstv %s2017
    %v2022 = vmul.f32 %v2021, %v2015
    %v2023 = vmul.f32 %v2021, %v2016
    %v2024 = vadd.f32 %v1994, %v2022
    %v2025 = vadd.f32 %v1995, %v2023
    %v2026 = vstv %s2018
    %v2027 = vmul.f32 %v2026, %v2015
    %v2028 = vmul.f32 %v2026, %v2016
    %v2029 = vadd.f32 %v1999, %v2027
    %v2030 = vadd.f32 %v2000, %v2028
    %v2031 = vstv %s2019
    %v2032 = vmul.f32 %v2031, %v2015
    %v2033 = vmul.f32 %v2031, %v2016
    %v2034 = vadd.f32 %v2004, %v2032
    %v2035 = vadd.f32 %v2005, %v2033
    %v2036 = vstv %s2020
    %v2037 = vmul.f32 %v2036, %v2015
    %v2038 = vmul.f32 %v2036, %v2016
    %v2039 = vadd.f32 %v2009, %v2037
    %v2040 = vadd.f32 %v2010, %v2038
    %2041 = vrot.lane.b32.xlu0 %v1207, 127
    %v2042 = vpop.permute.xlu0 %2041
    %2043 = vrot.lane.b32.xlu0 %v1209, 127
    %v2044 = vpop.permute.xlu0 %2043
    %v2045 = vsel %vm106, %v2042, 0.0
    %v2046 = vsel %vm106, %v2044, 0.0
    %s2047 = sld [smem:[#allocation7 + $0x17]]
    %s2048 = sld [smem:[#allocation7 + $0x5f]]
    %s2049 = sld [smem:[#allocation7 + $0xa7]]
    %s2050 = sld [smem:[#allocation7 + $0xef]]
    %v2051 = vstv %s2047
    %v2052 = vmul.f32 %v2051, %v2045
    %v2053 = vmul.f32 %v2051, %v2046
    %v2054 = vadd.f32 %v2024, %v2052
    %v2055 = vadd.f32 %v2025, %v2053
    %v2056 = vstv %s2048
    %v2057 = vmul.f32 %v2056, %v2045
    %v2058 = vmul.f32 %v2056, %v2046
    %v2059 = vadd.f32 %v2029, %v2057
    %v2060 = vadd.f32 %v2030, %v2058
    %v2061 = vstv %s2049
    %v2062 = vmul.f32 %v2061, %v2045
    %v2063 = vmul.f32 %v2061, %v2046
    %v2064 = vadd.f32 %v2034, %v2062
    %v2065 = vadd.f32 %v2035, %v2063
    %v2066 = vstv %s2050
    %v2067 = vmul.f32 %v2066, %v2045
    %v2068 = vmul.f32 %v2066, %v2046
    %v2069 = vadd.f32 %v2039, %v2067
    %v2070 = vadd.f32 %v2040, %v2068
    %2071 = vrot.lane.b32.xlu0 %v1246, 127
    %v2072 = vpop.permute.xlu0 %2071
    %2073 = vrot.lane.b32.xlu0 %v1248, 127
    %v2074 = vpop.permute.xlu0 %2073
    %v2075 = vsel %vm106, %v2072, 0.0
    %v2076 = vsel %vm106, %v2074, 0.0
    %s2077 = sld [smem:[#allocation7 + $0x20]]
    %s2078 = sld [smem:[#allocation7 + $0x68]]
    %s2079 = sld [smem:[#allocation7 + $0xb0]]
    %s2080 = sld [smem:[#allocation7 + $0xf8]]
    %v2081 = vstv %s2077
    %v2082 = vmul.f32 %v2081, %v2075
    %v2083 = vmul.f32 %v2081, %v2076
    %v2084 = vadd.f32 %v2054, %v2082
    %v2085 = vadd.f32 %v2055, %v2083
    %v2086 = vstv %s2078
    %v2087 = vmul.f32 %v2086, %v2075
    %v2088 = vmul.f32 %v2086, %v2076
    %v2089 = vadd.f32 %v2059, %v2087
    %v2090 = vadd.f32 %v2060, %v2088
    %v2091 = vstv %s2079
    %v2092 = vmul.f32 %v2091, %v2075
    %v2093 = vmul.f32 %v2091, %v2076
    %v2094 = vadd.f32 %v2064, %v2092
    %v2095 = vadd.f32 %v2065, %v2093
    %v2096 = vstv %s2080
    %v2097 = vmul.f32 %v2096, %v2075
    %v2098 = vmul.f32 %v2096, %v2076
    %v2099 = vadd.f32 %v2069, %v2097
    %v2100 = vadd.f32 %v2070, %v2098
    %2101 = vrot.lane.b32.xlu0 %v1285, 127
    %v2102 = vpop.permute.xlu0 %2101
    %2103 = vrot.lane.b32.xlu0 %v1287, 127
    %v2104 = vpop.permute.xlu0 %2103
    %v2105 = vsel %vm106, %v2102, 0.0
    %v2106 = vsel %vm106, %v2104, 0.0
    %s2107 = sld [smem:[#allocation7 + $0x29]]
    %s2108 = sld [smem:[#allocation7 + $0x71]]
    %s2109 = sld [smem:[#allocation7 + $0xb9]]
    %s2110 = sld [smem:[#allocation7 + $0x101]]
    %v2111 = vstv %s2107
    %v2112 = vmul.f32 %v2111, %v2105
    %v2113 = vmul.f32 %v2111, %v2106
    %v2114 = vadd.f32 %v2084, %v2112
    %v2115 = vadd.f32 %v2085, %v2113
    %v2116 = vstv %s2108
    %v2117 = vmul.f32 %v2116, %v2105
    %v2118 = vmul.f32 %v2116, %v2106
    %v2119 = vadd.f32 %v2089, %v2117
    %v2120 = vadd.f32 %v2090, %v2118
    %v2121 = vstv %s2109
    %v2122 = vmul.f32 %v2121, %v2105
    %v2123 = vmul.f32 %v2121, %v2106
    %v2124 = vadd.f32 %v2094, %v2122
    %v2125 = vadd.f32 %v2095, %v2123
    %v2126 = vstv %s2110
    %v2127 = vmul.f32 %v2126, %v2105
    %v2128 = vmul.f32 %v2126, %v2106
    %v2129 = vadd.f32 %v2099, %v2127
    %v2130 = vadd.f32 %v2100, %v2128
    %2131 = vrot.lane.b32.xlu0 %v1324, 127
    %v2132 = vpop.permute.xlu0 %2131
    %2133 = vrot.lane.b32.xlu0 %v1326, 127
    %v2134 = vpop.permute.xlu0 %2133
    %v2135 = vsel %vm106, %v2132, 0.0
    %v2136 = vsel %vm106, %v2134, 0.0
    %s2137 = sld [smem:[#allocation7 + $0x32]]
    %s2138 = sld [smem:[#allocation7 + $0x7a]]
    %s2139 = sld [smem:[#allocation7 + $0xc2]]
    %s2140 = sld [smem:[#allocation7 + $0x10a]]
    %v2141 = vstv %s2137
    %v2142 = vmul.f32 %v2141, %v2135
    %v2143 = vmul.f32 %v2141, %v2136
    %v2144 = vadd.f32 %v2114, %v2142
    %v2145 = vadd.f32 %v2115, %v2143
    %v2146 = vstv %s2138
    %v2147 = vmul.f32 %v2146, %v2135
    %v2148 = vmul.f32 %v2146, %v2136
    %v2149 = vadd.f32 %v2119, %v2147
    %v2150 = vadd.f32 %v2120, %v2148
    %v2151 = vstv %s2139
    %v2152 = vmul.f32 %v2151, %v2135
    %v2153 = vmul.f32 %v2151, %v2136
    %v2154 = vadd.f32 %v2124, %v2152
    %v2155 = vadd.f32 %v2125, %v2153
    %v2156 = vstv %s2140
    %v2157 = vmul.f32 %v2156, %v2135
    %v2158 = vmul.f32 %v2156, %v2136
    %v2159 = vadd.f32 %v2129, %v2157
    %v2160 = vadd.f32 %v2130, %v2158
    %2161 = vrot.lane.b32.xlu0 %v1363, 127
    %v2162 = vpop.permute.xlu0 %2161
    %2163 = vrot.lane.b32.xlu0 %v1365, 127
    %v2164 = vpop.permute.xlu0 %2163
    %v2165 = vsel %vm106, %v2162, 0.0
    %v2166 = vsel %vm106, %v2164, 0.0
    %s2167 = sld [smem:[#allocation7 + $0x3b]]
    %s2168 = sld [smem:[#allocation7 + $0x83]]
    %s2169 = sld [smem:[#allocation7 + $0xcb]]
    %s2170 = sld [smem:[#allocation7 + $0x113]]
    %v2171 = vstv %s2167
    %v2172 = vmul.f32 %v2171, %v2165
    %v2173 = vmul.f32 %v2171, %v2166
    %v2174 = vadd.f32 %v2144, %v2172
    %v2175 = vadd.f32 %v2145, %v2173
    %v2176 = vstv %s2168
    %v2177 = vmul.f32 %v2176, %v2165
    %v2178 = vmul.f32 %v2176, %v2166
    %v2179 = vadd.f32 %v2149, %v2177
    %v2180 = vadd.f32 %v2150, %v2178
    %v2181 = vstv %s2169
    %v2182 = vmul.f32 %v2181, %v2165
    %v2183 = vmul.f32 %v2181, %v2166
    %v2184 = vadd.f32 %v2154, %v2182
    %v2185 = vadd.f32 %v2155, %v2183
    %v2186 = vstv %s2170
    %v2187 = vmul.f32 %v2186, %v2165
    %v2188 = vmul.f32 %v2186, %v2166
    %v2189 = vadd.f32 %v2159, %v2187
    %v2190 = vadd.f32 %v2160, %v2188
    %2191 = vrot.lane.b32.xlu0 %v1402, 127
    %v2192 = vpop.permute.xlu0 %2191
    %2193 = vrot.lane.b32.xlu0 %v1404, 127
    %v2194 = vpop.permute.xlu0 %2193
    %v2195 = vsel %vm106, %v2192, 0.0
    %v2196 = vsel %vm106, %v2194, 0.0
    %s2197 = sld [smem:[#allocation7 + $0x44]]
    %s2198 = sld [smem:[#allocation7 + $0x8c]]
    %s2199 = sld [smem:[#allocation7 + $0xd4]]
    %s2200 = sld [smem:[#allocation7 + $0x11c]]
    %v2201 = vstv %s2197
    %v2202 = vmul.f32 %v2201, %v2195
    %v2203 = vmul.f32 %v2201, %v2196
    %v2204 = vadd.f32 %v2174, %v2202
    %v2205 = vadd.f32 %v2175, %v2203
    %v2206 = vstv %s2198
    %v2207 = vmul.f32 %v2206, %v2195
    %v2208 = vmul.f32 %v2206, %v2196
    %v2209 = vadd.f32 %v2179, %v2207
    %v2210 = vadd.f32 %v2180, %v2208
    %v2211 = vstv %s2199
    %v2212 = vmul.f32 %v2211, %v2195
    %v2213 = vmul.f32 %v2211, %v2196
    %v2214 = vadd.f32 %v2184, %v2212
    %v2215 = vadd.f32 %v2185, %v2213
    %v2216 = vstv %s2200
    %v2217 = vmul.f32 %v2216, %v2195
    %v2218 = vmul.f32 %v2216, %v2196
    %v2219 = vadd.f32 %v2189, %v2217
    %v2220 = vadd.f32 %v2190, %v2218
    %vm2221 = vcmask 1045504
    %v2222 = vrot.slane %v388, 2
    %v2223 = vrot.slane %v384, 2
    %v2224 = vsel %vm2221, %v2222, %v2223
    %v2225 = vrot.slane %v389, 2
    %v2226 = vsel %vm2221, %v2223, %v2225
    %2229 = vrot.lane.b32.xlu0 %v2224, 1
    %v2230 = vpop.permute.xlu0 %2229
    %2231 = vrot.lane.b32.xlu0 %v2226, 1
    %v2232 = vpop.permute.xlu0 %2231
    %v2233 = vsel %vm105, %v2230, 0.0
    %v2234 = vsel %vm105, %v2232, 0.0
    %s2235 = sld [smem:[#allocation7 + $0x6]]
    %s2236 = sld [smem:[#allocation7 + $0x4e]]
    %s2237 = sld [smem:[#allocation7 + $0x96]]
    %s2238 = sld [smem:[#allocation7 + $0xde]]
    %v2239 = vstv %s2235
    %v2240 = vmul.f32 %v2239, %v2233
    %v2241 = vmul.f32 %v2239, %v2234
    %v2242 = vadd.f32 %v2204, %v2240
    %v2243 = vadd.f32 %v2205, %v2241
    %v2244 = vstv %s2236
    %v2245 = vmul.f32 %v2244, %v2233
    %v2246 = vmul.f32 %v2244, %v2234
    %v2247 = vadd.f32 %v2209, %v2245
    %v2248 = vadd.f32 %v2210, %v2246
    %v2249 = vstv %s2237
    %v2250 = vmul.f32 %v2249, %v2233
    %v2251 = vmul.f32 %v2249, %v2234
    %v2252 = vadd.f32 %v2214, %v2250
    %v2253 = vadd.f32 %v2215, %v2251
    %v2254 = vstv %s2238
    %v2255 = vmul.f32 %v2254, %v2233
    %v2256 = vmul.f32 %v2254, %v2234
    %v2257 = vadd.f32 %v2219, %v2255
    %v2258 = vadd.f32 %v2220, %v2256
    %v2259 = vrot.slane %v398, 2
    %v2260 = vrot.slane %v394, 2
    %v2261 = vsel %vm2221, %v2259, %v2260
    %v2262 = vrot.slane %v399, 2
    %v2263 = vsel %vm2221, %v2260, %v2262
    %2266 = vrot.lane.b32.xlu0 %v2261, 1
    %v2267 = vpop.permute.xlu0 %2266
    %2268 = vrot.lane.b32.xlu0 %v2263, 1
    %v2269 = vpop.permute.xlu0 %2268
    %v2270 = vsel %vm105, %v2267, 0.0
    %v2271 = vsel %vm105, %v2269, 0.0
    %s2272 = sld [smem:[#allocation7 + $0xf]]
    %s2273 = sld [smem:[#allocation7 + $0x57]]
    %s2274 = sld [smem:[#allocation7 + $0x9f]]
    %s2275 = sld [smem:[#allocation7 + $0xe7]]
    %v2276 = vstv %s2272
    %v2277 = vmul.f32 %v2276, %v2270
    %v2278 = vmul.f32 %v2276, %v2271
    %v2279 = vadd.f32 %v2242, %v2277
    %v2280 = vadd.f32 %v2243, %v2278
    %v2281 = vstv %s2273
    %v2282 = vmul.f32 %v2281, %v2270
    %v2283 = vmul.f32 %v2281, %v2271
    %v2284 = vadd.f32 %v2247, %v2282
    %v2285 = vadd.f32 %v2248, %v2283
    %v2286 = vstv %s2274
    %v2287 = vmul.f32 %v2286, %v2270
    %v2288 = vmul.f32 %v2286, %v2271
    %v2289 = vadd.f32 %v2252, %v2287
    %v2290 = vadd.f32 %v2253, %v2288
    %v2291 = vstv %s2275
    %v2292 = vmul.f32 %v2291, %v2270
    %v2293 = vmul.f32 %v2291, %v2271
    %v2294 = vadd.f32 %v2257, %v2292
    %v2295 = vadd.f32 %v2258, %v2293
    %v2296 = vrot.slane %v408, 2
    %v2297 = vrot.slane %v404, 2
    %v2298 = vsel %vm2221, %v2296, %v2297
    %v2299 = vrot.slane %v409, 2
    %v2300 = vsel %vm2221, %v2297, %v2299
    %2303 = vrot.lane.b32.xlu0 %v2298, 1
    %v2304 = vpop.permute.xlu0 %2303
    %2305 = vrot.lane.b32.xlu0 %v2300, 1
    %v2306 = vpop.permute.xlu0 %2305
    %v2307 = vsel %vm105, %v2304, 0.0
    %v2308 = vsel %vm105, %v2306, 0.0
    %s2309 = sld [smem:[#allocation7 + $0x18]]
    %s2310 = sld [smem:[#allocation7 + $0x60]]
    %s2311 = sld [smem:[#allocation7 + $0xa8]]
    %s2312 = sld [smem:[#allocation7 + $0xf0]]
    %v2313 = vstv %s2309
    %v2314 = vmul.f32 %v2313, %v2307
    %v2315 = vmul.f32 %v2313, %v2308
    %v2316 = vadd.f32 %v2279, %v2314
    %v2317 = vadd.f32 %v2280, %v2315
    %v2318 = vstv %s2310
    %v2319 = vmul.f32 %v2318, %v2307
    %v2320 = vmul.f32 %v2318, %v2308
    %v2321 = vadd.f32 %v2284, %v2319
    %v2322 = vadd.f32 %v2285, %v2320
    %v2323 = vstv %s2311
    %v2324 = vmul.f32 %v2323, %v2307
    %v2325 = vmul.f32 %v2323, %v2308
    %v2326 = vadd.f32 %v2289, %v2324
    %v2327 = vadd.f32 %v2290, %v2325
    %v2328 = vstv %s2312
    %v2329 = vmul.f32 %v2328, %v2307
    %v2330 = vmul.f32 %v2328, %v2308
    %v2331 = vadd.f32 %v2294, %v2329
    %v2332 = vadd.f32 %v2295, %v2330
    %v2333 = vrot.slane %v418, 2
    %v2334 = vrot.slane %v414, 2
    %v2335 = vsel %vm2221, %v2333, %v2334
    %v2336 = vrot.slane %v419, 2
    %v2337 = vsel %vm2221, %v2334, %v2336
    %2340 = vrot.lane.b32.xlu0 %v2335, 1
    %v2341 = vpop.permute.xlu0 %2340
    %2342 = vrot.lane.b32.xlu0 %v2337, 1
    %v2343 = vpop.permute.xlu0 %2342
    %v2344 = vsel %vm105, %v2341, 0.0
    %v2345 = vsel %vm105, %v2343, 0.0
    %s2346 = sld [smem:[#allocation7 + $0x21]]
    %s2347 = sld [smem:[#allocation7 + $0x69]]
    %s2348 = sld [smem:[#allocation7 + $0xb1]]
    %s2349 = sld [smem:[#allocation7 + $0xf9]]
    %v2350 = vstv %s2346
    %v2351 = vmul.f32 %v2350, %v2344
    %v2352 = vmul.f32 %v2350, %v2345
    %v2353 = vadd.f32 %v2316, %v2351
    %v2354 = vadd.f32 %v2317, %v2352
    %v2355 = vstv %s2347
    %v2356 = vmul.f32 %v2355, %v2344
    %v2357 = vmul.f32 %v2355, %v2345
    %v2358 = vadd.f32 %v2321, %v2356
    %v2359 = vadd.f32 %v2322, %v2357
    %v2360 = vstv %s2348
    %v2361 = vmul.f32 %v2360, %v2344
    %v2362 = vmul.f32 %v2360, %v2345
    %v2363 = vadd.f32 %v2326, %v2361
    %v2364 = vadd.f32 %v2327, %v2362
    %v2365 = vstv %s2349
    %v2366 = vmul.f32 %v2365, %v2344
    %v2367 = vmul.f32 %v2365, %v2345
    %v2368 = vadd.f32 %v2331, %v2366
    %v2369 = vadd.f32 %v2332, %v2367
    %v2370 = vrot.slane %v428, 2
    %v2371 = vrot.slane %v424, 2
    %v2372 = vsel %vm2221, %v2370, %v2371
    %v2373 = vrot.slane %v429, 2
    %v2374 = vsel %vm2221, %v2371, %v2373
    %2377 = vrot.lane.b32.xlu0 %v2372, 1
    %v2378 = vpop.permute.xlu0 %2377
    %2379 = vrot.lane.b32.xlu0 %v2374, 1
    %v2380 = vpop.permute.xlu0 %2379
    %v2381 = vsel %vm105, %v2378, 0.0
    %v2382 = vsel %vm105, %v2380, 0.0
    %s2383 = sld [smem:[#allocation7 + $0x2a]]
    %s2384 = sld [smem:[#allocation7 + $0x72]]
    %s2385 = sld [smem:[#allocation7 + $0xba]]
    %s2386 = sld [smem:[#allocation7 + $0x102]]
    %v2387 = vstv %s2383
    %v2388 = vmul.f32 %v2387, %v2381
    %v2389 = vmul.f32 %v2387, %v2382
    %v2390 = vadd.f32 %v2353, %v2388
    %v2391 = vadd.f32 %v2354, %v2389
    %v2392 = vstv %s2384
    %v2393 = vmul.f32 %v2392, %v2381
    %v2394 = vmul.f32 %v2392, %v2382
    %v2395 = vadd.f32 %v2358, %v2393
    %v2396 = vadd.f32 %v2359, %v2394
    %v2397 = vstv %s2385
    %v2398 = vmul.f32 %v2397, %v2381
    %v2399 = vmul.f32 %v2397, %v2382
    %v2400 = vadd.f32 %v2363, %v2398
    %v2401 = vadd.f32 %v2364, %v2399
    %v2402 = vstv %s2386
    %v2403 = vmul.f32 %v2402, %v2381
    %v2404 = vmul.f32 %v2402, %v2382
    %v2405 = vadd.f32 %v2368, %v2403
    %v2406 = vadd.f32 %v2369, %v2404
    %v2407 = vrot.slane %v438, 2
    %v2408 = vrot.slane %v434, 2
    %v2409 = vsel %vm2221, %v2407, %v2408
    %v2410 = vrot.slane %v439, 2
    %v2411 = vsel %vm2221, %v2408, %v2410
    %2414 = vrot.lane.b32.xlu0 %v2409, 1
    %v2415 = vpop.permute.xlu0 %2414
    %2416 = vrot.lane.b32.xlu0 %v2411, 1
    %v2417 = vpop.permute.xlu0 %2416
    %v2418 = vsel %vm105, %v2415, 0.0
    %v2419 = vsel %vm105, %v2417, 0.0
    %s2420 = sld [smem:[#allocation7 + $0x33]]
    %s2421 = sld [smem:[#allocation7 + $0x7b]]
    %s2422 = sld [smem:[#allocation7 + $0xc3]]
    %s2423 = sld [smem:[#allocation7 + $0x10b]]
    %v2424 = vstv %s2420
    %v2425 = vmul.f32 %v2424, %v2418
    %v2426 = vmul.f32 %v2424, %v2419
    %v2427 = vadd.f32 %v2390, %v2425
    %v2428 = vadd.f32 %v2391, %v2426
    %v2429 = vstv %s2421
    %v2430 = vmul.f32 %v2429, %v2418
    %v2431 = vmul.f32 %v2429, %v2419
    %v2432 = vadd.f32 %v2395, %v2430
    %v2433 = vadd.f32 %v2396, %v2431
    %v2434 = vstv %s2422
    %v2435 = vmul.f32 %v2434, %v2418
    %v2436 = vmul.f32 %v2434, %v2419
    %v2437 = vadd.f32 %v2400, %v2435
    %v2438 = vadd.f32 %v2401, %v2436
    %v2439 = vstv %s2423
    %v2440 = vmul.f32 %v2439, %v2418
    %v2441 = vmul.f32 %v2439, %v2419
    %v2442 = vadd.f32 %v2405, %v2440
    %v2443 = vadd.f32 %v2406, %v2441
    %v2444 = vrot.slane %v448, 2
    %v2445 = vrot.slane %v444, 2
    %v2446 = vsel %vm2221, %v2444, %v2445
    %v2447 = vrot.slane %v449, 2
    %v2448 = vsel %vm2221, %v2445, %v2447
    %2451 = vrot.lane.b32.xlu0 %v2446, 1
    %v2452 = vpop.permute.xlu0 %2451
    %2453 = vrot.lane.b32.xlu0 %v2448, 1
    %v2454 = vpop.permute.xlu0 %2453
    %v2455 = vsel %vm105, %v2452, 0.0
    %v2456 = vsel %vm105, %v2454, 0.0
    %s2457 = sld [smem:[#allocation7 + $0x3c]]
    %s2458 = sld [smem:[#allocation7 + $0x84]]
    %s2459 = sld [smem:[#allocation7 + $0xcc]]
    %s2460 = sld [smem:[#allocation7 + $0x114]]
    %v2461 = vstv %s2457
    %v2462 = vmul.f32 %v2461, %v2455
    %v2463 = vmul.f32 %v2461, %v2456
    %v2464 = vadd.f32 %v2427, %v2462
    %v2465 = vadd.f32 %v2428, %v2463
    %v2466 = vstv %s2458
    %v2467 = vmul.f32 %v2466, %v2455
    %v2468 = vmul.f32 %v2466, %v2456
    %v2469 = vadd.f32 %v2432, %v2467
    %v2470 = vadd.f32 %v2433, %v2468
    %v2471 = vstv %s2459
    %v2472 = vmul.f32 %v2471, %v2455
    %v2473 = vmul.f32 %v2471, %v2456
    %v2474 = vadd.f32 %v2437, %v2472
    %v2475 = vadd.f32 %v2438, %v2473
    %v2476 = vstv %s2460
    %v2477 = vmul.f32 %v2476, %v2455
    %v2478 = vmul.f32 %v2476, %v2456
    %v2479 = vadd.f32 %v2442, %v2477
    %v2480 = vadd.f32 %v2443, %v2478
    %v2481 = vrot.slane %v458, 2
    %v2482 = vrot.slane %v454, 2
    %v2483 = vsel %vm2221, %v2481, %v2482
    %v2484 = vrot.slane %v459, 2
    %v2485 = vsel %vm2221, %v2482, %v2484
    %2488 = vrot.lane.b32.xlu0 %v2483, 1
    %v2489 = vpop.permute.xlu0 %2488
    %2490 = vrot.lane.b32.xlu0 %v2485, 1
    %v2491 = vpop.permute.xlu0 %2490
    %v2492 = vsel %vm105, %v2489, 0.0
    %v2493 = vsel %vm105, %v2491, 0.0
    %s2494 = sld [smem:[#allocation7 + $0x45]]
    %s2495 = sld [smem:[#allocation7 + $0x8d]]
    %s2496 = sld [smem:[#allocation7 + $0xd5]]
    %s2497 = sld [smem:[#allocation7 + $0x11d]]
    %v2498 = vstv %s2494
    %v2499 = vmul.f32 %v2498, %v2492
    %v2500 = vmul.f32 %v2498, %v2493
    %v2501 = vadd.f32 %v2464, %v2499
    %v2502 = vadd.f32 %v2465, %v2500
    %v2503 = vstv %s2495
    %v2504 = vmul.f32 %v2503, %v2492
    %v2505 = vmul.f32 %v2503, %v2493
    %v2506 = vadd.f32 %v2469, %v2504
    %v2507 = vadd.f32 %v2470, %v2505
    %v2508 = vstv %s2496
    %v2509 = vmul.f32 %v2508, %v2492
    %v2510 = vmul.f32 %v2508, %v2493
    %v2511 = vadd.f32 %v2474, %v2509
    %v2512 = vadd.f32 %v2475, %v2510
    %v2513 = vstv %s2497
    %v2514 = vmul.f32 %v2513, %v2492
    %v2515 = vmul.f32 %v2513, %v2493
    %v2516 = vadd.f32 %v2479, %v2514
    %v2517 = vadd.f32 %v2480, %v2515
    %s2518 = sld [smem:[#allocation7 + $0x7]]
    %s2519 = sld [smem:[#allocation7 + $0x4f]]
    %s2520 = sld [smem:[#allocation7 + $0x97]]
    %s2521 = sld [smem:[#allocation7 + $0xdf]]
    %v2522 = vstv %s2518
    %v2523 = vmul.f32 %v2522, %v388
    %v2524 = vmul.f32 %v2522, %v384
    %v2525 = vmul.f32 %v2522, %v389
    %v2529 = vrot.slane %v2523, 2
    %v2530 = vrot.slane %v2524, 2
    %v2531 = vsel %vm2221, %v2529, %v2530
    %v2532 = vrot.slane %v2525, 2
    %v2533 = vsel %vm2221, %v2530, %v2532
    %v2536 = vadd.f32 %v2501, %v2531
    %v2537 = vadd.f32 %v2502, %v2533
    %v2538 = vstv %s2519
    %v2539 = vmul.f32 %v2538, %v388
    %v2540 = vmul.f32 %v2538, %v384
    %v2541 = vmul.f32 %v2538, %v389
    %v2545 = vrot.slane %v2539, 2
    %v2546 = vrot.slane %v2540, 2
    %v2547 = vsel %vm2221, %v2545, %v2546
    %v2548 = vrot.slane %v2541, 2
    %v2549 = vsel %vm2221, %v2546, %v2548
    %v2552 = vadd.f32 %v2506, %v2547
    %v2553 = vadd.f32 %v2507, %v2549
    %v2554 = vstv %s2520
    %v2555 = vmul.f32 %v2554, %v388
    %v2556 = vmul.f32 %v2554, %v384
    %v2557 = vmul.f32 %v2554, %v389
    %v2561 = vrot.slane %v2555, 2
    %v2562 = vrot.slane %v2556, 2
    %v2563 = vsel %vm2221, %v2561, %v2562
    %v2564 = vrot.slane %v2557, 2
    %v2565 = vsel %vm2221, %v2562, %v2564
    %v2568 = vadd.f32 %v2511, %v2563
    %v2569 = vadd.f32 %v2512, %v2565
    %v2570 = vstv %s2521
    %v2571 = vmul.f32 %v2570, %v388
    %v2572 = vmul.f32 %v2570, %v384
    %v2573 = vmul.f32 %v2570, %v389
    %v2577 = vrot.slane %v2571, 2
    %v2578 = vrot.slane %v2572, 2
    %v2579 = vsel %vm2221, %v2577, %v2578
    %v2580 = vrot.slane %v2573, 2
    %v2581 = vsel %vm2221, %v2578, %v2580
    %v2584 = vadd.f32 %v2516, %v2579
    %v2585 = vadd.f32 %v2517, %v2581
    %s2586 = sld [smem:[#allocation7 + $0x10]]
    %s2587 = sld [smem:[#allocation7 + $0x58]]
    %s2588 = sld [smem:[#allocation7 + $0xa0]]
    %s2589 = sld [smem:[#allocation7 + $0xe8]]
    %v2590 = vstv %s2586
    %v2591 = vmul.f32 %v2590, %v398
    %v2592 = vmul.f32 %v2590, %v394
    %v2593 = vmul.f32 %v2590, %v399
    %v2597 = vrot.slane %v2591, 2
    %v2598 = vrot.slane %v2592, 2
    %v2599 = vsel %vm2221, %v2597, %v2598
    %v2600 = vrot.slane %v2593, 2
    %v2601 = vsel %vm2221, %v2598, %v2600
    %v2604 = vadd.f32 %v2536, %v2599
    %v2605 = vadd.f32 %v2537, %v2601
    %v2606 = vstv %s2587
    %v2607 = vmul.f32 %v2606, %v398
    %v2608 = vmul.f32 %v2606, %v394
    %v2609 = vmul.f32 %v2606, %v399
    %v2613 = vrot.slane %v2607, 2
    %v2614 = vrot.slane %v2608, 2
    %v2615 = vsel %vm2221, %v2613, %v2614
    %v2616 = vrot.slane %v2609, 2
    %v2617 = vsel %vm2221, %v2614, %v2616
    %v2620 = vadd.f32 %v2552, %v2615
    %v2621 = vadd.f32 %v2553, %v2617
    %v2622 = vstv %s2588
    %v2623 = vmul.f32 %v2622, %v398
    %v2624 = vmul.f32 %v2622, %v394
    %v2625 = vmul.f32 %v2622, %v399
    %v2629 = vrot.slane %v2623, 2
    %v2630 = vrot.slane %v2624, 2
    %v2631 = vsel %vm2221, %v2629, %v2630
    %v2632 = vrot.slane %v2625, 2
    %v2633 = vsel %vm2221, %v2630, %v2632
    %v2636 = vadd.f32 %v2568, %v2631
    %v2637 = vadd.f32 %v2569, %v2633
    %v2638 = vstv %s2589
    %v2639 = vmul.f32 %v2638, %v398
    %v2640 = vmul.f32 %v2638, %v394
    %v2641 = vmul.f32 %v2638, %v399
    %v2645 = vrot.slane %v2639, 2
    %v2646 = vrot.slane %v2640, 2
    %v2647 = vsel %vm2221, %v2645, %v2646
    %v2648 = vrot.slane %v2641, 2
    %v2649 = vsel %vm2221, %v2646, %v2648
    %v2652 = vadd.f32 %v2584, %v2647
    %v2653 = vadd.f32 %v2585, %v2649
    %s2654 = sld [smem:[#allocation7 + $0x19]]
    %s2655 = sld [smem:[#allocation7 + $0x61]]
    %s2656 = sld [smem:[#allocation7 + $0xa9]]
    %s2657 = sld [smem:[#allocation7 + $0xf1]]
    %v2658 = vstv %s2654
    %v2659 = vmul.f32 %v2658, %v408
    %v2660 = vmul.f32 %v2658, %v404
    %v2661 = vmul.f32 %v2658, %v409
    %v2665 = vrot.slane %v2659, 2
    %v2666 = vrot.slane %v2660, 2
    %v2667 = vsel %vm2221, %v2665, %v2666
    %v2668 = vrot.slane %v2661, 2
    %v2669 = vsel %vm2221, %v2666, %v2668
    %v2672 = vadd.f32 %v2604, %v2667
    %v2673 = vadd.f32 %v2605, %v2669
    %v2674 = vstv %s2655
    %v2675 = vmul.f32 %v2674, %v408
    %v2676 = vmul.f32 %v2674, %v404
    %v2677 = vmul.f32 %v2674, %v409
    %v2681 = vrot.slane %v2675, 2
    %v2682 = vrot.slane %v2676, 2
    %v2683 = vsel %vm2221, %v2681, %v2682
    %v2684 = vrot.slane %v2677, 2
    %v2685 = vsel %vm2221, %v2682, %v2684
    %v2688 = vadd.f32 %v2620, %v2683
    %v2689 = vadd.f32 %v2621, %v2685
    %v2690 = vstv %s2656
    %v2691 = vmul.f32 %v2690, %v408
    %v2692 = vmul.f32 %v2690, %v404
    %v2693 = vmul.f32 %v2690, %v409
    %v2697 = vrot.slane %v2691, 2
    %v2698 = vrot.slane %v2692, 2
    %v2699 = vsel %vm2221, %v2697, %v2698
    %v2700 = vrot.slane %v2693, 2
    %v2701 = vsel %vm2221, %v2698, %v2700
    %v2704 = vadd.f32 %v2636, %v2699
    %v2705 = vadd.f32 %v2637, %v2701
    %v2706 = vstv %s2657
    %v2707 = vmul.f32 %v2706, %v408
    %v2708 = vmul.f32 %v2706, %v404
    %v2709 = vmul.f32 %v2706, %v409
    %v2713 = vrot.slane %v2707, 2
    %v2714 = vrot.slane %v2708, 2
    %v2715 = vsel %vm2221, %v2713, %v2714
    %v2716 = vrot.slane %v2709, 2
    %v2717 = vsel %vm2221, %v2714, %v2716
    %v2720 = vadd.f32 %v2652, %v2715
    %v2721 = vadd.f32 %v2653, %v2717
    %s2722 = sld [smem:[#allocation7 + $0x22]]
    %s2723 = sld [smem:[#allocation7 + $0x6a]]
    %s2724 = sld [smem:[#allocation7 + $0xb2]]
    %s2725 = sld [smem:[#allocation7 + $0xfa]]
    %v2726 = vstv %s2722
    %v2727 = vmul.f32 %v2726, %v418
    %v2728 = vmul.f32 %v2726, %v414
    %v2729 = vmul.f32 %v2726, %v419
    %v2733 = vrot.slane %v2727, 2
    %v2734 = vrot.slane %v2728, 2
    %v2735 = vsel %vm2221, %v2733, %v2734
    %v2736 = vrot.slane %v2729, 2
    %v2737 = vsel %vm2221, %v2734, %v2736
    %v2740 = vadd.f32 %v2672, %v2735
    %v2741 = vadd.f32 %v2673, %v2737
    %v2742 = vstv %s2723
    %v2743 = vmul.f32 %v2742, %v418
    %v2744 = vmul.f32 %v2742, %v414
    %v2745 = vmul.f32 %v2742, %v419
    %v2749 = vrot.slane %v2743, 2
    %v2750 = vrot.slane %v2744, 2
    %v2751 = vsel %vm2221, %v2749, %v2750
    %v2752 = vrot.slane %v2745, 2
    %v2753 = vsel %vm2221, %v2750, %v2752
    %v2756 = vadd.f32 %v2688, %v2751
    %v2757 = vadd.f32 %v2689, %v2753
    %v2758 = vstv %s2724
    %v2759 = vmul.f32 %v2758, %v418
    %v2760 = vmul.f32 %v2758, %v414
    %v2761 = vmul.f32 %v2758, %v419
    %v2765 = vrot.slane %v2759, 2
    %v2766 = vrot.slane %v2760, 2
    %v2767 = vsel %vm2221, %v2765, %v2766
    %v2768 = vrot.slane %v2761, 2
    %v2769 = vsel %vm2221, %v2766, %v2768
    %v2772 = vadd.f32 %v2704, %v2767
    %v2773 = vadd.f32 %v2705, %v2769
    %v2774 = vstv %s2725
    %v2775 = vmul.f32 %v2774, %v418
    %v2776 = vmul.f32 %v2774, %v414
    %v2777 = vmul.f32 %v2774, %v419
    %v2781 = vrot.slane %v2775, 2
    %v2782 = vrot.slane %v2776, 2
    %v2783 = vsel %vm2221, %v2781, %v2782
    %v2784 = vrot.slane %v2777, 2
    %v2785 = vsel %vm2221, %v2782, %v2784
    %v2788 = vadd.f32 %v2720, %v2783
    %v2789 = vadd.f32 %v2721, %v2785
    %s2790 = sld [smem:[#allocation7 + $0x2b]]
    %s2791 = sld [smem:[#allocation7 + $0x73]]
    %s2792 = sld [smem:[#allocation7 + $0xbb]]
    %s2793 = sld [smem:[#allocation7 + $0x103]]
    %v2794 = vstv %s2790
    %v2795 = vmul.f32 %v2794, %v428
    %v2796 = vmul.f32 %v2794, %v424
    %v2797 = vmul.f32 %v2794, %v429
    %v2801 = vrot.slane %v2795, 2
    %v2802 = vrot.slane %v2796, 2
    %v2803 = vsel %vm2221, %v2801, %v2802
    %v2804 = vrot.slane %v2797, 2
    %v2805 = vsel %vm2221, %v2802, %v2804
    %v2808 = vadd.f32 %v2740, %v2803
    %v2809 = vadd.f32 %v2741, %v2805
    %v2810 = vstv %s2791
    %v2811 = vmul.f32 %v2810, %v428
    %v2812 = vmul.f32 %v2810, %v424
    %v2813 = vmul.f32 %v2810, %v429
    %v2817 = vrot.slane %v2811, 2
    %v2818 = vrot.slane %v2812, 2
    %v2819 = vsel %vm2221, %v2817, %v2818
    %v2820 = vrot.slane %v2813, 2
    %v2821 = vsel %vm2221, %v2818, %v2820
    %v2824 = vadd.f32 %v2756, %v2819
    %v2825 = vadd.f32 %v2757, %v2821
    %v2826 = vstv %s2792
    %v2827 = vmul.f32 %v2826, %v428
    %v2828 = vmul.f32 %v2826, %v424
    %v2829 = vmul.f32 %v2826, %v429
    %v2833 = vrot.slane %v2827, 2
    %v2834 = vrot.slane %v2828, 2
    %v2835 = vsel %vm2221, %v2833, %v2834
    %v2836 = vrot.slane %v2829, 2
    %v2837 = vsel %vm2221, %v2834, %v2836
    %v2840 = vadd.f32 %v2772, %v2835
    %v2841 = vadd.f32 %v2773, %v2837
    %v2842 = vstv %s2793
    %v2843 = vmul.f32 %v2842, %v428
    %v2844 = vmul.f32 %v2842, %v424
    %v2845 = vmul.f32 %v2842, %v429
    %v2849 = vrot.slane %v2843, 2
    %v2850 = vrot.slane %v2844, 2
    %v2851 = vsel %vm2221, %v2849, %v2850
    %v2852 = vrot.slane %v2845, 2
    %v2853 = vsel %vm2221, %v2850, %v2852
    %v2856 = vadd.f32 %v2788, %v2851
    %v2857 = vadd.f32 %v2789, %v2853
    %s2858 = sld [smem:[#allocation7 + $0x34]]
    %s2859 = sld [smem:[#allocation7 + $0x7c]]
    %s2860 = sld [smem:[#allocation7 + $0xc4]]
    %s2861 = sld [smem:[#allocation7 + $0x10c]]
    %v2862 = vstv %s2858
    %v2863 = vmul.f32 %v2862, %v438
    %v2864 = vmul.f32 %v2862, %v434
    %v2865 = vmul.f32 %v2862, %v439
    %v2869 = vrot.slane %v2863, 2
    %v2870 = vrot.slane %v2864, 2
    %v2871 = vsel %vm2221, %v2869, %v2870
    %v2872 = vrot.slane %v2865, 2
    %v2873 = vsel %vm2221, %v2870, %v2872
    %v2876 = vadd.f32 %v2808, %v2871
    %v2877 = vadd.f32 %v2809, %v2873
    %v2878 = vstv %s2859
    %v2879 = vmul.f32 %v2878, %v438
    %v2880 = vmul.f32 %v2878, %v434
    %v2881 = vmul.f32 %v2878, %v439
    %v2885 = vrot.slane %v2879, 2
    %v2886 = vrot.slane %v2880, 2
    %v2887 = vsel %vm2221, %v2885, %v2886
    %v2888 = vrot.slane %v2881, 2
    %v2889 = vsel %vm2221, %v2886, %v2888
    %v2892 = vadd.f32 %v2824, %v2887
    %v2893 = vadd.f32 %v2825, %v2889
    %v2894 = vstv %s2860
    %v2895 = vmul.f32 %v2894, %v438
    %v2896 = vmul.f32 %v2894, %v434
    %v2897 = vmul.f32 %v2894, %v439
    %v2901 = vrot.slane %v2895, 2
    %v2902 = vrot.slane %v2896, 2
    %v2903 = vsel %vm2221, %v2901, %v2902
    %v2904 = vrot.slane %v2897, 2
    %v2905 = vsel %vm2221, %v2902, %v2904
    %v2908 = vadd.f32 %v2840, %v2903
    %v2909 = vadd.f32 %v2841, %v2905
    %v2910 = vstv %s2861
    %v2911 = vmul.f32 %v2910, %v438
    %v2912 = vmul.f32 %v2910, %v434
    %v2913 = vmul.f32 %v2910, %v439
    %v2917 = vrot.slane %v2911, 2
    %v2918 = vrot.slane %v2912, 2
    %v2919 = vsel %vm2221, %v2917, %v2918
    %v2920 = vrot.slane %v2913, 2
    %v2921 = vsel %vm2221, %v2918, %v2920
    %v2924 = vadd.f32 %v2856, %v2919
    %v2925 = vadd.f32 %v2857, %v2921
    %s2926 = sld [smem:[#allocation7 + $0x3d]]
    %s2927 = sld [smem:[#allocation7 + $0x85]]
    %s2928 = sld [smem:[#allocation7 + $0xcd]]
    %s2929 = sld [smem:[#allocation7 + $0x115]]
    %v2930 = vstv %s2926
    %v2931 = vmul.f32 %v2930, %v448
    %v2932 = vmul.f32 %v2930, %v444
    %v2933 = vmul.f32 %v2930, %v449
    %v2937 = vrot.slane %v2931, 2
    %v2938 = vrot.slane %v2932, 2
    %v2939 = vsel %vm2221, %v2937, %v2938
    %v2940 = vrot.slane %v2933, 2
    %v2941 = vsel %vm2221, %v2938, %v2940
    %v2944 = vadd.f32 %v2876, %v2939
    %v2945 = vadd.f32 %v2877, %v2941
    %v2946 = vstv %s2927
    %v2947 = vmul.f32 %v2946, %v448
    %v2948 = vmul.f32 %v2946, %v444
    %v2949 = vmul.f32 %v2946, %v449
    %v2953 = vrot.slane %v2947, 2
    %v2954 = vrot.slane %v2948, 2
    %v2955 = vsel %vm2221, %v2953, %v2954
    %v2956 = vrot.slane %v2949, 2
    %v2957 = vsel %vm2221, %v2954, %v2956
    %v2960 = vadd.f32 %v2892, %v2955
    %v2961 = vadd.f32 %v2893, %v2957
    %v2962 = vstv %s2928
    %v2963 = vmul.f32 %v2962, %v448
    %v2964 = vmul.f32 %v2962, %v444
    %v2965 = vmul.f32 %v2962, %v449
    %v2969 = vrot.slane %v2963, 2
    %v2970 = vrot.slane %v2964, 2
    %v2971 = vsel %vm2221, %v2969, %v2970
    %v2972 = vrot.slane %v2965, 2
    %v2973 = vsel %vm2221, %v2970, %v2972
    %v2976 = vadd.f32 %v2908, %v2971
    %v2977 = vadd.f32 %v2909, %v2973
    %v2978 = vstv %s2929
    %v2979 = vmul.f32 %v2978, %v448
    %v2980 = vmul.f32 %v2978, %v444
    %v2981 = vmul.f32 %v2978, %v449
    %v2985 = vrot.slane %v2979, 2
    %v2986 = vrot.slane %v2980, 2
    %v2987 = vsel %vm2221, %v2985, %v2986
    %v2988 = vrot.slane %v2981, 2
    %v2989 = vsel %vm2221, %v2986, %v2988
    %v2992 = vadd.f32 %v2924, %v2987
    %v2993 = vadd.f32 %v2925, %v2989
    %s2994 = sld [smem:[#allocation7 + $0x46]]
    %s2995 = sld [smem:[#allocation7 + $0x8e]]
    %s2996 = sld [smem:[#allocation7 + $0xd6]]
    %s2997 = sld [smem:[#allocation7 + $0x11e]]
    %v2998 = vstv %s2994
    %v2999 = vmul.f32 %v2998, %v458
    %v3000 = vmul.f32 %v2998, %v454
    %v3001 = vmul.f32 %v2998, %v459
    %v3005 = vrot.slane %v2999, 2
    %v3006 = vrot.slane %v3000, 2
    %v3007 = vsel %vm2221, %v3005, %v3006
    %v3008 = vrot.slane %v3001, 2
    %v3009 = vsel %vm2221, %v3006, %v3008
    %v3012 = vadd.f32 %v2944, %v3007
    %v3013 = vadd.f32 %v2945, %v3009
    %v3014 = vstv %s2995
    %v3015 = vmul.f32 %v3014, %v458
    %v3016 = vmul.f32 %v3014, %v454
    %v3017 = vmul.f32 %v3014, %v459
    %v3021 = vrot.slane %v3015, 2
    %v3022 = vrot.slane %v3016, 2
    %v3023 = vsel %vm2221, %v3021, %v3022
    %v3024 = vrot.slane %v3017, 2
    %v3025 = vsel %vm2221, %v3022, %v3024
    %v3028 = vadd.f32 %v2960, %v3023
    %v3029 = vadd.f32 %v2961, %v3025
    %v3030 = vstv %s2996
    %v3031 = vmul.f32 %v3030, %v458
    %v3032 = vmul.f32 %v3030, %v454
    %v3033 = vmul.f32 %v3030, %v459
    %v3037 = vrot.slane %v3031, 2
    %v3038 = vrot.slane %v3032, 2
    %v3039 = vsel %vm2221, %v3037, %v3038
    %v3040 = vrot.slane %v3033, 2
    %v3041 = vsel %vm2221, %v3038, %v3040
    %v3044 = vadd.f32 %v2976, %v3039
    %v3045 = vadd.f32 %v2977, %v3041
    %v3046 = vstv %s2997
    %v3047 = vmul.f32 %v3046, %v458
    %v3048 = vmul.f32 %v3046, %v454
    %v3049 = vmul.f32 %v3046, %v459
    %v3053 = vrot.slane %v3047, 2
    %v3054 = vrot.slane %v3048, 2
    %v3055 = vsel %vm2221, %v3053, %v3054
    %v3056 = vrot.slane %v3049, 2
    %v3057 = vsel %vm2221, %v3054, %v3056
    %v3060 = vadd.f32 %v2992, %v3055
    %v3061 = vadd.f32 %v2993, %v3057
    %3062 = vrot.lane.b32.xlu0 %v2224, 127
    %v3063 = vpop.permute.xlu0 %3062
    %3064 = vrot.lane.b32.xlu0 %v2226, 127
    %v3065 = vpop.permute.xlu0 %3064
    %v3066 = vsel %vm106, %v3063, 0.0
    %v3067 = vsel %vm106, %v3065, 0.0
    %s3068 = sld [smem:[#allocation7 + $0x8]]
    %s3069 = sld [smem:[#allocation7 + $0x50]]
    %s3070 = sld [smem:[#allocation7 + $0x98]]
    %s3071 = sld [smem:[#allocation7 + $0xe0]]
    %v3072 = vstv %s3068
    %v3073 = vmul.f32 %v3072, %v3066
    %v3074 = vmul.f32 %v3072, %v3067
    %v3075 = vadd.f32 %v3012, %v3073
    %v3076 = vadd.f32 %v3013, %v3074
    %v3077 = vstv %s3069
    %v3078 = vmul.f32 %v3077, %v3066
    %v3079 = vmul.f32 %v3077, %v3067
    %v3080 = vadd.f32 %v3028, %v3078
    %v3081 = vadd.f32 %v3029, %v3079
    %v3082 = vstv %s3070
    %v3083 = vmul.f32 %v3082, %v3066
    %v3084 = vmul.f32 %v3082, %v3067
    %v3085 = vadd.f32 %v3044, %v3083
    %v3086 = vadd.f32 %v3045, %v3084
    %v3087 = vstv %s3071
    %v3088 = vmul.f32 %v3087, %v3066
    %v3089 = vmul.f32 %v3087, %v3067
    %v3090 = vadd.f32 %v3060, %v3088
    %v3091 = vadd.f32 %v3061, %v3089
    %3092 = vrot.lane.b32.xlu0 %v2261, 127
    %v3093 = vpop.permute.xlu0 %3092
    %3094 = vrot.lane.b32.xlu0 %v2263, 127
    %v3095 = vpop.permute.xlu0 %3094
    %v3096 = vsel %vm106, %v3093, 0.0
    %v3097 = vsel %vm106, %v3095, 0.0
    %s3098 = sld [smem:[#allocation7 + $0x11]]
    %s3099 = sld [smem:[#allocation7 + $0x59]]
    %s3100 = sld [smem:[#allocation7 + $0xa1]]
    %s3101 = sld [smem:[#allocation7 + $0xe9]]
    %v3102 = vstv %s3098
    %v3103 = vmul.f32 %v3102, %v3096
    %v3104 = vmul.f32 %v3102, %v3097
    %v3105 = vadd.f32 %v3075, %v3103
    %v3106 = vadd.f32 %v3076, %v3104
    %v3107 = vstv %s3099
    %v3108 = vmul.f32 %v3107, %v3096
    %v3109 = vmul.f32 %v3107, %v3097
    %v3110 = vadd.f32 %v3080, %v3108
    %v3111 = vadd.f32 %v3081, %v3109
    %v3112 = vstv %s3100
    %v3113 = vmul.f32 %v3112, %v3096
    %v3114 = vmul.f32 %v3112, %v3097
    %v3115 = vadd.f32 %v3085, %v3113
    %v3116 = vadd.f32 %v3086, %v3114
    %v3117 = vstv %s3101
    %v3118 = vmul.f32 %v3117, %v3096
    %v3119 = vmul.f32 %v3117, %v3097
    %v3120 = vadd.f32 %v3090, %v3118
    %v3121 = vadd.f32 %v3091, %v3119
    %3122 = vrot.lane.b32.xlu0 %v2298, 127
    %v3123 = vpop.permute.xlu0 %3122
    %3124 = vrot.lane.b32.xlu0 %v2300, 127
    %v3125 = vpop.permute.xlu0 %3124
    %v3126 = vsel %vm106, %v3123, 0.0
    %v3127 = vsel %vm106, %v3125, 0.0
    %s3128 = sld [smem:[#allocation7 + $0x1a]]
    %s3129 = sld [smem:[#allocation7 + $0x62]]
    %s3130 = sld [smem:[#allocation7 + $0xaa]]
    %s3131 = sld [smem:[#allocation7 + $0xf2]]
    %v3132 = vstv %s3128
    %v3133 = vmul.f32 %v3132, %v3126
    %v3134 = vmul.f32 %v3132, %v3127
    %v3135 = vadd.f32 %v3105, %v3133
    %v3136 = vadd.f32 %v3106, %v3134
    %v3137 = vstv %s3129
    %v3138 = vmul.f32 %v3137, %v3126
    %v3139 = vmul.f32 %v3137, %v3127
    %v3140 = vadd.f32 %v3110, %v3138
    %v3141 = vadd.f32 %v3111, %v3139
    %v3142 = vstv %s3130
    %v3143 = vmul.f32 %v3142, %v3126
    %v3144 = vmul.f32 %v3142, %v3127
    %v3145 = vadd.f32 %v3115, %v3143
    %v3146 = vadd.f32 %v3116, %v3144
    %v3147 = vstv %s3131
    %v3148 = vmul.f32 %v3147, %v3126
    %v3149 = vmul.f32 %v3147, %v3127
    %v3150 = vadd.f32 %v3120, %v3148
    %v3151 = vadd.f32 %v3121, %v3149
    %3152 = vrot.lane.b32.xlu0 %v2335, 127
    %v3153 = vpop.permute.xlu0 %3152
    %3154 = vrot.lane.b32.xlu0 %v2337, 127
    %v3155 = vpop.permute.xlu0 %3154
    %v3156 = vsel %vm106, %v3153, 0.0
    %v3157 = vsel %vm106, %v3155, 0.0
    %s3158 = sld [smem:[#allocation7 + $0x23]]
    %s3159 = sld [smem:[#allocation7 + $0x6b]]
    %s3160 = sld [smem:[#allocation7 + $0xb3]]
    %s3161 = sld [smem:[#allocation7 + $0xfb]]
    %v3162 = vstv %s3158
    %v3163 = vmul.f32 %v3162, %v3156
    %v3164 = vmul.f32 %v3162, %v3157
    %v3165 = vadd.f32 %v3135, %v3163
    %v3166 = vadd.f32 %v3136, %v3164
    %v3167 = vstv %s3159
    %v3168 = vmul.f32 %v3167, %v3156
    %v3169 = vmul.f32 %v3167, %v3157
    %v3170 = vadd.f32 %v3140, %v3168
    %v3171 = vadd.f32 %v3141, %v3169
    %v3172 = vstv %s3160
    %v3173 = vmul.f32 %v3172, %v3156
    %v3174 = vmul.f32 %v3172, %v3157
    %v3175 = vadd.f32 %v3145, %v3173
    %v3176 = vadd.f32 %v3146, %v3174
    %v3177 = vstv %s3161
    %v3178 = vmul.f32 %v3177, %v3156
    %v3179 = vmul.f32 %v3177, %v3157
    %v3180 = vadd.f32 %v3150, %v3178
    %v3181 = vadd.f32 %v3151, %v3179
    %3182 = vrot.lane.b32.xlu0 %v2372, 127
    %v3183 = vpop.permute.xlu0 %3182
    %3184 = vrot.lane.b32.xlu0 %v2374, 127
    %v3185 = vpop.permute.xlu0 %3184
    %v3186 = vsel %vm106, %v3183, 0.0
    %v3187 = vsel %vm106, %v3185, 0.0
    %s3188 = sld [smem:[#allocation7 + $0x2c]]
    %s3189 = sld [smem:[#allocation7 + $0x74]]
    %s3190 = sld [smem:[#allocation7 + $0xbc]]
    %s3191 = sld [smem:[#allocation7 + $0x104]]
    %v3192 = vstv %s3188
    %v3193 = vmul.f32 %v3192, %v3186
    %v3194 = vmul.f32 %v3192, %v3187
    %v3195 = vadd.f32 %v3165, %v3193
    %v3196 = vadd.f32 %v3166, %v3194
    %v3197 = vstv %s3189
    %v3198 = vmul.f32 %v3197, %v3186
    %v3199 = vmul.f32 %v3197, %v3187
    %v3200 = vadd.f32 %v3170, %v3198
    %v3201 = vadd.f32 %v3171, %v3199
    %v3202 = vstv %s3190
    %v3203 = vmul.f32 %v3202, %v3186
    %v3204 = vmul.f32 %v3202, %v3187
    %v3205 = vadd.f32 %v3175, %v3203
    %v3206 = vadd.f32 %v3176, %v3204
    %v3207 = vstv %s3191
    %v3208 = vmul.f32 %v3207, %v3186
    %v3209 = vmul.f32 %v3207, %v3187
    %v3210 = vadd.f32 %v3180, %v3208
    %v3211 = vadd.f32 %v3181, %v3209
    %3212 = vrot.lane.b32.xlu0 %v2409, 127
    %v3213 = vpop.permute.xlu0 %3212
    %3214 = vrot.lane.b32.xlu0 %v2411, 127
    %v3215 = vpop.permute.xlu0 %3214
    %v3216 = vsel %vm106, %v3213, 0.0
    %v3217 = vsel %vm106, %v3215, 0.0
    %s3218 = sld [smem:[#allocation7 + $0x35]]
    %s3219 = sld [smem:[#allocation7 + $0x7d]]
    %s3220 = sld [smem:[#allocation7 + $0xc5]]
    %s3221 = sld [smem:[#allocation7 + $0x10d]]
    %v3222 = vstv %s3218
    %v3223 = vmul.f32 %v3222, %v3216
    %v3224 = vmul.f32 %v3222, %v3217
    %v3225 = vadd.f32 %v3195, %v3223
    %v3226 = vadd.f32 %v3196, %v3224
    %v3227 = vstv %s3219
    %v3228 = vmul.f32 %v3227, %v3216
    %v3229 = vmul.f32 %v3227, %v3217
    %v3230 = vadd.f32 %v3200, %v3228
    %v3231 = vadd.f32 %v3201, %v3229
    %v3232 = vstv %s3220
    %v3233 = vmul.f32 %v3232, %v3216
    %v3234 = vmul.f32 %v3232, %v3217
    %v3235 = vadd.f32 %v3205, %v3233
    %v3236 = vadd.f32 %v3206, %v3234
    %v3237 = vstv %s3221
    %v3238 = vmul.f32 %v3237, %v3216
    %v3239 = vmul.f32 %v3237, %v3217
    %v3240 = vadd.f32 %v3210, %v3238
    %v3241 = vadd.f32 %v3211, %v3239
    %3242 = vrot.lane.b32.xlu0 %v2446, 127
    %v3243 = vpop.permute.xlu0 %3242
    %3244 = vrot.lane.b32.xlu0 %v2448, 127
    %v3245 = vpop.permute.xlu0 %3244
    %v3246 = vsel %vm106, %v3243, 0.0
    %v3247 = vsel %vm106, %v3245, 0.0
    %s3248 = sld [smem:[#allocation7 + $0x3e]]
    %s3249 = sld [smem:[#allocation7 + $0x86]]
    %s3250 = sld [smem:[#allocation7 + $0xce]]
    %s3251 = sld [smem:[#allocation7 + $0x116]]
    %v3252 = vstv %s3248
    %v3253 = vmul.f32 %v3252, %v3246
    %v3254 = vmul.f32 %v3252, %v3247
    %v3255 = vadd.f32 %v3225, %v3253
    %v3256 = vadd.f32 %v3226, %v3254
    %v3257 = vstv %s3249
    %v3258 = vmul.f32 %v3257, %v3246
    %v3259 = vmul.f32 %v3257, %v3247
    %v3260 = vadd.f32 %v3230, %v3258
    %v3261 = vadd.f32 %v3231, %v3259
    %v3262 = vstv %s3250
    %v3263 = vmul.f32 %v3262, %v3246
    %v3264 = vmul.f32 %v3262, %v3247
    %v3265 = vadd.f32 %v3235, %v3263
    %v3266 = vadd.f32 %v3236, %v3264
    %v3267 = vstv %s3251
    %v3268 = vmul.f32 %v3267, %v3246
    %v3269 = vmul.f32 %v3267, %v3247
    %v3270 = vadd.f32 %v3240, %v3268
    %v3271 = vadd.f32 %v3241, %v3269
    %3272 = vrot.lane.b32.xlu0 %v2483, 127
    %v3273 = vpop.permute.xlu0 %3272
    %3274 = vrot.lane.b32.xlu0 %v2485, 127
    %v3275 = vpop.permute.xlu0 %3274
    %v3276 = vsel %vm106, %v3273, 0.0
    %v3277 = vsel %vm106, %v3275, 0.0
    %s3278 = sld [smem:[#allocation7 + $0x47]]
    %s3279 = sld [smem:[#allocation7 + $0x8f]]
    %s3280 = sld [smem:[#allocation7 + $0xd7]]
    %s3281 = sld [smem:[#allocation7 + $0x11f]]
    %v3282 = vstv %s3278
    %v3283 = vmul.f32 %v3282, %v3276
    %v3284 = vmul.f32 %v3282, %v3277
    %v3285 = vadd.f32 %v3255, %v3283
    %v3286 = vadd.f32 %v3256, %v3284
    %v3287 = vstv %s3279
    %v3288 = vmul.f32 %v3287, %v3276
    %v3289 = vmul.f32 %v3287, %v3277
    %v3290 = vadd.f32 %v3260, %v3288
    %v3291 = vadd.f32 %v3261, %v3289
    %v3292 = vstv %s3280
    %v3293 = vmul.f32 %v3292, %v3276
    %v3294 = vmul.f32 %v3292, %v3277
    %v3295 = vadd.f32 %v3265, %v3293
    %v3296 = vadd.f32 %v3266, %v3294
    %v3297 = vstv %s3281
    %v3298 = vmul.f32 %v3297, %v3276
    %v3299 = vmul.f32 %v3297, %v3277
    %v3300 = vadd.f32 %v3270, %v3298
    %v3301 = vadd.f32 %v3271, %v3299
    %vm3302 = vcmp.gt.f32.partialorder %v3285, 0.0
    %vm3303 = vcmp.gt.f32.partialorder %v3286, 0.0
    %v3304 = vmul.f32 %v3285, 1.442695
    %v3305 = vpow.pop %v3304
    %v3306 = vmul.f32 %v3286, 1.442695
    %v3307 = vpow.pop %v3306
    %v3308 = vsub.f32 %v3305, 1.0
    %v3309 = vsub.f32 %v3307, 1.0
    %v3310 = vmul.f32 %v3308, 1.6732632
    %v3311 = vmul.f32 %v3309, 1.6732632
    %v3312 = vsel %vm3302, %v3285, %v3310
    %v3313 = vsel %vm3303, %v3286, %v3311
    %vm3314 = vcmp.gt.f32.partialorder %v3290, 0.0
    %vm3315 = vcmp.gt.f32.partialorder %v3291, 0.0
    %v3316 = vmul.f32 %v3290, 1.442695
    %v3317 = vpow.pop %v3316
    %v3318 = vmul.f32 %v3291, 1.442695
    %v3319 = vpow.pop %v3318
    %v3320 = vsub.f32 %v3317, 1.0
    %v3321 = vsub.f32 %v3319, 1.0
    %v3322 = vmul.f32 %v3320, 1.6732632
    %v3323 = vmul.f32 %v3321, 1.6732632
    %v3324 = vsel %vm3314, %v3290, %v3322
    %v3325 = vsel %vm3315, %v3291, %v3323
    %vm3326 = vcmp.gt.f32.partialorder %v3295, 0.0
    %vm3327 = vcmp.gt.f32.partialorder %v3296, 0.0
    %v3328 = vmul.f32 %v3295, 1.442695
    %v3329 = vpow.pop %v3328
    %v3330 = vmul.f32 %v3296, 1.442695
    %v3331 = vpow.pop %v3330
    %v3332 = vsub.f32 %v3329, 1.0
    %v3333 = vsub.f32 %v3331, 1.0
    %v3334 = vmul.f32 %v3332, 1.6732632
    %v3335 = vmul.f32 %v3333, 1.6732632
    %v3336 = vsel %vm3326, %v3295, %v3334
    %v3337 = vsel %vm3327, %v3296, %v3335
    %vm3338 = vcmp.gt.f32.partialorder %v3300, 0.0
    %vm3339 = vcmp.gt.f32.partialorder %v3301, 0.0
    %v3340 = vmul.f32 %v3300, 1.442695
    %v3341 = vpow.pop %v3340
    %v3342 = vmul.f32 %v3301, 1.442695
    %v3343 = vpow.pop %v3342
    %v3344 = vsub.f32 %v3341, 1.0
    %v3345 = vsub.f32 %v3343, 1.0
    %v3346 = vmul.f32 %v3344, 1.6732632
    %v3347 = vmul.f32 %v3345, 1.6732632
    %v3348 = vsel %vm3338, %v3300, %v3346
    %v3349 = vsel %vm3339, %v3301, %v3347
    %v3352 = vrot.slane %v3312, 7
    %v3353 = vrot.slane %v3313, 7
    %v3354 = vsel %vm381, %v3352, %v3353
    %v3358 = vsel %vm381, 0.0, %v3352
    %v3359 = vsel %vm381, %v3353, 0.0
    %v3362 = vrot.slane %v3324, 7
    %v3363 = vrot.slane %v3325, 7
    %v3364 = vsel %vm381, %v3362, %v3363
    %v3368 = vsel %vm381, 0.0, %v3362
    %v3369 = vsel %vm381, %v3363, 0.0
    %v3372 = vrot.slane %v3336, 7
    %v3373 = vrot.slane %v3337, 7
    %v3374 = vsel %vm381, %v3372, %v3373
    %v3378 = vsel %vm381, 0.0, %v3372
    %v3379 = vsel %vm381, %v3373, 0.0
    %v3382 = vrot.slane %v3348, 7
    %v3383 = vrot.slane %v3349, 7
    %v3384 = vsel %vm381, %v3382, %v3383
    %v3388 = vsel %vm381, 0.0, %v3382
    %v3389 = vsel %vm381, %v3383, 0.0
    %3390 = vrot.lane.b32.xlu0 %v3358, 1
    %v3391 = vpop.permute.xlu0 %3390
    %3392 = vrot.lane.b32.xlu0 %v3354, 1
    %v3393 = vpop.permute.xlu0 %3392
    %v3394 = vsel %vm105, %v3391, 0.0
    %v3395 = vsel %vm105, %v3393, 0.0
    %s3396 = sld [smem:[#allocation9]]
    %s3397 = sld [smem:[#allocation9 + $0x24]]
    %s3398 = sld [smem:[#allocation9 + $0x48]]
    %s3399 = sld [smem:[#allocation9 + $0x6c]]
    %v3400 = vstv %s3396
    %v3401 = vmul.f32 %v3400, %v3394
    %v3402 = vmul.f32 %v3400, %v3395
    %v3403 = vstv %s3397
    %v3404 = vmul.f32 %v3403, %v3394
    %v3405 = vmul.f32 %v3403, %v3395
    %v3406 = vstv %s3398
    %v3407 = vmul.f32 %v3406, %v3394
    %v3408 = vmul.f32 %v3406, %v3395
    %v3409 = vstv %s3399
    %v3410 = vmul.f32 %v3409, %v3394
    %v3411 = vmul.f32 %v3409, %v3395
    %3412 = vrot.lane.b32.xlu0 %v3368, 1
    %v3413 = vpop.permute.xlu0 %3412
    %3414 = vrot.lane.b32.xlu0 %v3364, 1
    %v3415 = vpop.permute.xlu0 %3414
    %v3416 = vsel %vm105, %v3413, 0.0
    %v3417 = vsel %vm105, %v3415, 0.0
    %s3418 = sld [smem:[#allocation9 + $0x9]]
    %s3419 = sld [smem:[#allocation9 + $0x2d]]
    %s3420 = sld [smem:[#allocation9 + $0x51]]
    %s3421 = sld [smem:[#allocation9 + $0x75]]
    %v3422 = vstv %s3418
    %v3423 = vmul.f32 %v3422, %v3416
    %v3424 = vmul.f32 %v3422, %v3417
    %v3425 = vadd.f32 %v3401, %v3423
    %v3426 = vadd.f32 %v3402, %v3424
    %v3427 = vstv %s3419
    %v3428 = vmul.f32 %v3427, %v3416
    %v3429 = vmul.f32 %v3427, %v3417
    %v3430 = vadd.f32 %v3404, %v3428
    %v3431 = vadd.f32 %v3405, %v3429
    %v3432 = vstv %s3420
    %v3433 = vmul.f32 %v3432, %v3416
    %v3434 = vmul.f32 %v3432, %v3417
    %v3435 = vadd.f32 %v3407, %v3433
    %v3436 = vadd.f32 %v3408, %v3434
    %v3437 = vstv %s3421
    %v3438 = vmul.f32 %v3437, %v3416
    %v3439 = vmul.f32 %v3437, %v3417
    %v3440 = vadd.f32 %v3410, %v3438
    %v3441 = vadd.f32 %v3411, %v3439
    %3442 = vrot.lane.b32.xlu0 %v3378, 1
    %v3443 = vpop.permute.xlu0 %3442
    %3444 = vrot.lane.b32.xlu0 %v3374, 1
    %v3445 = vpop.permute.xlu0 %3444
    %v3446 = vsel %vm105, %v3443, 0.0
    %v3447 = vsel %vm105, %v3445, 0.0
    %s3448 = sld [smem:[#allocation9 + $0x12]]
    %s3449 = sld [smem:[#allocation9 + $0x36]]
    %s3450 = sld [smem:[#allocation9 + $0x5a]]
    %s3451 = sld [smem:[#allocation9 + $0x7e]]
    %v3452 = vstv %s3448
    %v3453 = vmul.f32 %v3452, %v3446
    %v3454 = vmul.f32 %v3452, %v3447
    %v3455 = vadd.f32 %v3425, %v3453
    %v3456 = vadd.f32 %v3426, %v3454
    %v3457 = vstv %s3449
    %v3458 = vmul.f32 %v3457, %v3446
    %v3459 = vmul.f32 %v3457, %v3447
    %v3460 = vadd.f32 %v3430, %v3458
    %v3461 = vadd.f32 %v3431, %v3459
    %v3462 = vstv %s3450
    %v3463 = vmul.f32 %v3462, %v3446
    %v3464 = vmul.f32 %v3462, %v3447
    %v3465 = vadd.f32 %v3435, %v3463
    %v3466 = vadd.f32 %v3436, %v3464
    %v3467 = vstv %s3451
    %v3468 = vmul.f32 %v3467, %v3446
    %v3469 = vmul.f32 %v3467, %v3447
    %v3470 = vadd.f32 %v3440, %v3468
    %v3471 = vadd.f32 %v3441, %v3469
    %3472 = vrot.lane.b32.xlu0 %v3388, 1
    %v3473 = vpop.permute.xlu0 %3472
    %3474 = vrot.lane.b32.xlu0 %v3384, 1
    %v3475 = vpop.permute.xlu0 %3474
    %v3476 = vsel %vm105, %v3473, 0.0
    %v3477 = vsel %vm105, %v3475, 0.0
    %s3478 = sld [smem:[#allocation9 + $0x1b]]
    %s3479 = sld [smem:[#allocation9 + $0x3f]]
    %s3480 = sld [smem:[#allocation9 + $0x63]]
    %s3481 = sld [smem:[#allocation9 + $0x87]]
    %v3482 = vstv %s3478
    %v3483 = vmul.f32 %v3482, %v3476
    %v3484 = vmul.f32 %v3482, %v3477
    %v3485 = vadd.f32 %v3455, %v3483
    %v3486 = vadd.f32 %v3456, %v3484
    %v3487 = vstv %s3479
    %v3488 = vmul.f32 %v3487, %v3476
    %v3489 = vmul.f32 %v3487, %v3477
    %v3490 = vadd.f32 %v3460, %v3488
    %v3491 = vadd.f32 %v3461, %v3489
    %v3492 = vstv %s3480
    %v3493 = vmul.f32 %v3492, %v3476
    %v3494 = vmul.f32 %v3492, %v3477
    %v3495 = vadd.f32 %v3465, %v3493
    %v3496 = vadd.f32 %v3466, %v3494
    %v3497 = vstv %s3481
    %v3498 = vmul.f32 %v3497, %v3476
    %v3499 = vmul.f32 %v3497, %v3477
    %v3500 = vadd.f32 %v3470, %v3498
    %v3501 = vadd.f32 %v3471, %v3499
    %s3502 = sld [smem:[#allocation9 + $0x1]]
    %s3503 = sld [smem:[#allocation9 + $0x25]]
    %s3504 = sld [smem:[#allocation9 + $0x49]]
    %s3505 = sld [smem:[#allocation9 + $0x6d]]
    %v3506 = vstv %s3502
    %v3507 = vmul.f32 %v3506, %v3358
    %v3508 = vmul.f32 %v3506, %v3354
    %v3509 = vadd.f32 %v3485, %v3507
    %v3510 = vadd.f32 %v3486, %v3508
    %v3511 = vstv %s3503
    %v3512 = vmul.f32 %v3511, %v3358
    %v3513 = vmul.f32 %v3511, %v3354
    %v3514 = vadd.f32 %v3490, %v3512
    %v3515 = vadd.f32 %v3491, %v3513
    %v3516 = vstv %s3504
    %v3517 = vmul.f32 %v3516, %v3358
    %v3518 = vmul.f32 %v3516, %v3354
    %v3519 = vadd.f32 %v3495, %v3517
    %v3520 = vadd.f32 %v3496, %v3518
    %v3521 = vstv %s3505
    %v3522 = vmul.f32 %v3521, %v3358
    %v3523 = vmul.f32 %v3521, %v3354
    %v3524 = vadd.f32 %v3500, %v3522
    %v3525 = vadd.f32 %v3501, %v3523
    %s3526 = sld [smem:[#allocation9 + $0xa]]
    %s3527 = sld [smem:[#allocation9 + $0x2e]]
    %s3528 = sld [smem:[#allocation9 + $0x52]]
    %s3529 = sld [smem:[#allocation9 + $0x76]]
    %v3530 = vstv %s3526
    %v3531 = vmul.f32 %v3530, %v3368
    %v3532 = vmul.f32 %v3530, %v3364
    %v3533 = vadd.f32 %v3509, %v3531
    %v3534 = vadd.f32 %v3510, %v3532
    %v3535 = vstv %s3527
    %v3536 = vmul.f32 %v3535, %v3368
    %v3537 = vmul.f32 %v3535, %v3364
    %v3538 = vadd.f32 %v3514, %v3536
    %v3539 = vadd.f32 %v3515, %v3537
    %v3540 = vstv %s3528
    %v3541 = vmul.f32 %v3540, %v3368
    %v3542 = vmul.f32 %v3540, %v3364
    %v3543 = vadd.f32 %v3519, %v3541
    %v3544 = vadd.f32 %v3520, %v3542
    %v3545 = vstv %s3529
    %v3546 = vmul.f32 %v3545, %v3368
    %v3547 = vmul.f32 %v3545, %v3364
    %v3548 = vadd.f32 %v3524, %v3546
    %v3549 = vadd.f32 %v3525, %v3547
    %s3550 = sld [smem:[#allocation9 + $0x13]]
    %s3551 = sld [smem:[#allocation9 + $0x37]]
    %s3552 = sld [smem:[#allocation9 + $0x5b]]
    %s3553 = sld [smem:[#allocation9 + $0x7f]]
    %v3554 = vstv %s3550
    %v3555 = vmul.f32 %v3554, %v3378
    %v3556 = vmul.f32 %v3554, %v3374
    %v3557 = vadd.f32 %v3533, %v3555
    %v3558 = vadd.f32 %v3534, %v3556
    %v3559 = vstv %s3551
    %v3560 = vmul.f32 %v3559, %v3378
    %v3561 = vmul.f32 %v3559, %v3374
    %v3562 = vadd.f32 %v3538, %v3560
    %v3563 = vadd.f32 %v3539, %v3561
    %v3564 = vstv %s3552
    %v3565 = vmul.f32 %v3564, %v3378
    %v3566 = vmul.f32 %v3564, %v3374
    %v3567 = vadd.f32 %v3543, %v3565
    %v3568 = vadd.f32 %v3544, %v3566
    %v3569 = vstv %s3553
    %v3570 = vmul.f32 %v3569, %v3378
    %v3571 = vmul.f32 %v3569, %v3374
    %v3572 = vadd.f32 %v3548, %v3570
    %v3573 = vadd.f32 %v3549, %v3571
    %s3574 = sld [smem:[#allocation9 + $0x1c]]
    %s3575 = sld [smem:[#allocation9 + $0x40]]
    %s3576 = sld [smem:[#allocation9 + $0x64]]
    %s3577 = sld [smem:[#allocation9 + $0x88]]
    %v3578 = vstv %s3574
    %v3579 = vmul.f32 %v3578, %v3388
    %v3580 = vmul.f32 %v3578, %v3384
    %v3581 = vadd.f32 %v3557, %v3579
    %v3582 = vadd.f32 %v3558, %v3580
    %v3583 = vstv %s3575
    %v3584 = vmul.f32 %v3583, %v3388
    %v3585 = vmul.f32 %v3583, %v3384
    %v3586 = vadd.f32 %v3562, %v3584
    %v3587 = vadd.f32 %v3563, %v3585
    %v3588 = vstv %s3576
    %v3589 = vmul.f32 %v3588, %v3388
    %v3590 = vmul.f32 %v3588, %v3384
    %v3591 = vadd.f32 %v3567, %v3589
    %v3592 = vadd.f32 %v3568, %v3590
    %v3593 = vstv %s3577
    %v3594 = vmul.f32 %v3593, %v3388
    %v3595 = vmul.f32 %v3593, %v3384
    %v3596 = vadd.f32 %v3572, %v3594
    %v3597 = vadd.f32 %v3573, %v3595
    %3598 = vrot.lane.b32.xlu0 %v3358, 127
    %v3599 = vpop.permute.xlu0 %3598
    %3600 = vrot.lane.b32.xlu0 %v3354, 127
    %v3601 = vpop.permute.xlu0 %3600
    %v3602 = vsel %vm106, %v3599, 0.0
    %v3603 = vsel %vm106, %v3601, 0.0
    %s3604 = sld [smem:[#allocation9 + $0x2]]
    %s3605 = sld [smem:[#allocation9 + $0x26]]
    %s3606 = sld [smem:[#allocation9 + $0x4a]]
    %s3607 = sld [smem:[#allocation9 + $0x6e]]
    %v3608 = vstv %s3604
    %v3609 = vmul.f32 %v3608, %v3602
    %v3610 = vmul.f32 %v3608, %v3603
    %v3611 = vadd.f32 %v3581, %v3609
    %v3612 = vadd.f32 %v3582, %v3610
    %v3613 = vstv %s3605
    %v3614 = vmul.f32 %v3613, %v3602
    %v3615 = vmul.f32 %v3613, %v3603
    %v3616 = vadd.f32 %v3586, %v3614
    %v3617 = vadd.f32 %v3587, %v3615
    %v3618 = vstv %s3606
    %v3619 = vmul.f32 %v3618, %v3602
    %v3620 = vmul.f32 %v3618, %v3603
    %v3621 = vadd.f32 %v3591, %v3619
    %v3622 = vadd.f32 %v3592, %v3620
    %v3623 = vstv %s3607
    %v3624 = vmul.f32 %v3623, %v3602
    %v3625 = vmul.f32 %v3623, %v3603
    %v3626 = vadd.f32 %v3596, %v3624
    %v3627 = vadd.f32 %v3597, %v3625
    %3628 = vrot.lane.b32.xlu0 %v3368, 127
    %v3629 = vpop.permute.xlu0 %3628
    %3630 = vrot.lane.b32.xlu0 %v3364, 127
    %v3631 = vpop.permute.xlu0 %3630
    %v3632 = vsel %vm106, %v3629, 0.0
    %v3633 = vsel %vm106, %v3631, 0.0
    %s3634 = sld [smem:[#allocation9 + $0xb]]
    %s3635 = sld [smem:[#allocation9 + $0x2f]]
    %s3636 = sld [smem:[#allocation9 + $0x53]]
    %s3637 = sld [smem:[#allocation9 + $0x77]]
    %v3638 = vstv %s3634
    %v3639 = vmul.f32 %v3638, %v3632
    %v3640 = vmul.f32 %v3638, %v3633
    %v3641 = vadd.f32 %v3611, %v3639
    %v3642 = vadd.f32 %v3612, %v3640
    %v3643 = vstv %s3635
    %v3644 = vmul.f32 %v3643, %v3632
    %v3645 = vmul.f32 %v3643, %v3633
    %v3646 = vadd.f32 %v3616, %v3644
    %v3647 = vadd.f32 %v3617, %v3645
    %v3648 = vstv %s3636
    %v3649 = vmul.f32 %v3648, %v3632
    %v3650 = vmul.f32 %v3648, %v3633
    %v3651 = vadd.f32 %v3621, %v3649
    %v3652 = vadd.f32 %v3622, %v3650
    %v3653 = vstv %s3637
    %v3654 = vmul.f32 %v3653, %v3632
    %v3655 = vmul.f32 %v3653, %v3633
    %v3656 = vadd.f32 %v3626, %v3654
    %v3657 = vadd.f32 %v3627, %v3655
    %3658 = vrot.lane.b32.xlu0 %v3378, 127
    %v3659 = vpop.permute.xlu0 %3658
    %3660 = vrot.lane.b32.xlu0 %v3374, 127
    %v3661 = vpop.permute.xlu0 %3660
    %v3662 = vsel %vm106, %v3659, 0.0
    %v3663 = vsel %vm106, %v3661, 0.0
    %s3664 = sld [smem:[#allocation9 + $0x14]]
    %s3665 = sld [smem:[#allocation9 + $0x38]]
    %s3666 = sld [smem:[#allocation9 + $0x5c]]
    %s3667 = sld [smem:[#allocation9 + $0x80]]
    %v3668 = vstv %s3664
    %v3669 = vmul.f32 %v3668, %v3662
    %v3670 = vmul.f32 %v3668, %v3663
    %v3671 = vadd.f32 %v3641, %v3669
    %v3672 = vadd.f32 %v3642, %v3670
    %v3673 = vstv %s3665
    %v3674 = vmul.f32 %v3673, %v3662
    %v3675 = vmul.f32 %v3673, %v3663
    %v3676 = vadd.f32 %v3646, %v3674
    %v3677 = vadd.f32 %v3647, %v3675
    %v3678 = vstv %s3666
    %v3679 = vmul.f32 %v3678, %v3662
    %v3680 = vmul.f32 %v3678, %v3663
    %v3681 = vadd.f32 %v3651, %v3679
    %v3682 = vadd.f32 %v3652, %v3680
    %v3683 = vstv %s3667
    %v3684 = vmul.f32 %v3683, %v3662
    %v3685 = vmul.f32 %v3683, %v3663
    %v3686 = vadd.f32 %v3656, %v3684
    %v3687 = vadd.f32 %v3657, %v3685
    %3688 = vrot.lane.b32.xlu0 %v3388, 127
    %v3689 = vpop.permute.xlu0 %3688
    %3690 = vrot.lane.b32.xlu0 %v3384, 127
    %v3691 = vpop.permute.xlu0 %3690
    %v3692 = vsel %vm106, %v3689, 0.0
    %v3693 = vsel %vm106, %v3691, 0.0
    %s3694 = sld [smem:[#allocation9 + $0x1d]]
    %s3695 = sld [smem:[#allocation9 + $0x41]]
    %s3696 = sld [smem:[#allocation9 + $0x65]]
    %s3697 = sld [smem:[#allocation9 + $0x89]]
    %v3698 = vstv %s3694
    %v3699 = vmul.f32 %v3698, %v3692
    %v3700 = vmul.f32 %v3698, %v3693
    %v3701 = vadd.f32 %v3671, %v3699
    %v3702 = vadd.f32 %v3672, %v3700
    %v3703 = vstv %s3695
    %v3704 = vmul.f32 %v3703, %v3692
    %v3705 = vmul.f32 %v3703, %v3693
    %v3706 = vadd.f32 %v3676, %v3704
    %v3707 = vadd.f32 %v3677, %v3705
    %v3708 = vstv %s3696
    %v3709 = vmul.f32 %v3708, %v3692
    %v3710 = vmul.f32 %v3708, %v3693
    %v3711 = vadd.f32 %v3681, %v3709
    %v3712 = vadd.f32 %v3682, %v3710
    %v3713 = vstv %s3697
    %v3714 = vmul.f32 %v3713, %v3692
    %v3715 = vmul.f32 %v3713, %v3693
    %v3716 = vadd.f32 %v3686, %v3714
    %v3717 = vadd.f32 %v3687, %v3715
    %v3720 = vrot.slane %v3358, 1
    %v3721 = vrot.slane %v3354, 1
    %v3722 = vsel %vm1126, %v3720, %v3721
    %v3723 = vrot.slane %v3359, 1
    %v3724 = vsel %vm1126, %v3721, %v3723
    %3727 = vrot.lane.b32.xlu0 %v3722, 1
    %v3728 = vpop.permute.xlu0 %3727
    %3729 = vrot.lane.b32.xlu0 %v3724, 1
    %v3730 = vpop.permute.xlu0 %3729
    %v3731 = vsel %vm105, %v3728, 0.0
    %v3732 = vsel %vm105, %v3730, 0.0
    %s3733 = sld [smem:[#allocation9 + $0x3]]
    %s3734 = sld [smem:[#allocation9 + $0x27]]
    %s3735 = sld [smem:[#allocation9 + $0x4b]]
    %s3736 = sld [smem:[#allocation9 + $0x6f]]
    %v3737 = vstv %s3733
    %v3738 = vmul.f32 %v3737, %v3731
    %v3739 = vmul.f32 %v3737, %v3732
    %v3740 = vadd.f32 %v3701, %v3738
    %v3741 = vadd.f32 %v3702, %v3739
    %v3742 = vstv %s3734
    %v3743 = vmul.f32 %v3742, %v3731
    %v3744 = vmul.f32 %v3742, %v3732
    %v3745 = vadd.f32 %v3706, %v3743
    %v3746 = vadd.f32 %v3707, %v3744
    %v3747 = vstv %s3735
    %v3748 = vmul.f32 %v3747, %v3731
    %v3749 = vmul.f32 %v3747, %v3732
    %v3750 = vadd.f32 %v3711, %v3748
    %v3751 = vadd.f32 %v3712, %v3749
    %v3752 = vstv %s3736
    %v3753 = vmul.f32 %v3752, %v3731
    %v3754 = vmul.f32 %v3752, %v3732
    %v3755 = vadd.f32 %v3716, %v3753
    %v3756 = vadd.f32 %v3717, %v3754
    %v3759 = vrot.slane %v3368, 1
    %v3760 = vrot.slane %v3364, 1
    %v3761 = vsel %vm1126, %v3759, %v3760
    %v3762 = vrot.slane %v3369, 1
    %v3763 = vsel %vm1126, %v3760, %v3762
    %3766 = vrot.lane.b32.xlu0 %v3761, 1
    %v3767 = vpop.permute.xlu0 %3766
    %3768 = vrot.lane.b32.xlu0 %v3763, 1
    %v3769 = vpop.permute.xlu0 %3768
    %v3770 = vsel %vm105, %v3767, 0.0
    %v3771 = vsel %vm105, %v3769, 0.0
    %s3772 = sld [smem:[#allocation9 + $0xc]]
    %s3773 = sld [smem:[#allocation9 + $0x30]]
    %s3774 = sld [smem:[#allocation9 + $0x54]]
    %s3775 = sld [smem:[#allocation9 + $0x78]]
    %v3776 = vstv %s3772
    %v3777 = vmul.f32 %v3776, %v3770
    %v3778 = vmul.f32 %v3776, %v3771
    %v3779 = vadd.f32 %v3740, %v3777
    %v3780 = vadd.f32 %v3741, %v3778
    %v3781 = vstv %s3773
    %v3782 = vmul.f32 %v3781, %v3770
    %v3783 = vmul.f32 %v3781, %v3771
    %v3784 = vadd.f32 %v3745, %v3782
    %v3785 = vadd.f32 %v3746, %v3783
    %v3786 = vstv %s3774
    %v3787 = vmul.f32 %v3786, %v3770
    %v3788 = vmul.f32 %v3786, %v3771
    %v3789 = vadd.f32 %v3750, %v3787
    %v3790 = vadd.f32 %v3751, %v3788
    %v3791 = vstv %s3775
    %v3792 = vmul.f32 %v3791, %v3770
    %v3793 = vmul.f32 %v3791, %v3771
    %v3794 = vadd.f32 %v3755, %v3792
    %v3795 = vadd.f32 %v3756, %v3793
    %v3798 = vrot.slane %v3378, 1
    %v3799 = vrot.slane %v3374, 1
    %v3800 = vsel %vm1126, %v3798, %v3799
    %v3801 = vrot.slane %v3379, 1
    %v3802 = vsel %vm1126, %v3799, %v3801
    %3805 = vrot.lane.b32.xlu0 %v3800, 1
    %v3806 = vpop.permute.xlu0 %3805
    %3807 = vrot.lane.b32.xlu0 %v3802, 1
    %v3808 = vpop.permute.xlu0 %3807
    %v3809 = vsel %vm105, %v3806, 0.0
    %v3810 = vsel %vm105, %v3808, 0.0
    %s3811 = sld [smem:[#allocation9 + $0x15]]
    %s3812 = sld [smem:[#allocation9 + $0x39]]
    %s3813 = sld [smem:[#allocation9 + $0x5d]]
    %s3814 = sld [smem:[#allocation9 + $0x81]]
    %v3815 = vstv %s3811
    %v3816 = vmul.f32 %v3815, %v3809
    %v3817 = vmul.f32 %v3815, %v3810
    %v3818 = vadd.f32 %v3779, %v3816
    %v3819 = vadd.f32 %v3780, %v3817
    %v3820 = vstv %s3812
    %v3821 = vmul.f32 %v3820, %v3809
    %v3822 = vmul.f32 %v3820, %v3810
    %v3823 = vadd.f32 %v3784, %v3821
    %v3824 = vadd.f32 %v3785, %v3822
    %v3825 = vstv %s3813
    %v3826 = vmul.f32 %v3825, %v3809
    %v3827 = vmul.f32 %v3825, %v3810
    %v3828 = vadd.f32 %v3789, %v3826
    %v3829 = vadd.f32 %v3790, %v3827
    %v3830 = vstv %s3814
    %v3831 = vmul.f32 %v3830, %v3809
    %v3832 = vmul.f32 %v3830, %v3810
    %v3833 = vadd.f32 %v3794, %v3831
    %v3834 = vadd.f32 %v3795, %v3832
    %v3837 = vrot.slane %v3388, 1
    %v3838 = vrot.slane %v3384, 1
    %v3839 = vsel %vm1126, %v3837, %v3838
    %v3840 = vrot.slane %v3389, 1
    %v3841 = vsel %vm1126, %v3838, %v3840
    %3844 = vrot.lane.b32.xlu0 %v3839, 1
    %v3845 = vpop.permute.xlu0 %3844
    %3846 = vrot.lane.b32.xlu0 %v3841, 1
    %v3847 = vpop.permute.xlu0 %3846
    %v3848 = vsel %vm105, %v3845, 0.0
    %v3849 = vsel %vm105, %v3847, 0.0
    %s3850 = sld [smem:[#allocation9 + $0x1e]]
    %s3851 = sld [smem:[#allocation9 + $0x42]]
    %s3852 = sld [smem:[#allocation9 + $0x66]]
    %s3853 = sld [smem:[#allocation9 + $0x8a]]
    %v3854 = vstv %s3850
    %v3855 = vmul.f32 %v3854, %v3848
    %v3856 = vmul.f32 %v3854, %v3849
    %v3857 = vadd.f32 %v3818, %v3855
    %v3858 = vadd.f32 %v3819, %v3856
    %v3859 = vstv %s3851
    %v3860 = vmul.f32 %v3859, %v3848
    %v3861 = vmul.f32 %v3859, %v3849
    %v3862 = vadd.f32 %v3823, %v3860
    %v3863 = vadd.f32 %v3824, %v3861
    %v3864 = vstv %s3852
    %v3865 = vmul.f32 %v3864, %v3848
    %v3866 = vmul.f32 %v3864, %v3849
    %v3867 = vadd.f32 %v3828, %v3865
    %v3868 = vadd.f32 %v3829, %v3866
    %v3869 = vstv %s3853
    %v3870 = vmul.f32 %v3869, %v3848
    %v3871 = vmul.f32 %v3869, %v3849
    %v3872 = vadd.f32 %v3833, %v3870
    %v3873 = vadd.f32 %v3834, %v3871
    %s3874 = sld [smem:[#allocation9 + $0x4]]
    %s3875 = sld [smem:[#allocation9 + $0x28]]
    %s3876 = sld [smem:[#allocation9 + $0x4c]]
    %s3877 = sld [smem:[#allocation9 + $0x70]]
    %v3878 = vstv %s3874
    %v3879 = vmul.f32 %v3878, %v3358
    %v3880 = vmul.f32 %v3878, %v3354
    %v3881 = vmul.f32 %v3878, %v3359
    %v3885 = vrot.slane %v3879, 1
    %v3886 = vrot.slane %v3880, 1
    %v3887 = vsel %vm1126, %v3885, %v3886
    %v3888 = vrot.slane %v3881, 1
    %v3889 = vsel %vm1126, %v3886, %v3888
    %v3892 = vadd.f32 %v3857, %v3887
    %v3893 = vadd.f32 %v3858, %v3889
    %v3894 = vstv %s3875
    %v3895 = vmul.f32 %v3894, %v3358
    %v3896 = vmul.f32 %v3894, %v3354
    %v3897 = vmul.f32 %v3894, %v3359
    %v3901 = vrot.slane %v3895, 1
    %v3902 = vrot.slane %v3896, 1
    %v3903 = vsel %vm1126, %v3901, %v3902
    %v3904 = vrot.slane %v3897, 1
    %v3905 = vsel %vm1126, %v3902, %v3904
    %v3908 = vadd.f32 %v3862, %v3903
    %v3909 = vadd.f32 %v3863, %v3905
    %v3910 = vstv %s3876
    %v3911 = vmul.f32 %v3910, %v3358
    %v3912 = vmul.f32 %v3910, %v3354
    %v3913 = vmul.f32 %v3910, %v3359
    %v3917 = vrot.slane %v3911, 1
    %v3918 = vrot.slane %v3912, 1
    %v3919 = vsel %vm1126, %v3917, %v3918
    %v3920 = vrot.slane %v3913, 1
    %v3921 = vsel %vm1126, %v3918, %v3920
    %v3924 = vadd.f32 %v3867, %v3919
    %v3925 = vadd.f32 %v3868, %v3921
    %v3926 = vstv %s3877
    %v3927 = vmul.f32 %v3926, %v3358
    %v3928 = vmul.f32 %v3926, %v3354
    %v3929 = vmul.f32 %v3926, %v3359
    %v3933 = vrot.slane %v3927, 1
    %v3934 = vrot.slane %v3928, 1
    %v3935 = vsel %vm1126, %v3933, %v3934
    %v3936 = vrot.slane %v3929, 1
    %v3937 = vsel %vm1126, %v3934, %v3936
    %v3940 = vadd.f32 %v3872, %v3935
    %v3941 = vadd.f32 %v3873, %v3937
    %s3942 = sld [smem:[#allocation9 + $0xd]]
    %s3943 = sld [smem:[#allocation9 + $0x31]]
    %s3944 = sld [smem:[#allocation9 + $0x55]]
    %s3945 = sld [smem:[#allocation9 + $0x79]]
    %v3946 = vstv %s3942
    %v3947 = vmul.f32 %v3946, %v3368
    %v3948 = vmul.f32 %v3946, %v3364
    %v3949 = vmul.f32 %v3946, %v3369
    %v3953 = vrot.slane %v3947, 1
    %v3954 = vrot.slane %v3948, 1
    %v3955 = vsel %vm1126, %v3953, %v3954
    %v3956 = vrot.slane %v3949, 1
    %v3957 = vsel %vm1126, %v3954, %v3956
    %v3960 = vadd.f32 %v3892, %v3955
    %v3961 = vadd.f32 %v3893, %v3957
    %v3962 = vstv %s3943
    %v3963 = vmul.f32 %v3962, %v3368
    %v3964 = vmul.f32 %v3962, %v3364
    %v3965 = vmul.f32 %v3962, %v3369
    %v3969 = vrot.slane %v3963, 1
    %v3970 = vrot.slane %v3964, 1
    %v3971 = vsel %vm1126, %v3969, %v3970
    %v3972 = vrot.slane %v3965, 1
    %v3973 = vsel %vm1126, %v3970, %v3972
    %v3976 = vadd.f32 %v3908, %v3971
    %v3977 = vadd.f32 %v3909, %v3973
    %v3978 = vstv %s3944
    %v3979 = vmul.f32 %v3978, %v3368
    %v3980 = vmul.f32 %v3978, %v3364
    %v3981 = vmul.f32 %v3978, %v3369
    %v3985 = vrot.slane %v3979, 1
    %v3986 = vrot.slane %v3980, 1
    %v3987 = vsel %vm1126, %v3985, %v3986
    %v3988 = vrot.slane %v3981, 1
    %v3989 = vsel %vm1126, %v3986, %v3988
    %v3992 = vadd.f32 %v3924, %v3987
    %v3993 = vadd.f32 %v3925, %v3989
    %v3994 = vstv %s3945
    %v3995 = vmul.f32 %v3994, %v3368
    %v3996 = vmul.f32 %v3994, %v3364
    %v3997 = vmul.f32 %v3994, %v3369
    %v4001 = vrot.slane %v3995, 1
    %v4002 = vrot.slane %v3996, 1
    %v4003 = vsel %vm1126, %v4001, %v4002
    %v4004 = vrot.slane %v3997, 1
    %v4005 = vsel %vm1126, %v4002, %v4004
    %v4008 = vadd.f32 %v3940, %v4003
    %v4009 = vadd.f32 %v3941, %v4005
    %s4010 = sld [smem:[#allocation9 + $0x16]]
    %s4011 = sld [smem:[#allocation9 + $0x3a]]
    %s4012 = sld [smem:[#allocation9 + $0x5e]]
    %s4013 = sld [smem:[#allocation9 + $0x82]]
    %v4014 = vstv %s4010
    %v4015 = vmul.f32 %v4014, %v3378
    %v4016 = vmul.f32 %v4014, %v3374
    %v4017 = vmul.f32 %v4014, %v3379
    %v4021 = vrot.slane %v4015, 1
    %v4022 = vrot.slane %v4016, 1
    %v4023 = vsel %vm1126, %v4021, %v4022
    %v4024 = vrot.slane %v4017, 1
    %v4025 = vsel %vm1126, %v4022, %v4024
    %v4028 = vadd.f32 %v3960, %v4023
    %v4029 = vadd.f32 %v3961, %v4025
    %v4030 = vstv %s4011
    %v4031 = vmul.f32 %v4030, %v3378
    %v4032 = vmul.f32 %v4030, %v3374
    %v4033 = vmul.f32 %v4030, %v3379
    %v4037 = vrot.slane %v4031, 1
    %v4038 = vrot.slane %v4032, 1
    %v4039 = vsel %vm1126, %v4037, %v4038
    %v4040 = vrot.slane %v4033, 1
    %v4041 = vsel %vm1126, %v4038, %v4040
    %v4044 = vadd.f32 %v3976, %v4039
    %v4045 = vadd.f32 %v3977, %v4041
    %v4046 = vstv %s4012
    %v4047 = vmul.f32 %v4046, %v3378
    %v4048 = vmul.f32 %v4046, %v3374
    %v4049 = vmul.f32 %v4046, %v3379
    %v4053 = vrot.slane %v4047, 1
    %v4054 = vrot.slane %v4048, 1
    %v4055 = vsel %vm1126, %v4053, %v4054
    %v4056 = vrot.slane %v4049, 1
    %v4057 = vsel %vm1126, %v4054, %v4056
    %v4060 = vadd.f32 %v3992, %v4055
    %v4061 = vadd.f32 %v3993, %v4057
    %v4062 = vstv %s4013
    %v4063 = vmul.f32 %v4062, %v3378
    %v4064 = vmul.f32 %v4062, %v3374
    %v4065 = vmul.f32 %v4062, %v3379
    %v4069 = vrot.slane %v4063, 1
    %v4070 = vrot.slane %v4064, 1
    %v4071 = vsel %vm1126, %v4069, %v4070
    %v4072 = vrot.slane %v4065, 1
    %v4073 = vsel %vm1126, %v4070, %v4072
    %v4076 = vadd.f32 %v4008, %v4071
    %v4077 = vadd.f32 %v4009, %v4073
    %s4078 = sld [smem:[#allocation9 + $0x1f]]
    %s4079 = sld [smem:[#allocation9 + $0x43]]
    %s4080 = sld [smem:[#allocation9 + $0x67]]
    %s4081 = sld [smem:[#allocation9 + $0x8b]]
    %v4082 = vstv %s4078
    %v4083 = vmul.f32 %v4082, %v3388
    %v4084 = vmul.f32 %v4082, %v3384
    %v4085 = vmul.f32 %v4082, %v3389
    %v4089 = vrot.slane %v4083, 1
    %v4090 = vrot.slane %v4084, 1
    %v4091 = vsel %vm1126, %v4089, %v4090
    %v4092 = vrot.slane %v4085, 1
    %v4093 = vsel %vm1126, %v4090, %v4092
    %v4096 = vadd.f32 %v4028, %v4091
    %v4097 = vadd.f32 %v4029, %v4093
    %v4098 = vstv %s4079
    %v4099 = vmul.f32 %v4098, %v3388
    %v4100 = vmul.f32 %v4098, %v3384
    %v4101 = vmul.f32 %v4098, %v3389
    %v4105 = vrot.slane %v4099, 1
    %v4106 = vrot.slane %v4100, 1
    %v4107 = vsel %vm1126, %v4105, %v4106
    %v4108 = vrot.slane %v4101, 1
    %v4109 = vsel %vm1126, %v4106, %v4108
    %v4112 = vadd.f32 %v4044, %v4107
    %v4113 = vadd.f32 %v4045, %v4109
    %v4114 = vstv %s4080
    %v4115 = vmul.f32 %v4114, %v3388
    %v4116 = vmul.f32 %v4114, %v3384
    %v4117 = vmul.f32 %v4114, %v3389
    %v4121 = vrot.slane %v4115, 1
    %v4122 = vrot.slane %v4116, 1
    %v4123 = vsel %vm1126, %v4121, %v4122
    %v4124 = vrot.slane %v4117, 1
    %v4125 = vsel %vm1126, %v4122, %v4124
    %v4128 = vadd.f32 %v4060, %v4123
    %v4129 = vadd.f32 %v4061, %v4125
    %v4130 = vstv %s4081
    %v4131 = vmul.f32 %v4130, %v3388
    %v4132 = vmul.f32 %v4130, %v3384
    %v4133 = vmul.f32 %v4130, %v3389
    %v4137 = vrot.slane %v4131, 1
    %v4138 = vrot.slane %v4132, 1
    %v4139 = vsel %vm1126, %v4137, %v4138
    %v4140 = vrot.slane %v4133, 1
    %v4141 = vsel %vm1126, %v4138, %v4140
    %v4144 = vadd.f32 %v4076, %v4139
    %v4145 = vadd.f32 %v4077, %v4141
    %4146 = vrot.lane.b32.xlu0 %v3722, 127
    %v4147 = vpop.permute.xlu0 %4146
    %4148 = vrot.lane.b32.xlu0 %v3724, 127
    %v4149 = vpop.permute.xlu0 %4148
    %v4150 = vsel %vm106, %v4147, 0.0
    %v4151 = vsel %vm106, %v4149, 0.0
    %s4152 = sld [smem:[#allocation9 + $0x5]]
    %s4153 = sld [smem:[#allocation9 + $0x29]]
    %s4154 = sld [smem:[#allocation9 + $0x4d]]
    %s4155 = sld [smem:[#allocation9 + $0x71]]
    %v4156 = vstv %s4152
    %v4157 = vmul.f32 %v4156, %v4150
    %v4158 = vmul.f32 %v4156, %v4151
    %v4159 = vadd.f32 %v4096, %v4157
    %v4160 = vadd.f32 %v4097, %v4158
    %v4161 = vstv %s4153
    %v4162 = vmul.f32 %v4161, %v4150
    %v4163 = vmul.f32 %v4161, %v4151
    %v4164 = vadd.f32 %v4112, %v4162
    %v4165 = vadd.f32 %v4113, %v4163
    %v4166 = vstv %s4154
    %v4167 = vmul.f32 %v4166, %v4150
    %v4168 = vmul.f32 %v4166, %v4151
    %v4169 = vadd.f32 %v4128, %v4167
    %v4170 = vadd.f32 %v4129, %v4168
    %v4171 = vstv %s4155
    %v4172 = vmul.f32 %v4171, %v4150
    %v4173 = vmul.f32 %v4171, %v4151
    %v4174 = vadd.f32 %v4144, %v4172
    %v4175 = vadd.f32 %v4145, %v4173
    %4176 = vrot.lane.b32.xlu0 %v3761, 127
    %v4177 = vpop.permute.xlu0 %4176
    %4178 = vrot.lane.b32.xlu0 %v3763, 127
    %v4179 = vpop.permute.xlu0 %4178
    %v4180 = vsel %vm106, %v4177, 0.0
    %v4181 = vsel %vm106, %v4179, 0.0
    %s4182 = sld [smem:[#allocation9 + $0xe]]
    %s4183 = sld [smem:[#allocation9 + $0x32]]
    %s4184 = sld [smem:[#allocation9 + $0x56]]
    %s4185 = sld [smem:[#allocation9 + $0x7a]]
    %v4186 = vstv %s4182
    %v4187 = vmul.f32 %v4186, %v4180
    %v4188 = vmul.f32 %v4186, %v4181
    %v4189 = vadd.f32 %v4159, %v4187
    %v4190 = vadd.f32 %v4160, %v4188
    %v4191 = vstv %s4183
    %v4192 = vmul.f32 %v4191, %v4180
    %v4193 = vmul.f32 %v4191, %v4181
    %v4194 = vadd.f32 %v4164, %v4192
    %v4195 = vadd.f32 %v4165, %v4193
    %v4196 = vstv %s4184
    %v4197 = vmul.f32 %v4196, %v4180
    %v4198 = vmul.f32 %v4196, %v4181
    %v4199 = vadd.f32 %v4169, %v4197
    %v4200 = vadd.f32 %v4170, %v4198
    %v4201 = vstv %s4185
    %v4202 = vmul.f32 %v4201, %v4180
    %v4203 = vmul.f32 %v4201, %v4181
    %v4204 = vadd.f32 %v4174, %v4202
    %v4205 = vadd.f32 %v4175, %v4203
    %4206 = vrot.lane.b32.xlu0 %v3800, 127
    %v4207 = vpop.permute.xlu0 %4206
    %4208 = vrot.lane.b32.xlu0 %v3802, 127
    %v4209 = vpop.permute.xlu0 %4208
    %v4210 = vsel %vm106, %v4207, 0.0
    %v4211 = vsel %vm106, %v4209, 0.0
    %s4212 = sld [smem:[#allocation9 + $0x17]]
    %s4213 = sld [smem:[#allocation9 + $0x3b]]
    %s4214 = sld [smem:[#allocation9 + $0x5f]]
    %s4215 = sld [smem:[#allocation9 + $0x83]]
    %v4216 = vstv %s4212
    %v4217 = vmul.f32 %v4216, %v4210
    %v4218 = vmul.f32 %v4216, %v4211
    %v4219 = vadd.f32 %v4189, %v4217
    %v4220 = vadd.f32 %v4190, %v4218
    %v4221 = vstv %s4213
    %v4222 = vmul.f32 %v4221, %v4210
    %v4223 = vmul.f32 %v4221, %v4211
    %v4224 = vadd.f32 %v4194, %v4222
    %v4225 = vadd.f32 %v4195, %v4223
    %v4226 = vstv %s4214
    %v4227 = vmul.f32 %v4226, %v4210
    %v4228 = vmul.f32 %v4226, %v4211
    %v4229 = vadd.f32 %v4199, %v4227
    %v4230 = vadd.f32 %v4200, %v4228
    %v4231 = vstv %s4215
    %v4232 = vmul.f32 %v4231, %v4210
    %v4233 = vmul.f32 %v4231, %v4211
    %v4234 = vadd.f32 %v4204, %v4232
    %v4235 = vadd.f32 %v4205, %v4233
    %4236 = vrot.lane.b32.xlu0 %v3839, 127
    %v4237 = vpop.permute.xlu0 %4236
    %4238 = vrot.lane.b32.xlu0 %v3841, 127
    %v4239 = vpop.permute.xlu0 %4238
    %v4240 = vsel %vm106, %v4237, 0.0
    %v4241 = vsel %vm106, %v4239, 0.0
    %s4242 = sld [smem:[#allocation9 + $0x20]]
    %s4243 = sld [smem:[#allocation9 + $0x44]]
    %s4244 = sld [smem:[#allocation9 + $0x68]]
    %s4245 = sld [smem:[#allocation9 + $0x8c]]
    %v4246 = vstv %s4242
    %v4247 = vmul.f32 %v4246, %v4240
    %v4248 = vmul.f32 %v4246, %v4241
    %v4249 = vadd.f32 %v4219, %v4247
    %v4250 = vadd.f32 %v4220, %v4248
    %v4251 = vstv %s4243
    %v4252 = vmul.f32 %v4251, %v4240
    %v4253 = vmul.f32 %v4251, %v4241
    %v4254 = vadd.f32 %v4224, %v4252
    %v4255 = vadd.f32 %v4225, %v4253
    %v4256 = vstv %s4244
    %v4257 = vmul.f32 %v4256, %v4240
    %v4258 = vmul.f32 %v4256, %v4241
    %v4259 = vadd.f32 %v4229, %v4257
    %v4260 = vadd.f32 %v4230, %v4258
    %v4261 = vstv %s4245
    %v4262 = vmul.f32 %v4261, %v4240
    %v4263 = vmul.f32 %v4261, %v4241
    %v4264 = vadd.f32 %v4234, %v4262
    %v4265 = vadd.f32 %v4235, %v4263
    %v4266 = vrot.slane %v3358, 2
    %v4267 = vrot.slane %v3354, 2
    %v4268 = vsel %vm2221, %v4266, %v4267
    %v4269 = vrot.slane %v3359, 2
    %v4270 = vsel %vm2221, %v4267, %v4269
    %4273 = vrot.lane.b32.xlu0 %v4268, 1
    %v4274 = vpop.permute.xlu0 %4273
    %4275 = vrot.lane.b32.xlu0 %v4270, 1
    %v4276 = vpop.permute.xlu0 %4275
    %v4277 = vsel %vm105, %v4274, 0.0
    %v4278 = vsel %vm105, %v4276, 0.0
    %s4279 = sld [smem:[#allocation9 + $0x6]]
    %s4280 = sld [smem:[#allocation9 + $0x2a]]
    %s4281 = sld [smem:[#allocation9 + $0x4e]]
    %s4282 = sld [smem:[#allocation9 + $0x72]]
    %v4283 = vstv %s4279
    %v4284 = vmul.f32 %v4283, %v4277
    %v4285 = vmul.f32 %v4283, %v4278
    %v4286 = vadd.f32 %v4249, %v4284
    %v4287 = vadd.f32 %v4250, %v4285
    %v4288 = vstv %s4280
    %v4289 = vmul.f32 %v4288, %v4277
    %v4290 = vmul.f32 %v4288, %v4278
    %v4291 = vadd.f32 %v4254, %v4289
    %v4292 = vadd.f32 %v4255, %v4290
    %v4293 = vstv %s4281
    %v4294 = vmul.f32 %v4293, %v4277
    %v4295 = vmul.f32 %v4293, %v4278
    %v4296 = vadd.f32 %v4259, %v4294
    %v4297 = vadd.f32 %v4260, %v4295
    %v4298 = vstv %s4282
    %v4299 = vmul.f32 %v4298, %v4277
    %v4300 = vmul.f32 %v4298, %v4278
    %v4301 = vadd.f32 %v4264, %v4299
    %v4302 = vadd.f32 %v4265, %v4300
    %v4303 = vrot.slane %v3368, 2
    %v4304 = vrot.slane %v3364, 2
    %v4305 = vsel %vm2221, %v4303, %v4304
    %v4306 = vrot.slane %v3369, 2
    %v4307 = vsel %vm2221, %v4304, %v4306
    %4310 = vrot.lane.b32.xlu0 %v4305, 1
    %v4311 = vpop.permute.xlu0 %4310
    %4312 = vrot.lane.b32.xlu0 %v4307, 1
    %v4313 = vpop.permute.xlu0 %4312
    %v4314 = vsel %vm105, %v4311, 0.0
    %v4315 = vsel %vm105, %v4313, 0.0
    %s4316 = sld [smem:[#allocation9 + $0xf]]
    %s4317 = sld [smem:[#allocation9 + $0x33]]
    %s4318 = sld [smem:[#allocation9 + $0x57]]
    %s4319 = sld [smem:[#allocation9 + $0x7b]]
    %v4320 = vstv %s4316
    %v4321 = vmul.f32 %v4320, %v4314
    %v4322 = vmul.f32 %v4320, %v4315
    %v4323 = vadd.f32 %v4286, %v4321
    %v4324 = vadd.f32 %v4287, %v4322
    %v4325 = vstv %s4317
    %v4326 = vmul.f32 %v4325, %v4314
    %v4327 = vmul.f32 %v4325, %v4315
    %v4328 = vadd.f32 %v4291, %v4326
    %v4329 = vadd.f32 %v4292, %v4327
    %v4330 = vstv %s4318
    %v4331 = vmul.f32 %v4330, %v4314
    %v4332 = vmul.f32 %v4330, %v4315
    %v4333 = vadd.f32 %v4296, %v4331
    %v4334 = vadd.f32 %v4297, %v4332
    %v4335 = vstv %s4319
    %v4336 = vmul.f32 %v4335, %v4314
    %v4337 = vmul.f32 %v4335, %v4315
    %v4338 = vadd.f32 %v4301, %v4336
    %v4339 = vadd.f32 %v4302, %v4337
    %v4340 = vrot.slane %v3378, 2
    %v4341 = vrot.slane %v3374, 2
    %v4342 = vsel %vm2221, %v4340, %v4341
    %v4343 = vrot.slane %v3379, 2
    %v4344 = vsel %vm2221, %v4341, %v4343
    %4347 = vrot.lane.b32.xlu0 %v4342, 1
    %v4348 = vpop.permute.xlu0 %4347
    %4349 = vrot.lane.b32.xlu0 %v4344, 1
    %v4350 = vpop.permute.xlu0 %4349
    %v4351 = vsel %vm105, %v4348, 0.0
    %v4352 = vsel %vm105, %v4350, 0.0
    %s4353 = sld [smem:[#allocation9 + $0x18]]
    %s4354 = sld [smem:[#allocation9 + $0x3c]]
    %s4355 = sld [smem:[#allocation9 + $0x60]]
    %s4356 = sld [smem:[#allocation9 + $0x84]]
    %v4357 = vstv %s4353
    %v4358 = vmul.f32 %v4357, %v4351
    %v4359 = vmul.f32 %v4357, %v4352
    %v4360 = vadd.f32 %v4323, %v4358
    %v4361 = vadd.f32 %v4324, %v4359
    %v4362 = vstv %s4354
    %v4363 = vmul.f32 %v4362, %v4351
    %v4364 = vmul.f32 %v4362, %v4352
    %v4365 = vadd.f32 %v4328, %v4363
    %v4366 = vadd.f32 %v4329, %v4364
    %v4367 = vstv %s4355
    %v4368 = vmul.f32 %v4367, %v4351
    %v4369 = vmul.f32 %v4367, %v4352
    %v4370 = vadd.f32 %v4333, %v4368
    %v4371 = vadd.f32 %v4334, %v4369
    %v4372 = vstv %s4356
    %v4373 = vmul.f32 %v4372, %v4351
    %v4374 = vmul.f32 %v4372, %v4352
    %v4375 = vadd.f32 %v4338, %v4373
    %v4376 = vadd.f32 %v4339, %v4374
    %v4377 = vrot.slane %v3388, 2
    %v4378 = vrot.slane %v3384, 2
    %v4379 = vsel %vm2221, %v4377, %v4378
    %v4380 = vrot.slane %v3389, 2
    %v4381 = vsel %vm2221, %v4378, %v4380
    %4384 = vrot.lane.b32.xlu0 %v4379, 1
    %v4385 = vpop.permute.xlu0 %4384
    %4386 = vrot.lane.b32.xlu0 %v4381, 1
    %v4387 = vpop.permute.xlu0 %4386
    %v4388 = vsel %vm105, %v4385, 0.0
    %v4389 = vsel %vm105, %v4387, 0.0
    %s4390 = sld [smem:[#allocation9 + $0x21]]
    %s4391 = sld [smem:[#allocation9 + $0x45]]
    %s4392 = sld [smem:[#allocation9 + $0x69]]
    %s4393 = sld [smem:[#allocation9 + $0x8d]]
    %v4394 = vstv %s4390
    %v4395 = vmul.f32 %v4394, %v4388
    %v4396 = vmul.f32 %v4394, %v4389
    %v4397 = vadd.f32 %v4360, %v4395
    %v4398 = vadd.f32 %v4361, %v4396
    %v4399 = vstv %s4391
    %v4400 = vmul.f32 %v4399, %v4388
    %v4401 = vmul.f32 %v4399, %v4389
    %v4402 = vadd.f32 %v4365, %v4400
    %v4403 = vadd.f32 %v4366, %v4401
    %v4404 = vstv %s4392
    %v4405 = vmul.f32 %v4404, %v4388
    %v4406 = vmul.f32 %v4404, %v4389
    %v4407 = vadd.f32 %v4370, %v4405
    %v4408 = vadd.f32 %v4371, %v4406
    %v4409 = vstv %s4393
    %v4410 = vmul.f32 %v4409, %v4388
    %v4411 = vmul.f32 %v4409, %v4389
    %v4412 = vadd.f32 %v4375, %v4410
    %v4413 = vadd.f32 %v4376, %v4411
    %s4414 = sld [smem:[#allocation9 + $0x7]]
    %s4415 = sld [smem:[#allocation9 + $0x2b]]
    %s4416 = sld [smem:[#allocation9 + $0x4f]]
    %s4417 = sld [smem:[#allocation9 + $0x73]]
    %v4418 = vstv %s4414
    %v4419 = vmul.f32 %v4418, %v3358
    %v4420 = vmul.f32 %v4418, %v3354
    %v4421 = vmul.f32 %v4418, %v3359
    %v4425 = vrot.slane %v4419, 2
    %v4426 = vrot.slane %v4420, 2
    %v4427 = vsel %vm2221, %v4425, %v4426
    %v4428 = vrot.slane %v4421, 2
    %v4429 = vsel %vm2221, %v4426, %v4428
    %v4432 = vadd.f32 %v4397, %v4427
    %v4433 = vadd.f32 %v4398, %v4429
    %v4434 = vstv %s4415
    %v4435 = vmul.f32 %v4434, %v3358
    %v4436 = vmul.f32 %v4434, %v3354
    %v4437 = vmul.f32 %v4434, %v3359
    %v4441 = vrot.slane %v4435, 2
    %v4442 = vrot.slane %v4436, 2
    %v4443 = vsel %vm2221, %v4441, %v4442
    %v4444 = vrot.slane %v4437, 2
    %v4445 = vsel %vm2221, %v4442, %v4444
    %v4448 = vadd.f32 %v4402, %v4443
    %v4449 = vadd.f32 %v4403, %v4445
    %v4450 = vstv %s4416
    %v4451 = vmul.f32 %v4450, %v3358
    %v4452 = vmul.f32 %v4450, %v3354
    %v4453 = vmul.f32 %v4450, %v3359
    %v4457 = vrot.slane %v4451, 2
    %v4458 = vrot.slane %v4452, 2
    %v4459 = vsel %vm2221, %v4457, %v4458
    %v4460 = vrot.slane %v4453, 2
    %v4461 = vsel %vm2221, %v4458, %v4460
    %v4464 = vadd.f32 %v4407, %v4459
    %v4465 = vadd.f32 %v4408, %v4461
    %v4466 = vstv %s4417
    %v4467 = vmul.f32 %v4466, %v3358
    %v4468 = vmul.f32 %v4466, %v3354
    %v4469 = vmul.f32 %v4466, %v3359
    %v4473 = vrot.slane %v4467, 2
    %v4474 = vrot.slane %v4468, 2
    %v4475 = vsel %vm2221, %v4473, %v4474
    %v4476 = vrot.slane %v4469, 2
    %v4477 = vsel %vm2221, %v4474, %v4476
    %v4480 = vadd.f32 %v4412, %v4475
    %v4481 = vadd.f32 %v4413, %v4477
    %s4482 = sld [smem:[#allocation9 + $0x10]]
    %s4483 = sld [smem:[#allocation9 + $0x34]]
    %s4484 = sld [smem:[#allocation9 + $0x58]]
    %s4485 = sld [smem:[#allocation9 + $0x7c]]
    %v4486 = vstv %s4482
    %v4487 = vmul.f32 %v4486, %v3368
    %v4488 = vmul.f32 %v4486, %v3364
    %v4489 = vmul.f32 %v4486, %v3369
    %v4493 = vrot.slane %v4487, 2
    %v4494 = vrot.slane %v4488, 2
    %v4495 = vsel %vm2221, %v4493, %v4494
    %v4496 = vrot.slane %v4489, 2
    %v4497 = vsel %vm2221, %v4494, %v4496
    %v4500 = vadd.f32 %v4432, %v4495
    %v4501 = vadd.f32 %v4433, %v4497
    %v4502 = vstv %s4483
    %v4503 = vmul.f32 %v4502, %v3368
    %v4504 = vmul.f32 %v4502, %v3364
    %v4505 = vmul.f32 %v4502, %v3369
    %v4509 = vrot.slane %v4503, 2
    %v4510 = vrot.slane %v4504, 2
    %v4511 = vsel %vm2221, %v4509, %v4510
    %v4512 = vrot.slane %v4505, 2
    %v4513 = vsel %vm2221, %v4510, %v4512
    %v4516 = vadd.f32 %v4448, %v4511
    %v4517 = vadd.f32 %v4449, %v4513
    %v4518 = vstv %s4484
    %v4519 = vmul.f32 %v4518, %v3368
    %v4520 = vmul.f32 %v4518, %v3364
    %v4521 = vmul.f32 %v4518, %v3369
    %v4525 = vrot.slane %v4519, 2
    %v4526 = vrot.slane %v4520, 2
    %v4527 = vsel %vm2221, %v4525, %v4526
    %v4528 = vrot.slane %v4521, 2
    %v4529 = vsel %vm2221, %v4526, %v4528
    %v4532 = vadd.f32 %v4464, %v4527
    %v4533 = vadd.f32 %v4465, %v4529
    %v4534 = vstv %s4485
    %v4535 = vmul.f32 %v4534, %v3368
    %v4536 = vmul.f32 %v4534, %v3364
    %v4537 = vmul.f32 %v4534, %v3369
    %v4541 = vrot.slane %v4535, 2
    %v4542 = vrot.slane %v4536, 2
    %v4543 = vsel %vm2221, %v4541, %v4542
    %v4544 = vrot.slane %v4537, 2
    %v4545 = vsel %vm2221, %v4542, %v4544
    %v4548 = vadd.f32 %v4480, %v4543
    %v4549 = vadd.f32 %v4481, %v4545
    %s4550 = sld [smem:[#allocation9 + $0x19]]
    %s4551 = sld [smem:[#allocation9 + $0x3d]]
    %s4552 = sld [smem:[#allocation9 + $0x61]]
    %s4553 = sld [smem:[#allocation9 + $0x85]]
    %v4554 = vstv %s4550
    %v4555 = vmul.f32 %v4554, %v3378
    %v4556 = vmul.f32 %v4554, %v3374
    %v4557 = vmul.f32 %v4554, %v3379
    %v4561 = vrot.slane %v4555, 2
    %v4562 = vrot.slane %v4556, 2
    %v4563 = vsel %vm2221, %v4561, %v4562
    %v4564 = vrot.slane %v4557, 2
    %v4565 = vsel %vm2221, %v4562, %v4564
    %v4568 = vadd.f32 %v4500, %v4563
    %v4569 = vadd.f32 %v4501, %v4565
    %v4570 = vstv %s4551
    %v4571 = vmul.f32 %v4570, %v3378
    %v4572 = vmul.f32 %v4570, %v3374
    %v4573 = vmul.f32 %v4570, %v3379
    %v4577 = vrot.slane %v4571, 2
    %v4578 = vrot.slane %v4572, 2
    %v4579 = vsel %vm2221, %v4577, %v4578
    %v4580 = vrot.slane %v4573, 2
    %v4581 = vsel %vm2221, %v4578, %v4580
    %v4584 = vadd.f32 %v4516, %v4579
    %v4585 = vadd.f32 %v4517, %v4581
    %v4586 = vstv %s4552
    %v4587 = vmul.f32 %v4586, %v3378
    %v4588 = vmul.f32 %v4586, %v3374
    %v4589 = vmul.f32 %v4586, %v3379
    %v4593 = vrot.slane %v4587, 2
    %v4594 = vrot.slane %v4588, 2
    %v4595 = vsel %vm2221, %v4593, %v4594
    %v4596 = vrot.slane %v4589, 2
    %v4597 = vsel %vm2221, %v4594, %v4596
    %v4600 = vadd.f32 %v4532, %v4595
    %v4601 = vadd.f32 %v4533, %v4597
    %v4602 = vstv %s4553
    %v4603 = vmul.f32 %v4602, %v3378
    %v4604 = vmul.f32 %v4602, %v3374
    %v4605 = vmul.f32 %v4602, %v3379
    %v4609 = vrot.slane %v4603, 2
    %v4610 = vrot.slane %v4604, 2
    %v4611 = vsel %vm2221, %v4609, %v4610
    %v4612 = vrot.slane %v4605, 2
    %v4613 = vsel %vm2221, %v4610, %v4612
    %v4616 = vadd.f32 %v4548, %v4611
    %v4617 = vadd.f32 %v4549, %v4613
    %s4618 = sld [smem:[#allocation9 + $0x22]]
    %s4619 = sld [smem:[#allocation9 + $0x46]]
    %s4620 = sld [smem:[#allocation9 + $0x6a]]
    %s4621 = sld [smem:[#allocation9 + $0x8e]]
    %v4622 = vstv %s4618
    %v4623 = vmul.f32 %v4622, %v3388
    %v4624 = vmul.f32 %v4622, %v3384
    %v4625 = vmul.f32 %v4622, %v3389
    %v4629 = vrot.slane %v4623, 2
    %v4630 = vrot.slane %v4624, 2
    %v4631 = vsel %vm2221, %v4629, %v4630
    %v4632 = vrot.slane %v4625, 2
    %v4633 = vsel %vm2221, %v4630, %v4632
    %v4636 = vadd.f32 %v4568, %v4631
    %v4637 = vadd.f32 %v4569, %v4633
    %v4638 = vstv %s4619
    %v4639 = vmul.f32 %v4638, %v3388
    %v4640 = vmul.f32 %v4638, %v3384
    %v4641 = vmul.f32 %v4638, %v3389
    %v4645 = vrot.slane %v4639, 2
    %v4646 = vrot.slane %v4640, 2
    %v4647 = vsel %vm2221, %v4645, %v4646
    %v4648 = vrot.slane %v4641, 2
    %v4649 = vsel %vm2221, %v4646, %v4648
    %v4652 = vadd.f32 %v4584, %v4647
    %v4653 = vadd.f32 %v4585, %v4649
    %v4654 = vstv %s4620
    %v4655 = vmul.f32 %v4654, %v3388
    %v4656 = vmul.f32 %v4654, %v3384
    %v4657 = vmul.f32 %v4654, %v3389
    %v4661 = vrot.slane %v4655, 2
    %v4662 = vrot.slane %v4656, 2
    %v4663 = vsel %vm2221, %v4661, %v4662
    %v4664 = vrot.slane %v4657, 2
    %v4665 = vsel %vm2221, %v4662, %v4664
    %v4668 = vadd.f32 %v4600, %v4663
    %v4669 = vadd.f32 %v4601, %v4665
    %v4670 = vstv %s4621
    %v4671 = vmul.f32 %v4670, %v3388
    %v4672 = vmul.f32 %v4670, %v3384
    %v4673 = vmul.f32 %v4670, %v3389
    %v4677 = vrot.slane %v4671, 2
    %v4678 = vrot.slane %v4672, 2
    %v4679 = vsel %vm2221, %v4677, %v4678
    %v4680 = vrot.slane %v4673, 2
    %v4681 = vsel %vm2221, %v4678, %v4680
    %v4684 = vadd.f32 %v4616, %v4679
    %v4685 = vadd.f32 %v4617, %v4681
    %4686 = vrot.lane.b32.xlu0 %v4268, 127
    %v4687 = vpop.permute.xlu0 %4686
    %4688 = vrot.lane.b32.xlu0 %v4270, 127
    %v4689 = vpop.permute.xlu0 %4688
    %v4690 = vsel %vm106, %v4687, 0.0
    %v4691 = vsel %vm106, %v4689, 0.0
    %s4692 = sld [smem:[#allocation9 + $0x8]]
    %s4693 = sld [smem:[#allocation9 + $0x2c]]
    %s4694 = sld [smem:[#allocation9 + $0x50]]
    %s4695 = sld [smem:[#allocation9 + $0x74]]
    %v4696 = vstv %s4692
    %v4697 = vmul.f32 %v4696, %v4690
    %v4698 = vmul.f32 %v4696, %v4691
    %v4699 = vadd.f32 %v4636, %v4697
    %v4700 = vadd.f32 %v4637, %v4698
    %v4701 = vstv %s4693
    %v4702 = vmul.f32 %v4701, %v4690
    %v4703 = vmul.f32 %v4701, %v4691
    %v4704 = vadd.f32 %v4652, %v4702
    %v4705 = vadd.f32 %v4653, %v4703
    %v4706 = vstv %s4694
    %v4707 = vmul.f32 %v4706, %v4690
    %v4708 = vmul.f32 %v4706, %v4691
    %v4709 = vadd.f32 %v4668, %v4707
    %v4710 = vadd.f32 %v4669, %v4708
    %v4711 = vstv %s4695
    %v4712 = vmul.f32 %v4711, %v4690
    %v4713 = vmul.f32 %v4711, %v4691
    %v4714 = vadd.f32 %v4684, %v4712
    %v4715 = vadd.f32 %v4685, %v4713
    %4716 = vrot.lane.b32.xlu0 %v4305, 127
    %v4717 = vpop.permute.xlu0 %4716
    %4718 = vrot.lane.b32.xlu0 %v4307, 127
    %v4719 = vpop.permute.xlu0 %4718
    %v4720 = vsel %vm106, %v4717, 0.0
    %v4721 = vsel %vm106, %v4719, 0.0
    %s4722 = sld [smem:[#allocation9 + $0x11]]
    %s4723 = sld [smem:[#allocation9 + $0x35]]
    %s4724 = sld [smem:[#allocation9 + $0x59]]
    %s4725 = sld [smem:[#allocation9 + $0x7d]]
    %v4726 = vstv %s4722
    %v4727 = vmul.f32 %v4726, %v4720
    %v4728 = vmul.f32 %v4726, %v4721
    %v4729 = vadd.f32 %v4699, %v4727
    %v4730 = vadd.f32 %v4700, %v4728
    %v4731 = vstv %s4723
    %v4732 = vmul.f32 %v4731, %v4720
    %v4733 = vmul.f32 %v4731, %v4721
    %v4734 = vadd.f32 %v4704, %v4732
    %v4735 = vadd.f32 %v4705, %v4733
    %v4736 = vstv %s4724
    %v4737 = vmul.f32 %v4736, %v4720
    %v4738 = vmul.f32 %v4736, %v4721
    %v4739 = vadd.f32 %v4709, %v4737
    %v4740 = vadd.f32 %v4710, %v4738
    %v4741 = vstv %s4725
    %v4742 = vmul.f32 %v4741, %v4720
    %v4743 = vmul.f32 %v4741, %v4721
    %v4744 = vadd.f32 %v4714, %v4742
    %v4745 = vadd.f32 %v4715, %v4743
    %4746 = vrot.lane.b32.xlu0 %v4342, 127
    %v4747 = vpop.permute.xlu0 %4746
    %4748 = vrot.lane.b32.xlu0 %v4344, 127
    %v4749 = vpop.permute.xlu0 %4748
    %v4750 = vsel %vm106, %v4747, 0.0
    %v4751 = vsel %vm106, %v4749, 0.0
    %s4752 = sld [smem:[#allocation9 + $0x1a]]
    %s4753 = sld [smem:[#allocation9 + $0x3e]]
    %s4754 = sld [smem:[#allocation9 + $0x62]]
    %s4755 = sld [smem:[#allocation9 + $0x86]]
    %v4756 = vstv %s4752
    %v4757 = vmul.f32 %v4756, %v4750
    %v4758 = vmul.f32 %v4756, %v4751
    %v4759 = vadd.f32 %v4729, %v4757
    %v4760 = vadd.f32 %v4730, %v4758
    %v4761 = vstv %s4753
    %v4762 = vmul.f32 %v4761, %v4750
    %v4763 = vmul.f32 %v4761, %v4751
    %v4764 = vadd.f32 %v4734, %v4762
    %v4765 = vadd.f32 %v4735, %v4763
    %v4766 = vstv %s4754
    %v4767 = vmul.f32 %v4766, %v4750
    %v4768 = vmul.f32 %v4766, %v4751
    %v4769 = vadd.f32 %v4739, %v4767
    %v4770 = vadd.f32 %v4740, %v4768
    %v4771 = vstv %s4755
    %v4772 = vmul.f32 %v4771, %v4750
    %v4773 = vmul.f32 %v4771, %v4751
    %v4774 = vadd.f32 %v4744, %v4772
    %v4775 = vadd.f32 %v4745, %v4773
    %4776 = vrot.lane.b32.xlu0 %v4379, 127
    %v4777 = vpop.permute.xlu0 %4776
    %4778 = vrot.lane.b32.xlu0 %v4381, 127
    %v4779 = vpop.permute.xlu0 %4778
    %v4780 = vsel %vm106, %v4777, 0.0
    %v4781 = vsel %vm106, %v4779, 0.0
    %s4782 = sld [smem:[#allocation9 + $0x23]]
    %s4783 = sld [smem:[#allocation9 + $0x47]]
    %s4784 = sld [smem:[#allocation9 + $0x6b]]
    %s4785 = sld [smem:[#allocation9 + $0x8f]]
    %v4786 = vstv %s4782
    %v4787 = vmul.f32 %v4786, %v4780
    %v4788 = vmul.f32 %v4786, %v4781
    %v4789 = vadd.f32 %v4759, %v4787
    %v4790 = vadd.f32 %v4760, %v4788
    %v4791 = vstv %s4783
    %v4792 = vmul.f32 %v4791, %v4780
    %v4793 = vmul.f32 %v4791, %v4781
    %v4794 = vadd.f32 %v4764, %v4792
    %v4795 = vadd.f32 %v4765, %v4793
    %v4796 = vstv %s4784
    %v4797 = vmul.f32 %v4796, %v4780
    %v4798 = vmul.f32 %v4796, %v4781
    %v4799 = vadd.f32 %v4769, %v4797
    %v4800 = vadd.f32 %v4770, %v4798
    %v4801 = vstv %s4785
    %v4802 = vmul.f32 %v4801, %v4780
    %v4803 = vmul.f32 %v4801, %v4781
    %v4804 = vadd.f32 %v4774, %v4802
    %v4805 = vadd.f32 %v4775, %v4803
    %vm4806 = vcmp.gt.f32.partialorder %v4789, 0.0
    %vm4807 = vcmp.gt.f32.partialorder %v4790, 0.0
    %v4808 = vmul.f32 %v4789, 1.442695
    %v4809 = vpow.pop %v4808
    %v4810 = vmul.f32 %v4790, 1.442695
    %v4811 = vpow.pop %v4810
    %v4812 = vsub.f32 %v4809, 1.0
    %v4813 = vsub.f32 %v4811, 1.0
    %v4814 = vmul.f32 %v4812, 1.6732632
    %v4815 = vmul.f32 %v4813, 1.6732632
    %v4816 = vsel %vm4806, %v4789, %v4814
    %v4817 = vsel %vm4807, %v4790, %v4815
    %vm4818 = vcmp.gt.f32.partialorder %v4794, 0.0
    %vm4819 = vcmp.gt.f32.partialorder %v4795, 0.0
    %v4820 = vmul.f32 %v4794, 1.442695
    %v4821 = vpow.pop %v4820
    %v4822 = vmul.f32 %v4795, 1.442695
    %v4823 = vpow.pop %v4822
    %v4824 = vsub.f32 %v4821, 1.0
    %v4825 = vsub.f32 %v4823, 1.0
    %v4826 = vmul.f32 %v4824, 1.6732632
    %v4827 = vmul.f32 %v4825, 1.6732632
    %v4828 = vsel %vm4818, %v4794, %v4826
    %v4829 = vsel %vm4819, %v4795, %v4827
    %vm4830 = vcmp.gt.f32.partialorder %v4799, 0.0
    %vm4831 = vcmp.gt.f32.partialorder %v4800, 0.0
    %v4832 = vmul.f32 %v4799, 1.442695
    %v4833 = vpow.pop %v4832
    %v4834 = vmul.f32 %v4800, 1.442695
    %v4835 = vpow.pop %v4834
    %v4836 = vsub.f32 %v4833, 1.0
    %v4837 = vsub.f32 %v4835, 1.0
    %v4838 = vmul.f32 %v4836, 1.6732632
    %v4839 = vmul.f32 %v4837, 1.6732632
    %v4840 = vsel %vm4830, %v4799, %v4838
    %v4841 = vsel %vm4831, %v4800, %v4839
    %vm4842 = vcmp.gt.f32.partialorder %v4804, 0.0
    %vm4843 = vcmp.gt.f32.partialorder %v4805, 0.0
    %v4844 = vmul.f32 %v4804, 1.442695
    %v4845 = vpow.pop %v4844
    %v4846 = vmul.f32 %v4805, 1.442695
    %v4847 = vpow.pop %v4846
    %v4848 = vsub.f32 %v4845, 1.0
    %v4849 = vsub.f32 %v4847, 1.0
    %v4850 = vmul.f32 %v4848, 1.6732632
    %v4851 = vmul.f32 %v4849, 1.6732632
    %v4852 = vsel %vm4842, %v4804, %v4850
    %v4853 = vsel %vm4843, %v4805, %v4851
    %v4856 = vrot.slane %v4816, 7
    %v4857 = vrot.slane %v4817, 7
    %v4858 = vsel %vm381, %v4856, %v4857
    %v4862 = vsel %vm381, 0.0, %v4856
    %v4863 = vsel %vm381, %v4857, 0.0
    %v4866 = vrot.slane %v4828, 7
    %v4867 = vrot.slane %v4829, 7
    %v4868 = vsel %vm381, %v4866, %v4867
    %v4872 = vsel %vm381, 0.0, %v4866
    %v4873 = vsel %vm381, %v4867, 0.0
    %v4876 = vrot.slane %v4840, 7
    %v4877 = vrot.slane %v4841, 7
    %v4878 = vsel %vm381, %v4876, %v4877
    %v4882 = vsel %vm381, 0.0, %v4876
    %v4883 = vsel %vm381, %v4877, 0.0
    %v4886 = vrot.slane %v4852, 7
    %v4887 = vrot.slane %v4853, 7
    %v4888 = vsel %vm381, %v4886, %v4887
    %v4892 = vsel %vm381, 0.0, %v4886
    %v4893 = vsel %vm381, %v4887, 0.0
    %4894 = vrot.lane.b32.xlu0 %v4862, 1
    %v4895 = vpop.permute.xlu0 %4894
    %4896 = vrot.lane.b32.xlu0 %v4858, 1
    %v4897 = vpop.permute.xlu0 %4896
    %v4898 = vsel %vm105, %v4895, 0.0
    %v4899 = vsel %vm105, %v4897, 0.0
    %s4900 = sld [smem:[#allocation10]]
    %v4901 = vstv %s4900
    %v4902 = vmul.f32 %v4901, %v4898
    %v4903 = vmul.f32 %v4901, %v4899
    %4904 = vrot.lane.b32.xlu0 %v4872, 1
    %v4905 = vpop.permute.xlu0 %4904
    %4906 = vrot.lane.b32.xlu0 %v4868, 1
    %v4907 = vpop.permute.xlu0 %4906
    %v4908 = vsel %vm105, %v4905, 0.0
    %v4909 = vsel %vm105, %v4907, 0.0
    %s4910 = sld [smem:[#allocation10 + $0x9]]
    %v4911 = vstv %s4910
    %v4912 = vmul.f32 %v4911, %v4908
    %v4913 = vmul.f32 %v4911, %v4909
    %v4914 = vadd.f32 %v4902, %v4912
    %v4915 = vadd.f32 %v4903, %v4913
    %4916 = vrot.lane.b32.xlu0 %v4882, 1
    %v4917 = vpop.permute.xlu0 %4916
    %4918 = vrot.lane.b32.xlu0 %v4878, 1
    %v4919 = vpop.permute.xlu0 %4918
    %v4920 = vsel %vm105, %v4917, 0.0
    %v4921 = vsel %vm105, %v4919, 0.0
    %s4922 = sld [smem:[#allocation10 + $0x12]]
    %v4923 = vstv %s4922
    %v4924 = vmul.f32 %v4923, %v4920
    %v4925 = vmul.f32 %v4923, %v4921
    %v4926 = vadd.f32 %v4914, %v4924
    %v4927 = vadd.f32 %v4915, %v4925
    %4928 = vrot.lane.b32.xlu0 %v4892, 1
    %v4929 = vpop.permute.xlu0 %4928
    %4930 = vrot.lane.b32.xlu0 %v4888, 1
    %v4931 = vpop.permute.xlu0 %4930
    %v4932 = vsel %vm105, %v4929, 0.0
    %v4933 = vsel %vm105, %v4931, 0.0
    %s4934 = sld [smem:[#allocation10 + $0x1b]]
    %v4935 = vstv %s4934
    %v4936 = vmul.f32 %v4935, %v4932
    %v4937 = vmul.f32 %v4935, %v4933
    %v4938 = vadd.f32 %v4926, %v4936
    %v4939 = vadd.f32 %v4927, %v4937
    %s4940 = sld [smem:[#allocation10 + $0x1]]
    %v4941 = vstv %s4940
    %v4942 = vmul.f32 %v4941, %v4862
    %v4943 = vmul.f32 %v4941, %v4858
    %v4944 = vadd.f32 %v4938, %v4942
    %v4945 = vadd.f32 %v4939, %v4943
    %s4946 = sld [smem:[#allocation10 + $0xa]]
    %v4947 = vstv %s4946
    %v4948 = vmul.f32 %v4947, %v4872
    %v4949 = vmul.f32 %v4947, %v4868
    %v4950 = vadd.f32 %v4944, %v4948
    %v4951 = vadd.f32 %v4945, %v4949
    %s4952 = sld [smem:[#allocation10 + $0x13]]
    %v4953 = vstv %s4952
    %v4954 = vmul.f32 %v4953, %v4882
    %v4955 = vmul.f32 %v4953, %v4878
    %v4956 = vadd.f32 %v4950, %v4954
    %v4957 = vadd.f32 %v4951, %v4955
    %s4958 = sld [smem:[#allocation10 + $0x1c]]
    %v4959 = vstv %s4958
    %v4960 = vmul.f32 %v4959, %v4892
    %v4961 = vmul.f32 %v4959, %v4888
    %v4962 = vadd.f32 %v4956, %v4960
    %v4963 = vadd.f32 %v4957, %v4961
    %4964 = vrot.lane.b32.xlu0 %v4862, 127
    %v4965 = vpop.permute.xlu0 %4964
    %4966 = vrot.lane.b32.xlu0 %v4858, 127
    %v4967 = vpop.permute.xlu0 %4966
    %v4968 = vsel %vm106, %v4965, 0.0
    %v4969 = vsel %vm106, %v4967, 0.0
    %s4970 = sld [smem:[#allocation10 + $0x2]]
    %v4971 = vstv %s4970
    %v4972 = vmul.f32 %v4971, %v4968
    %v4973 = vmul.f32 %v4971, %v4969
    %v4974 = vadd.f32 %v4962, %v4972
    %v4975 = vadd.f32 %v4963, %v4973
    %4976 = vrot.lane.b32.xlu0 %v4872, 127
    %v4977 = vpop.permute.xlu0 %4976
    %4978 = vrot.lane.b32.xlu0 %v4868, 127
    %v4979 = vpop.permute.xlu0 %4978
    %v4980 = vsel %vm106, %v4977, 0.0
    %v4981 = vsel %vm106, %v4979, 0.0
    %s4982 = sld [smem:[#allocation10 + $0xb]]
    %v4983 = vstv %s4982
    %v4984 = vmul.f32 %v4983, %v4980
    %v4985 = vmul.f32 %v4983, %v4981
    %v4986 = vadd.f32 %v4974, %v4984
    %v4987 = vadd.f32 %v4975, %v4985
    %4988 = vrot.lane.b32.xlu0 %v4882, 127
    %v4989 = vpop.permute.xlu0 %4988
    %4990 = vrot.lane.b32.xlu0 %v4878, 127
    %v4991 = vpop.permute.xlu0 %4990
    %v4992 = vsel %vm106, %v4989, 0.0
    %v4993 = vsel %vm106, %v4991, 0.0
    %s4994 = sld [smem:[#allocation10 + $0x14]]
    %v4995 = vstv %s4994
    %v4996 = vmul.f32 %v4995, %v4992
    %v4997 = vmul.f32 %v4995, %v4993
    %v4998 = vadd.f32 %v4986, %v4996
    %v4999 = vadd.f32 %v4987, %v4997
    %5000 = vrot.lane.b32.xlu0 %v4892, 127
    %v5001 = vpop.permute.xlu0 %5000
    %5002 = vrot.lane.b32.xlu0 %v4888, 127
    %v5003 = vpop.permute.xlu0 %5002
    %v5004 = vsel %vm106, %v5001, 0.0
    %v5005 = vsel %vm106, %v5003, 0.0
    %s5006 = sld [smem:[#allocation10 + $0x1d]]
    %v5007 = vstv %s5006
    %v5008 = vmul.f32 %v5007, %v5004
    %v5009 = vmul.f32 %v5007, %v5005
    %v5010 = vadd.f32 %v4998, %v5008
    %v5011 = vadd.f32 %v4999, %v5009
    %v5014 = vrot.slane %v4862, 1
    %v5015 = vrot.slane %v4858, 1
    %v5016 = vsel %vm1126, %v5014, %v5015
    %v5017 = vrot.slane %v4863, 1
    %v5018 = vsel %vm1126, %v5015, %v5017
    %5021 = vrot.lane.b32.xlu0 %v5016, 1
    %v5022 = vpop.permute.xlu0 %5021
    %5023 = vrot.lane.b32.xlu0 %v5018, 1
    %v5024 = vpop.permute.xlu0 %5023
    %v5025 = vsel %vm105, %v5022, 0.0
    %v5026 = vsel %vm105, %v5024, 0.0
    %s5027 = sld [smem:[#allocation10 + $0x3]]
    %v5028 = vstv %s5027
    %v5029 = vmul.f32 %v5028, %v5025
    %v5030 = vmul.f32 %v5028, %v5026
    %v5031 = vadd.f32 %v5010, %v5029
    %v5032 = vadd.f32 %v5011, %v5030
    %v5035 = vrot.slane %v4872, 1
    %v5036 = vrot.slane %v4868, 1
    %v5037 = vsel %vm1126, %v5035, %v5036
    %v5038 = vrot.slane %v4873, 1
    %v5039 = vsel %vm1126, %v5036, %v5038
    %5042 = vrot.lane.b32.xlu0 %v5037, 1
    %v5043 = vpop.permute.xlu0 %5042
    %5044 = vrot.lane.b32.xlu0 %v5039, 1
    %v5045 = vpop.permute.xlu0 %5044
    %v5046 = vsel %vm105, %v5043, 0.0
    %v5047 = vsel %vm105, %v5045, 0.0
    %s5048 = sld [smem:[#allocation10 + $0xc]]
    %v5049 = vstv %s5048
    %v5050 = vmul.f32 %v5049, %v5046
    %v5051 = vmul.f32 %v5049, %v5047
    %v5052 = vadd.f32 %v5031, %v5050
    %v5053 = vadd.f32 %v5032, %v5051
    %v5056 = vrot.slane %v4882, 1
    %v5057 = vrot.slane %v4878, 1
    %v5058 = vsel %vm1126, %v5056, %v5057
    %v5059 = vrot.slane %v4883, 1
    %v5060 = vsel %vm1126, %v5057, %v5059
    %5063 = vrot.lane.b32.xlu0 %v5058, 1
    %v5064 = vpop.permute.xlu0 %5063
    %5065 = vrot.lane.b32.xlu0 %v5060, 1
    %v5066 = vpop.permute.xlu0 %5065
    %v5067 = vsel %vm105, %v5064, 0.0
    %v5068 = vsel %vm105, %v5066, 0.0
    %s5069 = sld [smem:[#allocation10 + $0x15]]
    %v5070 = vstv %s5069
    %v5071 = vmul.f32 %v5070, %v5067
    %v5072 = vmul.f32 %v5070, %v5068
    %v5073 = vadd.f32 %v5052, %v5071
    %v5074 = vadd.f32 %v5053, %v5072
    %v5077 = vrot.slane %v4892, 1
    %v5078 = vrot.slane %v4888, 1
    %v5079 = vsel %vm1126, %v5077, %v5078
    %v5080 = vrot.slane %v4893, 1
    %v5081 = vsel %vm1126, %v5078, %v5080
    %5084 = vrot.lane.b32.xlu0 %v5079, 1
    %v5085 = vpop.permute.xlu0 %5084
    %5086 = vrot.lane.b32.xlu0 %v5081, 1
    %v5087 = vpop.permute.xlu0 %5086
    %v5088 = vsel %vm105, %v5085, 0.0
    %v5089 = vsel %vm105, %v5087, 0.0
    %s5090 = sld [smem:[#allocation10 + $0x1e]]
    %v5091 = vstv %s5090
    %v5092 = vmul.f32 %v5091, %v5088
    %v5093 = vmul.f32 %v5091, %v5089
    %v5094 = vadd.f32 %v5073, %v5092
    %v5095 = vadd.f32 %v5074, %v5093
    %s5096 = sld [smem:[#allocation10 + $0x4]]
    %v5097 = vstv %s5096
    %v5098 = vmul.f32 %v5097, %v4862
    %v5099 = vmul.f32 %v5097, %v4858
    %v5100 = vmul.f32 %v5097, %v4863
    %v5104 = vrot.slane %v5098, 1
    %v5105 = vrot.slane %v5099, 1
    %v5106 = vsel %vm1126, %v5104, %v5105
    %v5107 = vrot.slane %v5100, 1
    %v5108 = vsel %vm1126, %v5105, %v5107
    %v5111 = vadd.f32 %v5094, %v5106
    %v5112 = vadd.f32 %v5095, %v5108
    %s5113 = sld [smem:[#allocation10 + $0xd]]
    %v5114 = vstv %s5113
    %v5115 = vmul.f32 %v5114, %v4872
    %v5116 = vmul.f32 %v5114, %v4868
    %v5117 = vmul.f32 %v5114, %v4873
    %v5121 = vrot.slane %v5115, 1
    %v5122 = vrot.slane %v5116, 1
    %v5123 = vsel %vm1126, %v5121, %v5122
    %v5124 = vrot.slane %v5117, 1
    %v5125 = vsel %vm1126, %v5122, %v5124
    %v5128 = vadd.f32 %v5111, %v5123
    %v5129 = vadd.f32 %v5112, %v5125
    %s5130 = sld [smem:[#allocation10 + $0x16]]
    %v5131 = vstv %s5130
    %v5132 = vmul.f32 %v5131, %v4882
    %v5133 = vmul.f32 %v5131, %v4878
    %v5134 = vmul.f32 %v5131, %v4883
    %v5138 = vrot.slane %v5132, 1
    %v5139 = vrot.slane %v5133, 1
    %v5140 = vsel %vm1126, %v5138, %v5139
    %v5141 = vrot.slane %v5134, 1
    %v5142 = vsel %vm1126, %v5139, %v5141
    %v5145 = vadd.f32 %v5128, %v5140
    %v5146 = vadd.f32 %v5129, %v5142
    %s5147 = sld [smem:[#allocation10 + $0x1f]]
    %v5148 = vstv %s5147
    %v5149 = vmul.f32 %v5148, %v4892
    %v5150 = vmul.f32 %v5148, %v4888
    %v5151 = vmul.f32 %v5148, %v4893
    %v5155 = vrot.slane %v5149, 1
    %v5156 = vrot.slane %v5150, 1
    %v5157 = vsel %vm1126, %v5155, %v5156
    %v5158 = vrot.slane %v5151, 1
    %v5159 = vsel %vm1126, %v5156, %v5158
    %v5162 = vadd.f32 %v5145, %v5157
    %v5163 = vadd.f32 %v5146, %v5159
    %5164 = vrot.lane.b32.xlu0 %v5016, 127
    %v5165 = vpop.permute.xlu0 %5164
    %5166 = vrot.lane.b32.xlu0 %v5018, 127
    %v5167 = vpop.permute.xlu0 %5166
    %v5168 = vsel %vm106, %v5165, 0.0
    %v5169 = vsel %vm106, %v5167, 0.0
    %s5170 = sld [smem:[#allocation10 + $0x5]]
    %v5171 = vstv %s5170
    %v5172 = vmul.f32 %v5171, %v5168
    %v5173 = vmul.f32 %v5171, %v5169
    %v5174 = vadd.f32 %v5162, %v5172
    %v5175 = vadd.f32 %v5163, %v5173
    %5176 = vrot.lane.b32.xlu0 %v5037, 127
    %v5177 = vpop.permute.xlu0 %5176
    %5178 = vrot.lane.b32.xlu0 %v5039, 127
    %v5179 = vpop.permute.xlu0 %5178
    %v5180 = vsel %vm106, %v5177, 0.0
    %v5181 = vsel %vm106, %v5179, 0.0
    %s5182 = sld [smem:[#allocation10 + $0xe]]
    %v5183 = vstv %s5182
    %v5184 = vmul.f32 %v5183, %v5180
    %v5185 = vmul.f32 %v5183, %v5181
    %v5186 = vadd.f32 %v5174, %v5184
    %v5187 = vadd.f32 %v5175, %v5185
    %5188 = vrot.lane.b32.xlu0 %v5058, 127
    %v5189 = vpop.permute.xlu0 %5188
    %5190 = vrot.lane.b32.xlu0 %v5060, 127
    %v5191 = vpop.permute.xlu0 %5190
    %v5192 = vsel %vm106, %v5189, 0.0
    %v5193 = vsel %vm106, %v5191, 0.0
    %s5194 = sld [smem:[#allocation10 + $0x17]]
    %v5195 = vstv %s5194
    %v5196 = vmul.f32 %v5195, %v5192
    %v5197 = vmul.f32 %v5195, %v5193
    %v5198 = vadd.f32 %v5186, %v5196
    %v5199 = vadd.f32 %v5187, %v5197
    %5200 = vrot.lane.b32.xlu0 %v5079, 127
    %v5201 = vpop.permute.xlu0 %5200
    %5202 = vrot.lane.b32.xlu0 %v5081, 127
    %v5203 = vpop.permute.xlu0 %5202
    %v5204 = vsel %vm106, %v5201, 0.0
    %v5205 = vsel %vm106, %v5203, 0.0
    %s5206 = sld [smem:[#allocation10 + $0x20]]
    %v5207 = vstv %s5206
    %v5208 = vmul.f32 %v5207, %v5204
    %v5209 = vmul.f32 %v5207, %v5205
    %v5210 = vadd.f32 %v5198, %v5208
    %v5211 = vadd.f32 %v5199, %v5209
    %v5212 = vrot.slane %v4862, 2
    %v5213 = vrot.slane %v4858, 2
    %v5214 = vsel %vm2221, %v5212, %v5213
    %v5215 = vrot.slane %v4863, 2
    %v5216 = vsel %vm2221, %v5213, %v5215
    %5219 = vrot.lane.b32.xlu0 %v5214, 1
    %v5220 = vpop.permute.xlu0 %5219
    %5221 = vrot.lane.b32.xlu0 %v5216, 1
    %v5222 = vpop.permute.xlu0 %5221
    %v5223 = vsel %vm105, %v5220, 0.0
    %v5224 = vsel %vm105, %v5222, 0.0
    %s5225 = sld [smem:[#allocation10 + $0x6]]
    %v5226 = vstv %s5225
    %v5227 = vmul.f32 %v5226, %v5223
    %v5228 = vmul.f32 %v5226, %v5224
    %v5229 = vadd.f32 %v5210, %v5227
    %v5230 = vadd.f32 %v5211, %v5228
    %v5231 = vrot.slane %v4872, 2
    %v5232 = vrot.slane %v4868, 2
    %v5233 = vsel %vm2221, %v5231, %v5232
    %v5234 = vrot.slane %v4873, 2
    %v5235 = vsel %vm2221, %v5232, %v5234
    %5238 = vrot.lane.b32.xlu0 %v5233, 1
    %v5239 = vpop.permute.xlu0 %5238
    %5240 = vrot.lane.b32.xlu0 %v5235, 1
    %v5241 = vpop.permute.xlu0 %5240
    %v5242 = vsel %vm105, %v5239, 0.0
    %v5243 = vsel %vm105, %v5241, 0.0
    %s5244 = sld [smem:[#allocation10 + $0xf]]
    %v5245 = vstv %s5244
    %v5246 = vmul.f32 %v5245, %v5242
    %v5247 = vmul.f32 %v5245, %v5243
    %v5248 = vadd.f32 %v5229, %v5246
    %v5249 = vadd.f32 %v5230, %v5247
    %v5250 = vrot.slane %v4882, 2
    %v5251 = vrot.slane %v4878, 2
    %v5252 = vsel %vm2221, %v5250, %v5251
    %v5253 = vrot.slane %v4883, 2
    %v5254 = vsel %vm2221, %v5251, %v5253
    %5257 = vrot.lane.b32.xlu0 %v5252, 1
    %v5258 = vpop.permute.xlu0 %5257
    %5259 = vrot.lane.b32.xlu0 %v5254, 1
    %v5260 = vpop.permute.xlu0 %5259
    %v5261 = vsel %vm105, %v5258, 0.0
    %v5262 = vsel %vm105, %v5260, 0.0
    %s5263 = sld [smem:[#allocation10 + $0x18]]
    %v5264 = vstv %s5263
    %v5265 = vmul.f32 %v5264, %v5261
    %v5266 = vmul.f32 %v5264, %v5262
    %v5267 = vadd.f32 %v5248, %v5265
    %v5268 = vadd.f32 %v5249, %v5266
    %v5269 = vrot.slane %v4892, 2
    %v5270 = vrot.slane %v4888, 2
    %v5271 = vsel %vm2221, %v5269, %v5270
    %v5272 = vrot.slane %v4893, 2
    %v5273 = vsel %vm2221, %v5270, %v5272
    %5276 = vrot.lane.b32.xlu0 %v5271, 1
    %v5277 = vpop.permute.xlu0 %5276
    %5278 = vrot.lane.b32.xlu0 %v5273, 1
    %v5279 = vpop.permute.xlu0 %5278
    %v5280 = vsel %vm105, %v5277, 0.0
    %v5281 = vsel %vm105, %v5279, 0.0
    %s5282 = sld [smem:[#allocation10 + $0x21]]
    %v5283 = vstv %s5282
    %v5284 = vmul.f32 %v5283, %v5280
    %v5285 = vmul.f32 %v5283, %v5281
    %v5286 = vadd.f32 %v5267, %v5284
    %v5287 = vadd.f32 %v5268, %v5285
    %s5288 = sld [smem:[#allocation10 + $0x7]]
    %v5289 = vstv %s5288
    %v5290 = vmul.f32 %v5289, %v4862
    %v5291 = vmul.f32 %v5289, %v4858
    %v5292 = vmul.f32 %v5289, %v4863
    %v5296 = vrot.slane %v5290, 2
    %v5297 = vrot.slane %v5291, 2
    %v5298 = vsel %vm2221, %v5296, %v5297
    %v5299 = vrot.slane %v5292, 2
    %v5300 = vsel %vm2221, %v5297, %v5299
    %v5303 = vadd.f32 %v5286, %v5298
    %v5304 = vadd.f32 %v5287, %v5300
    %s5305 = sld [smem:[#allocation10 + $0x10]]
    %v5306 = vstv %s5305
    %v5307 = vmul.f32 %v5306, %v4872
    %v5308 = vmul.f32 %v5306, %v4868
    %v5309 = vmul.f32 %v5306, %v4873
    %v5313 = vrot.slane %v5307, 2
    %v5314 = vrot.slane %v5308, 2
    %v5315 = vsel %vm2221, %v5313, %v5314
    %v5316 = vrot.slane %v5309, 2
    %v5317 = vsel %vm2221, %v5314, %v5316
    %v5320 = vadd.f32 %v5303, %v5315
    %v5321 = vadd.f32 %v5304, %v5317
    %s5322 = sld [smem:[#allocation10 + $0x19]]
    %v5323 = vstv %s5322
    %v5324 = vmul.f32 %v5323, %v4882
    %v5325 = vmul.f32 %v5323, %v4878
    %v5326 = vmul.f32 %v5323, %v4883
    %v5330 = vrot.slane %v5324, 2
    %v5331 = vrot.slane %v5325, 2
    %v5332 = vsel %vm2221, %v5330, %v5331
    %v5333 = vrot.slane %v5326, 2
    %v5334 = vsel %vm2221, %v5331, %v5333
    %v5337 = vadd.f32 %v5320, %v5332
    %v5338 = vadd.f32 %v5321, %v5334
    %s5339 = sld [smem:[#allocation10 + $0x22]]
    %v5340 = vstv %s5339
    %v5341 = vmul.f32 %v5340, %v4892
    %v5342 = vmul.f32 %v5340, %v4888
    %v5343 = vmul.f32 %v5340, %v4893
    %v5347 = vrot.slane %v5341, 2
    %v5348 = vrot.slane %v5342, 2
    %v5349 = vsel %vm2221, %v5347, %v5348
    %v5350 = vrot.slane %v5343, 2
    %v5351 = vsel %vm2221, %v5348, %v5350
    %v5354 = vadd.f32 %v5337, %v5349
    %v5355 = vadd.f32 %v5338, %v5351
    %5356 = vrot.lane.b32.xlu0 %v5214, 127
    %v5357 = vpop.permute.xlu0 %5356
    %5358 = vrot.lane.b32.xlu0 %v5216, 127
    %v5359 = vpop.permute.xlu0 %5358
    %v5360 = vsel %vm106, %v5357, 0.0
    %v5361 = vsel %vm106, %v5359, 0.0
    %s5362 = sld [smem:[#allocation10 + $0x8]]
    %v5363 = vstv %s5362
    %v5364 = vmul.f32 %v5363, %v5360
    %v5365 = vmul.f32 %v5363, %v5361
    %v5366 = vadd.f32 %v5354, %v5364
    %v5367 = vadd.f32 %v5355, %v5365
    %5368 = vrot.lane.b32.xlu0 %v5233, 127
    %v5369 = vpop.permute.xlu0 %5368
    %5370 = vrot.lane.b32.xlu0 %v5235, 127
    %v5371 = vpop.permute.xlu0 %5370
    %v5372 = vsel %vm106, %v5369, 0.0
    %v5373 = vsel %vm106, %v5371, 0.0
    %s5374 = sld [smem:[#allocation10 + $0x11]]
    %v5375 = vstv %s5374
    %v5376 = vmul.f32 %v5375, %v5372
    %v5377 = vmul.f32 %v5375, %v5373
    %v5378 = vadd.f32 %v5366, %v5376
    %v5379 = vadd.f32 %v5367, %v5377
    %5380 = vrot.lane.b32.xlu0 %v5252, 127
    %v5381 = vpop.permute.xlu0 %5380
    %5382 = vrot.lane.b32.xlu0 %v5254, 127
    %v5383 = vpop.permute.xlu0 %5382
    %v5384 = vsel %vm106, %v5381, 0.0
    %v5385 = vsel %vm106, %v5383, 0.0
    %s5386 = sld [smem:[#allocation10 + $0x1a]]
    %v5387 = vstv %s5386
    %v5388 = vmul.f32 %v5387, %v5384
    %v5389 = vmul.f32 %v5387, %v5385
    %v5390 = vadd.f32 %v5378, %v5388
    %v5391 = vadd.f32 %v5379, %v5389
    %5392 = vrot.lane.b32.xlu0 %v5271, 127
    %v5393 = vpop.permute.xlu0 %5392
    %5394 = vrot.lane.b32.xlu0 %v5273, 127
    %v5395 = vpop.permute.xlu0 %5394
    %v5396 = vsel %vm106, %v5393, 0.0
    %v5397 = vsel %vm106, %v5395, 0.0
    %s5398 = sld [smem:[#allocation10 + $0x23]]
    %v5399 = vstv %s5398
    %v5400 = vmul.f32 %v5399, %v5396
    %v5401 = vmul.f32 %v5399, %v5397
    %v5402 = vadd.f32 %v5390, %v5400
    %v5403 = vadd.f32 %v5391, %v5401
    %v5404 = vsub.f32 0.0, %v5402
    %v5405 = vsub.f32 0.0, %v5403
    %v5406 = vmul.f32 %v5404, 1.442695
    %v5407 = vpow.pop %v5406
    %v5408 = vmul.f32 %v5405, 1.442695
    %v5409 = vpow.pop %v5408
    %v5410 = vadd.f32 %v5407, 1.0
    %v5411 = vadd.f32 %v5409, 1.0
    %v5412 = vrcp.pop %v5410
    %v5413 = vrcp.pop %v5411
    %5414 = vst [vmem:[#allocation12] sm:$0xff] %v5412
    %5415 = vst [vmem:[#allocation12 + $0x8] sm:$0xff] %v5413
    // Predicated region
    $region42: #{tpu_custom_call.1} parent=1 // pred_check
      _
    $region43: #{tpu_custom_call.1} parent=1 // pred_check_branch
      %5417 = sbr.rel (0) target = $region45
    $region44: #{tpu_custom_call.1} parent=1 // pred_region
      %s5419 = ssub.s32 256, 256
      %5420 = vsyncadd [#allocation4], %s5419
      %s5421 = sshll.u32 [#allocation12], 4
      %s5422 = int_to_ptr.vmem [resolvable:$true] %s5421
      %5427 = dma.vmem_to_hbm [thread:$0]  %s5422, 256, %s5, [#allocation4], 128, 128, 8
    $region45: #{tpu_custom_call.1} parent=1 // pred_fallthru
      _
    // Predicated region
    $region46: #{tpu_custom_call.1} parent=1 // pred_check
      _
    $region47: #{tpu_custom_call.1} parent=1 // pred_check_branch
      %5429 = sbr.rel (0) target = $region49
    $region48: #{tpu_custom_call.1} parent=1 // pred_region
      %5430 = dma.done [#allocation4], 256
    $region49: #{tpu_custom_call.1} parent=1 // pred_fallthru
      _
    %5431 = vsyncpa [#allocation3], 1
    %5432 = vsyncpa [#allocation4], 1
    %5433 = vsyncpa [#allocation5], 1
    %5434 = vsyncpa [#allocation8], 1
    %5435 = vsyncpa [#allocation11], 1

</llo_original>
